<compile_context>
chip_gen: v7x
topology: tpu7x:2x2x1
jax: 0.10.0
libtpu: 0.0.40
codegen_flags: <defaults>
</compile_context>

<pallas_src>
import math

import jax
import jax.numpy as jnp
import numpy as np
from jax import lax
from jax.experimental import pallas as pl
from jax.experimental.pallas import tpu as pltpu

EPS = 1e-5
_VMEM_LIMIT = 32 * 1024 * 1024   # explicit scoped-VMEM budget (safe on v5e/v6e/v7x)


def _round_up(v, m):
    return ((v + m - 1) // m) * m


# ---------------------------------------------------------------------------
# Shared conv helper: bf16 halo scratch + 9 accumulating MXU matmuls.
#   hb       : (H, W, Cp) bf16 pre-activation (bn+relu already applied)
#   pad_ref  : (H+2, W+2, Cp) bf16 VMEM scratch
#   w_ref    : (9, Cp, Cp) bf16 packed taps, tap t = (ky, kx) = divmod(t, 3)
# returns (H*W, Cp) f32 accumulator.
# ---------------------------------------------------------------------------
def _pad_and_conv(hb, pad_ref, w_ref):
    H, W, Cp = hb.shape
    # Interior written once (left/right halo columns concatenated in-register),
    # then only the two halo rows get extra zero stores.
    zc = jnp.zeros((H, 1, Cp), jnp.bfloat16)
    pad_ref[1:H + 1, :, :] = jnp.concatenate([zc, hb, zc], axis=1)
    zrow = jnp.zeros((1, W + 2, Cp), jnp.bfloat16)
    pad_ref[0:1, :, :] = zrow
    pad_ref[H + 1:H + 2, :, :] = zrow

    acc = jnp.zeros((H * W, Cp), jnp.float32)
    for t in range(9):                       # static unroll, 9 taps
        ky, kx = divmod(t, 3)
        patch = pad_ref[ky:ky + H, kx:kx + W, :].reshape(H * W, Cp)   # bf16
        acc = acc + jnp.dot(patch, w_ref[t],
                            preferred_element_type=jnp.float32)
    return acc


# ---------------------------------------------------------------------------
# Kernel 1: relu(x * scale1 + shift1) -> conv1, fused per-image stats of y1.
#   Outputs: y1 (bf16) and (sum, centered second moment) per channel (f32).
# ---------------------------------------------------------------------------
def bn_relu_conv_stats_kernel(x_ref, scale_ref, shift_ref, w_ref,
                              y_ref, stats_ref, pad_ref):
    _, H, W, Cp = x_ref.shape
    h = jnp.maximum(x_ref[0] * scale_ref[0] + shift_ref[0], 0.0)   # f32 VPU
    acc = _pad_and_conv(h.astype(jnp.bfloat16), pad_ref, w_ref)    # (H*W, Cp) f32

    # Per-image channel stats of y1, taken from the exact f32 accumulator
    # (before the bf16 downcast), nearly free on the XLU.
    s = jnp.sum(acc, axis=0)                                        # (Cp,)
    d = acc - s * (1.0 / (H * W))
    m2 = jnp.sum(d * d, axis=0)                                     # centered
    stats_ref[0] = jnp.stack([s, m2], axis=0)                       # (2, Cp)

    y_ref[0] = acc.reshape(H, W, Cp).astype(jnp.bfloat16)


# ---------------------------------------------------------------------------
# Kernel 2: relu(y1 * scale2 + shift2) -> conv2 -> + residual.
# ---------------------------------------------------------------------------
def bn_relu_conv_add_kernel(y_ref, scale_ref, shift_ref, w_ref, res_ref,
                            out_ref, pad_ref):
    _, H, W, Cp = y_ref.shape
    h = jnp.maximum(y_ref[0].astype(jnp.float32) * scale_ref[0] + shift_ref[0],
                    0.0)
    acc = _pad_and_conv(h.astype(jnp.bfloat16), pad_ref, w_ref)
    # Residual read only here (short live range).
    out_ref[0] = acc.reshape(H, W, Cp) + res_ref[0]


# ---------------------------------------------------------------------------
# pallas_call wrappers
# ---------------------------------------------------------------------------
def _conv1_pass(x_p, scale, shift, w_packed):
    N, H, W, Cp = x_p.shape
    x_spec = pl.BlockSpec((1, H, W, Cp), lambda n: (n, 0, 0, 0))
    vec_spec = pl.BlockSpec((1, Cp), lambda n: (0, 0))
    w_spec = pl.BlockSpec((9, Cp, Cp), lambda n: (0, 0, 0))
    y_spec = pl.BlockSpec((1, H, W, Cp), lambda n: (n, 0, 0, 0))
    stats_spec = pl.BlockSpec((1, 2, Cp), lambda n: (n, 0, 0))
    return pl.pallas_call(
        bn_relu_conv_stats_kernel,
        grid=(N,),
        out_shape=(jax.ShapeDtypeStruct((N, H, W, Cp), jnp.bfloat16),
                   jax.ShapeDtypeStruct((N, 2, Cp), jnp.float32)),
        in_specs=[x_spec, vec_spec, vec_spec, w_spec],
        out_specs=(y_spec, stats_spec),
        scratch_shapes=[pltpu.VMEM((H + 2, W + 2, Cp), jnp.bfloat16)],
        compiler_params=pltpu.CompilerParams(
            dimension_semantics=("parallel",),
            vmem_limit_bytes=_VMEM_LIMIT),
    )(x_p, scale, shift, w_packed)


def _conv2_pass(y1, scale, shift, w_packed, residual):
    N, H, W, Cp = y1.shape
    y_spec = pl.BlockSpec((1, H, W, Cp), lambda n: (n, 0, 0, 0))
    vec_spec = pl.BlockSpec((1, Cp), lambda n: (0, 0))
    w_spec = pl.BlockSpec((9, Cp, Cp), lambda n: (0, 0, 0))
    out_spec = pl.BlockSpec((1, H, W, Cp), lambda n: (n, 0, 0, 0))
    return pl.pallas_call(
        bn_relu_conv_add_kernel,
        grid=(N,),
        out_shape=jax.ShapeDtypeStruct((N, H, W, Cp), jnp.float32),
        in_specs=[y_spec, vec_spec, vec_spec, w_spec, y_spec],
        out_specs=out_spec,
        scratch_shapes=[pltpu.VMEM((H + 2, W + 2, Cp), jnp.bfloat16)],
        compiler_params=pltpu.CompilerParams(
            dimension_semantics=("parallel",),
            vmem_limit_bytes=_VMEM_LIMIT),
    )(y1, scale, shift, w_packed, residual)


# ---------------------------------------------------------------------------
# Glue: layout conversion, channel padding, weight packing, BN folding, merge.
# ---------------------------------------------------------------------------
def _pack_conv_weight(w_oihw, c_pad):
    """OIHW -> HWIO -> zero-pad channels -> (9, Cp, Cp) bf16 per-tap matrices."""
    o, i, kh, kw = w_oihw.shape
    w = jnp.transpose(w_oihw, (2, 3, 1, 0))                       # (3,3,I,O)
    w = jnp.pad(w, ((0, 0), (0, 0), (0, c_pad - i), (0, c_pad - o)))
    return w.reshape(kh * kw, c_pad, c_pad).astype(jnp.bfloat16)


def _fold_bn(gamma, beta, mean, var):
    inv = lax.rsqrt(var + EPS)
    scale = gamma * inv
    shift = beta - mean * scale
    return (scale[None, :].astype(jnp.float32),
            shift[None, :].astype(jnp.float32))


def _merge_stats(stats, n_per):
    """Chan merge of per-image (sum, centered m2) -> global mean / biased var."""
    n_imgs = stats.shape[0]
    total = n_imgs * n_per
    s = stats[:, 0, :]                                   # (N, Cp)
    m2 = stats[:, 1, :]
    mean_t = s / n_per
    mean = jnp.sum(s, axis=0) / total
    var = (jnp.sum(m2, axis=0)
           + n_per * jnp.sum(jnp.square(mean_t - mean), axis=0)) / total
    return mean, var


def basic_block_forward(x_nchw, params):
    """PyTorch-facing entry point: NCHW input, OIHW conv weights."""
    N, C, H, W = x_nchw.shape
    Cp = _round_up(C, 128)                       # lane-dense channel width

    x_nhwc = jnp.transpose(x_nchw, (0, 2, 3, 1)).astype(jnp.float32)
    x_p = jnp.pad(x_nhwc, ((0, 0), (0, 0), (0, 0), (0, Cp - C)))

    w1_p = _pack_conv_weight(params["conv1_w"], Cp)
    w2_p = _pack_conv_weight(params["conv2_w"], Cp)

    def pad_c(v):
        return jnp.pad(v, (0, Cp - C))           # padded channels: gamma=beta=0

    # BN1 batch statistics of the raw input: a tiny jnp reduction (must finish
    # before any conv1 work, so it cannot live inside the conv1 grid).
    mean1 = jnp.mean(x_nhwc, axis=(0, 1, 2))
    var1 = jnp.mean(jnp.square(x_nhwc - mean1), axis=(0, 1, 2))
    scale1, shift1 = _fold_bn(pad_c(params["bn1_g"]), pad_c(params["bn1_b"]),
                              pad_c(mean1), pad_c(var1))

    # Pallas call 1: bn1 + relu + conv1, with fused per-image y1 channel stats.
    y1, y1_stats = _conv1_pass(x_p, scale1, shift1, w1_p)

    # Merge y1 stats, fold BN2.
    mean2, var2 = _merge_stats(y1_stats, H * W)
    scale2, shift2 = _fold_bn(pad_c(params["bn2_g"]), pad_c(params["bn2_b"]),
                              mean2, var2)

    # Pallas call 2: bn2 + relu + conv2 + residual.
    out_p = _conv2_pass(y1, scale2, shift2, w2_p, x_p)

    return jnp.transpose(out_p[..., :C], (0, 3, 1, 2))            # back to NCHW


# ---------------------------------------------------------------------------
# Pure-JAX f32 reference (nn.BatchNorm2d training-mode math, 3x3 SAME conv)
# ---------------------------------------------------------------------------
def reference_forward(x_nchw, params):
    def bn(x, g, b):
        mean = jnp.mean(x, axis=(0, 2, 3), keepdims=True)
        var = jnp.mean((x - mean) ** 2, axis=(0, 2, 3), keepdims=True)
        return (x - mean) / jnp.sqrt(var + EPS) * g.reshape(1, -1, 1, 1) \
            + b.reshape(1, -1, 1, 1)

    def conv(x, w):
        return lax.conv_general_dilated(
            x, w, window_strides=(1, 1), padding="SAME",
            dimension_numbers=("NCHW", "OIHW", "NCHW"))

    h = jax.nn.relu(bn(x_nchw, params["bn1_g"], params["bn1_b"]))
    h = conv(h, params["conv1_w"])
    h = jax.nn.relu(bn(h, params["bn2_g"], params["bn2_b"]))
    h = conv(h, params["conv2_w"])
    return h + x_nchw


# ---------------------------------------------------------------------------
if __name__ == "__main__":
    # BasicBlock(inplanes=16, planes=16, stride=1)  (layer1 of PreResNetBase)
    N, C, H, W = 2, 16, 16, 16

    key = jax.random.PRNGKey(0)
    ks = jax.random.split(key, 7)
    conv_std = math.sqrt(2.0 / (9 * C))          # module's kaiming-style init
    params = {
        "conv1_w": conv_std * jax.random.normal(ks[0], (C, C, 3, 3), jnp.float32),
        "conv2_w": conv_std * jax.random.normal(ks[1], (C, C, 3, 3), jnp.float32),
        "bn1_g": 1.0 + 0.1 * jax.random.normal(ks[2], (C,), jnp.float32),
        "bn1_b": 0.1 * jax.random.normal(ks[3], (C,), jnp.float32),
        "bn2_g": 1.0 + 0.1 * jax.random.normal(ks[4], (C,), jnp.float32),
        "bn2_b": 0.1 * jax.random.normal(ks[5], (C,), jnp.float32),
    }
    x = jax.random.normal(ks[6], (N, C, H, W), jnp.float32)

    out = jax.jit(basic_block_forward)(x, params)
    out = jax.block_until_ready(out)

    ref = reference_forward(x, params)
    # Tolerance accounts for intentional bf16 MXU inputs + bf16 intermediate
    # (f32 accumulation / f32 BN math everywhere else).
    np.testing.assert_allclose(np.asarray(out), np.asarray(ref),
                               rtol=2e-2, atol=5e-2)
    assert out.shape == (N, C, H, W)
    print("KERNEL_OK")
</pallas_src>

<mosaic_0001>
module attributes {stable_mosaic.version = 11 : i64} {
  func.func @bn_relu_conv_stats_kernel(%arg0: i32, %arg1: memref<1x16x16x128xf32, #tpu.memory_space<vmem>>, %arg2: memref<1x128xf32, #tpu.memory_space<vmem>>, %arg3: memref<1x128xf32, #tpu.memory_space<vmem>>, %arg4: memref<9x128x128xbf16, #tpu.memory_space<vmem>>, %arg5: memref<1x16x16x128xbf16, #tpu.memory_space<vmem>>, %arg6: memref<1x2x128xf32, #tpu.memory_space<vmem>>, %arg7: memref<18x18x128xbf16, #tpu.memory_space<vmem>>) attributes {dimension_semantics = [#tpu.dimension_semantics<parallel>], iteration_bounds = array<i64: 2>, scalar_prefetch = 0 : i64, scratch_operands = 1 : i64, tpu.core_type = #tpu.core_type<tc>, window_params = [{transform_indices = @transform_0, window_bounds = array<i64: 1, 16, 16, 128>}, {pipeline_mode = #tpu.pipeline_mode<synchronous>, transform_indices = @transform_1, window_bounds = array<i64: 1, 128>}, {pipeline_mode = #tpu.pipeline_mode<synchronous>, transform_indices = @transform_2, window_bounds = array<i64: 1, 128>}, {pipeline_mode = #tpu.pipeline_mode<synchronous>, transform_indices = @transform_3, window_bounds = array<i64: 9, 128, 128>}, {transform_indices = @transform_4, window_bounds = array<i64: 1, 16, 16, 128>}, {transform_indices = @transform_5, window_bounds = array<i64: 1, 2, 128>}]} {
    %c0 = arith.constant 0 : index
    %c0_0 = arith.constant 0 : index
    %c0_1 = arith.constant 0 : index
    %c0_2 = arith.constant 0 : index
    %0 = vector.load %arg1[%c0, %c0_0, %c0_1, %c0_2] : memref<1x16x16x128xf32, #tpu.memory_space<vmem>>, vector<1x16x16x128xf32>
    %1 = vector.shape_cast %0 : vector<1x16x16x128xf32> to vector<16x16x128xf32>
    %c0_3 = arith.constant 0 : index
    %c0_4 = arith.constant 0 : index
    %2 = vector.load %arg2[%c0_3, %c0_4] : memref<1x128xf32, #tpu.memory_space<vmem>>, vector<1x128xf32>
    %3 = vector.shape_cast %2 : vector<1x128xf32> to vector<128xf32>
    %4 = vector.shape_cast %3 : vector<128xf32> to vector<1x1x128xf32>
    %5 = vector.broadcast %4 : vector<1x1x128xf32> to vector<16x16x128xf32>
    %6 = arith.mulf %1, %5 : vector<16x16x128xf32>
    %c0_5 = arith.constant 0 : index
    %c0_6 = arith.constant 0 : index
    %7 = vector.load %arg3[%c0_5, %c0_6] : memref<1x128xf32, #tpu.memory_space<vmem>>, vector<1x128xf32>
    %8 = vector.shape_cast %7 : vector<1x128xf32> to vector<128xf32>
    %9 = vector.shape_cast %8 : vector<128xf32> to vector<1x1x128xf32>
    %10 = vector.broadcast %9 : vector<1x1x128xf32> to vector<16x16x128xf32>
    %11 = arith.addf %6, %10 : vector<16x16x128xf32>
    %cst = arith.constant 0.000000e+00 : f32
    %12 = vector.broadcast %cst : f32 to vector<16x16x128xf32>
    %13 = arith.maximumf %11, %12 : vector<16x16x128xf32>
    %14 = arith.truncf %13 : vector<16x16x128xf32> to vector<16x16x128xbf16>
    %cst_7 = arith.constant 0.000000e+00 : bf16
    %15 = vector.broadcast %cst_7 : bf16 to vector<16x1x128xbf16>
    %16 = tpu.concatenate %15, %14, %15 in 1 : vector<16x1x128xbf16>, vector<16x16x128xbf16>, vector<16x1x128xbf16> -> vector<16x18x128xbf16>
    %c1 = arith.constant 1 : index
    %c0_8 = arith.constant 0 : index
    %c0_9 = arith.constant 0 : index
    %17 = vector.load %arg7[%c1, %c0_8, %c0_9] : memref<18x18x128xbf16, #tpu.memory_space<vmem>>, vector<16x18x128xbf16>
    tpu.vector_store %arg7[%c1, %c0_8, %c0_9], %16 {strides = array<i32>} : memref<18x18x128xbf16, #tpu.memory_space<vmem>>, vector<16x18x128xbf16>,
    %cst_10 = arith.constant 0.000000e+00 : bf16
    %18 = vector.broadcast %cst_10 : bf16 to vector<1x18x128xbf16>
    %c0_11 = arith.constant 0 : index
    %c0_12 = arith.constant 0 : index
    %c0_13 = arith.constant 0 : index
    %19 = vector.load %arg7[%c0_11, %c0_12, %c0_13] : memref<18x18x128xbf16, #tpu.memory_space<vmem>>, vector<1x18x128xbf16>
    tpu.vector_store %arg7[%c0_11, %c0_12, %c0_13], %18 {strides = array<i32>} : memref<18x18x128xbf16, #tpu.memory_space<vmem>>, vector<1x18x128xbf16>,
    %c17 = arith.constant 17 : index
    %c0_14 = arith.constant 0 : index
    %c0_15 = arith.constant 0 : index
    %20 = vector.load %arg7[%c17, %c0_14, %c0_15] : memref<18x18x128xbf16, #tpu.memory_space<vmem>>, vector<1x18x128xbf16>
    tpu.vector_store %arg7[%c17, %c0_14, %c0_15], %18 {strides = array<i32>} : memref<18x18x128xbf16, #tpu.memory_space<vmem>>, vector<1x18x128xbf16>,
    %cst_16 = arith.constant 0.000000e+00 : f32
    %21 = vector.broadcast %cst_16 : f32 to vector<256x128xf32>
    %c0_17 = arith.constant 0 : index
    %c0_18 = arith.constant 0 : index
    %c0_19 = arith.constant 0 : index
    %22 = vector.load %arg7[%c0_17, %c0_18, %c0_19] : memref<18x18x128xbf16, #tpu.memory_space<vmem>>, vector<16x16x128xbf16>
    %23 = vector.shape_cast %22 : vector<16x16x128xbf16> to vector<256x128xbf16>
    %c0_20 = arith.constant 0 : index
    %c0_21 = arith.constant 0 : index
    %c0_22 = arith.constant 0 : index
    %24 = vector.load %arg4[%c0_20, %c0_21, %c0_22] : memref<9x128x128xbf16, #tpu.memory_space<vmem>>, vector<1x128x128xbf16>
    %25 = vector.shape_cast %24 : vector<1x128x128xbf16> to vector<128x128xbf16>
    %cst_23 = arith.constant dense<0.000000e+00> : vector<256x128xf32>
    %26 = tpu.matmul %23, %25, %cst_23 {dimension_numbers = #tpu.dot_dimension_numbers<[1], [0], [0], [1], [0, 0, 1, 1], [], []>} : vector<256x128xbf16>, vector<128x128xbf16>, vector<256x128xf32> -> vector<256x128xf32>
    %27 = arith.addf %21, %26 : vector<256x128xf32>
    %c0_24 = arith.constant 0 : index
    %c1_25 = arith.constant 1 : index
    %c0_26 = arith.constant 0 : index
    %28 = vector.load %arg7[%c0_24, %c1_25, %c0_26] : memref<18x18x128xbf16, #tpu.memory_space<vmem>>, vector<16x16x128xbf16>
    %29 = vector.shape_cast %28 : vector<16x16x128xbf16> to vector<256x128xbf16>
    %c1_27 = arith.constant 1 : index
    %c0_28 = arith.constant 0 : index
    %c0_29 = arith.constant 0 : index
    %30 = vector.load %arg4[%c1_27, %c0_28, %c0_29] : memref<9x128x128xbf16, #tpu.memory_space<vmem>>, vector<1x128x128xbf16>
    %31 = vector.shape_cast %30 : vector<1x128x128xbf16> to vector<128x128xbf16>
    %cst_30 = arith.constant dense<0.000000e+00> : vector<256x128xf32>
    %32 = tpu.matmul %29, %31, %cst_30 {dimension_numbers = #tpu.dot_dimension_numbers<[1], [0], [0], [1], [0, 0, 1, 1], [], []>} : vector<256x128xbf16>, vector<128x128xbf16>, vector<256x128xf32> -> vector<256x128xf32>
    %33 = arith.addf %27, %32 : vector<256x128xf32>
    %c0_31 = arith.constant 0 : index
    %c2 = arith.constant 2 : index
    %c0_32 = arith.constant 0 : index
    %34 = vector.load %arg7[%c0_31, %c2, %c0_32] : memref<18x18x128xbf16, #tpu.memory_space<vmem>>, vector<16x16x128xbf16>
    %35 = vector.shape_cast %34 : vector<16x16x128xbf16> to vector<256x128xbf16>
    %c2_33 = arith.constant 2 : index
    %c0_34 = arith.constant 0 : index
    %c0_35 = arith.constant 0 : index
    %36 = vector.load %arg4[%c2_33, %c0_34, %c0_35] : memref<9x128x128xbf16, #tpu.memory_space<vmem>>, vector<1x128x128xbf16>
    %37 = vector.shape_cast %36 : vector<1x128x128xbf16> to vector<128x128xbf16>
    %cst_36 = arith.constant dense<0.000000e+00> : vector<256x128xf32>
    %38 = tpu.matmul %35, %37, %cst_36 {dimension_numbers = #tpu.dot_dimension_numbers<[1], [0], [0], [1], [0, 0, 1, 1], [], []>} : vector<256x128xbf16>, vector<128x128xbf16>, vector<256x128xf32> -> vector<256x128xf32>
    %39 = arith.addf %33, %38 : vector<256x128xf32>
    %c1_37 = arith.constant 1 : index
    %c0_38 = arith.constant 0 : index
    %c0_39 = arith.constant 0 : index
    %40 = vector.load %arg7[%c1_37, %c0_38, %c0_39] : memref<18x18x128xbf16, #tpu.memory_space<vmem>>, vector<16x16x128xbf16>
    %41 = vector.shape_cast %40 : vector<16x16x128xbf16> to vector<256x128xbf16>
    %c3 = arith.constant 3 : index
    %c0_40 = arith.constant 0 : index
    %c0_41 = arith.constant 0 : index
    %42 = vector.load %arg4[%c3, %c0_40, %c0_41] : memref<9x128x128xbf16, #tpu.memory_space<vmem>>, vector<1x128x128xbf16>
    %43 = vector.shape_cast %42 : vector<1x128x128xbf16> to vector<128x128xbf16>
    %cst_42 = arith.constant dense<0.000000e+00> : vector<256x128xf32>
    %44 = tpu.matmul %41, %43, %cst_42 {dimension_numbers = #tpu.dot_dimension_numbers<[1], [0], [0], [1], [0, 0, 1, 1], [], []>} : vector<256x128xbf16>, vector<128x128xbf16>, vector<256x128xf32> -> vector<256x128xf32>
    %45 = arith.addf %39, %44 : vector<256x128xf32>
    %c1_43 = arith.constant 1 : index
    %c1_44 = arith.constant 1 : index
    %c0_45 = arith.constant 0 : index
    %46 = vector.load %arg7[%c1_43, %c1_44, %c0_45] : memref<18x18x128xbf16, #tpu.memory_space<vmem>>, vector<16x16x128xbf16>
    %47 = vector.shape_cast %46 : vector<16x16x128xbf16> to vector<256x128xbf16>
    %c4 = arith.constant 4 : index
    %c0_46 = arith.constant 0 : index
    %c0_47 = arith.constant 0 : index
    %48 = vector.load %arg4[%c4, %c0_46, %c0_47] : memref<9x128x128xbf16, #tpu.memory_space<vmem>>, vector<1x128x128xbf16>
    %49 = vector.shape_cast %48 : vector<1x128x128xbf16> to vector<128x128xbf16>
    %cst_48 = arith.constant dense<0.000000e+00> : vector<256x128xf32>
    %50 = tpu.matmul %47, %49, %cst_48 {dimension_numbers = #tpu.dot_dimension_numbers<[1], [0], [0], [1], [0, 0, 1, 1], [], []>} : vector<256x128xbf16>, vector<128x128xbf16>, vector<256x128xf32> -> vector<256x128xf32>
    %51 = arith.addf %45, %50 : vector<256x128xf32>
    %c1_49 = arith.constant 1 : index
    %c2_50 = arith.constant 2 : index
    %c0_51 = arith.constant 0 : index
    %52 = vector.load %arg7[%c1_49, %c2_50, %c0_51] : memref<18x18x128xbf16, #tpu.memory_space<vmem>>, vector<16x16x128xbf16>
    %53 = vector.shape_cast %52 : vector<16x16x128xbf16> to vector<256x128xbf16>
    %c5 = arith.constant 5 : index
    %c0_52 = arith.constant 0 : index
    %c0_53 = arith.constant 0 : index
    %54 = vector.load %arg4[%c5, %c0_52, %c0_53] : memref<9x128x128xbf16, #tpu.memory_space<vmem>>, vector<1x128x128xbf16>
    %55 = vector.shape_cast %54 : vector<1x128x128xbf16> to vector<128x128xbf16>
    %cst_54 = arith.constant dense<0.000000e+00> : vector<256x128xf32>
    %56 = tpu.matmul %53, %55, %cst_54 {dimension_numbers = #tpu.dot_dimension_numbers<[1], [0], [0], [1], [0, 0, 1, 1], [], []>} : vector<256x128xbf16>, vector<128x128xbf16>, vector<256x128xf32> -> vector<256x128xf32>
    %57 = arith.addf %51, %56 : vector<256x128xf32>
    %c2_55 = arith.constant 2 : index
    %c0_56 = arith.constant 0 : index
    %c0_57 = arith.constant 0 : index
    %58 = vector.load %arg7[%c2_55, %c0_56, %c0_57] : memref<18x18x128xbf16, #tpu.memory_space<vmem>>, vector<16x16x128xbf16>
    %59 = vector.shape_cast %58 : vector<16x16x128xbf16> to vector<256x128xbf16>
    %c6 = arith.constant 6 : index
    %c0_58 = arith.constant 0 : index
    %c0_59 = arith.constant 0 : index
    %60 = vector.load %arg4[%c6, %c0_58, %c0_59] : memref<9x128x128xbf16, #tpu.memory_space<vmem>>, vector<1x128x128xbf16>
    %61 = vector.shape_cast %60 : vector<1x128x128xbf16> to vector<128x128xbf16>
    %cst_60 = arith.constant dense<0.000000e+00> : vector<256x128xf32>
    %62 = tpu.matmul %59, %61, %cst_60 {dimension_numbers = #tpu.dot_dimension_numbers<[1], [0], [0], [1], [0, 0, 1, 1], [], []>} : vector<256x128xbf16>, vector<128x128xbf16>, vector<256x128xf32> -> vector<256x128xf32>
    %63 = arith.addf %57, %62 : vector<256x128xf32>
    %c2_61 = arith.constant 2 : index
    %c1_62 = arith.constant 1 : index
    %c0_63 = arith.constant 0 : index
    %64 = vector.load %arg7[%c2_61, %c1_62, %c0_63] : memref<18x18x128xbf16, #tpu.memory_space<vmem>>, vector<16x16x128xbf16>
    %65 = vector.shape_cast %64 : vector<16x16x128xbf16> to vector<256x128xbf16>
    %c7 = arith.constant 7 : index
    %c0_64 = arith.constant 0 : index
    %c0_65 = arith.constant 0 : index
    %66 = vector.load %arg4[%c7, %c0_64, %c0_65] : memref<9x128x128xbf16, #tpu.memory_space<vmem>>, vector<1x128x128xbf16>
    %67 = vector.shape_cast %66 : vector<1x128x128xbf16> to vector<128x128xbf16>
    %cst_66 = arith.constant dense<0.000000e+00> : vector<256x128xf32>
    %68 = tpu.matmul %65, %67, %cst_66 {dimension_numbers = #tpu.dot_dimension_numbers<[1], [0], [0], [1], [0, 0, 1, 1], [], []>} : vector<256x128xbf16>, vector<128x128xbf16>, vector<256x128xf32> -> vector<256x128xf32>
    %69 = arith.addf %63, %68 : vector<256x128xf32>
    %c2_67 = arith.constant 2 : index
    %c2_68 = arith.constant 2 : index
    %c0_69 = arith.constant 0 : index
    %70 = vector.load %arg7[%c2_67, %c2_68, %c0_69] : memref<18x18x128xbf16, #tpu.memory_space<vmem>>, vector<16x16x128xbf16>
    %71 = vector.shape_cast %70 : vector<16x16x128xbf16> to vector<256x128xbf16>
    %c8 = arith.constant 8 : index
    %c0_70 = arith.constant 0 : index
    %c0_71 = arith.constant 0 : index
    %72 = vector.load %arg4[%c8, %c0_70, %c0_71] : memref<9x128x128xbf16, #tpu.memory_space<vmem>>, vector<1x128x128xbf16>
    %73 = vector.shape_cast %72 : vector<1x128x128xbf16> to vector<128x128xbf16>
    %cst_72 = arith.constant dense<0.000000e+00> : vector<256x128xf32>
    %74 = tpu.matmul %71, %73, %cst_72 {dimension_numbers = #tpu.dot_dimension_numbers<[1], [0], [0], [1], [0, 0, 1, 1], [], []>} : vector<256x128xbf16>, vector<128x128xbf16>, vector<256x128xf32> -> vector<256x128xf32>
    %75 = arith.addf %69, %74 : vector<256x128xf32>
    %cst_73 = arith.constant dense<0.000000e+00> : vector<128xf32>
    %76 = vector.multi_reduction <add>, %75, %cst_73 [0] : vector<256x128xf32> to vector<128xf32>
    %cst_74 = arith.constant 3.906250e-03 : f32
    %77 = vector.broadcast %cst_74 : f32 to vector<128xf32>
    %78 = arith.mulf %76, %77 : vector<128xf32>
    %79 = vector.shape_cast %78 : vector<128xf32> to vector<1x128xf32>
    %80 = vector.broadcast %79 : vector<1x128xf32> to vector<256x128xf32>
    %81 = arith.subf %75, %80 : vector<256x128xf32>
    %82 = arith.mulf %81, %81 : vector<256x128xf32>
    %cst_75 = arith.constant dense<0.000000e+00> : vector<128xf32>
    %83 = vector.multi_reduction <add>, %82, %cst_75 [0] : vector<256x128xf32> to vector<128xf32>
    %84 = vector.shape_cast %76 : vector<128xf32> to vector<1x128xf32>
    %85 = vector.shape_cast %83 : vector<128xf32> to vector<1x128xf32>
    %86 = tpu.concatenate %84, %85 in 0 : vector<1x128xf32>, vector<1x128xf32> -> vector<2x128xf32>
    %c0_76 = arith.constant 0 : index
    %c0_77 = arith.constant 0 : index
    %c0_78 = arith.constant 0 : index
    %87 = vector.load %arg6[%c0_76, %c0_77, %c0_78] : memref<1x2x128xf32, #tpu.memory_space<vmem>>, vector<1x2x128xf32>
    %88 = vector.shape_cast %87 : vector<1x2x128xf32> to vector<2x128xf32>
    %89 = vector.shape_cast %86 : vector<2x128xf32> to vector<1x2x128xf32>
    tpu.vector_store %arg6[%c0_76, %c0_77, %c0_78], %89 {strides = array<i32>} : memref<1x2x128xf32, #tpu.memory_space<vmem>>, vector<1x2x128xf32>,
    %90 = vector.shape_cast %75 : vector<256x128xf32> to vector<16x16x128xf32>
    %91 = arith.truncf %90 : vector<16x16x128xf32> to vector<16x16x128xbf16>
    %c0_79 = arith.constant 0 : index
    %c0_80 = arith.constant 0 : index
    %c0_81 = arith.constant 0 : index
    %c0_82 = arith.constant 0 : index
    %92 = vector.load %arg5[%c0_79, %c0_80, %c0_81, %c0_82] : memref<1x16x16x128xbf16, #tpu.memory_space<vmem>>, vector<1x16x16x128xbf16>
    %93 = vector.shape_cast %92 : vector<1x16x16x128xbf16> to vector<16x16x128xbf16>
    %94 = vector.shape_cast %91 : vector<16x16x128xbf16> to vector<1x16x16x128xbf16>
    tpu.vector_store %arg5[%c0_79, %c0_80, %c0_81, %c0_82], %94 {strides = array<i32>} : memref<1x16x16x128xbf16, #tpu.memory_space<vmem>>, vector<1x16x16x128xbf16>,
    return
  }
  func.func @transform_0(%arg0: i32) -> (i32, i32, i32, i32) {
    %c0_i32 = arith.constant 0 : i32
    %c0_i32_0 = arith.constant 0 : i32
    %c0_i32_1 = arith.constant 0 : i32
    %c0_i32_2 = arith.constant 0 : i32
    return %arg0, %c0_i32, %c0_i32_0, %c0_i32_1 : i32, i32, i32, i32
  }
  func.func @transform_1(%arg0: i32) -> (i32, i32) {
    %c0_i32 = arith.constant 0 : i32
    %c0_i32_0 = arith.constant 0 : i32
    %c0_i32_1 = arith.constant 0 : i32
    return %c0_i32, %c0_i32_0 : i32, i32
  }
  func.func @transform_2(%arg0: i32) -> (i32, i32) {
    %c0_i32 = arith.constant 0 : i32
    %c0_i32_0 = arith.constant 0 : i32
    %c0_i32_1 = arith.constant 0 : i32
    return %c0_i32, %c0_i32_0 : i32, i32
  }
  func.func @transform_3(%arg0: i32) -> (i32, i32, i32) {
    %c0_i32 = arith.constant 0 : i32
    %c0_i32_0 = arith.constant 0 : i32
    %c0_i32_1 = arith.constant 0 : i32
    %c0_i32_2 = arith.constant 0 : i32
    return %c0_i32, %c0_i32_0, %c0_i32_1 : i32, i32, i32
  }
  func.func @transform_4(%arg0: i32) -> (i32, i32, i32, i32) {
    %c0_i32 = arith.constant 0 : i32
    %c0_i32_0 = arith.constant 0 : i32
    %c0_i32_1 = arith.constant 0 : i32
    %c0_i32_2 = arith.constant 0 : i32
    return %arg0, %c0_i32, %c0_i32_0, %c0_i32_1 : i32, i32, i32, i32
  }
  func.func @transform_5(%arg0: i32) -> (i32, i32, i32) {
    %c0_i32 = arith.constant 0 : i32
    %c0_i32_0 = arith.constant 0 : i32
    %c0_i32_1 = arith.constant 0 : i32
    return %arg0, %c0_i32, %c0_i32_0 : i32, i32, i32
  }
}

module attributes {stable_mosaic.version = 11 : i64} {
  func.func @bn_relu_conv_add_kernel(%arg0: i32, %arg1: memref<1x16x16x128xbf16, #tpu.memory_space<vmem>>, %arg2: memref<1x128xf32, #tpu.memory_space<vmem>>, %arg3: memref<1x128xf32, #tpu.memory_space<vmem>>, %arg4: memref<9x128x128xbf16, #tpu.memory_space<vmem>>, %arg5: memref<1x16x16x128xf32, #tpu.memory_space<vmem>>, %arg6: memref<1x16x16x128xf32, #tpu.memory_space<vmem>>, %arg7: memref<18x18x128xbf16, #tpu.memory_space<vmem>>) attributes {dimension_semantics = [#tpu.dimension_semantics<parallel>], iteration_bounds = array<i64: 2>, scalar_prefetch = 0 : i64, scratch_operands = 1 : i64, tpu.core_type = #tpu.core_type<tc>, window_params = [{transform_indices = @transform_0, window_bounds = array<i64: 1, 16, 16, 128>}, {pipeline_mode = #tpu.pipeline_mode<synchronous>, transform_indices = @transform_1, window_bounds = array<i64: 1, 128>}, {pipeline_mode = #tpu.pipeline_mode<synchronous>, transform_indices = @transform_2, window_bounds = array<i64: 1, 128>}, {pipeline_mode = #tpu.pipeline_mode<synchronous>, transform_indices = @transform_3, window_bounds = array<i64: 9, 128, 128>}, {transform_indices = @transform_4, window_bounds = array<i64: 1, 16, 16, 128>}, {transform_indices = @transform_5, window_bounds = array<i64: 1, 16, 16, 128>}]} {
    %c0 = arith.constant 0 : index
    %c0_0 = arith.constant 0 : index
    %c0_1 = arith.constant 0 : index
    %c0_2 = arith.constant 0 : index
    %0 = vector.load %arg1[%c0, %c0_0, %c0_1, %c0_2] : memref<1x16x16x128xbf16, #tpu.memory_space<vmem>>, vector<1x16x16x128xbf16>
    %1 = vector.shape_cast %0 : vector<1x16x16x128xbf16> to vector<16x16x128xbf16>
    %2 = arith.extf %1 : vector<16x16x128xbf16> to vector<16x16x128xf32>
    %c0_3 = arith.constant 0 : index
    %c0_4 = arith.constant 0 : index
    %3 = vector.load %arg2[%c0_3, %c0_4] : memref<1x128xf32, #tpu.memory_space<vmem>>, vector<1x128xf32>
    %4 = vector.shape_cast %3 : vector<1x128xf32> to vector<128xf32>
    %5 = vector.shape_cast %4 : vector<128xf32> to vector<1x1x128xf32>
    %6 = vector.broadcast %5 : vector<1x1x128xf32> to vector<16x16x128xf32>
    %7 = arith.mulf %2, %6 : vector<16x16x128xf32>
    %c0_5 = arith.constant 0 : index
    %c0_6 = arith.constant 0 : index
    %8 = vector.load %arg3[%c0_5, %c0_6] : memref<1x128xf32, #tpu.memory_space<vmem>>, vector<1x128xf32>
    %9 = vector.shape_cast %8 : vector<1x128xf32> to vector<128xf32>
    %10 = vector.shape_cast %9 : vector<128xf32> to vector<1x1x128xf32>
    %11 = vector.broadcast %10 : vector<1x1x128xf32> to vector<16x16x128xf32>
    %12 = arith.addf %7, %11 : vector<16x16x128xf32>
    %cst = arith.constant 0.000000e+00 : f32
    %13 = vector.broadcast %cst : f32 to vector<16x16x128xf32>
    %14 = arith.maximumf %12, %13 : vector<16x16x128xf32>
    %15 = arith.truncf %14 : vector<16x16x128xf32> to vector<16x16x128xbf16>
    %cst_7 = arith.constant 0.000000e+00 : bf16
    %16 = vector.broadcast %cst_7 : bf16 to vector<16x1x128xbf16>
    %17 = tpu.concatenate %16, %15, %16 in 1 : vector<16x1x128xbf16>, vector<16x16x128xbf16>, vector<16x1x128xbf16> -> vector<16x18x128xbf16>
    %c1 = arith.constant 1 : index
    %c0_8 = arith.constant 0 : index
    %c0_9 = arith.constant 0 : index
    %18 = vector.load %arg7[%c1, %c0_8, %c0_9] : memref<18x18x128xbf16, #tpu.memory_space<vmem>>, vector<16x18x128xbf16>
    tpu.vector_store %arg7[%c1, %c0_8, %c0_9], %17 {strides = array<i32>} : memref<18x18x128xbf16, #tpu.memory_space<vmem>>, vector<16x18x128xbf16>,
    %cst_10 = arith.constant 0.000000e+00 : bf16
    %19 = vector.broadcast %cst_10 : bf16 to vector<1x18x128xbf16>
    %c0_11 = arith.constant 0 : index
    %c0_12 = arith.constant 0 : index
    %c0_13 = arith.constant 0 : index
    %20 = vector.load %arg7[%c0_11, %c0_12, %c0_13] : memref<18x18x128xbf16, #tpu.memory_space<vmem>>, vector<1x18x128xbf16>
    tpu.vector_store %arg7[%c0_11, %c0_12, %c0_13], %19 {strides = array<i32>} : memref<18x18x128xbf16, #tpu.memory_space<vmem>>, vector<1x18x128xbf16>,
    %c17 = arith.constant 17 : index
    %c0_14 = arith.constant 0 : index
    %c0_15 = arith.constant 0 : index
    %21 = vector.load %arg7[%c17, %c0_14, %c0_15] : memref<18x18x128xbf16, #tpu.memory_space<vmem>>, vector<1x18x128xbf16>
    tpu.vector_store %arg7[%c17, %c0_14, %c0_15], %19 {strides = array<i32>} : memref<18x18x128xbf16, #tpu.memory_space<vmem>>, vector<1x18x128xbf16>,
    %cst_16 = arith.constant 0.000000e+00 : f32
    %22 = vector.broadcast %cst_16 : f32 to vector<256x128xf32>
    %c0_17 = arith.constant 0 : index
    %c0_18 = arith.constant 0 : index
    %c0_19 = arith.constant 0 : index
    %23 = vector.load %arg7[%c0_17, %c0_18, %c0_19] : memref<18x18x128xbf16, #tpu.memory_space<vmem>>, vector<16x16x128xbf16>
    %24 = vector.shape_cast %23 : vector<16x16x128xbf16> to vector<256x128xbf16>
    %c0_20 = arith.constant 0 : index
    %c0_21 = arith.constant 0 : index
    %c0_22 = arith.constant 0 : index
    %25 = vector.load %arg4[%c0_20, %c0_21, %c0_22] : memref<9x128x128xbf16, #tpu.memory_space<vmem>>, vector<1x128x128xbf16>
    %26 = vector.shape_cast %25 : vector<1x128x128xbf16> to vector<128x128xbf16>
    %cst_23 = arith.constant dense<0.000000e+00> : vector<256x128xf32>
    %27 = tpu.matmul %24, %26, %cst_23 {dimension_numbers = #tpu.dot_dimension_numbers<[1], [0], [0], [1], [0, 0, 1, 1], [], []>} : vector<256x128xbf16>, vector<128x128xbf16>, vector<256x128xf32> -> vector<256x128xf32>
    %28 = arith.addf %22, %27 : vector<256x128xf32>
    %c0_24 = arith.constant 0 : index
    %c1_25 = arith.constant 1 : index
    %c0_26 = arith.constant 0 : index
    %29 = vector.load %arg7[%c0_24, %c1_25, %c0_26] : memref<18x18x128xbf16, #tpu.memory_space<vmem>>, vector<16x16x128xbf16>
    %30 = vector.shape_cast %29 : vector<16x16x128xbf16> to vector<256x128xbf16>
    %c1_27 = arith.constant 1 : index
    %c0_28 = arith.constant 0 : index
    %c0_29 = arith.constant 0 : index
    %31 = vector.load %arg4[%c1_27, %c0_28, %c0_29] : memref<9x128x128xbf16, #tpu.memory_space<vmem>>, vector<1x128x128xbf16>
    %32 = vector.shape_cast %31 : vector<1x128x128xbf16> to vector<128x128xbf16>
    %cst_30 = arith.constant dense<0.000000e+00> : vector<256x128xf32>
    %33 = tpu.matmul %30, %32, %cst_30 {dimension_numbers = #tpu.dot_dimension_numbers<[1], [0], [0], [1], [0, 0, 1, 1], [], []>} : vector<256x128xbf16>, vector<128x128xbf16>, vector<256x128xf32> -> vector<256x128xf32>
    %34 = arith.addf %28, %33 : vector<256x128xf32>
    %c0_31 = arith.constant 0 : index
    %c2 = arith.constant 2 : index
    %c0_32 = arith.constant 0 : index
    %35 = vector.load %arg7[%c0_31, %c2, %c0_32] : memref<18x18x128xbf16, #tpu.memory_space<vmem>>, vector<16x16x128xbf16>
    %36 = vector.shape_cast %35 : vector<16x16x128xbf16> to vector<256x128xbf16>
    %c2_33 = arith.constant 2 : index
    %c0_34 = arith.constant 0 : index
    %c0_35 = arith.constant 0 : index
    %37 = vector.load %arg4[%c2_33, %c0_34, %c0_35] : memref<9x128x128xbf16, #tpu.memory_space<vmem>>, vector<1x128x128xbf16>
    %38 = vector.shape_cast %37 : vector<1x128x128xbf16> to vector<128x128xbf16>
    %cst_36 = arith.constant dense<0.000000e+00> : vector<256x128xf32>
    %39 = tpu.matmul %36, %38, %cst_36 {dimension_numbers = #tpu.dot_dimension_numbers<[1], [0], [0], [1], [0, 0, 1, 1], [], []>} : vector<256x128xbf16>, vector<128x128xbf16>, vector<256x128xf32> -> vector<256x128xf32>
    %40 = arith.addf %34, %39 : vector<256x128xf32>
    %c1_37 = arith.constant 1 : index
    %c0_38 = arith.constant 0 : index
    %c0_39 = arith.constant 0 : index
    %41 = vector.load %arg7[%c1_37, %c0_38, %c0_39] : memref<18x18x128xbf16, #tpu.memory_space<vmem>>, vector<16x16x128xbf16>
    %42 = vector.shape_cast %41 : vector<16x16x128xbf16> to vector<256x128xbf16>
    %c3 = arith.constant 3 : index
    %c0_40 = arith.constant 0 : index
    %c0_41 = arith.constant 0 : index
    %43 = vector.load %arg4[%c3, %c0_40, %c0_41] : memref<9x128x128xbf16, #tpu.memory_space<vmem>>, vector<1x128x128xbf16>
    %44 = vector.shape_cast %43 : vector<1x128x128xbf16> to vector<128x128xbf16>
    %cst_42 = arith.constant dense<0.000000e+00> : vector<256x128xf32>
    %45 = tpu.matmul %42, %44, %cst_42 {dimension_numbers = #tpu.dot_dimension_numbers<[1], [0], [0], [1], [0, 0, 1, 1], [], []>} : vector<256x128xbf16>, vector<128x128xbf16>, vector<256x128xf32> -> vector<256x128xf32>
    %46 = arith.addf %40, %45 : vector<256x128xf32>
    %c1_43 = arith.constant 1 : index
    %c1_44 = arith.constant 1 : index
    %c0_45 = arith.constant 0 : index
    %47 = vector.load %arg7[%c1_43, %c1_44, %c0_45] : memref<18x18x128xbf16, #tpu.memory_space<vmem>>, vector<16x16x128xbf16>
    %48 = vector.shape_cast %47 : vector<16x16x128xbf16> to vector<256x128xbf16>
    %c4 = arith.constant 4 : index
    %c0_46 = arith.constant 0 : index
    %c0_47 = arith.constant 0 : index
    %49 = vector.load %arg4[%c4, %c0_46, %c0_47] : memref<9x128x128xbf16, #tpu.memory_space<vmem>>, vector<1x128x128xbf16>
    %50 = vector.shape_cast %49 : vector<1x128x128xbf16> to vector<128x128xbf16>
    %cst_48 = arith.constant dense<0.000000e+00> : vector<256x128xf32>
    %51 = tpu.matmul %48, %50, %cst_48 {dimension_numbers = #tpu.dot_dimension_numbers<[1], [0], [0], [1], [0, 0, 1, 1], [], []>} : vector<256x128xbf16>, vector<128x128xbf16>, vector<256x128xf32> -> vector<256x128xf32>
    %52 = arith.addf %46, %51 : vector<256x128xf32>
    %c1_49 = arith.constant 1 : index
    %c2_50 = arith.constant 2 : index
    %c0_51 = arith.constant 0 : index
    %53 = vector.load %arg7[%c1_49, %c2_50, %c0_51] : memref<18x18x128xbf16, #tpu.memory_space<vmem>>, vector<16x16x128xbf16>
    %54 = vector.shape_cast %53 : vector<16x16x128xbf16> to vector<256x128xbf16>
    %c5 = arith.constant 5 : index
    %c0_52 = arith.constant 0 : index
    %c0_53 = arith.constant 0 : index
    %55 = vector.load %arg4[%c5, %c0_52, %c0_53] : memref<9x128x128xbf16, #tpu.memory_space<vmem>>, vector<1x128x128xbf16>
    %56 = vector.shape_cast %55 : vector<1x128x128xbf16> to vector<128x128xbf16>
    %cst_54 = arith.constant dense<0.000000e+00> : vector<256x128xf32>
    %57 = tpu.matmul %54, %56, %cst_54 {dimension_numbers = #tpu.dot_dimension_numbers<[1], [0], [0], [1], [0, 0, 1, 1], [], []>} : vector<256x128xbf16>, vector<128x128xbf16>, vector<256x128xf32> -> vector<256x128xf32>
    %58 = arith.addf %52, %57 : vector<256x128xf32>
    %c2_55 = arith.constant 2 : index
    %c0_56 = arith.constant 0 : index
    %c0_57 = arith.constant 0 : index
    %59 = vector.load %arg7[%c2_55, %c0_56, %c0_57] : memref<18x18x128xbf16, #tpu.memory_space<vmem>>, vector<16x16x128xbf16>
    %60 = vector.shape_cast %59 : vector<16x16x128xbf16> to vector<256x128xbf16>
    %c6 = arith.constant 6 : index
    %c0_58 = arith.constant 0 : index
    %c0_59 = arith.constant 0 : index
    %61 = vector.load %arg4[%c6, %c0_58, %c0_59] : memref<9x128x128xbf16, #tpu.memory_space<vmem>>, vector<1x128x128xbf16>
    %62 = vector.shape_cast %61 : vector<1x128x128xbf16> to vector<128x128xbf16>
    %cst_60 = arith.constant dense<0.000000e+00> : vector<256x128xf32>
    %63 = tpu.matmul %60, %62, %cst_60 {dimension_numbers = #tpu.dot_dimension_numbers<[1], [0], [0], [1], [0, 0, 1, 1], [], []>} : vector<256x128xbf16>, vector<128x128xbf16>, vector<256x128xf32> -> vector<256x128xf32>
    %64 = arith.addf %58, %63 : vector<256x128xf32>
    %c2_61 = arith.constant 2 : index
    %c1_62 = arith.constant 1 : index
    %c0_63 = arith.constant 0 : index
    %65 = vector.load %arg7[%c2_61, %c1_62, %c0_63] : memref<18x18x128xbf16, #tpu.memory_space<vmem>>, vector<16x16x128xbf16>
    %66 = vector.shape_cast %65 : vector<16x16x128xbf16> to vector<256x128xbf16>
    %c7 = arith.constant 7 : index
    %c0_64 = arith.constant 0 : index
    %c0_65 = arith.constant 0 : index
    %67 = vector.load %arg4[%c7, %c0_64, %c0_65] : memref<9x128x128xbf16, #tpu.memory_space<vmem>>, vector<1x128x128xbf16>
    %68 = vector.shape_cast %67 : vector<1x128x128xbf16> to vector<128x128xbf16>
    %cst_66 = arith.constant dense<0.000000e+00> : vector<256x128xf32>
    %69 = tpu.matmul %66, %68, %cst_66 {dimension_numbers = #tpu.dot_dimension_numbers<[1], [0], [0], [1], [0, 0, 1, 1], [], []>} : vector<256x128xbf16>, vector<128x128xbf16>, vector<256x128xf32> -> vector<256x128xf32>
    %70 = arith.addf %64, %69 : vector<256x128xf32>
    %c2_67 = arith.constant 2 : index
    %c2_68 = arith.constant 2 : index
    %c0_69 = arith.constant 0 : index
    %71 = vector.load %arg7[%c2_67, %c2_68, %c0_69] : memref<18x18x128xbf16, #tpu.memory_space<vmem>>, vector<16x16x128xbf16>
    %72 = vector.shape_cast %71 : vector<16x16x128xbf16> to vector<256x128xbf16>
    %c8 = arith.constant 8 : index
    %c0_70 = arith.constant 0 : index
    %c0_71 = arith.constant 0 : index
    %73 = vector.load %arg4[%c8, %c0_70, %c0_71] : memref<9x128x128xbf16, #tpu.memory_space<vmem>>, vector<1x128x128xbf16>
    %74 = vector.shape_cast %73 : vector<1x128x128xbf16> to vector<128x128xbf16>
    %cst_72 = arith.constant dense<0.000000e+00> : vector<256x128xf32>
    %75 = tpu.matmul %72, %74, %cst_72 {dimension_numbers = #tpu.dot_dimension_numbers<[1], [0], [0], [1], [0, 0, 1, 1], [], []>} : vector<256x128xbf16>, vector<128x128xbf16>, vector<256x128xf32> -> vector<256x128xf32>
    %76 = arith.addf %70, %75 : vector<256x128xf32>
    %77 = vector.shape_cast %76 : vector<256x128xf32> to vector<16x16x128xf32>
    %c0_73 = arith.constant 0 : index
    %c0_74 = arith.constant 0 : index
    %c0_75 = arith.constant 0 : index
    %c0_76 = arith.constant 0 : index
    %78 = vector.load %arg5[%c0_73, %c0_74, %c0_75, %c0_76] : memref<1x16x16x128xf32, #tpu.memory_space<vmem>>, vector<1x16x16x128xf32>
    %79 = vector.shape_cast %78 : vector<1x16x16x128xf32> to vector<16x16x128xf32>
    %80 = arith.addf %77, %79 : vector<16x16x128xf32>
    %c0_77 = arith.constant 0 : index
    %c0_78 = arith.constant 0 : index
    %c0_79 = arith.constant 0 : index
    %c0_80 = arith.constant 0 : index
    %81 = vector.load %arg6[%c0_77, %c0_78, %c0_79, %c0_80] : memref<1x16x16x128xf32, #tpu.memory_space<vmem>>, vector<1x16x16x128xf32>
    %82 = vector.shape_cast %81 : vector<1x16x16x128xf32> to vector<16x16x128xf32>
    %83 = vector.shape_cast %80 : vector<16x16x128xf32> to vector<1x16x16x128xf32>
    tpu.vector_store %arg6[%c0_77, %c0_78, %c0_79, %c0_80], %83 {strides = array<i32>} : memref<1x16x16x128xf32, #tpu.memory_space<vmem>>, vector<1x16x16x128xf32>,
    return
  }
  func.func @transform_0(%arg0: i32) -> (i32, i32, i32, i32) {
    %c0_i32 = arith.constant 0 : i32
    %c0_i32_0 = arith.constant 0 : i32
    %c0_i32_1 = arith.constant 0 : i32
    %c0_i32_2 = arith.constant 0 : i32
    return %arg0, %c0_i32, %c0_i32_0, %c0_i32_1 : i32, i32, i32, i32
  }
  func.func @transform_1(%arg0: i32) -> (i32, i32) {
    %c0_i32 = arith.constant 0 : i32
    %c0_i32_0 = arith.constant 0 : i32
    %c0_i32_1 = arith.constant 0 : i32
    return %c0_i32, %c0_i32_0 : i32, i32
  }
  func.func @transform_2(%arg0: i32) -> (i32, i32) {
    %c0_i32 = arith.constant 0 : i32
    %c0_i32_0 = arith.constant 0 : i32
    %c0_i32_1 = arith.constant 0 : i32
    return %c0_i32, %c0_i32_0 : i32, i32
  }
  func.func @transform_3(%arg0: i32) -> (i32, i32, i32) {
    %c0_i32 = arith.constant 0 : i32
    %c0_i32_0 = arith.constant 0 : i32
    %c0_i32_1 = arith.constant 0 : i32
    %c0_i32_2 = arith.constant 0 : i32
    return %c0_i32, %c0_i32_0, %c0_i32_1 : i32, i32, i32
  }
  func.func @transform_4(%arg0: i32) -> (i32, i32, i32, i32) {
    %c0_i32 = arith.constant 0 : i32
    %c0_i32_0 = arith.constant 0 : i32
    %c0_i32_1 = arith.constant 0 : i32
    %c0_i32_2 = arith.constant 0 : i32
    return %arg0, %c0_i32, %c0_i32_0, %c0_i32_1 : i32, i32, i32, i32
  }
  func.func @transform_5(%arg0: i32) -> (i32, i32, i32, i32) {
    %c0_i32 = arith.constant 0 : i32
    %c0_i32_0 = arith.constant 0 : i32
    %c0_i32_1 = arith.constant 0 : i32
    %c0_i32_2 = arith.constant 0 : i32
    return %arg0, %c0_i32, %c0_i32_0, %c0_i32_1 : i32, i32, i32, i32
  }
}

</mosaic_0001>

<llo_original>
// kernel: basic_block_forward.2
$region0: #{basic_block_forward.2}
  #allocation0 [shape = 'u32[]', space=smem, size = 0x4, offset = 0x4, fixed_abs, tag = 'smem constant byte address 0x4 - core index']
  #allocation1 [shape = 'u32[144,128]{1,0:T(1,128)}', space=vmem, size = 0x12000, scoped, tag = 'internal scratch']
  #allocation2 [shape = 'bf16[18,18,128]{2,1,0:T(8,128)(2,1)}', space=vmem, size = 0x1b000, scoped, tag = 'scratch operand']
  %s0 = inlined_call_operand.vmem [shape: f32[2,16,16,128], index: 0, kind: input, shape index: {}]
  %s1 = inlined_call_operand.vmem [shape: f32[1,128], index: 1, kind: input, shape index: {}]
  %s2 = inlined_call_operand.vmem [shape: f32[1,128], index: 2, kind: input, shape index: {}]
  %s3 = inlined_call_operand.vmem [shape: bf16[9,128,128], index: 3, kind: input, shape index: {}]
  %s4 = inlined_call_operand.vmem [shape: bf16[2,16,16,128], index: 4, kind: output, shape index: {0}]
  %s5 = inlined_call_operand.vmem [shape: f32[2,2,128], index: 5, kind: output, shape index: {1}]
  %6 = xla_tuple %s4, %s5
  %s7 = sld [smem:[#allocation0]]
  $region57: #{basic_block_forward.2} parent=0
    _
  %s9 = ssub.s32 1, %s7
  %s10 = scalar_select 0, %s9, %s7
  loop: start=0, step=1, limit=4
  $region2: #{basic_block_forward.2} parent=0 // loop_pre_header
    _
  $region3: #{basic_block_forward.2} parent=0 // loop_header
    %s12 = sphi 0, %s16
    %p13 = scmp.ge.s32.totalorder %s12, 4
    %s22 = sphi 0, %s24
    %s25 = sphi 0, %s22
    %s26 = sphi 0, %s25
    %s42 = sphi 0, %s26
    %s46 = sphi 0, %s46
    %s48 = sphi 0, %s46
    %s49 = sphi 0, %s48
    %s63 = sphi 0, %s49
    %s67 = sphi 0, %s67
    %s69 = sphi 0, %s67
    %s70 = sphi 0, %s69
    %s84 = sphi 0, %s70
    %s88 = sphi 0, %s88
    %s90 = sphi 0, %s88
    %s91 = sphi 0, %s90
    %s105 = sphi 0, %s91
    %s111 = sphi 0, %s113
    %s114 = sphi 0, %s111
    %s115 = sphi 0, %s114
    %s131 = sphi 0, %s115
    %s137 = sphi 0, %s139
    %s140 = sphi 0, %s137
    %s141 = sphi 0, %s140
    %s157 = sphi 0, %s141
  $region4: #{basic_block_forward.2} parent=0 // loop_header_branch
    %15 = sbr.rel (%p13) target = $region8
  $region5: #{basic_block_forward.2} parent=0 // loop_body
    %s17 = ssub.s32 %s12, 1
    %s18 = ssub.s32 %s12, 2
    %s19 = sadd.s32 %s12, 1
    %s20 = ssub.s32 %s12, %s19
    %p21 = scmp.eq.s32.totalorder %s20, 0
    %s23 = sadd.s32 %s22, 1
    %s24 = scalar_select %p21, %s22, %s23
    %p27 = pneg %p21
    %p28 = scmp.eq.s32.totalorder %s12, 1
    %p29 = por %p27, %p28
    %p30 = scmp.ne.s32.totalorder %s22, %s25
    %p31 = scmp.eq.s32.totalorder %s12, 0
    %p32 = por %p30, %p31
    %p33 = scmp.ne.s32.totalorder %s22, %s25
    %p34 = scmp.eq.s32.totalorder %s17, 1
    %p35 = por %p33, %p34
    %p36 = scmp.ne.s32.totalorder %s25, %s26
    %p37 = scmp.eq.s32.totalorder %s17, 0
    %p38 = por %p36, %p37
    %p39 = scmp.ne.s32.totalorder %s25, %s26
    %p40 = scmp.eq.s32.totalorder %s18, 1
    %p41 = por %p39, %p40
    %p43 = scmp.ne.s32.totalorder %s26, %s42
    %p44 = scmp.eq.s32.totalorder %s18, 0
    %p45 = por %p43, %p44
    %s47 = sadd.s32 %s46, 1
    %p50 = scmp.eq.s32.totalorder %s12, 1
    %p51 = scmp.ne.s32.totalorder %s46, %s48
    %p52 = scmp.eq.s32.totalorder %s12, 0
    %p53 = por %p51, %p52
    %p54 = scmp.ne.s32.totalorder %s46, %s48
    %p55 = scmp.eq.s32.totalorder %s17, 1
    %p56 = por %p54, %p55
    %p57 = scmp.ne.s32.totalorder %s48, %s49
    %p58 = scmp.eq.s32.totalorder %s17, 0
    %p59 = por %p57, %p58
    %p60 = scmp.ne.s32.totalorder %s48, %s49
    %p61 = scmp.eq.s32.totalorder %s18, 1
    %p62 = por %p60, %p61
    %p64 = scmp.ne.s32.totalorder %s49, %s63
    %p65 = scmp.eq.s32.totalorder %s18, 0
    %p66 = por %p64, %p65
    %s68 = sadd.s32 %s67, 1
    %p71 = scmp.eq.s32.totalorder %s12, 1
    %p72 = scmp.ne.s32.totalorder %s67, %s69
    %p73 = scmp.eq.s32.totalorder %s12, 0
    %p74 = por %p72, %p73
    %p75 = scmp.ne.s32.totalorder %s67, %s69
    %p76 = scmp.eq.s32.totalorder %s17, 1
    %p77 = por %p75, %p76
    %p78 = scmp.ne.s32.totalorder %s69, %s70
    %p79 = scmp.eq.s32.totalorder %s17, 0
    %p80 = por %p78, %p79
    %p81 = scmp.ne.s32.totalorder %s69, %s70
    %p82 = scmp.eq.s32.totalorder %s18, 1
    %p83 = por %p81, %p82
    %p85 = scmp.ne.s32.totalorder %s70, %s84
    %p86 = scmp.eq.s32.totalorder %s18, 0
    %p87 = por %p85, %p86
    %s89 = sadd.s32 %s88, 1
    %p92 = scmp.eq.s32.totalorder %s12, 1
    %p93 = scmp.ne.s32.totalorder %s88, %s90
    %p94 = scmp.eq.s32.totalorder %s12, 0
    %p95 = por %p93, %p94
    %p96 = scmp.ne.s32.totalorder %s88, %s90
    %p97 = scmp.eq.s32.totalorder %s17, 1
    %p98 = por %p96, %p97
    %p99 = scmp.ne.s32.totalorder %s90, %s91
    %p100 = scmp.eq.s32.totalorder %s17, 0
    %p101 = por %p99, %p100
    %p102 = scmp.ne.s32.totalorder %s90, %s91
    %p103 = scmp.eq.s32.totalorder %s18, 1
    %p104 = por %p102, %p103
    %p106 = scmp.ne.s32.totalorder %s91, %s105
    %p107 = scmp.eq.s32.totalorder %s18, 0
    %p108 = por %p106, %p107
    %s109 = ssub.s32 %s12, %s19
    %p110 = scmp.eq.s32.totalorder %s109, 0
    %s112 = sadd.s32 %s111, 1
    %s113 = scalar_select %p110, %s111, %s112
    %p116 = pneg %p110
    %p117 = scmp.eq.s32.totalorder %s12, 1
    %p118 = por %p116, %p117
    %p119 = scmp.ne.s32.totalorder %s111, %s114
    %p120 = scmp.eq.s32.totalorder %s12, 0
    %p121 = por %p119, %p120
    %p122 = scmp.ne.s32.totalorder %s111, %s114
    %p123 = scmp.eq.s32.totalorder %s17, 1
    %p124 = por %p122, %p123
    %p125 = scmp.ne.s32.totalorder %s114, %s115
    %p126 = scmp.eq.s32.totalorder %s17, 0
    %p127 = por %p125, %p126
    %p128 = scmp.ne.s32.totalorder %s114, %s115
    %p129 = scmp.eq.s32.totalorder %s18, 1
    %p130 = por %p128, %p129
    %p132 = scmp.ne.s32.totalorder %s115, %s131
    %p133 = scmp.eq.s32.totalorder %s18, 0
    %p134 = por %p132, %p133
    %s135 = ssub.s32 %s12, %s19
    %p136 = scmp.eq.s32.totalorder %s135, 0
    %s138 = sadd.s32 %s137, 1
    %s139 = scalar_select %p136, %s137, %s138
    %p142 = pneg %p136
    %p143 = scmp.eq.s32.totalorder %s12, 1
    %p144 = por %p142, %p143
    %p145 = scmp.ne.s32.totalorder %s137, %s140
    %p146 = scmp.eq.s32.totalorder %s12, 0
    %p147 = por %p145, %p146
    %p148 = scmp.ne.s32.totalorder %s137, %s140
    %p149 = scmp.eq.s32.totalorder %s17, 1
    %p150 = por %p148, %p149
    %p151 = scmp.ne.s32.totalorder %s140, %s141
    %p152 = scmp.eq.s32.totalorder %s17, 0
    %p153 = por %p151, %p152
    %p154 = scmp.ne.s32.totalorder %s140, %s141
    %p155 = scmp.eq.s32.totalorder %s18, 1
    %p156 = por %p154, %p155
    %p158 = scmp.ne.s32.totalorder %s141, %s157
    %p159 = scmp.eq.s32.totalorder %s18, 0
    %p160 = por %p158, %p159
    %p161 = scmp.le.s32.totalorder 1, %s12
    %p162 = scmp.lt.s32.totalorder %s12, 3
    %p163 = pnand %p161, %p162
    %p164 = pneg %p163
    // Predicated region
    $region9: #{basic_block_forward.2} parent=5 // pred_check
      _
    $region10: #{basic_block_forward.2} parent=5 // pred_check_branch
      %166 = sbr.rel (%p163) target = $region12
    $region11: #{basic_block_forward.2} parent=5 // pred_region
      %s167 = ssub.s32 %s12, 1
      // Predicated region
      $region13: #{basic_block_forward.2} parent=11 // pred_check
        %p168 = pneg %p59
      $region14: #{basic_block_forward.2} parent=11 // pred_check_branch
        %170 = sbr.rel (%p168) target = $region16
      $region15: #{basic_block_forward.2} parent=11 // pred_region
        _
      $region16: #{basic_block_forward.2} parent=11 // pred_fallthru
        _
      // Predicated region
      $region17: #{basic_block_forward.2} parent=11 // pred_check
        %p171 = pneg %p80
      $region18: #{basic_block_forward.2} parent=11 // pred_check_branch
        %173 = sbr.rel (%p171) target = $region20
      $region19: #{basic_block_forward.2} parent=11 // pred_region
        _
      $region20: #{basic_block_forward.2} parent=11 // pred_fallthru
        _
      // Predicated region
      $region21: #{basic_block_forward.2} parent=11 // pred_check
        %p174 = pneg %p101
      $region22: #{basic_block_forward.2} parent=11 // pred_check_branch
        %176 = sbr.rel (%p174) target = $region24
      $region23: #{basic_block_forward.2} parent=11 // pred_region
        _
      $region24: #{basic_block_forward.2} parent=11 // pred_fallthru
        _
    $region12: #{basic_block_forward.2} parent=5 // pred_fallthru
      _
    %p177 = scmp.lt.s32.totalorder %s12, 2
    // Predicated region
    $region25: #{basic_block_forward.2} parent=5 // pred_check
      %p178 = pneg %p177
    $region26: #{basic_block_forward.2} parent=5 // pred_check_branch
      %180 = sbr.rel (%p178) target = $region28
    $region27: #{basic_block_forward.2} parent=5 // pred_region
      // Predicated region
      $region29: #{basic_block_forward.2} parent=27 // pred_check
        %p181 = pneg %p32
      $region30: #{basic_block_forward.2} parent=27 // pred_check_branch
        %183 = sbr.rel (%p181) target = $region32
      $region31: #{basic_block_forward.2} parent=27 // pred_region
        %p184 = scmp.lt.s32.totalorder %s12, 1
        %s185 = scalar_select %p184, %s12, 1
        %s186 = smul.addr %s185, 32
        %s187 = smul.addr %s186, 8
        %s188 = scalar_lea.vmem %s0, %s187
      $region32: #{basic_block_forward.2} parent=27 // pred_fallthru
        _
    $region28: #{basic_block_forward.2} parent=5 // pred_fallthru
      _
    %p189 = scmp.le.s32.totalorder 1, %s12
    %p190 = scmp.lt.s32.totalorder %s12, 3
    %p191 = pnand %p189, %p190
    %p192 = pneg %p191
    // Predicated region
    $region33: #{basic_block_forward.2} parent=5 // pred_check
      _
    $region34: #{basic_block_forward.2} parent=5 // pred_check_branch
      %194 = sbr.rel (%p191) target = $region36
    $region35: #{basic_block_forward.2} parent=5 // pred_region
      %s195 = ssub.s32 %s12, 1
      %p196 = scmp.lt.s32.totalorder %s17, 1
      %s197 = scalar_select %p196, %s17, 1
      %s198 = smul.addr %s197, 32
      %s199 = smul.addr %s198, 8
      %s200 = scalar_lea.vmem %s0, %s199
      %p201 = pneg %p38
      %p202 = pneg %p35
      %p203 = pneg %p59
      %p204 = pneg %p56
      %p205 = pneg %p80
      %p206 = pneg %p77
      %p207 = pneg %p101
      %p208 = pneg %p98
      %p209 = pneg %p127
      %p210 = pneg %p124
      %p211 = scmp.lt.s32.totalorder %s17, 1
      %s212 = scalar_select %p211, %s17, 1
      %s213 = smul.addr %s212, 32
      %s214 = smul.addr %s213, 4
      %s215 = scalar_lea.vmem %s4, %s214
      %p216 = pneg %p153
      %p217 = pneg %p150
      %p218 = scmp.lt.s32.totalorder %s17, 1
      %s219 = scalar_select %p218, %s17, 1
      %s220 = smul.addr %s219, 2
      %s221 = scalar_lea.vmem %s5, %s220
      %p222 = scmp.lt.s32.totalorder %s17, 1
      %s223 = scalar_select %p222, %s17, 1
      %s224 = smul.addr %s223, 32
      %s225 = smul.addr %s224, 8
      %s226 = scalar_lea.vmem %s0, %s225
      %p227 = scmp.lt.s32.totalorder %s17, 1
      %s228 = scalar_select %p227, %s17, 1
      %s229 = smul.addr %s228, 32
      %s230 = smul.addr %s229, 4
      %s231 = scalar_lea.vmem %s4, %s230
      %p232 = scmp.lt.s32.totalorder %s17, 1
      %s233 = scalar_select %p232, %s17, 1
      %s234 = smul.addr %s233, 2
      %s235 = scalar_lea.vmem %s5, %s234
      %v237 = vld [vmem:[%s226] sm:$0xff]
      %v238 = vld [vmem:[%s226 + $0x8] sm:$0xff]
      %v239 = vld [vmem:[%s226 + $0x10] sm:$0xff]
      %v240 = vld [vmem:[%s226 + $0x18] sm:$0xff]
      %v241 = vld [vmem:[%s226 + $0x20] sm:$0xff]
      %v242 = vld [vmem:[%s226 + $0x28] sm:$0xff]
      %v243 = vld [vmem:[%s226 + $0x30] sm:$0xff]
      %v244 = vld [vmem:[%s226 + $0x38] sm:$0xff]
      %v245 = vld [vmem:[%s226 + $0x40] sm:$0xff]
      %v246 = vld [vmem:[%s226 + $0x48] sm:$0xff]
      %v247 = vld [vmem:[%s226 + $0x50] sm:$0xff]
      %v248 = vld [vmem:[%s226 + $0x58] sm:$0xff]
      %v249 = vld [vmem:[%s226 + $0x60] sm:$0xff]
      %v250 = vld [vmem:[%s226 + $0x68] sm:$0xff]
      %v251 = vld [vmem:[%s226 + $0x70] sm:$0xff]
      %v252 = vld [vmem:[%s226 + $0x78] sm:$0xff]
      %v253 = vld [vmem:[%s226 + $0x80] sm:$0xff]
      %v254 = vld [vmem:[%s226 + $0x88] sm:$0xff]
      %v255 = vld [vmem:[%s226 + $0x90] sm:$0xff]
      %v256 = vld [vmem:[%s226 + $0x98] sm:$0xff]
      %v257 = vld [vmem:[%s226 + $0xa0] sm:$0xff]
      %v258 = vld [vmem:[%s226 + $0xa8] sm:$0xff]
      %v259 = vld [vmem:[%s226 + $0xb0] sm:$0xff]
      %v260 = vld [vmem:[%s226 + $0xb8] sm:$0xff]
      %v261 = vld [vmem:[%s226 + $0xc0] sm:$0xff]
      %v262 = vld [vmem:[%s226 + $0xc8] sm:$0xff]
      %v263 = vld [vmem:[%s226 + $0xd0] sm:$0xff]
      %v264 = vld [vmem:[%s226 + $0xd8] sm:$0xff]
      %v265 = vld [vmem:[%s226 + $0xe0] sm:$0xff]
      %v266 = vld [vmem:[%s226 + $0xe8] sm:$0xff]
      %v267 = vld [vmem:[%s226 + $0xf0] sm:$0xff]
      %v268 = vld [vmem:[%s226 + $0xf8] sm:$0xff]
      %v269 = vld [vmem:[%s1] sm:$0x1]
      %v271 = vlaneseq
      %v272 = vshrl.u32 %v271, 7
      %v273 = vsub.s32 0, %v272
      %v274 = vrot.slane %v269, %v273
      %v276 = vmul.f32 %v237, %v274
      %v277 = vmul.f32 %v238, %v274
      %v278 = vmul.f32 %v239, %v274
      %v279 = vmul.f32 %v240, %v274
      %v280 = vmul.f32 %v241, %v274
      %v281 = vmul.f32 %v242, %v274
      %v282 = vmul.f32 %v243, %v274
      %v283 = vmul.f32 %v244, %v274
      %v284 = vmul.f32 %v245, %v274
      %v285 = vmul.f32 %v246, %v274
      %v286 = vmul.f32 %v247, %v274
      %v287 = vmul.f32 %v248, %v274
      %v288 = vmul.f32 %v249, %v274
      %v289 = vmul.f32 %v250, %v274
      %v290 = vmul.f32 %v251, %v274
      %v291 = vmul.f32 %v252, %v274
      %v292 = vmul.f32 %v253, %v274
      %v293 = vmul.f32 %v254, %v274
      %v294 = vmul.f32 %v255, %v274
      %v295 = vmul.f32 %v256, %v274
      %v296 = vmul.f32 %v257, %v274
      %v297 = vmul.f32 %v258, %v274
      %v298 = vmul.f32 %v259, %v274
      %v299 = vmul.f32 %v260, %v274
      %v300 = vmul.f32 %v261, %v274
      %v301 = vmul.f32 %v262, %v274
      %v302 = vmul.f32 %v263, %v274
      %v303 = vmul.f32 %v264, %v274
      %v304 = vmul.f32 %v265, %v274
      %v305 = vmul.f32 %v266, %v274
      %v306 = vmul.f32 %v267, %v274
      %v307 = vmul.f32 %v268, %v274
      %v308 = vld [vmem:[%s2] sm:$0x1]
      %v310 = vlaneseq
      %v311 = vshrl.u32 %v310, 7
      %v312 = vsub.s32 0, %v311
      %v313 = vrot.slane %v308, %v312
      %v315 = vadd.f32 %v276, %v313
      %v316 = vadd.f32 %v277, %v313
      %v317 = vadd.f32 %v278, %v313
      %v318 = vadd.f32 %v279, %v313
      %v319 = vadd.f32 %v280, %v313
      %v320 = vadd.f32 %v281, %v313
      %v321 = vadd.f32 %v282, %v313
      %v322 = vadd.f32 %v283, %v313
      %v323 = vadd.f32 %v284, %v313
      %v324 = vadd.f32 %v285, %v313
      %v325 = vadd.f32 %v286, %v313
      %v326 = vadd.f32 %v287, %v313
      %v327 = vadd.f32 %v288, %v313
      %v328 = vadd.f32 %v289, %v313
      %v329 = vadd.f32 %v290, %v313
      %v330 = vadd.f32 %v291, %v313
      %v331 = vadd.f32 %v292, %v313
      %v332 = vadd.f32 %v293, %v313
      %v333 = vadd.f32 %v294, %v313
      %v334 = vadd.f32 %v295, %v313
      %v335 = vadd.f32 %v296, %v313
      %v336 = vadd.f32 %v297, %v313
      %v337 = vadd.f32 %v298, %v313
      %v338 = vadd.f32 %v299, %v313
      %v339 = vadd.f32 %v300, %v313
      %v340 = vadd.f32 %v301, %v313
      %v341 = vadd.f32 %v302, %v313
      %v342 = vadd.f32 %v303, %v313
      %v343 = vadd.f32 %v304, %v313
      %v344 = vadd.f32 %v305, %v313
      %v345 = vadd.f32 %v306, %v313
      %v346 = vadd.f32 %v307, %v313
      %v347 = vmax.f32 %v315, 0.0
      %v348 = vmax.f32 %v316, 0.0
      %v349 = vmax.f32 %v317, 0.0
      %v350 = vmax.f32 %v318, 0.0
      %v351 = vmax.f32 %v319, 0.0
      %v352 = vmax.f32 %v320, 0.0
      %v353 = vmax.f32 %v321, 0.0
      %v354 = vmax.f32 %v322, 0.0
      %v355 = vmax.f32 %v323, 0.0
      %v356 = vmax.f32 %v324, 0.0
      %v357 = vmax.f32 %v325, 0.0
      %v358 = vmax.f32 %v326, 0.0
      %v359 = vmax.f32 %v327, 0.0
      %v360 = vmax.f32 %v328, 0.0
      %v361 = vmax.f32 %v329, 0.0
      %v362 = vmax.f32 %v330, 0.0
      %v363 = vmax.f32 %v331, 0.0
      %v364 = vmax.f32 %v332, 0.0
      %v365 = vmax.f32 %v333, 0.0
      %v366 = vmax.f32 %v334, 0.0
      %v367 = vmax.f32 %v335, 0.0
      %v368 = vmax.f32 %v336, 0.0
      %v369 = vmax.f32 %v337, 0.0
      %v370 = vmax.f32 %v338, 0.0
      %v371 = vmax.f32 %v339, 0.0
      %v372 = vmax.f32 %v340, 0.0
      %v373 = vmax.f32 %v341, 0.0
      %v374 = vmax.f32 %v342, 0.0
      %v375 = vmax.f32 %v343, 0.0
      %v376 = vmax.f32 %v344, 0.0
      %v377 = vmax.f32 %v345, 0.0
      %v378 = vmax.f32 %v346, 0.0
      %v379 = vpack.c.bf16 %v348, %v347
      %v380 = vpack.c.bf16 %v350, %v349
      %v381 = vpack.c.bf16 %v352, %v351
      %v382 = vpack.c.bf16 %v354, %v353
      %v383 = vpack.c.bf16 %v356, %v355
      %v384 = vpack.c.bf16 %v358, %v357
      %v385 = vpack.c.bf16 %v360, %v359
      %v386 = vpack.c.bf16 %v362, %v361
      %v387 = vpack.c.bf16 %v364, %v363
      %v388 = vpack.c.bf16 %v366, %v365
      %v389 = vpack.c.bf16 %v368, %v367
      %v390 = vpack.c.bf16 %v370, %v369
      %v391 = vpack.c.bf16 %v372, %v371
      %v392 = vpack.c.bf16 %v374, %v373
      %v393 = vpack.c.bf16 %v376, %v375
      %v394 = vpack.c.bf16 %v378, %v377
      %v396 = vshrl.u32 %v379, 16
      %v398 = vrot.slane %v396, 7
      %v399 = vshll.u32 %v379, 16
      %v401 = vor.u32 %v398, %v399
      %v403 = vshrl.u32 %v380, 16
      %v405 = vrot.slane %v403, 7
      %v406 = vshll.u32 %v380, 16
      %v408 = vor.u32 %v405, %v406
      %v410 = vshrl.u32 %v381, 16
      %v412 = vrot.slane %v410, 7
      %v413 = vshll.u32 %v381, 16
      %v415 = vor.u32 %v412, %v413
      %v417 = vshrl.u32 %v382, 16
      %v419 = vrot.slane %v417, 7
      %v420 = vshll.u32 %v382, 16
      %v422 = vor.u32 %v419, %v420
      %v424 = vshrl.u32 %v383, 16
      %v426 = vrot.slane %v424, 7
      %v427 = vshll.u32 %v383, 16
      %v429 = vor.u32 %v426, %v427
      %v431 = vshrl.u32 %v384, 16
      %v433 = vrot.slane %v431, 7
      %v434 = vshll.u32 %v384, 16
      %v436 = vor.u32 %v433, %v434
      %v438 = vshrl.u32 %v385, 16
      %v440 = vrot.slane %v438, 7
      %v441 = vshll.u32 %v385, 16
      %v443 = vor.u32 %v440, %v441
      %v445 = vshrl.u32 %v386, 16
      %v447 = vrot.slane %v445, 7
      %v448 = vshll.u32 %v386, 16
      %v450 = vor.u32 %v447, %v448
      %v452 = vshrl.u32 %v387, 16
      %v454 = vrot.slane %v452, 7
      %v455 = vshll.u32 %v387, 16
      %v457 = vor.u32 %v454, %v455
      %v459 = vshrl.u32 %v388, 16
      %v461 = vrot.slane %v459, 7
      %v462 = vshll.u32 %v388, 16
      %v464 = vor.u32 %v461, %v462
      %v466 = vshrl.u32 %v389, 16
      %v468 = vrot.slane %v466, 7
      %v469 = vshll.u32 %v389, 16
      %v471 = vor.u32 %v468, %v469
      %v473 = vshrl.u32 %v390, 16
      %v475 = vrot.slane %v473, 7
      %v476 = vshll.u32 %v390, 16
      %v478 = vor.u32 %v475, %v476
      %v480 = vshrl.u32 %v391, 16
      %v482 = vrot.slane %v480, 7
      %v483 = vshll.u32 %v391, 16
      %v485 = vor.u32 %v482, %v483
      %v487 = vshrl.u32 %v392, 16
      %v489 = vrot.slane %v487, 7
      %v490 = vshll.u32 %v392, 16
      %v492 = vor.u32 %v489, %v490
      %v494 = vshrl.u32 %v393, 16
      %v496 = vrot.slane %v494, 7
      %v497 = vshll.u32 %v393, 16
      %v499 = vor.u32 %v496, %v497
      %v501 = vshrl.u32 %v394, 16
      %v503 = vrot.slane %v501, 7
      %v504 = vshll.u32 %v394, 16
      %v506 = vor.u32 %v503, %v504
      %vm539 = vcmask 1040384
      %vm540 = vsmask.f32 256
      %vm541 = vmand %vm539, %vm540
      %v542 = vsel %vm541, 0, %v401
      %v543 = vsel %vm541, 0, %v408
      %v544 = vsel %vm541, 0, %v415
      %v545 = vsel %vm541, 0, %v422
      %v546 = vsel %vm541, 0, %v429
      %v547 = vsel %vm541, 0, %v436
      %v548 = vsel %vm541, 0, %v443
      %v549 = vsel %vm541, 0, %v450
      %v550 = vsel %vm541, 0, %v457
      %v551 = vsel %vm541, 0, %v464
      %v552 = vsel %vm541, 0, %v471
      %v553 = vsel %vm541, 0, %v478
      %v554 = vsel %vm541, 0, %v485
      %v555 = vsel %vm541, 0, %v492
      %v556 = vsel %vm541, 0, %v499
      %v557 = vsel %vm541, 0, %v506
      %v558 = vsel %vm541, %v398, 0
      %v559 = vsel %vm541, %v405, 0
      %v560 = vsel %vm541, %v412, 0
      %v561 = vsel %vm541, %v419, 0
      %v562 = vsel %vm541, %v426, 0
      %v563 = vsel %vm541, %v433, 0
      %v564 = vsel %vm541, %v440, 0
      %v565 = vsel %vm541, %v447, 0
      %v566 = vsel %vm541, %v454, 0
      %v567 = vsel %vm541, %v461, 0
      %v568 = vsel %vm541, %v468, 0
      %v569 = vsel %vm541, %v475, 0
      %v570 = vsel %vm541, %v482, 0
      %v571 = vsel %vm541, %v489, 0
      %v572 = vsel %vm541, %v496, 0
      %v573 = vsel %vm541, %v503, 0
      %v606 = vunpack.c.l.b16 %v542
      %v607 = vunpack.c.h.b16 %v542
      %v608 = vunpack.c.l.b16 %v558
      %v609 = vunpack.c.l.b16 %v543
      %v610 = vunpack.c.h.b16 %v543
      %v611 = vunpack.c.l.b16 %v559
      %v612 = vunpack.c.l.b16 %v544
      %v613 = vunpack.c.h.b16 %v544
      %v614 = vunpack.c.l.b16 %v560
      %v615 = vunpack.c.l.b16 %v545
      %v616 = vunpack.c.h.b16 %v545
      %v617 = vunpack.c.l.b16 %v561
      %v618 = vunpack.c.l.b16 %v546
      %v619 = vunpack.c.h.b16 %v546
      %v620 = vunpack.c.l.b16 %v562
      %v621 = vunpack.c.l.b16 %v547
      %v622 = vunpack.c.h.b16 %v547
      %v623 = vunpack.c.l.b16 %v563
      %v624 = vunpack.c.l.b16 %v548
      %v625 = vunpack.c.h.b16 %v548
      %v626 = vunpack.c.l.b16 %v564
      %v627 = vunpack.c.l.b16 %v549
      %v628 = vunpack.c.h.b16 %v549
      %v629 = vunpack.c.l.b16 %v565
      %v630 = vunpack.c.l.b16 %v550
      %v631 = vunpack.c.h.b16 %v550
      %v632 = vunpack.c.l.b16 %v566
      %v633 = vunpack.c.l.b16 %v551
      %v634 = vunpack.c.h.b16 %v551
      %v635 = vunpack.c.l.b16 %v567
      %v636 = vunpack.c.l.b16 %v552
      %v637 = vunpack.c.h.b16 %v552
      %v638 = vunpack.c.l.b16 %v568
      %v639 = vunpack.c.l.b16 %v553
      %v640 = vunpack.c.h.b16 %v553
      %v641 = vunpack.c.l.b16 %v569
      %v642 = vunpack.c.l.b16 %v554
      %v643 = vunpack.c.h.b16 %v554
      %v644 = vunpack.c.l.b16 %v570
      %v645 = vunpack.c.l.b16 %v555
      %v646 = vunpack.c.h.b16 %v555
      %v647 = vunpack.c.l.b16 %v571
      %v648 = vunpack.c.l.b16 %v556
      %v649 = vunpack.c.h.b16 %v556
      %v650 = vunpack.c.l.b16 %v572
      %v651 = vunpack.c.l.b16 %v557
      %v652 = vunpack.c.h.b16 %v557
      %v653 = vunpack.c.l.b16 %v573
      %v654 = vpack.c.b16 %v606, %v606
      %v655 = vpack.c.b16 %v607, %v607
      %v656 = vpack.c.b16 %v608, %v608
      %v657 = vpack.c.b16 %v609, %v609
      %v658 = vpack.c.b16 %v610, %v610
      %v659 = vpack.c.b16 %v611, %v611
      %v660 = vpack.c.b16 %v612, %v612
      %v661 = vpack.c.b16 %v613, %v613
      %v662 = vpack.c.b16 %v614, %v614
      %v663 = vpack.c.b16 %v615, %v615
      %v664 = vpack.c.b16 %v616, %v616
      %v665 = vpack.c.b16 %v617, %v617
      %v666 = vpack.c.b16 %v618, %v618
      %v667 = vpack.c.b16 %v619, %v619
      %v668 = vpack.c.b16 %v620, %v620
      %v669 = vpack.c.b16 %v621, %v621
      %v670 = vpack.c.b16 %v622, %v622
      %v671 = vpack.c.b16 %v623, %v623
      %v672 = vpack.c.b16 %v624, %v624
      %v673 = vpack.c.b16 %v625, %v625
      %v674 = vpack.c.b16 %v626, %v626
      %v675 = vpack.c.b16 %v627, %v627
      %v676 = vpack.c.b16 %v628, %v628
      %v677 = vpack.c.b16 %v629, %v629
      %v678 = vpack.c.b16 %v630, %v630
      %v679 = vpack.c.b16 %v631, %v631
      %v680 = vpack.c.b16 %v632, %v632
      %v681 = vpack.c.b16 %v633, %v633
      %v682 = vpack.c.b16 %v634, %v634
      %v683 = vpack.c.b16 %v635, %v635
      %v684 = vpack.c.b16 %v636, %v636
      %v685 = vpack.c.b16 %v637, %v637
      %v686 = vpack.c.b16 %v638, %v638
      %v687 = vpack.c.b16 %v639, %v639
      %v688 = vpack.c.b16 %v640, %v640
      %v689 = vpack.c.b16 %v641, %v641
      %v690 = vpack.c.b16 %v642, %v642
      %v691 = vpack.c.b16 %v643, %v643
      %v692 = vpack.c.b16 %v644, %v644
      %v693 = vpack.c.b16 %v645, %v645
      %v694 = vpack.c.b16 %v646, %v646
      %v695 = vpack.c.b16 %v647, %v647
      %v696 = vpack.c.b16 %v648, %v648
      %v697 = vpack.c.b16 %v649, %v649
      %v698 = vpack.c.b16 %v650, %v650
      %v699 = vpack.c.b16 %v651, %v651
      %v700 = vpack.c.b16 %v652, %v652
      %v701 = vpack.c.b16 %v653, %v653
      %s750 = scalar_lea.vmem [#allocation2], 12
      %751 = vst [vmem:[%s750] sm:$0xf] %v654
      %752 = vst [vmem:[%s750 + $0x4] sm:$0xf] %v655
      %753 = vst [vmem:[%s750 + $0x8] sm:$0x1] %v656
      %754 = vst [vmem:[%s750 + $0xc] sm:$0xf] %v657
      %755 = vst [vmem:[%s750 + $0x10] sm:$0xf] %v658
      %756 = vst [vmem:[%s750 + $0x14] sm:$0x1] %v659
      %757 = vst [vmem:[%s750 + $0x18] sm:$0xf] %v660
      %758 = vst [vmem:[%s750 + $0x1c] sm:$0xf] %v661
      %759 = vst [vmem:[%s750 + $0x20] sm:$0x1] %v662
      %760 = vst [vmem:[%s750 + $0x24] sm:$0xf] %v663
      %761 = vst [vmem:[%s750 + $0x28] sm:$0xf] %v664
      %762 = vst [vmem:[%s750 + $0x2c] sm:$0x1] %v665
      %763 = vst [vmem:[%s750 + $0x30] sm:$0xf] %v666
      %764 = vst [vmem:[%s750 + $0x34] sm:$0xf] %v667
      %765 = vst [vmem:[%s750 + $0x38] sm:$0x1] %v668
      %766 = vst [vmem:[%s750 + $0x3c] sm:$0xf] %v669
      %767 = vst [vmem:[%s750 + $0x40] sm:$0xf] %v670
      %768 = vst [vmem:[%s750 + $0x44] sm:$0x1] %v671
      %769 = vst [vmem:[%s750 + $0x48] sm:$0xf] %v672
      %770 = vst [vmem:[%s750 + $0x4c] sm:$0xf] %v673
      %771 = vst [vmem:[%s750 + $0x50] sm:$0x1] %v674
      %772 = vst [vmem:[%s750 + $0x54] sm:$0xf] %v675
      %773 = vst [vmem:[%s750 + $0x58] sm:$0xf] %v676
      %774 = vst [vmem:[%s750 + $0x5c] sm:$0x1] %v677
      %775 = vst [vmem:[%s750 + $0x60] sm:$0xf] %v678
      %776 = vst [vmem:[%s750 + $0x64] sm:$0xf] %v679
      %777 = vst [vmem:[%s750 + $0x68] sm:$0x1] %v680
      %778 = vst [vmem:[%s750 + $0x6c] sm:$0xf] %v681
      %779 = vst [vmem:[%s750 + $0x70] sm:$0xf] %v682
      %780 = vst [vmem:[%s750 + $0x74] sm:$0x1] %v683
      %781 = vst [vmem:[%s750 + $0x78] sm:$0xf] %v684
      %782 = vst [vmem:[%s750 + $0x7c] sm:$0xf] %v685
      %783 = vst [vmem:[%s750 + $0x80] sm:$0x1] %v686
      %784 = vst [vmem:[%s750 + $0x84] sm:$0xf] %v687
      %785 = vst [vmem:[%s750 + $0x88] sm:$0xf] %v688
      %786 = vst [vmem:[%s750 + $0x8c] sm:$0x1] %v689
      %787 = vst [vmem:[%s750 + $0x90] sm:$0xf] %v690
      %788 = vst [vmem:[%s750 + $0x94] sm:$0xf] %v691
      %789 = vst [vmem:[%s750 + $0x98] sm:$0x1] %v692
      %790 = vst [vmem:[%s750 + $0x9c] sm:$0xf] %v693
      %791 = vst [vmem:[%s750 + $0xa0] sm:$0xf] %v694
      %792 = vst [vmem:[%s750 + $0xa4] sm:$0x1] %v695
      %793 = vst [vmem:[%s750 + $0xa8] sm:$0xf] %v696
      %794 = vst [vmem:[%s750 + $0xac] sm:$0xf] %v697
      %795 = vst [vmem:[%s750 + $0xb0] sm:$0x1] %v698
      %796 = vst [vmem:[%s750 + $0xb4] sm:$0xf] %v699
      %797 = vst [vmem:[%s750 + $0xb8] sm:$0xf] %v700
      %798 = vst [vmem:[%s750 + $0xbc] sm:$0x1] %v701
      %799 = vst [vmem:[#allocation2] sm:$0xf] 0
      %800 = vst [vmem:[#allocation2 + $0x4] sm:$0xf] 0
      %801 = vst [vmem:[#allocation2 + $0x8] sm:$0x1] 0
      %s802 = scalar_lea.vmem [#allocation2], 204
      %803 = vst [vmem:[%s802] sm:$0xf] 0
      %804 = vst [vmem:[%s802 + $0x4] sm:$0xf] 0
      %805 = vst [vmem:[%s802 + $0x8] sm:$0x1] 0
      %v806 = vld [vmem:[#allocation2] sm:$0xf]
      %v807 = vld [vmem:[#allocation2 + $0x4] sm:$0xf]
      %v808 = vld [vmem:[#allocation2 + $0xc] sm:$0xf]
      %v809 = vld [vmem:[#allocation2 + $0x10] sm:$0xf]
      %v810 = vld [vmem:[#allocation2 + $0x18] sm:$0xf]
      %v811 = vld [vmem:[#allocation2 + $0x1c] sm:$0xf]
      %v812 = vld [vmem:[#allocation2 + $0x24] sm:$0xf]
      %v813 = vld [vmem:[#allocation2 + $0x28] sm:$0xf]
      %v814 = vld [vmem:[#allocation2 + $0x30] sm:$0xf]
      %v815 = vld [vmem:[#allocation2 + $0x34] sm:$0xf]
      %v816 = vld [vmem:[#allocation2 + $0x3c] sm:$0xf]
      %v817 = vld [vmem:[#allocation2 + $0x40] sm:$0xf]
      %v818 = vld [vmem:[#allocation2 + $0x48] sm:$0xf]
      %v819 = vld [vmem:[#allocation2 + $0x4c] sm:$0xf]
      %v820 = vld [vmem:[#allocation2 + $0x54] sm:$0xf]
      %v821 = vld [vmem:[#allocation2 + $0x58] sm:$0xf]
      %v822 = vld [vmem:[#allocation2 + $0x60] sm:$0xf]
      %v823 = vld [vmem:[#allocation2 + $0x64] sm:$0xf]
      %v824 = vld [vmem:[#allocation2 + $0x6c] sm:$0xf]
      %v825 = vld [vmem:[#allocation2 + $0x70] sm:$0xf]
      %v826 = vld [vmem:[#allocation2 + $0x78] sm:$0xf]
      %v827 = vld [vmem:[#allocation2 + $0x7c] sm:$0xf]
      %v828 = vld [vmem:[#allocation2 + $0x84] sm:$0xf]
      %v829 = vld [vmem:[#allocation2 + $0x88] sm:$0xf]
      %v830 = vld [vmem:[#allocation2 + $0x90] sm:$0xf]
      %v831 = vld [vmem:[#allocation2 + $0x94] sm:$0xf]
      %v832 = vld [vmem:[#allocation2 + $0x9c] sm:$0xf]
      %v833 = vld [vmem:[#allocation2 + $0xa0] sm:$0xf]
      %v834 = vld [vmem:[#allocation2 + $0xa8] sm:$0xf]
      %v835 = vld [vmem:[#allocation2 + $0xac] sm:$0xf]
      %v836 = vld [vmem:[#allocation2 + $0xb4] sm:$0xf]
      %v837 = vld [vmem:[#allocation2 + $0xb8] sm:$0xf]
      %v838 = vld [vmem:[%s3] sm:$0xf]
      %v839 = vld [vmem:[%s3 + $0x4] sm:$0xf]
      %v840 = vld [vmem:[%s3 + $0x8] sm:$0xf]
      %v841 = vld [vmem:[%s3 + $0xc] sm:$0xf]
      %v842 = vld [vmem:[%s3 + $0x10] sm:$0xf]
      %v843 = vld [vmem:[%s3 + $0x14] sm:$0xf]
      %v844 = vld [vmem:[%s3 + $0x18] sm:$0xf]
      %v845 = vld [vmem:[%s3 + $0x1c] sm:$0xf]
      %v846 = vld [vmem:[%s3 + $0x20] sm:$0xf]
      %v847 = vld [vmem:[%s3 + $0x24] sm:$0xf]
      %v848 = vld [vmem:[%s3 + $0x28] sm:$0xf]
      %v849 = vld [vmem:[%s3 + $0x2c] sm:$0xf]
      %v850 = vld [vmem:[%s3 + $0x30] sm:$0xf]
      %v851 = vld [vmem:[%s3 + $0x34] sm:$0xf]
      %v852 = vld [vmem:[%s3 + $0x38] sm:$0xf]
      %v853 = vld [vmem:[%s3 + $0x3c] sm:$0xf]
      %v854 = vld [vmem:[#allocation2 + $0x8] sm:$0x1]
      %v855 = vld [vmem:[#allocation2 + $0x14] sm:$0x1]
      %v856 = vld [vmem:[#allocation2 + $0x20] sm:$0x1]
      %v857 = vld [vmem:[#allocation2 + $0x2c] sm:$0x1]
      %v858 = vld [vmem:[#allocation2 + $0x38] sm:$0x1]
      %v859 = vld [vmem:[#allocation2 + $0x44] sm:$0x1]
      %v860 = vld [vmem:[#allocation2 + $0x50] sm:$0x1]
      %v861 = vld [vmem:[#allocation2 + $0x5c] sm:$0x1]
      %v862 = vld [vmem:[#allocation2 + $0x68] sm:$0x1]
      %v863 = vld [vmem:[#allocation2 + $0x74] sm:$0x1]
      %v864 = vld [vmem:[#allocation2 + $0x80] sm:$0x1]
      %v865 = vld [vmem:[#allocation2 + $0x8c] sm:$0x1]
      %v866 = vld [vmem:[#allocation2 + $0x98] sm:$0x1]
      %v867 = vld [vmem:[#allocation2 + $0xa4] sm:$0x1]
      %v868 = vld [vmem:[#allocation2 + $0xb0] sm:$0x1]
      %v869 = vld [vmem:[#allocation2 + $0xbc] sm:$0x1]
      %vm870 = vsmask.f32 3328
      %vm871 = vsmask.f32 7440
      %vm872 = vmor %vm870, %vm871
      %v874 = vshrl.u32 %v806, 16
      %v876 = vrot.slane %v874, 4
      %v877 = vshll.u32 %v806, 16
      %v879 = vrot.slane %v877, 5
      %v880 = vor.u32 %v876, %v879
      %v881 = vrot.slane %v880, 4
      %v883 = vshll.u32 %v807, 16
      %v885 = vrot.slane %v883, 5
      %v886 = vsel %vm872, %v881, %v885
      %v887 = vshrl.u32 %v807, 16
      %v889 = vrot.slane %v887, 4
      %v890 = vor.u32 %v889, %v885
      %v891 = vrot.slane %v890, 4
      %v893 = vshll.u32 %v854, 16
      %v895 = vrot.slane %v893, 5
      %v896 = vsel %vm872, %v891, %v895
      %v898 = vshrl.u32 %v808, 16
      %v900 = vrot.slane %v898, 4
      %v901 = vshll.u32 %v808, 16
      %v903 = vrot.slane %v901, 5
      %v904 = vor.u32 %v900, %v903
      %v905 = vrot.slane %v904, 4
      %v907 = vshll.u32 %v809, 16
      %v909 = vrot.slane %v907, 5
      %v910 = vsel %vm872, %v905, %v909
      %v911 = vshrl.u32 %v809, 16
      %v913 = vrot.slane %v911, 4
      %v914 = vor.u32 %v913, %v909
      %v915 = vrot.slane %v914, 4
      %v917 = vshll.u32 %v855, 16
      %v919 = vrot.slane %v917, 5
      %v920 = vsel %vm872, %v915, %v919
      %v922 = vshrl.u32 %v810, 16
      %v924 = vrot.slane %v922, 4
      %v925 = vshll.u32 %v810, 16
      %v927 = vrot.slane %v925, 5
      %v928 = vor.u32 %v924, %v927
      %v929 = vrot.slane %v928, 4
      %v931 = vshll.u32 %v811, 16
      %v933 = vrot.slane %v931, 5
      %v934 = vsel %vm872, %v929, %v933
      %v935 = vshrl.u32 %v811, 16
      %v937 = vrot.slane %v935, 4
      %v938 = vor.u32 %v937, %v933
      %v939 = vrot.slane %v938, 4
      %v941 = vshll.u32 %v856, 16
      %v943 = vrot.slane %v941, 5
      %v944 = vsel %vm872, %v939, %v943
      %v946 = vshrl.u32 %v812, 16
      %v948 = vrot.slane %v946, 4
      %v949 = vshll.u32 %v812, 16
      %v951 = vrot.slane %v949, 5
      %v952 = vor.u32 %v948, %v951
      %v953 = vrot.slane %v952, 4
      %v955 = vshll.u32 %v813, 16
      %v957 = vrot.slane %v955, 5
      %v958 = vsel %vm872, %v953, %v957
      %v959 = vshrl.u32 %v813, 16
      %v961 = vrot.slane %v959, 4
      %v962 = vor.u32 %v961, %v957
      %v963 = vrot.slane %v962, 4
      %v965 = vshll.u32 %v857, 16
      %v967 = vrot.slane %v965, 5
      %v968 = vsel %vm872, %v963, %v967
      %v970 = vshrl.u32 %v814, 16
      %v972 = vrot.slane %v970, 4
      %v973 = vshll.u32 %v814, 16
      %v975 = vrot.slane %v973, 5
      %v976 = vor.u32 %v972, %v975
      %v977 = vrot.slane %v976, 4
      %v979 = vshll.u32 %v815, 16
      %v981 = vrot.slane %v979, 5
      %v982 = vsel %vm872, %v977, %v981
      %v983 = vshrl.u32 %v815, 16
      %v985 = vrot.slane %v983, 4
      %v986 = vor.u32 %v985, %v981
      %v987 = vrot.slane %v986, 4
      %v989 = vshll.u32 %v858, 16
      %v991 = vrot.slane %v989, 5
      %v992 = vsel %vm872, %v987, %v991
      %v994 = vshrl.u32 %v816, 16
      %v996 = vrot.slane %v994, 4
      %v997 = vshll.u32 %v816, 16
      %v999 = vrot.slane %v997, 5
      %v1000 = vor.u32 %v996, %v999
      %v1001 = vrot.slane %v1000, 4
      %v1003 = vshll.u32 %v817, 16
      %v1005 = vrot.slane %v1003, 5
      %v1006 = vsel %vm872, %v1001, %v1005
      %v1007 = vshrl.u32 %v817, 16
      %v1009 = vrot.slane %v1007, 4
      %v1010 = vor.u32 %v1009, %v1005
      %v1011 = vrot.slane %v1010, 4
      %v1013 = vshll.u32 %v859, 16
      %v1015 = vrot.slane %v1013, 5
      %v1016 = vsel %vm872, %v1011, %v1015
      %v1018 = vshrl.u32 %v818, 16
      %v1020 = vrot.slane %v1018, 4
      %v1021 = vshll.u32 %v818, 16
      %v1023 = vrot.slane %v1021, 5
      %v1024 = vor.u32 %v1020, %v1023
      %v1025 = vrot.slane %v1024, 4
      %v1027 = vshll.u32 %v819, 16
      %v1029 = vrot.slane %v1027, 5
      %v1030 = vsel %vm872, %v1025, %v1029
      %v1031 = vshrl.u32 %v819, 16
      %v1033 = vrot.slane %v1031, 4
      %v1034 = vor.u32 %v1033, %v1029
      %v1035 = vrot.slane %v1034, 4
      %v1037 = vshll.u32 %v860, 16
      %v1039 = vrot.slane %v1037, 5
      %v1040 = vsel %vm872, %v1035, %v1039
      %v1042 = vshrl.u32 %v820, 16
      %v1044 = vrot.slane %v1042, 4
      %v1045 = vshll.u32 %v820, 16
      %v1047 = vrot.slane %v1045, 5
      %v1048 = vor.u32 %v1044, %v1047
      %v1049 = vrot.slane %v1048, 4
      %v1051 = vshll.u32 %v821, 16
      %v1053 = vrot.slane %v1051, 5
      %v1054 = vsel %vm872, %v1049, %v1053
      %v1055 = vshrl.u32 %v821, 16
      %v1057 = vrot.slane %v1055, 4
      %v1058 = vor.u32 %v1057, %v1053
      %v1059 = vrot.slane %v1058, 4
      %v1061 = vshll.u32 %v861, 16
      %v1063 = vrot.slane %v1061, 5
      %v1064 = vsel %vm872, %v1059, %v1063
      %v1066 = vshrl.u32 %v822, 16
      %v1068 = vrot.slane %v1066, 4
      %v1069 = vshll.u32 %v822, 16
      %v1071 = vrot.slane %v1069, 5
      %v1072 = vor.u32 %v1068, %v1071
      %v1073 = vrot.slane %v1072, 4
      %v1075 = vshll.u32 %v823, 16
      %v1077 = vrot.slane %v1075, 5
      %v1078 = vsel %vm872, %v1073, %v1077
      %v1079 = vshrl.u32 %v823, 16
      %v1081 = vrot.slane %v1079, 4
      %v1082 = vor.u32 %v1081, %v1077
      %v1083 = vrot.slane %v1082, 4
      %v1085 = vshll.u32 %v862, 16
      %v1087 = vrot.slane %v1085, 5
      %v1088 = vsel %vm872, %v1083, %v1087
      %v1090 = vshrl.u32 %v824, 16
      %v1092 = vrot.slane %v1090, 4
      %v1093 = vshll.u32 %v824, 16
      %v1095 = vrot.slane %v1093, 5
      %v1096 = vor.u32 %v1092, %v1095
      %v1097 = vrot.slane %v1096, 4
      %v1099 = vshll.u32 %v825, 16
      %v1101 = vrot.slane %v1099, 5
      %v1102 = vsel %vm872, %v1097, %v1101
      %v1103 = vshrl.u32 %v825, 16
      %v1105 = vrot.slane %v1103, 4
      %v1106 = vor.u32 %v1105, %v1101
      %v1107 = vrot.slane %v1106, 4
      %v1109 = vshll.u32 %v863, 16
      %v1111 = vrot.slane %v1109, 5
      %v1112 = vsel %vm872, %v1107, %v1111
      %v1114 = vshrl.u32 %v826, 16
      %v1116 = vrot.slane %v1114, 4
      %v1117 = vshll.u32 %v826, 16
      %v1119 = vrot.slane %v1117, 5
      %v1120 = vor.u32 %v1116, %v1119
      %v1121 = vrot.slane %v1120, 4
      %v1123 = vshll.u32 %v827, 16
      %v1125 = vrot.slane %v1123, 5
      %v1126 = vsel %vm872, %v1121, %v1125
      %v1127 = vshrl.u32 %v827, 16
      %v1129 = vrot.slane %v1127, 4
      %v1130 = vor.u32 %v1129, %v1125
      %v1131 = vrot.slane %v1130, 4
      %v1133 = vshll.u32 %v864, 16
      %v1135 = vrot.slane %v1133, 5
      %v1136 = vsel %vm872, %v1131, %v1135
      %v1138 = vshrl.u32 %v828, 16
      %v1140 = vrot.slane %v1138, 4
      %v1141 = vshll.u32 %v828, 16
      %v1143 = vrot.slane %v1141, 5
      %v1144 = vor.u32 %v1140, %v1143
      %v1145 = vrot.slane %v1144, 4
      %v1147 = vshll.u32 %v829, 16
      %v1149 = vrot.slane %v1147, 5
      %v1150 = vsel %vm872, %v1145, %v1149
      %v1151 = vshrl.u32 %v829, 16
      %v1153 = vrot.slane %v1151, 4
      %v1154 = vor.u32 %v1153, %v1149
      %v1155 = vrot.slane %v1154, 4
      %v1157 = vshll.u32 %v865, 16
      %v1159 = vrot.slane %v1157, 5
      %v1160 = vsel %vm872, %v1155, %v1159
      %v1162 = vshrl.u32 %v830, 16
      %v1164 = vrot.slane %v1162, 4
      %v1165 = vshll.u32 %v830, 16
      %v1167 = vrot.slane %v1165, 5
      %v1168 = vor.u32 %v1164, %v1167
      %v1169 = vrot.slane %v1168, 4
      %v1171 = vshll.u32 %v831, 16
      %v1173 = vrot.slane %v1171, 5
      %v1174 = vsel %vm872, %v1169, %v1173
      %v1175 = vshrl.u32 %v831, 16
      %v1177 = vrot.slane %v1175, 4
      %v1178 = vor.u32 %v1177, %v1173
      %v1179 = vrot.slane %v1178, 4
      %v1181 = vshll.u32 %v866, 16
      %v1183 = vrot.slane %v1181, 5
      %v1184 = vsel %vm872, %v1179, %v1183
      %v1186 = vshrl.u32 %v832, 16
      %v1188 = vrot.slane %v1186, 4
      %v1189 = vshll.u32 %v832, 16
      %v1191 = vrot.slane %v1189, 5
      %v1192 = vor.u32 %v1188, %v1191
      %v1193 = vrot.slane %v1192, 4
      %v1195 = vshll.u32 %v833, 16
      %v1197 = vrot.slane %v1195, 5
      %v1198 = vsel %vm872, %v1193, %v1197
      %v1199 = vshrl.u32 %v833, 16
      %v1201 = vrot.slane %v1199, 4
      %v1202 = vor.u32 %v1201, %v1197
      %v1203 = vrot.slane %v1202, 4
      %v1205 = vshll.u32 %v867, 16
      %v1207 = vrot.slane %v1205, 5
      %v1208 = vsel %vm872, %v1203, %v1207
      %v1210 = vshrl.u32 %v834, 16
      %v1212 = vrot.slane %v1210, 4
      %v1213 = vshll.u32 %v834, 16
      %v1215 = vrot.slane %v1213, 5
      %v1216 = vor.u32 %v1212, %v1215
      %v1217 = vrot.slane %v1216, 4
      %v1219 = vshll.u32 %v835, 16
      %v1221 = vrot.slane %v1219, 5
      %v1222 = vsel %vm872, %v1217, %v1221
      %v1223 = vshrl.u32 %v835, 16
      %v1225 = vrot.slane %v1223, 4
      %v1226 = vor.u32 %v1225, %v1221
      %v1227 = vrot.slane %v1226, 4
      %v1229 = vshll.u32 %v868, 16
      %v1231 = vrot.slane %v1229, 5
      %v1232 = vsel %vm872, %v1227, %v1231
      %v1234 = vshrl.u32 %v836, 16
      %v1236 = vrot.slane %v1234, 4
      %v1237 = vshll.u32 %v836, 16
      %v1239 = vrot.slane %v1237, 5
      %v1240 = vor.u32 %v1236, %v1239
      %v1241 = vrot.slane %v1240, 4
      %v1243 = vshll.u32 %v837, 16
      %v1245 = vrot.slane %v1243, 5
      %v1246 = vsel %vm872, %v1241, %v1245
      %v1247 = vshrl.u32 %v837, 16
      %v1249 = vrot.slane %v1247, 4
      %v1250 = vor.u32 %v1249, %v1245
      %v1251 = vrot.slane %v1250, 4
      %v1253 = vshll.u32 %v869, 16
      %v1255 = vrot.slane %v1253, 5
      %v1256 = vsel %vm872, %v1251, %v1255
      %s1257 = scalar_lea.vmem %s3, 64
      %v1258 = vld [vmem:[%s1257] sm:$0xf]
      %v1259 = vld [vmem:[%s1257 + $0x4] sm:$0xf]
      %v1260 = vld [vmem:[%s1257 + $0x8] sm:$0xf]
      %v1261 = vld [vmem:[%s1257 + $0xc] sm:$0xf]
      %v1262 = vld [vmem:[%s1257 + $0x10] sm:$0xf]
      %v1263 = vld [vmem:[%s1257 + $0x14] sm:$0xf]
      %v1264 = vld [vmem:[%s1257 + $0x18] sm:$0xf]
      %v1265 = vld [vmem:[%s1257 + $0x1c] sm:$0xf]
      %v1266 = vld [vmem:[%s1257 + $0x20] sm:$0xf]
      %v1267 = vld [vmem:[%s1257 + $0x24] sm:$0xf]
      %v1268 = vld [vmem:[%s1257 + $0x28] sm:$0xf]
      %v1269 = vld [vmem:[%s1257 + $0x2c] sm:$0xf]
      %v1270 = vld [vmem:[%s1257 + $0x30] sm:$0xf]
      %v1271 = vld [vmem:[%s1257 + $0x34] sm:$0xf]
      %v1272 = vld [vmem:[%s1257 + $0x38] sm:$0xf]
      %v1273 = vld [vmem:[%s1257 + $0x3c] sm:$0xf]
      %v1274 = vunpack.c.l.b16 %v886
      %v1275 = vunpack.c.l.b16 %v896
      %v1276 = vunpack.c.l.b16 %v910
      %v1277 = vunpack.c.l.b16 %v920
      %v1278 = vunpack.c.l.b16 %v934
      %v1279 = vunpack.c.l.b16 %v944
      %v1280 = vunpack.c.l.b16 %v958
      %v1281 = vunpack.c.l.b16 %v968
      %v1282 = vunpack.c.l.b16 %v982
      %v1283 = vunpack.c.l.b16 %v992
      %v1284 = vunpack.c.l.b16 %v1006
      %v1285 = vunpack.c.l.b16 %v1016
      %v1286 = vunpack.c.l.b16 %v1030
      %v1287 = vunpack.c.l.b16 %v1040
      %v1288 = vunpack.c.l.b16 %v1054
      %v1289 = vunpack.c.l.b16 %v1064
      %v1290 = vunpack.c.l.b16 %v1078
      %v1291 = vunpack.c.l.b16 %v1088
      %v1292 = vunpack.c.l.b16 %v1102
      %v1293 = vunpack.c.l.b16 %v1112
      %v1294 = vunpack.c.l.b16 %v1126
      %v1295 = vunpack.c.l.b16 %v1136
      %v1296 = vunpack.c.l.b16 %v1150
      %v1297 = vunpack.c.l.b16 %v1160
      %v1298 = vunpack.c.l.b16 %v1174
      %v1299 = vunpack.c.l.b16 %v1184
      %v1300 = vunpack.c.l.b16 %v1198
      %v1301 = vunpack.c.l.b16 %v1208
      %v1302 = vunpack.c.l.b16 %v1222
      %v1303 = vunpack.c.l.b16 %v1232
      %v1304 = vunpack.c.l.b16 %v1246
      %v1305 = vunpack.c.l.b16 %v1256
      %v1306 = vpack.c.b16 %v1275, %v1274
      %v1307 = vpack.c.b16 %v1277, %v1276
      %v1308 = vpack.c.b16 %v1279, %v1278
      %v1309 = vpack.c.b16 %v1281, %v1280
      %v1310 = vpack.c.b16 %v1283, %v1282
      %v1311 = vpack.c.b16 %v1285, %v1284
      %v1312 = vpack.c.b16 %v1287, %v1286
      %v1313 = vpack.c.b16 %v1289, %v1288
      %v1314 = vpack.c.b16 %v1291, %v1290
      %v1315 = vpack.c.b16 %v1293, %v1292
      %v1316 = vpack.c.b16 %v1295, %v1294
      %v1317 = vpack.c.b16 %v1297, %v1296
      %v1318 = vpack.c.b16 %v1299, %v1298
      %v1319 = vpack.c.b16 %v1301, %v1300
      %v1320 = vpack.c.b16 %v1303, %v1302
      %v1321 = vpack.c.b16 %v1305, %v1304
      %v1354 = vunpack.c.l.b16 %v1258
      %v1355 = vunpack.c.l.b16 %v1259
      %v1356 = vunpack.c.l.b16 %v1260
      %v1357 = vunpack.c.l.b16 %v1261
      %v1358 = vunpack.c.l.b16 %v1262
      %v1359 = vunpack.c.l.b16 %v1263
      %v1360 = vunpack.c.l.b16 %v1264
      %v1361 = vunpack.c.l.b16 %v1265
      %v1362 = vunpack.c.l.b16 %v1266
      %v1363 = vunpack.c.l.b16 %v1267
      %v1364 = vunpack.c.l.b16 %v1268
      %v1365 = vunpack.c.l.b16 %v1269
      %v1366 = vunpack.c.l.b16 %v1270
      %v1367 = vunpack.c.l.b16 %v1271
      %v1368 = vunpack.c.l.b16 %v1272
      %v1369 = vunpack.c.l.b16 %v1273
      %v1370 = vpack.c.b16 %v1355, %v1354
      %v1371 = vpack.c.b16 %v1357, %v1356
      %v1372 = vpack.c.b16 %v1359, %v1358
      %v1373 = vpack.c.b16 %v1361, %v1360
      %v1374 = vpack.c.b16 %v1363, %v1362
      %v1375 = vpack.c.b16 %v1365, %v1364
      %v1376 = vpack.c.b16 %v1367, %v1366
      %v1377 = vpack.c.b16 %v1369, %v1368
      %1386 = vmatprep.subr.bf16.mxu0 0
      %1387 = vmatpush1.bf16.msra.mxu0 %v1370
      %1388 = vmatprep.subr.bf16.mxu0 0
      %1389 = vmatpush1.bf16.msra.mxu0 %v1371
      %1390 = vmatprep.subr.bf16.mxu0 0
      %1391 = vmatpush1.bf16.msra.mxu0 %v1372
      %1392 = vmatprep.subr.bf16.mxu0 0
      %1393 = vmatpush1.bf16.msra.mxu0 %v1373
      %1394 = vmatprep.subr.bf16.mxu0 0
      %1395 = vmatpush1.bf16.msra.mxu0 %v1374
      %1396 = vmatprep.subr.bf16.mxu0 0
      %1397 = vmatpush1.bf16.msra.mxu0 %v1375
      %1398 = vmatprep.subr.bf16.mxu0 0
      %1399 = vmatpush1.bf16.msra.mxu0 %v1376
      %1400 = vmatprep.subr.bf16.mxu0 0
      %1401 = vmatpush1.bf16.msra.mxu0 %v1377
      %1402 = vmatprep.subr.bf16.mxu0 0
      %1403 = vmatpush1.bf16.msra.mxu0 0
      %1404 = vmatprep.subr.bf16.mxu0 0
      %1405 = vmatpush1.bf16.msra.mxu0 0
      %1406 = vmatprep.subr.bf16.mxu0 0
      %1407 = vmatpush1.bf16.msra.mxu0 0
      %1408 = vmatprep.subr.bf16.mxu0 0
      %1409 = vmatpush1.bf16.msra.mxu0 0
      %1410 = vmatprep.subr.bf16.mxu0 0
      %1411 = vmatpush1.bf16.msra.mxu0 0
      %1412 = vmatprep.subr.bf16.mxu0 0
      %1413 = vmatpush1.bf16.msra.mxu0 0
      %1414 = vmatprep.subr.bf16.mxu0 0
      %1415 = vmatpush1.bf16.msra.mxu0 0
      %1416 = vmatprep.subr.bf16.mxu0 0
      %1417 = vmatpush1.bf16.msra.mxu0 0
      %1418 = vmatprep.mubr.bf16.mxu0 0
      %1419 = vmatmul.mubr.bf16.gmra.mrb[0].mxu0 %v1306
      %v1420 = vpop.f32.mrb[0].mxu0
      %v1421 = vadd.f32 0.0, %v1420
      %v1422 = vpop.f32.mrb[0].mxu0
      %v1423 = vpop.f32.mrb[0].mxu0
      %v1424 = vadd.f32 0.0, %v1423
      %v1425 = vpop.f32.mrb[0].mxu0
      %1426 = vmatprep.mubr.bf16.mxu0 0
      %1427 = vmatmul.mubr.bf16.gmra.mrb[0].mxu0 %v1307
      %v1428 = vpop.f32.mrb[0].mxu0
      %v1429 = vadd.f32 0.0, %v1428
      %v1430 = vpop.f32.mrb[0].mxu0
      %v1431 = vpop.f32.mrb[0].mxu0
      %v1432 = vadd.f32 0.0, %v1431
      %v1433 = vpop.f32.mrb[0].mxu0
      %1434 = vmatprep.mubr.bf16.mxu0 0
      %1435 = vmatmul.mubr.bf16.gmra.mrb[0].mxu0 %v1308
      %v1436 = vpop.f32.mrb[0].mxu0
      %v1437 = vadd.f32 0.0, %v1436
      %v1438 = vpop.f32.mrb[0].mxu0
      %v1439 = vpop.f32.mrb[0].mxu0
      %v1440 = vadd.f32 0.0, %v1439
      %v1441 = vpop.f32.mrb[0].mxu0
      %1442 = vmatprep.mubr.bf16.mxu0 0
      %1443 = vmatmul.mubr.bf16.gmra.mrb[0].mxu0 %v1309
      %v1444 = vpop.f32.mrb[0].mxu0
      %v1445 = vadd.f32 0.0, %v1444
      %v1446 = vpop.f32.mrb[0].mxu0
      %v1447 = vpop.f32.mrb[0].mxu0
      %v1448 = vadd.f32 0.0, %v1447
      %v1449 = vpop.f32.mrb[0].mxu0
      %1450 = vmatprep.mubr.bf16.mxu0 0
      %1451 = vmatmul.mubr.bf16.gmra.mrb[0].mxu0 %v1310
      %v1452 = vpop.f32.mrb[0].mxu0
      %v1453 = vadd.f32 0.0, %v1452
      %v1454 = vpop.f32.mrb[0].mxu0
      %v1455 = vpop.f32.mrb[0].mxu0
      %v1456 = vadd.f32 0.0, %v1455
      %v1457 = vpop.f32.mrb[0].mxu0
      %1458 = vmatprep.mubr.bf16.mxu0 0
      %1459 = vmatmul.mubr.bf16.gmra.mrb[0].mxu0 %v1311
      %v1460 = vpop.f32.mrb[0].mxu0
      %v1461 = vadd.f32 0.0, %v1460
      %v1462 = vpop.f32.mrb[0].mxu0
      %v1463 = vpop.f32.mrb[0].mxu0
      %v1464 = vadd.f32 0.0, %v1463
      %v1465 = vpop.f32.mrb[0].mxu0
      %1466 = vmatprep.mubr.bf16.mxu0 0
      %1467 = vmatmul.mubr.bf16.gmra.mrb[0].mxu0 %v1312
      %v1468 = vpop.f32.mrb[0].mxu0
      %v1469 = vadd.f32 0.0, %v1468
      %v1470 = vpop.f32.mrb[0].mxu0
      %v1471 = vpop.f32.mrb[0].mxu0
      %v1472 = vadd.f32 0.0, %v1471
      %v1473 = vpop.f32.mrb[0].mxu0
      %1474 = vmatprep.mubr.bf16.mxu0 0
      %1475 = vmatmul.mubr.bf16.gmra.mrb[0].mxu0 %v1313
      %v1476 = vpop.f32.mrb[0].mxu0
      %v1477 = vadd.f32 0.0, %v1476
      %v1478 = vpop.f32.mrb[0].mxu0
      %v1479 = vpop.f32.mrb[0].mxu0
      %v1480 = vadd.f32 0.0, %v1479
      %v1481 = vpop.f32.mrb[0].mxu0
      %1482 = vmatprep.mubr.bf16.mxu0 0
      %1483 = vmatmul.mubr.bf16.gmra.mrb[0].mxu0 %v1314
      %v1484 = vpop.f32.mrb[0].mxu0
      %v1485 = vadd.f32 0.0, %v1484
      %v1486 = vpop.f32.mrb[0].mxu0
      %v1487 = vpop.f32.mrb[0].mxu0
      %v1488 = vadd.f32 0.0, %v1487
      %v1489 = vpop.f32.mrb[0].mxu0
      %1490 = vmatprep.mubr.bf16.mxu0 0
      %1491 = vmatmul.mubr.bf16.gmra.mrb[0].mxu0 %v1315
      %v1492 = vpop.f32.mrb[0].mxu0
      %v1493 = vadd.f32 0.0, %v1492
      %v1494 = vpop.f32.mrb[0].mxu0
      %v1495 = vpop.f32.mrb[0].mxu0
      %v1496 = vadd.f32 0.0, %v1495
      %v1497 = vpop.f32.mrb[0].mxu0
      %1498 = vmatprep.mubr.bf16.mxu0 0
      %1499 = vmatmul.mubr.bf16.gmra.mrb[0].mxu0 %v1316
      %v1500 = vpop.f32.mrb[0].mxu0
      %v1501 = vadd.f32 0.0, %v1500
      %v1502 = vpop.f32.mrb[0].mxu0
      %v1503 = vpop.f32.mrb[0].mxu0
      %v1504 = vadd.f32 0.0, %v1503
      %v1505 = vpop.f32.mrb[0].mxu0
      %1506 = vmatprep.mubr.bf16.mxu0 0
      %1507 = vmatmul.mubr.bf16.gmra.mrb[0].mxu0 %v1317
      %v1508 = vpop.f32.mrb[0].mxu0
      %v1509 = vadd.f32 0.0, %v1508
      %v1510 = vpop.f32.mrb[0].mxu0
      %v1511 = vpop.f32.mrb[0].mxu0
      %v1512 = vadd.f32 0.0, %v1511
      %v1513 = vpop.f32.mrb[0].mxu0
      %1514 = vmatprep.mubr.bf16.mxu0 0
      %1515 = vmatmul.mubr.bf16.gmra.mrb[0].mxu0 %v1318
      %v1516 = vpop.f32.mrb[0].mxu0
      %v1517 = vadd.f32 0.0, %v1516
      %v1518 = vpop.f32.mrb[0].mxu0
      %v1519 = vpop.f32.mrb[0].mxu0
      %v1520 = vadd.f32 0.0, %v1519
      %v1521 = vpop.f32.mrb[0].mxu0
      %1522 = vmatprep.mubr.bf16.mxu0 0
      %1523 = vmatmul.mubr.bf16.gmra.mrb[0].mxu0 %v1319
      %v1524 = vpop.f32.mrb[0].mxu0
      %v1525 = vadd.f32 0.0, %v1524
      %v1526 = vpop.f32.mrb[0].mxu0
      %v1527 = vpop.f32.mrb[0].mxu0
      %v1528 = vadd.f32 0.0, %v1527
      %v1529 = vpop.f32.mrb[0].mxu0
      %1530 = vmatprep.mubr.bf16.mxu0 0
      %1531 = vmatmul.mubr.bf16.gmra.mrb[0].mxu0 %v1320
      %v1532 = vpop.f32.mrb[0].mxu0
      %v1533 = vadd.f32 0.0, %v1532
      %v1534 = vpop.f32.mrb[0].mxu0
      %v1535 = vpop.f32.mrb[0].mxu0
      %v1536 = vadd.f32 0.0, %v1535
      %v1537 = vpop.f32.mrb[0].mxu0
      %1538 = vmatprep.mubr.bf16.mxu0 0
      %1539 = vmatmul.mubr.bf16.gmra.mrb[0].mxu0 %v1321
      %v1540 = vpop.f32.mrb[0].mxu0
      %v1541 = vadd.f32 0.0, %v1540
      %v1542 = vpop.f32.mrb[0].mxu0
      %v1543 = vpop.f32.mrb[0].mxu0
      %v1544 = vadd.f32 0.0, %v1543
      %v1545 = vpop.f32.mrb[0].mxu0
      %1546 = vdwg.mxu0
      %v1579 = vunpack.c.l.b16 %v806
      %v1580 = vunpack.c.l.b16 %v807
      %v1581 = vunpack.c.l.b16 %v808
      %v1582 = vunpack.c.l.b16 %v809
      %v1583 = vunpack.c.l.b16 %v810
      %v1584 = vunpack.c.l.b16 %v811
      %v1585 = vunpack.c.l.b16 %v812
      %v1586 = vunpack.c.l.b16 %v813
      %v1587 = vunpack.c.l.b16 %v814
      %v1588 = vunpack.c.l.b16 %v815
      %v1589 = vunpack.c.l.b16 %v816
      %v1590 = vunpack.c.l.b16 %v817
      %v1591 = vunpack.c.l.b16 %v818
      %v1592 = vunpack.c.l.b16 %v819
      %v1593 = vunpack.c.l.b16 %v820
      %v1594 = vunpack.c.l.b16 %v821
      %v1595 = vunpack.c.l.b16 %v822
      %v1596 = vunpack.c.l.b16 %v823
      %v1597 = vunpack.c.l.b16 %v824
      %v1598 = vunpack.c.l.b16 %v825
      %v1599 = vunpack.c.l.b16 %v826
      %v1600 = vunpack.c.l.b16 %v827
      %v1601 = vunpack.c.l.b16 %v828
      %v1602 = vunpack.c.l.b16 %v829
      %v1603 = vunpack.c.l.b16 %v830
      %v1604 = vunpack.c.l.b16 %v831
      %v1605 = vunpack.c.l.b16 %v832
      %v1606 = vunpack.c.l.b16 %v833
      %v1607 = vunpack.c.l.b16 %v834
      %v1608 = vunpack.c.l.b16 %v835
      %v1609 = vunpack.c.l.b16 %v836
      %v1610 = vunpack.c.l.b16 %v837
      %v1611 = vpack.c.b16 %v1580, %v1579
      %v1612 = vpack.c.b16 %v1582, %v1581
      %v1613 = vpack.c.b16 %v1584, %v1583
      %v1614 = vpack.c.b16 %v1586, %v1585
      %v1615 = vpack.c.b16 %v1588, %v1587
      %v1616 = vpack.c.b16 %v1590, %v1589
      %v1617 = vpack.c.b16 %v1592, %v1591
      %v1618 = vpack.c.b16 %v1594, %v1593
      %v1619 = vpack.c.b16 %v1596, %v1595
      %v1620 = vpack.c.b16 %v1598, %v1597
      %v1621 = vpack.c.b16 %v1600, %v1599
      %v1622 = vpack.c.b16 %v1602, %v1601
      %v1623 = vpack.c.b16 %v1604, %v1603
      %v1624 = vpack.c.b16 %v1606, %v1605
      %v1625 = vpack.c.b16 %v1608, %v1607
      %v1626 = vpack.c.b16 %v1610, %v1609
      %v1659 = vunpack.c.l.b16 %v838
      %v1660 = vunpack.c.l.b16 %v839
      %v1661 = vunpack.c.l.b16 %v840
      %v1662 = vunpack.c.l.b16 %v841
      %v1663 = vunpack.c.l.b16 %v842
      %v1664 = vunpack.c.l.b16 %v843
      %v1665 = vunpack.c.l.b16 %v844
      %v1666 = vunpack.c.l.b16 %v845
      %v1667 = vunpack.c.l.b16 %v846
      %v1668 = vunpack.c.l.b16 %v847
      %v1669 = vunpack.c.l.b16 %v848
      %v1670 = vunpack.c.l.b16 %v849
      %v1671 = vunpack.c.l.b16 %v850
      %v1672 = vunpack.c.l.b16 %v851
      %v1673 = vunpack.c.l.b16 %v852
      %v1674 = vunpack.c.l.b16 %v853
      %v1675 = vpack.c.b16 %v1660, %v1659
      %v1676 = vpack.c.b16 %v1662, %v1661
      %v1677 = vpack.c.b16 %v1664, %v1663
      %v1678 = vpack.c.b16 %v1666, %v1665
      %v1679 = vpack.c.b16 %v1668, %v1667
      %v1680 = vpack.c.b16 %v1670, %v1669
      %v1681 = vpack.c.b16 %v1672, %v1671
      %v1682 = vpack.c.b16 %v1674, %v1673
      %1691 = vmatprep.subr.bf16.mxu0 0
      %1692 = vmatpush1.bf16.msra.mxu0 %v1675
      %1693 = vmatprep.subr.bf16.mxu0 0
      %1694 = vmatpush1.bf16.msra.mxu0 %v1676
      %1695 = vmatprep.subr.bf16.mxu0 0
      %1696 = vmatpush1.bf16.msra.mxu0 %v1677
      %1697 = vmatprep.subr.bf16.mxu0 0
      %1698 = vmatpush1.bf16.msra.mxu0 %v1678
      %1699 = vmatprep.subr.bf16.mxu0 0
      %1700 = vmatpush1.bf16.msra.mxu0 %v1679
      %1701 = vmatprep.subr.bf16.mxu0 0
      %1702 = vmatpush1.bf16.msra.mxu0 %v1680
      %1703 = vmatprep.subr.bf16.mxu0 0
      %1704 = vmatpush1.bf16.msra.mxu0 %v1681
      %1705 = vmatprep.subr.bf16.mxu0 0
      %1706 = vmatpush1.bf16.msra.mxu0 %v1682
      %1707 = vmatprep.subr.bf16.mxu0 0
      %1708 = vmatpush1.bf16.msra.mxu0 0
      %1709 = vmatprep.subr.bf16.mxu0 0
      %1710 = vmatpush1.bf16.msra.mxu0 0
      %1711 = vmatprep.subr.bf16.mxu0 0
      %1712 = vmatpush1.bf16.msra.mxu0 0
      %1713 = vmatprep.subr.bf16.mxu0 0
      %1714 = vmatpush1.bf16.msra.mxu0 0
      %1715 = vmatprep.subr.bf16.mxu0 0
      %1716 = vmatpush1.bf16.msra.mxu0 0
      %1717 = vmatprep.subr.bf16.mxu0 0
      %1718 = vmatpush1.bf16.msra.mxu0 0
      %1719 = vmatprep.subr.bf16.mxu0 0
      %1720 = vmatpush1.bf16.msra.mxu0 0
      %1721 = vmatprep.subr.bf16.mxu0 0
      %1722 = vmatpush1.bf16.msra.mxu0 0
      %1723 = vmatprep.mubr.bf16.mxu0 0
      %1724 = vmatmul.mubr.bf16.gmra.mrb[0].mxu0 %v1611
      %v1725 = vpop.f32.mrb[0].mxu0
      %v1726 = vadd.f32 %v1421, %v1725
      %v1727 = vpop.f32.mrb[0].mxu0
      %v1728 = vpop.f32.mrb[0].mxu0
      %v1729 = vadd.f32 %v1424, %v1728
      %v1730 = vpop.f32.mrb[0].mxu0
      %1731 = vmatprep.mubr.bf16.mxu0 0
      %1732 = vmatmul.mubr.bf16.gmra.mrb[0].mxu0 %v1612
      %v1733 = vpop.f32.mrb[0].mxu0
      %v1734 = vadd.f32 %v1429, %v1733
      %v1735 = vpop.f32.mrb[0].mxu0
      %v1736 = vpop.f32.mrb[0].mxu0
      %v1737 = vadd.f32 %v1432, %v1736
      %v1738 = vpop.f32.mrb[0].mxu0
      %1739 = vmatprep.mubr.bf16.mxu0 0
      %1740 = vmatmul.mubr.bf16.gmra.mrb[0].mxu0 %v1613
      %v1741 = vpop.f32.mrb[0].mxu0
      %v1742 = vadd.f32 %v1437, %v1741
      %v1743 = vpop.f32.mrb[0].mxu0
      %v1744 = vpop.f32.mrb[0].mxu0
      %v1745 = vadd.f32 %v1440, %v1744
      %v1746 = vpop.f32.mrb[0].mxu0
      %1747 = vmatprep.mubr.bf16.mxu0 0
      %1748 = vmatmul.mubr.bf16.gmra.mrb[0].mxu0 %v1614
      %v1749 = vpop.f32.mrb[0].mxu0
      %v1750 = vadd.f32 %v1445, %v1749
      %v1751 = vpop.f32.mrb[0].mxu0
      %v1752 = vpop.f32.mrb[0].mxu0
      %v1753 = vadd.f32 %v1448, %v1752
      %v1754 = vpop.f32.mrb[0].mxu0
      %1755 = vmatprep.mubr.bf16.mxu0 0
      %1756 = vmatmul.mubr.bf16.gmra.mrb[0].mxu0 %v1615
      %v1757 = vpop.f32.mrb[0].mxu0
      %v1758 = vadd.f32 %v1453, %v1757
      %v1759 = vpop.f32.mrb[0].mxu0
      %v1760 = vpop.f32.mrb[0].mxu0
      %v1761 = vadd.f32 %v1456, %v1760
      %v1762 = vpop.f32.mrb[0].mxu0
      %1763 = vmatprep.mubr.bf16.mxu0 0
      %1764 = vmatmul.mubr.bf16.gmra.mrb[0].mxu0 %v1616
      %v1765 = vpop.f32.mrb[0].mxu0
      %v1766 = vadd.f32 %v1461, %v1765
      %v1767 = vpop.f32.mrb[0].mxu0
      %v1768 = vpop.f32.mrb[0].mxu0
      %v1769 = vadd.f32 %v1464, %v1768
      %v1770 = vpop.f32.mrb[0].mxu0
      %1771 = vmatprep.mubr.bf16.mxu0 0
      %1772 = vmatmul.mubr.bf16.gmra.mrb[0].mxu0 %v1617
      %v1773 = vpop.f32.mrb[0].mxu0
      %v1774 = vadd.f32 %v1469, %v1773
      %v1775 = vpop.f32.mrb[0].mxu0
      %v1776 = vpop.f32.mrb[0].mxu0
      %v1777 = vadd.f32 %v1472, %v1776
      %v1778 = vpop.f32.mrb[0].mxu0
      %1779 = vmatprep.mubr.bf16.mxu0 0
      %1780 = vmatmul.mubr.bf16.gmra.mrb[0].mxu0 %v1618
      %v1781 = vpop.f32.mrb[0].mxu0
      %v1782 = vadd.f32 %v1477, %v1781
      %v1783 = vpop.f32.mrb[0].mxu0
      %v1784 = vpop.f32.mrb[0].mxu0
      %v1785 = vadd.f32 %v1480, %v1784
      %v1786 = vpop.f32.mrb[0].mxu0
      %1787 = vmatprep.mubr.bf16.mxu0 0
      %1788 = vmatmul.mubr.bf16.gmra.mrb[0].mxu0 %v1619
      %v1789 = vpop.f32.mrb[0].mxu0
      %v1790 = vadd.f32 %v1485, %v1789
      %v1791 = vpop.f32.mrb[0].mxu0
      %v1792 = vpop.f32.mrb[0].mxu0
      %v1793 = vadd.f32 %v1488, %v1792
      %v1794 = vpop.f32.mrb[0].mxu0
      %1795 = vmatprep.mubr.bf16.mxu0 0
      %1796 = vmatmul.mubr.bf16.gmra.mrb[0].mxu0 %v1620
      %v1797 = vpop.f32.mrb[0].mxu0
      %v1798 = vadd.f32 %v1493, %v1797
      %v1799 = vpop.f32.mrb[0].mxu0
      %v1800 = vpop.f32.mrb[0].mxu0
      %v1801 = vadd.f32 %v1496, %v1800
      %v1802 = vpop.f32.mrb[0].mxu0
      %1803 = vmatprep.mubr.bf16.mxu0 0
      %1804 = vmatmul.mubr.bf16.gmra.mrb[0].mxu0 %v1621
      %v1805 = vpop.f32.mrb[0].mxu0
      %v1806 = vadd.f32 %v1501, %v1805
      %v1807 = vpop.f32.mrb[0].mxu0
      %v1808 = vpop.f32.mrb[0].mxu0
      %v1809 = vadd.f32 %v1504, %v1808
      %v1810 = vpop.f32.mrb[0].mxu0
      %1811 = vmatprep.mubr.bf16.mxu0 0
      %1812 = vmatmul.mubr.bf16.gmra.mrb[0].mxu0 %v1622
      %v1813 = vpop.f32.mrb[0].mxu0
      %v1814 = vadd.f32 %v1509, %v1813
      %v1815 = vpop.f32.mrb[0].mxu0
      %v1816 = vpop.f32.mrb[0].mxu0
      %v1817 = vadd.f32 %v1512, %v1816
      %v1818 = vpop.f32.mrb[0].mxu0
      %1819 = vmatprep.mubr.bf16.mxu0 0
      %1820 = vmatmul.mubr.bf16.gmra.mrb[0].mxu0 %v1623
      %v1821 = vpop.f32.mrb[0].mxu0
      %v1822 = vadd.f32 %v1517, %v1821
      %v1823 = vpop.f32.mrb[0].mxu0
      %v1824 = vpop.f32.mrb[0].mxu0
      %v1825 = vadd.f32 %v1520, %v1824
      %v1826 = vpop.f32.mrb[0].mxu0
      %1827 = vmatprep.mubr.bf16.mxu0 0
      %1828 = vmatmul.mubr.bf16.gmra.mrb[0].mxu0 %v1624
      %v1829 = vpop.f32.mrb[0].mxu0
      %v1830 = vadd.f32 %v1525, %v1829
      %v1831 = vpop.f32.mrb[0].mxu0
      %v1832 = vpop.f32.mrb[0].mxu0
      %v1833 = vadd.f32 %v1528, %v1832
      %v1834 = vpop.f32.mrb[0].mxu0
      %1835 = vmatprep.mubr.bf16.mxu0 0
      %1836 = vmatmul.mubr.bf16.gmra.mrb[0].mxu0 %v1625
      %v1837 = vpop.f32.mrb[0].mxu0
      %v1838 = vadd.f32 %v1533, %v1837
      %v1839 = vpop.f32.mrb[0].mxu0
      %v1840 = vpop.f32.mrb[0].mxu0
      %v1841 = vadd.f32 %v1536, %v1840
      %v1842 = vpop.f32.mrb[0].mxu0
      %1843 = vmatprep.mubr.bf16.mxu0 0
      %1844 = vmatmul.mubr.bf16.gmra.mrb[0].mxu0 %v1626
      %v1845 = vpop.f32.mrb[0].mxu0
      %v1846 = vadd.f32 %v1541, %v1845
      %v1847 = vpop.f32.mrb[0].mxu0
      %v1848 = vpop.f32.mrb[0].mxu0
      %v1849 = vadd.f32 %v1544, %v1848
      %v1850 = vpop.f32.mrb[0].mxu0
      %1851 = vdwg.mxu0
      %v1852 = vld [vmem:[#allocation2] sm:$0xe]
      %v1853 = vld [vmem:[#allocation2 + $0xc] sm:$0xe]
      %v1854 = vld [vmem:[#allocation2 + $0x18] sm:$0xe]
      %v1855 = vld [vmem:[#allocation2 + $0x24] sm:$0xe]
      %v1856 = vld [vmem:[#allocation2 + $0x30] sm:$0xe]
      %v1857 = vld [vmem:[#allocation2 + $0x3c] sm:$0xe]
      %v1858 = vld [vmem:[#allocation2 + $0x48] sm:$0xe]
      %v1859 = vld [vmem:[#allocation2 + $0x54] sm:$0xe]
      %v1860 = vld [vmem:[#allocation2 + $0x60] sm:$0xe]
      %v1861 = vld [vmem:[#allocation2 + $0x6c] sm:$0xe]
      %v1862 = vld [vmem:[#allocation2 + $0x78] sm:$0xe]
      %v1863 = vld [vmem:[#allocation2 + $0x84] sm:$0xe]
      %v1864 = vld [vmem:[#allocation2 + $0x90] sm:$0xe]
      %v1865 = vld [vmem:[#allocation2 + $0x9c] sm:$0xe]
      %v1866 = vld [vmem:[#allocation2 + $0xa8] sm:$0xe]
      %v1867 = vld [vmem:[#allocation2 + $0xb4] sm:$0xe]
      %vm1900 = vcmask 1042432
      %vm1901 = vcmask 1046532
      %vm1902 = vmor %vm1900, %vm1901
      %v1903 = vrot.slane %v1852, 5
      %v1904 = vrot.slane %v1903, 4
      %v1905 = vrot.slane %v807, 5
      %v1906 = vsel %vm1902, %v1904, %v1905
      %v1907 = vrot.slane %v1905, 4
      %v1908 = vrot.slane %v854, 5
      %v1909 = vsel %vm1902, %v1907, %v1908
      %v1910 = vrot.slane %v1853, 5
      %v1911 = vrot.slane %v1910, 4
      %v1912 = vrot.slane %v809, 5
      %v1913 = vsel %vm1902, %v1911, %v1912
      %v1914 = vrot.slane %v1912, 4
      %v1915 = vrot.slane %v855, 5
      %v1916 = vsel %vm1902, %v1914, %v1915
      %v1917 = vrot.slane %v1854, 5
      %v1918 = vrot.slane %v1917, 4
      %v1919 = vrot.slane %v811, 5
      %v1920 = vsel %vm1902, %v1918, %v1919
      %v1921 = vrot.slane %v1919, 4
      %v1922 = vrot.slane %v856, 5
      %v1923 = vsel %vm1902, %v1921, %v1922
      %v1924 = vrot.slane %v1855, 5
      %v1925 = vrot.slane %v1924, 4
      %v1926 = vrot.slane %v813, 5
      %v1927 = vsel %vm1902, %v1925, %v1926
      %v1928 = vrot.slane %v1926, 4
      %v1929 = vrot.slane %v857, 5
      %v1930 = vsel %vm1902, %v1928, %v1929
      %v1931 = vrot.slane %v1856, 5
      %v1932 = vrot.slane %v1931, 4
      %v1933 = vrot.slane %v815, 5
      %v1934 = vsel %vm1902, %v1932, %v1933
      %v1935 = vrot.slane %v1933, 4
      %v1936 = vrot.slane %v858, 5
      %v1937 = vsel %vm1902, %v1935, %v1936
      %v1938 = vrot.slane %v1857, 5
      %v1939 = vrot.slane %v1938, 4
      %v1940 = vrot.slane %v817, 5
      %v1941 = vsel %vm1902, %v1939, %v1940
      %v1942 = vrot.slane %v1940, 4
      %v1943 = vrot.slane %v859, 5
      %v1944 = vsel %vm1902, %v1942, %v1943
      %v1945 = vrot.slane %v1858, 5
      %v1946 = vrot.slane %v1945, 4
      %v1947 = vrot.slane %v819, 5
      %v1948 = vsel %vm1902, %v1946, %v1947
      %v1949 = vrot.slane %v1947, 4
      %v1950 = vrot.slane %v860, 5
      %v1951 = vsel %vm1902, %v1949, %v1950
      %v1952 = vrot.slane %v1859, 5
      %v1953 = vrot.slane %v1952, 4
      %v1954 = vrot.slane %v821, 5
      %v1955 = vsel %vm1902, %v1953, %v1954
      %v1956 = vrot.slane %v1954, 4
      %v1957 = vrot.slane %v861, 5
      %v1958 = vsel %vm1902, %v1956, %v1957
      %v1959 = vrot.slane %v1860, 5
      %v1960 = vrot.slane %v1959, 4
      %v1961 = vrot.slane %v823, 5
      %v1962 = vsel %vm1902, %v1960, %v1961
      %v1963 = vrot.slane %v1961, 4
      %v1964 = vrot.slane %v862, 5
      %v1965 = vsel %vm1902, %v1963, %v1964
      %v1966 = vrot.slane %v1861, 5
      %v1967 = vrot.slane %v1966, 4
      %v1968 = vrot.slane %v825, 5
      %v1969 = vsel %vm1902, %v1967, %v1968
      %v1970 = vrot.slane %v1968, 4
      %v1971 = vrot.slane %v863, 5
      %v1972 = vsel %vm1902, %v1970, %v1971
      %v1973 = vrot.slane %v1862, 5
      %v1974 = vrot.slane %v1973, 4
      %v1975 = vrot.slane %v827, 5
      %v1976 = vsel %vm1902, %v1974, %v1975
      %v1977 = vrot.slane %v1975, 4
      %v1978 = vrot.slane %v864, 5
      %v1979 = vsel %vm1902, %v1977, %v1978
      %v1980 = vrot.slane %v1863, 5
      %v1981 = vrot.slane %v1980, 4
      %v1982 = vrot.slane %v829, 5
      %v1983 = vsel %vm1902, %v1981, %v1982
      %v1984 = vrot.slane %v1982, 4
      %v1985 = vrot.slane %v865, 5
      %v1986 = vsel %vm1902, %v1984, %v1985
      %v1987 = vrot.slane %v1864, 5
      %v1988 = vrot.slane %v1987, 4
      %v1989 = vrot.slane %v831, 5
      %v1990 = vsel %vm1902, %v1988, %v1989
      %v1991 = vrot.slane %v1989, 4
      %v1992 = vrot.slane %v866, 5
      %v1993 = vsel %vm1902, %v1991, %v1992
      %v1994 = vrot.slane %v1865, 5
      %v1995 = vrot.slane %v1994, 4
      %v1996 = vrot.slane %v833, 5
      %v1997 = vsel %vm1902, %v1995, %v1996
      %v1998 = vrot.slane %v1996, 4
      %v1999 = vrot.slane %v867, 5
      %v2000 = vsel %vm1902, %v1998, %v1999
      %v2001 = vrot.slane %v1866, 5
      %v2002 = vrot.slane %v2001, 4
      %v2003 = vrot.slane %v835, 5
      %v2004 = vsel %vm1902, %v2002, %v2003
      %v2005 = vrot.slane %v2003, 4
      %v2006 = vrot.slane %v868, 5
      %v2007 = vsel %vm1902, %v2005, %v2006
      %v2008 = vrot.slane %v1867, 5
      %v2009 = vrot.slane %v2008, 4
      %v2010 = vrot.slane %v837, 5
      %v2011 = vsel %vm1902, %v2009, %v2010
      %v2012 = vrot.slane %v2010, 4
      %v2013 = vrot.slane %v869, 5
      %v2014 = vsel %vm1902, %v2012, %v2013
      %s2015 = scalar_lea.vmem %s3, 128
      %v2016 = vld [vmem:[%s2015] sm:$0xf]
      %v2017 = vld [vmem:[%s2015 + $0x4] sm:$0xf]
      %v2018 = vld [vmem:[%s2015 + $0x8] sm:$0xf]
      %v2019 = vld [vmem:[%s2015 + $0xc] sm:$0xf]
      %v2020 = vld [vmem:[%s2015 + $0x10] sm:$0xf]
      %v2021 = vld [vmem:[%s2015 + $0x14] sm:$0xf]
      %v2022 = vld [vmem:[%s2015 + $0x18] sm:$0xf]
      %v2023 = vld [vmem:[%s2015 + $0x1c] sm:$0xf]
      %v2024 = vld [vmem:[%s2015 + $0x20] sm:$0xf]
      %v2025 = vld [vmem:[%s2015 + $0x24] sm:$0xf]
      %v2026 = vld [vmem:[%s2015 + $0x28] sm:$0xf]
      %v2027 = vld [vmem:[%s2015 + $0x2c] sm:$0xf]
      %v2028 = vld [vmem:[%s2015 + $0x30] sm:$0xf]
      %v2029 = vld [vmem:[%s2015 + $0x34] sm:$0xf]
      %v2030 = vld [vmem:[%s2015 + $0x38] sm:$0xf]
      %v2031 = vld [vmem:[%s2015 + $0x3c] sm:$0xf]
      %v2032 = vunpack.c.l.b16 %v1906
      %v2033 = vunpack.c.l.b16 %v1909
      %v2034 = vunpack.c.l.b16 %v1913
      %v2035 = vunpack.c.l.b16 %v1916
      %v2036 = vunpack.c.l.b16 %v1920
      %v2037 = vunpack.c.l.b16 %v1923
      %v2038 = vunpack.c.l.b16 %v1927
      %v2039 = vunpack.c.l.b16 %v1930
      %v2040 = vunpack.c.l.b16 %v1934
      %v2041 = vunpack.c.l.b16 %v1937
      %v2042 = vunpack.c.l.b16 %v1941
      %v2043 = vunpack.c.l.b16 %v1944
      %v2044 = vunpack.c.l.b16 %v1948
      %v2045 = vunpack.c.l.b16 %v1951
      %v2046 = vunpack.c.l.b16 %v1955
      %v2047 = vunpack.c.l.b16 %v1958
      %v2048 = vunpack.c.l.b16 %v1962
      %v2049 = vunpack.c.l.b16 %v1965
      %v2050 = vunpack.c.l.b16 %v1969
      %v2051 = vunpack.c.l.b16 %v1972
      %v2052 = vunpack.c.l.b16 %v1976
      %v2053 = vunpack.c.l.b16 %v1979
      %v2054 = vunpack.c.l.b16 %v1983
      %v2055 = vunpack.c.l.b16 %v1986
      %v2056 = vunpack.c.l.b16 %v1990
      %v2057 = vunpack.c.l.b16 %v1993
      %v2058 = vunpack.c.l.b16 %v1997
      %v2059 = vunpack.c.l.b16 %v2000
      %v2060 = vunpack.c.l.b16 %v2004
      %v2061 = vunpack.c.l.b16 %v2007
      %v2062 = vunpack.c.l.b16 %v2011
      %v2063 = vunpack.c.l.b16 %v2014
      %v2064 = vpack.c.b16 %v2033, %v2032
      %v2065 = vpack.c.b16 %v2035, %v2034
      %v2066 = vpack.c.b16 %v2037, %v2036
      %v2067 = vpack.c.b16 %v2039, %v2038
      %v2068 = vpack.c.b16 %v2041, %v2040
      %v2069 = vpack.c.b16 %v2043, %v2042
      %v2070 = vpack.c.b16 %v2045, %v2044
      %v2071 = vpack.c.b16 %v2047, %v2046
      %v2072 = vpack.c.b16 %v2049, %v2048
      %v2073 = vpack.c.b16 %v2051, %v2050
      %v2074 = vpack.c.b16 %v2053, %v2052
      %v2075 = vpack.c.b16 %v2055, %v2054
      %v2076 = vpack.c.b16 %v2057, %v2056
      %v2077 = vpack.c.b16 %v2059, %v2058
      %v2078 = vpack.c.b16 %v2061, %v2060
      %v2079 = vpack.c.b16 %v2063, %v2062
      %v2112 = vunpack.c.l.b16 %v2016
      %v2113 = vunpack.c.l.b16 %v2017
      %v2114 = vunpack.c.l.b16 %v2018
      %v2115 = vunpack.c.l.b16 %v2019
      %v2116 = vunpack.c.l.b16 %v2020
      %v2117 = vunpack.c.l.b16 %v2021
      %v2118 = vunpack.c.l.b16 %v2022
      %v2119 = vunpack.c.l.b16 %v2023
      %v2120 = vunpack.c.l.b16 %v2024
      %v2121 = vunpack.c.l.b16 %v2025
      %v2122 = vunpack.c.l.b16 %v2026
      %v2123 = vunpack.c.l.b16 %v2027
      %v2124 = vunpack.c.l.b16 %v2028
      %v2125 = vunpack.c.l.b16 %v2029
      %v2126 = vunpack.c.l.b16 %v2030
      %v2127 = vunpack.c.l.b16 %v2031
      %v2128 = vpack.c.b16 %v2113, %v2112
      %v2129 = vpack.c.b16 %v2115, %v2114
      %v2130 = vpack.c.b16 %v2117, %v2116
      %v2131 = vpack.c.b16 %v2119, %v2118
      %v2132 = vpack.c.b16 %v2121, %v2120
      %v2133 = vpack.c.b16 %v2123, %v2122
      %v2134 = vpack.c.b16 %v2125, %v2124
      %v2135 = vpack.c.b16 %v2127, %v2126
      %2144 = vmatprep.subr.bf16.mxu0 0
      %2145 = vmatpush1.bf16.msra.mxu0 %v2128
      %2146 = vmatprep.subr.bf16.mxu0 0
      %2147 = vmatpush1.bf16.msra.mxu0 %v2129
      %2148 = vmatprep.subr.bf16.mxu0 0
      %2149 = vmatpush1.bf16.msra.mxu0 %v2130
      %2150 = vmatprep.subr.bf16.mxu0 0
      %2151 = vmatpush1.bf16.msra.mxu0 %v2131
      %2152 = vmatprep.subr.bf16.mxu0 0
      %2153 = vmatpush1.bf16.msra.mxu0 %v2132
      %2154 = vmatprep.subr.bf16.mxu0 0
      %2155 = vmatpush1.bf16.msra.mxu0 %v2133
      %2156 = vmatprep.subr.bf16.mxu0 0
      %2157 = vmatpush1.bf16.msra.mxu0 %v2134
      %2158 = vmatprep.subr.bf16.mxu0 0
      %2159 = vmatpush1.bf16.msra.mxu0 %v2135
      %2160 = vmatprep.subr.bf16.mxu0 0
      %2161 = vmatpush1.bf16.msra.mxu0 0
      %2162 = vmatprep.subr.bf16.mxu0 0
      %2163 = vmatpush1.bf16.msra.mxu0 0
      %2164 = vmatprep.subr.bf16.mxu0 0
      %2165 = vmatpush1.bf16.msra.mxu0 0
      %2166 = vmatprep.subr.bf16.mxu0 0
      %2167 = vmatpush1.bf16.msra.mxu0 0
      %2168 = vmatprep.subr.bf16.mxu0 0
      %2169 = vmatpush1.bf16.msra.mxu0 0
      %2170 = vmatprep.subr.bf16.mxu0 0
      %2171 = vmatpush1.bf16.msra.mxu0 0
      %2172 = vmatprep.subr.bf16.mxu0 0
      %2173 = vmatpush1.bf16.msra.mxu0 0
      %2174 = vmatprep.subr.bf16.mxu0 0
      %2175 = vmatpush1.bf16.msra.mxu0 0
      %2176 = vmatprep.mubr.bf16.mxu0 0
      %2177 = vmatmul.mubr.bf16.gmra.mrb[0].mxu0 %v2064
      %v2178 = vpop.f32.mrb[0].mxu0
      %v2179 = vadd.f32 0.0, %v2178
      %v2180 = vpop.f32.mrb[0].mxu0
      %v2181 = vpop.f32.mrb[0].mxu0
      %v2182 = vadd.f32 0.0, %v2181
      %v2183 = vpop.f32.mrb[0].mxu0
      %2184 = vmatprep.mubr.bf16.mxu0 0
      %2185 = vmatmul.mubr.bf16.gmra.mrb[0].mxu0 %v2065
      %v2186 = vpop.f32.mrb[0].mxu0
      %v2187 = vadd.f32 0.0, %v2186
      %v2188 = vpop.f32.mrb[0].mxu0
      %v2189 = vpop.f32.mrb[0].mxu0
      %v2190 = vadd.f32 0.0, %v2189
      %v2191 = vpop.f32.mrb[0].mxu0
      %2192 = vmatprep.mubr.bf16.mxu0 0
      %2193 = vmatmul.mubr.bf16.gmra.mrb[0].mxu0 %v2066
      %v2194 = vpop.f32.mrb[0].mxu0
      %v2195 = vadd.f32 0.0, %v2194
      %v2196 = vpop.f32.mrb[0].mxu0
      %v2197 = vpop.f32.mrb[0].mxu0
      %v2198 = vadd.f32 0.0, %v2197
      %v2199 = vpop.f32.mrb[0].mxu0
      %2200 = vmatprep.mubr.bf16.mxu0 0
      %2201 = vmatmul.mubr.bf16.gmra.mrb[0].mxu0 %v2067
      %v2202 = vpop.f32.mrb[0].mxu0
      %v2203 = vadd.f32 0.0, %v2202
      %v2204 = vpop.f32.mrb[0].mxu0
      %v2205 = vpop.f32.mrb[0].mxu0
      %v2206 = vadd.f32 0.0, %v2205
      %v2207 = vpop.f32.mrb[0].mxu0
      %2208 = vmatprep.mubr.bf16.mxu0 0
      %2209 = vmatmul.mubr.bf16.gmra.mrb[0].mxu0 %v2068
      %v2210 = vpop.f32.mrb[0].mxu0
      %v2211 = vadd.f32 0.0, %v2210
      %v2212 = vpop.f32.mrb[0].mxu0
      %v2213 = vpop.f32.mrb[0].mxu0
      %v2214 = vadd.f32 0.0, %v2213
      %v2215 = vpop.f32.mrb[0].mxu0
      %2216 = vmatprep.mubr.bf16.mxu0 0
      %2217 = vmatmul.mubr.bf16.gmra.mrb[0].mxu0 %v2069
      %v2218 = vpop.f32.mrb[0].mxu0
      %v2219 = vadd.f32 0.0, %v2218
      %v2220 = vpop.f32.mrb[0].mxu0
      %v2221 = vpop.f32.mrb[0].mxu0
      %v2222 = vadd.f32 0.0, %v2221
      %v2223 = vpop.f32.mrb[0].mxu0
      %2224 = vmatprep.mubr.bf16.mxu0 0
      %2225 = vmatmul.mubr.bf16.gmra.mrb[0].mxu0 %v2070
      %v2226 = vpop.f32.mrb[0].mxu0
      %v2227 = vadd.f32 0.0, %v2226
      %v2228 = vpop.f32.mrb[0].mxu0
      %v2229 = vpop.f32.mrb[0].mxu0
      %v2230 = vadd.f32 0.0, %v2229
      %v2231 = vpop.f32.mrb[0].mxu0
      %2232 = vmatprep.mubr.bf16.mxu0 0
      %2233 = vmatmul.mubr.bf16.gmra.mrb[0].mxu0 %v2071
      %v2234 = vpop.f32.mrb[0].mxu0
      %v2235 = vadd.f32 0.0, %v2234
      %v2236 = vpop.f32.mrb[0].mxu0
      %v2237 = vpop.f32.mrb[0].mxu0
      %v2238 = vadd.f32 0.0, %v2237
      %v2239 = vpop.f32.mrb[0].mxu0
      %2240 = vmatprep.mubr.bf16.mxu0 0
      %2241 = vmatmul.mubr.bf16.gmra.mrb[0].mxu0 %v2072
      %v2242 = vpop.f32.mrb[0].mxu0
      %v2243 = vadd.f32 0.0, %v2242
      %v2244 = vpop.f32.mrb[0].mxu0
      %v2245 = vpop.f32.mrb[0].mxu0
      %v2246 = vadd.f32 0.0, %v2245
      %v2247 = vpop.f32.mrb[0].mxu0
      %2248 = vmatprep.mubr.bf16.mxu0 0
      %2249 = vmatmul.mubr.bf16.gmra.mrb[0].mxu0 %v2073
      %v2250 = vpop.f32.mrb[0].mxu0
      %v2251 = vadd.f32 0.0, %v2250
      %v2252 = vpop.f32.mrb[0].mxu0
      %v2253 = vpop.f32.mrb[0].mxu0
      %v2254 = vadd.f32 0.0, %v2253
      %v2255 = vpop.f32.mrb[0].mxu0
      %2256 = vmatprep.mubr.bf16.mxu0 0
      %2257 = vmatmul.mubr.bf16.gmra.mrb[0].mxu0 %v2074
      %v2258 = vpop.f32.mrb[0].mxu0
      %v2259 = vadd.f32 0.0, %v2258
      %v2260 = vpop.f32.mrb[0].mxu0
      %v2261 = vpop.f32.mrb[0].mxu0
      %v2262 = vadd.f32 0.0, %v2261
      %v2263 = vpop.f32.mrb[0].mxu0
      %2264 = vmatprep.mubr.bf16.mxu0 0
      %2265 = vmatmul.mubr.bf16.gmra.mrb[0].mxu0 %v2075
      %v2266 = vpop.f32.mrb[0].mxu0
      %v2267 = vadd.f32 0.0, %v2266
      %v2268 = vpop.f32.mrb[0].mxu0
      %v2269 = vpop.f32.mrb[0].mxu0
      %v2270 = vadd.f32 0.0, %v2269
      %v2271 = vpop.f32.mrb[0].mxu0
      %2272 = vmatprep.mubr.bf16.mxu0 0
      %2273 = vmatmul.mubr.bf16.gmra.mrb[0].mxu0 %v2076
      %v2274 = vpop.f32.mrb[0].mxu0
      %v2275 = vadd.f32 0.0, %v2274
      %v2276 = vpop.f32.mrb[0].mxu0
      %v2277 = vpop.f32.mrb[0].mxu0
      %v2278 = vadd.f32 0.0, %v2277
      %v2279 = vpop.f32.mrb[0].mxu0
      %2280 = vmatprep.mubr.bf16.mxu0 0
      %2281 = vmatmul.mubr.bf16.gmra.mrb[0].mxu0 %v2077
      %v2282 = vpop.f32.mrb[0].mxu0
      %v2283 = vadd.f32 0.0, %v2282
      %v2284 = vpop.f32.mrb[0].mxu0
      %v2285 = vpop.f32.mrb[0].mxu0
      %v2286 = vadd.f32 0.0, %v2285
      %v2287 = vpop.f32.mrb[0].mxu0
      %2288 = vmatprep.mubr.bf16.mxu0 0
      %2289 = vmatmul.mubr.bf16.gmra.mrb[0].mxu0 %v2078
      %v2290 = vpop.f32.mrb[0].mxu0
      %v2291 = vadd.f32 0.0, %v2290
      %v2292 = vpop.f32.mrb[0].mxu0
      %v2293 = vpop.f32.mrb[0].mxu0
      %v2294 = vadd.f32 0.0, %v2293
      %v2295 = vpop.f32.mrb[0].mxu0
      %2296 = vmatprep.mubr.bf16.mxu0 0
      %2297 = vmatmul.mubr.bf16.gmra.mrb[0].mxu0 %v2079
      %v2298 = vpop.f32.mrb[0].mxu0
      %v2299 = vadd.f32 0.0, %v2298
      %v2300 = vpop.f32.mrb[0].mxu0
      %v2301 = vpop.f32.mrb[0].mxu0
      %v2302 = vadd.f32 0.0, %v2301
      %v2303 = vpop.f32.mrb[0].mxu0
      %2304 = vdwg.mxu0
      %v2305 = vadd.f32 %v1726, %v2179
      %v2306 = vadd.f32 %v1729, %v2182
      %v2307 = vadd.f32 %v1734, %v2187
      %v2308 = vadd.f32 %v1737, %v2190
      %v2309 = vadd.f32 %v1742, %v2195
      %v2310 = vadd.f32 %v1745, %v2198
      %v2311 = vadd.f32 %v1750, %v2203
      %v2312 = vadd.f32 %v1753, %v2206
      %v2313 = vadd.f32 %v1758, %v2211
      %v2314 = vadd.f32 %v1761, %v2214
      %v2315 = vadd.f32 %v1766, %v2219
      %v2316 = vadd.f32 %v1769, %v2222
      %v2317 = vadd.f32 %v1774, %v2227
      %v2318 = vadd.f32 %v1777, %v2230
      %v2319 = vadd.f32 %v1782, %v2235
      %v2320 = vadd.f32 %v1785, %v2238
      %v2321 = vadd.f32 %v1790, %v2243
      %v2322 = vadd.f32 %v1793, %v2246
      %v2323 = vadd.f32 %v1798, %v2251
      %v2324 = vadd.f32 %v1801, %v2254
      %v2325 = vadd.f32 %v1806, %v2259
      %v2326 = vadd.f32 %v1809, %v2262
      %v2327 = vadd.f32 %v1814, %v2267
      %v2328 = vadd.f32 %v1817, %v2270
      %v2329 = vadd.f32 %v1822, %v2275
      %v2330 = vadd.f32 %v1825, %v2278
      %v2331 = vadd.f32 %v1830, %v2283
      %v2332 = vadd.f32 %v1833, %v2286
      %v2333 = vadd.f32 %v1838, %v2291
      %v2334 = vadd.f32 %v1841, %v2294
      %v2335 = vadd.f32 %v1846, %v2299
      %v2336 = vadd.f32 %v1849, %v2302
      %v2337 = vld [vmem:[%s750] sm:$0xf]
      %v2338 = vld [vmem:[%s750 + $0x4] sm:$0xf]
      %v2339 = vld [vmem:[%s750 + $0xc] sm:$0xf]
      %v2340 = vld [vmem:[%s750 + $0x10] sm:$0xf]
      %v2341 = vld [vmem:[%s750 + $0x18] sm:$0xf]
      %v2342 = vld [vmem:[%s750 + $0x1c] sm:$0xf]
      %v2343 = vld [vmem:[%s750 + $0x24] sm:$0xf]
      %v2344 = vld [vmem:[%s750 + $0x28] sm:$0xf]
      %v2345 = vld [vmem:[%s750 + $0x30] sm:$0xf]
      %v2346 = vld [vmem:[%s750 + $0x34] sm:$0xf]
      %v2347 = vld [vmem:[%s750 + $0x3c] sm:$0xf]
      %v2348 = vld [vmem:[%s750 + $0x40] sm:$0xf]
      %v2349 = vld [vmem:[%s750 + $0x48] sm:$0xf]
      %v2350 = vld [vmem:[%s750 + $0x4c] sm:$0xf]
      %v2351 = vld [vmem:[%s750 + $0x54] sm:$0xf]
      %v2352 = vld [vmem:[%s750 + $0x58] sm:$0xf]
      %v2353 = vld [vmem:[%s750 + $0x60] sm:$0xf]
      %v2354 = vld [vmem:[%s750 + $0x64] sm:$0xf]
      %v2355 = vld [vmem:[%s750 + $0x6c] sm:$0xf]
      %v2356 = vld [vmem:[%s750 + $0x70] sm:$0xf]
      %v2357 = vld [vmem:[%s750 + $0x78] sm:$0xf]
      %v2358 = vld [vmem:[%s750 + $0x7c] sm:$0xf]
      %v2359 = vld [vmem:[%s750 + $0x84] sm:$0xf]
      %v2360 = vld [vmem:[%s750 + $0x88] sm:$0xf]
      %v2361 = vld [vmem:[%s750 + $0x90] sm:$0xf]
      %v2362 = vld [vmem:[%s750 + $0x94] sm:$0xf]
      %v2363 = vld [vmem:[%s750 + $0x9c] sm:$0xf]
      %v2364 = vld [vmem:[%s750 + $0xa0] sm:$0xf]
      %v2365 = vld [vmem:[%s750 + $0xa8] sm:$0xf]
      %v2366 = vld [vmem:[%s750 + $0xac] sm:$0xf]
      %v2367 = vld [vmem:[%s750 + $0xb4] sm:$0xf]
      %v2368 = vld [vmem:[%s750 + $0xb8] sm:$0xf]
      %s2369 = scalar_lea.vmem %s3, 192
      %v2370 = vld [vmem:[%s2369] sm:$0xf]
      %v2371 = vld [vmem:[%s2369 + $0x4] sm:$0xf]
      %v2372 = vld [vmem:[%s2369 + $0x8] sm:$0xf]
      %v2373 = vld [vmem:[%s2369 + $0xc] sm:$0xf]
      %v2374 = vld [vmem:[%s2369 + $0x10] sm:$0xf]
      %v2375 = vld [vmem:[%s2369 + $0x14] sm:$0xf]
      %v2376 = vld [vmem:[%s2369 + $0x18] sm:$0xf]
      %v2377 = vld [vmem:[%s2369 + $0x1c] sm:$0xf]
      %v2378 = vld [vmem:[%s2369 + $0x20] sm:$0xf]
      %v2379 = vld [vmem:[%s2369 + $0x24] sm:$0xf]
      %v2380 = vld [vmem:[%s2369 + $0x28] sm:$0xf]
      %v2381 = vld [vmem:[%s2369 + $0x2c] sm:$0xf]
      %v2382 = vld [vmem:[%s2369 + $0x30] sm:$0xf]
      %v2383 = vld [vmem:[%s2369 + $0x34] sm:$0xf]
      %v2384 = vld [vmem:[%s2369 + $0x38] sm:$0xf]
      %v2385 = vld [vmem:[%s2369 + $0x3c] sm:$0xf]
      %v2418 = vunpack.c.l.b16 %v2337
      %v2419 = vunpack.c.l.b16 %v2338
      %v2420 = vunpack.c.l.b16 %v2339
      %v2421 = vunpack.c.l.b16 %v2340
      %v2422 = vunpack.c.l.b16 %v2341
      %v2423 = vunpack.c.l.b16 %v2342
      %v2424 = vunpack.c.l.b16 %v2343
      %v2425 = vunpack.c.l.b16 %v2344
      %v2426 = vunpack.c.l.b16 %v2345
      %v2427 = vunpack.c.l.b16 %v2346
      %v2428 = vunpack.c.l.b16 %v2347
      %v2429 = vunpack.c.l.b16 %v2348
      %v2430 = vunpack.c.l.b16 %v2349
      %v2431 = vunpack.c.l.b16 %v2350
      %v2432 = vunpack.c.l.b16 %v2351
      %v2433 = vunpack.c.l.b16 %v2352
      %v2434 = vunpack.c.l.b16 %v2353
      %v2435 = vunpack.c.l.b16 %v2354
      %v2436 = vunpack.c.l.b16 %v2355
      %v2437 = vunpack.c.l.b16 %v2356
      %v2438 = vunpack.c.l.b16 %v2357
      %v2439 = vunpack.c.l.b16 %v2358
      %v2440 = vunpack.c.l.b16 %v2359
      %v2441 = vunpack.c.l.b16 %v2360
      %v2442 = vunpack.c.l.b16 %v2361
      %v2443 = vunpack.c.l.b16 %v2362
      %v2444 = vunpack.c.l.b16 %v2363
      %v2445 = vunpack.c.l.b16 %v2364
      %v2446 = vunpack.c.l.b16 %v2365
      %v2447 = vunpack.c.l.b16 %v2366
      %v2448 = vunpack.c.l.b16 %v2367
      %v2449 = vunpack.c.l.b16 %v2368
      %v2450 = vpack.c.b16 %v2419, %v2418
      %v2451 = vpack.c.b16 %v2421, %v2420
      %v2452 = vpack.c.b16 %v2423, %v2422
      %v2453 = vpack.c.b16 %v2425, %v2424
      %v2454 = vpack.c.b16 %v2427, %v2426
      %v2455 = vpack.c.b16 %v2429, %v2428
      %v2456 = vpack.c.b16 %v2431, %v2430
      %v2457 = vpack.c.b16 %v2433, %v2432
      %v2458 = vpack.c.b16 %v2435, %v2434
      %v2459 = vpack.c.b16 %v2437, %v2436
      %v2460 = vpack.c.b16 %v2439, %v2438
      %v2461 = vpack.c.b16 %v2441, %v2440
      %v2462 = vpack.c.b16 %v2443, %v2442
      %v2463 = vpack.c.b16 %v2445, %v2444
      %v2464 = vpack.c.b16 %v2447, %v2446
      %v2465 = vpack.c.b16 %v2449, %v2448
      %v2498 = vunpack.c.l.b16 %v2370
      %v2499 = vunpack.c.l.b16 %v2371
      %v2500 = vunpack.c.l.b16 %v2372
      %v2501 = vunpack.c.l.b16 %v2373
      %v2502 = vunpack.c.l.b16 %v2374
      %v2503 = vunpack.c.l.b16 %v2375
      %v2504 = vunpack.c.l.b16 %v2376
      %v2505 = vunpack.c.l.b16 %v2377
      %v2506 = vunpack.c.l.b16 %v2378
      %v2507 = vunpack.c.l.b16 %v2379
      %v2508 = vunpack.c.l.b16 %v2380
      %v2509 = vunpack.c.l.b16 %v2381
      %v2510 = vunpack.c.l.b16 %v2382
      %v2511 = vunpack.c.l.b16 %v2383
      %v2512 = vunpack.c.l.b16 %v2384
      %v2513 = vunpack.c.l.b16 %v2385
      %v2514 = vpack.c.b16 %v2499, %v2498
      %v2515 = vpack.c.b16 %v2501, %v2500
      %v2516 = vpack.c.b16 %v2503, %v2502
      %v2517 = vpack.c.b16 %v2505, %v2504
      %v2518 = vpack.c.b16 %v2507, %v2506
      %v2519 = vpack.c.b16 %v2509, %v2508
      %v2520 = vpack.c.b16 %v2511, %v2510
      %v2521 = vpack.c.b16 %v2513, %v2512
      %2530 = vmatprep.subr.bf16.mxu0 0
      %2531 = vmatpush1.bf16.msra.mxu0 %v2514
      %2532 = vmatprep.subr.bf16.mxu0 0
      %2533 = vmatpush1.bf16.msra.mxu0 %v2515
      %2534 = vmatprep.subr.bf16.mxu0 0
      %2535 = vmatpush1.bf16.msra.mxu0 %v2516
      %2536 = vmatprep.subr.bf16.mxu0 0
      %2537 = vmatpush1.bf16.msra.mxu0 %v2517
      %2538 = vmatprep.subr.bf16.mxu0 0
      %2539 = vmatpush1.bf16.msra.mxu0 %v2518
      %2540 = vmatprep.subr.bf16.mxu0 0
      %2541 = vmatpush1.bf16.msra.mxu0 %v2519
      %2542 = vmatprep.subr.bf16.mxu0 0
      %2543 = vmatpush1.bf16.msra.mxu0 %v2520
      %2544 = vmatprep.subr.bf16.mxu0 0
      %2545 = vmatpush1.bf16.msra.mxu0 %v2521
      %2546 = vmatprep.subr.bf16.mxu0 0
      %2547 = vmatpush1.bf16.msra.mxu0 0
      %2548 = vmatprep.subr.bf16.mxu0 0
      %2549 = vmatpush1.bf16.msra.mxu0 0
      %2550 = vmatprep.subr.bf16.mxu0 0
      %2551 = vmatpush1.bf16.msra.mxu0 0
      %2552 = vmatprep.subr.bf16.mxu0 0
      %2553 = vmatpush1.bf16.msra.mxu0 0
      %2554 = vmatprep.subr.bf16.mxu0 0
      %2555 = vmatpush1.bf16.msra.mxu0 0
      %2556 = vmatprep.subr.bf16.mxu0 0
      %2557 = vmatpush1.bf16.msra.mxu0 0
      %2558 = vmatprep.subr.bf16.mxu0 0
      %2559 = vmatpush1.bf16.msra.mxu0 0
      %2560 = vmatprep.subr.bf16.mxu0 0
      %2561 = vmatpush1.bf16.msra.mxu0 0
      %2562 = vmatprep.mubr.bf16.mxu0 0
      %2563 = vmatmul.mubr.bf16.gmra.mrb[0].mxu0 %v2450
      %v2564 = vpop.f32.mrb[0].mxu0
      %v2565 = vadd.f32 0.0, %v2564
      %v2566 = vpop.f32.mrb[0].mxu0
      %v2567 = vpop.f32.mrb[0].mxu0
      %v2568 = vadd.f32 0.0, %v2567
      %v2569 = vpop.f32.mrb[0].mxu0
      %2570 = vmatprep.mubr.bf16.mxu0 0
      %2571 = vmatmul.mubr.bf16.gmra.mrb[0].mxu0 %v2451
      %v2572 = vpop.f32.mrb[0].mxu0
      %v2573 = vadd.f32 0.0, %v2572
      %v2574 = vpop.f32.mrb[0].mxu0
      %v2575 = vpop.f32.mrb[0].mxu0
      %v2576 = vadd.f32 0.0, %v2575
      %v2577 = vpop.f32.mrb[0].mxu0
      %2578 = vmatprep.mubr.bf16.mxu0 0
      %2579 = vmatmul.mubr.bf16.gmra.mrb[0].mxu0 %v2452
      %v2580 = vpop.f32.mrb[0].mxu0
      %v2581 = vadd.f32 0.0, %v2580
      %v2582 = vpop.f32.mrb[0].mxu0
      %v2583 = vpop.f32.mrb[0].mxu0
      %v2584 = vadd.f32 0.0, %v2583
      %v2585 = vpop.f32.mrb[0].mxu0
      %2586 = vmatprep.mubr.bf16.mxu0 0
      %2587 = vmatmul.mubr.bf16.gmra.mrb[0].mxu0 %v2453
      %v2588 = vpop.f32.mrb[0].mxu0
      %v2589 = vadd.f32 0.0, %v2588
      %v2590 = vpop.f32.mrb[0].mxu0
      %v2591 = vpop.f32.mrb[0].mxu0
      %v2592 = vadd.f32 0.0, %v2591
      %v2593 = vpop.f32.mrb[0].mxu0
      %2594 = vmatprep.mubr.bf16.mxu0 0
      %2595 = vmatmul.mubr.bf16.gmra.mrb[0].mxu0 %v2454
      %v2596 = vpop.f32.mrb[0].mxu0
      %v2597 = vadd.f32 0.0, %v2596
      %v2598 = vpop.f32.mrb[0].mxu0
      %v2599 = vpop.f32.mrb[0].mxu0
      %v2600 = vadd.f32 0.0, %v2599
      %v2601 = vpop.f32.mrb[0].mxu0
      %2602 = vmatprep.mubr.bf16.mxu0 0
      %2603 = vmatmul.mubr.bf16.gmra.mrb[0].mxu0 %v2455
      %v2604 = vpop.f32.mrb[0].mxu0
      %v2605 = vadd.f32 0.0, %v2604
      %v2606 = vpop.f32.mrb[0].mxu0
      %v2607 = vpop.f32.mrb[0].mxu0
      %v2608 = vadd.f32 0.0, %v2607
      %v2609 = vpop.f32.mrb[0].mxu0
      %2610 = vmatprep.mubr.bf16.mxu0 0
      %2611 = vmatmul.mubr.bf16.gmra.mrb[0].mxu0 %v2456
      %v2612 = vpop.f32.mrb[0].mxu0
      %v2613 = vadd.f32 0.0, %v2612
      %v2614 = vpop.f32.mrb[0].mxu0
      %v2615 = vpop.f32.mrb[0].mxu0
      %v2616 = vadd.f32 0.0, %v2615
      %v2617 = vpop.f32.mrb[0].mxu0
      %2618 = vmatprep.mubr.bf16.mxu0 0
      %2619 = vmatmul.mubr.bf16.gmra.mrb[0].mxu0 %v2457
      %v2620 = vpop.f32.mrb[0].mxu0
      %v2621 = vadd.f32 0.0, %v2620
      %v2622 = vpop.f32.mrb[0].mxu0
      %v2623 = vpop.f32.mrb[0].mxu0
      %v2624 = vadd.f32 0.0, %v2623
      %v2625 = vpop.f32.mrb[0].mxu0
      %2626 = vmatprep.mubr.bf16.mxu0 0
      %2627 = vmatmul.mubr.bf16.gmra.mrb[0].mxu0 %v2458
      %v2628 = vpop.f32.mrb[0].mxu0
      %v2629 = vadd.f32 0.0, %v2628
      %v2630 = vpop.f32.mrb[0].mxu0
      %v2631 = vpop.f32.mrb[0].mxu0
      %v2632 = vadd.f32 0.0, %v2631
      %v2633 = vpop.f32.mrb[0].mxu0
      %2634 = vmatprep.mubr.bf16.mxu0 0
      %2635 = vmatmul.mubr.bf16.gmra.mrb[0].mxu0 %v2459
      %v2636 = vpop.f32.mrb[0].mxu0
      %v2637 = vadd.f32 0.0, %v2636
      %v2638 = vpop.f32.mrb[0].mxu0
      %v2639 = vpop.f32.mrb[0].mxu0
      %v2640 = vadd.f32 0.0, %v2639
      %v2641 = vpop.f32.mrb[0].mxu0
      %2642 = vmatprep.mubr.bf16.mxu0 0
      %2643 = vmatmul.mubr.bf16.gmra.mrb[0].mxu0 %v2460
      %v2644 = vpop.f32.mrb[0].mxu0
      %v2645 = vadd.f32 0.0, %v2644
      %v2646 = vpop.f32.mrb[0].mxu0
      %v2647 = vpop.f32.mrb[0].mxu0
      %v2648 = vadd.f32 0.0, %v2647
      %v2649 = vpop.f32.mrb[0].mxu0
      %2650 = vmatprep.mubr.bf16.mxu0 0
      %2651 = vmatmul.mubr.bf16.gmra.mrb[0].mxu0 %v2461
      %v2652 = vpop.f32.mrb[0].mxu0
      %v2653 = vadd.f32 0.0, %v2652
      %v2654 = vpop.f32.mrb[0].mxu0
      %v2655 = vpop.f32.mrb[0].mxu0
      %v2656 = vadd.f32 0.0, %v2655
      %v2657 = vpop.f32.mrb[0].mxu0
      %2658 = vmatprep.mubr.bf16.mxu0 0
      %2659 = vmatmul.mubr.bf16.gmra.mrb[0].mxu0 %v2462
      %v2660 = vpop.f32.mrb[0].mxu0
      %v2661 = vadd.f32 0.0, %v2660
      %v2662 = vpop.f32.mrb[0].mxu0
      %v2663 = vpop.f32.mrb[0].mxu0
      %v2664 = vadd.f32 0.0, %v2663
      %v2665 = vpop.f32.mrb[0].mxu0
      %2666 = vmatprep.mubr.bf16.mxu0 0
      %2667 = vmatmul.mubr.bf16.gmra.mrb[0].mxu0 %v2463
      %v2668 = vpop.f32.mrb[0].mxu0
      %v2669 = vadd.f32 0.0, %v2668
      %v2670 = vpop.f32.mrb[0].mxu0
      %v2671 = vpop.f32.mrb[0].mxu0
      %v2672 = vadd.f32 0.0, %v2671
      %v2673 = vpop.f32.mrb[0].mxu0
      %2674 = vmatprep.mubr.bf16.mxu0 0
      %2675 = vmatmul.mubr.bf16.gmra.mrb[0].mxu0 %v2464
      %v2676 = vpop.f32.mrb[0].mxu0
      %v2677 = vadd.f32 0.0, %v2676
      %v2678 = vpop.f32.mrb[0].mxu0
      %v2679 = vpop.f32.mrb[0].mxu0
      %v2680 = vadd.f32 0.0, %v2679
      %v2681 = vpop.f32.mrb[0].mxu0
      %2682 = vmatprep.mubr.bf16.mxu0 0
      %2683 = vmatmul.mubr.bf16.gmra.mrb[0].mxu0 %v2465
      %v2684 = vpop.f32.mrb[0].mxu0
      %v2685 = vadd.f32 0.0, %v2684
      %v2686 = vpop.f32.mrb[0].mxu0
      %v2687 = vpop.f32.mrb[0].mxu0
      %v2688 = vadd.f32 0.0, %v2687
      %v2689 = vpop.f32.mrb[0].mxu0
      %2690 = vdwg.mxu0
      %v2691 = vadd.f32 %v2305, %v2565
      %v2692 = vadd.f32 %v2306, %v2568
      %v2693 = vadd.f32 %v2307, %v2573
      %v2694 = vadd.f32 %v2308, %v2576
      %v2695 = vadd.f32 %v2309, %v2581
      %v2696 = vadd.f32 %v2310, %v2584
      %v2697 = vadd.f32 %v2311, %v2589
      %v2698 = vadd.f32 %v2312, %v2592
      %v2699 = vadd.f32 %v2313, %v2597
      %v2700 = vadd.f32 %v2314, %v2600
      %v2701 = vadd.f32 %v2315, %v2605
      %v2702 = vadd.f32 %v2316, %v2608
      %v2703 = vadd.f32 %v2317, %v2613
      %v2704 = vadd.f32 %v2318, %v2616
      %v2705 = vadd.f32 %v2319, %v2621
      %v2706 = vadd.f32 %v2320, %v2624
      %v2707 = vadd.f32 %v2321, %v2629
      %v2708 = vadd.f32 %v2322, %v2632
      %v2709 = vadd.f32 %v2323, %v2637
      %v2710 = vadd.f32 %v2324, %v2640
      %v2711 = vadd.f32 %v2325, %v2645
      %v2712 = vadd.f32 %v2326, %v2648
      %v2713 = vadd.f32 %v2327, %v2653
      %v2714 = vadd.f32 %v2328, %v2656
      %v2715 = vadd.f32 %v2329, %v2661
      %v2716 = vadd.f32 %v2330, %v2664
      %v2717 = vadd.f32 %v2331, %v2669
      %v2718 = vadd.f32 %v2332, %v2672
      %v2719 = vadd.f32 %v2333, %v2677
      %v2720 = vadd.f32 %v2334, %v2680
      %v2721 = vadd.f32 %v2335, %v2685
      %v2722 = vadd.f32 %v2336, %v2688
      %v2723 = vld [vmem:[%s750] sm:$0xf]
      %v2724 = vld [vmem:[%s750 + $0x4] sm:$0xf]
      %v2725 = vld [vmem:[%s750 + $0x8] sm:$0x1]
      %v2726 = vld [vmem:[%s750 + $0xc] sm:$0xf]
      %v2727 = vld [vmem:[%s750 + $0x10] sm:$0xf]
      %v2728 = vld [vmem:[%s750 + $0x14] sm:$0x1]
      %v2729 = vld [vmem:[%s750 + $0x18] sm:$0xf]
      %v2730 = vld [vmem:[%s750 + $0x1c] sm:$0xf]
      %v2731 = vld [vmem:[%s750 + $0x20] sm:$0x1]
      %v2732 = vld [vmem:[%s750 + $0x24] sm:$0xf]
      %v2733 = vld [vmem:[%s750 + $0x28] sm:$0xf]
      %v2734 = vld [vmem:[%s750 + $0x2c] sm:$0x1]
      %v2735 = vld [vmem:[%s750 + $0x30] sm:$0xf]
      %v2736 = vld [vmem:[%s750 + $0x34] sm:$0xf]
      %v2737 = vld [vmem:[%s750 + $0x38] sm:$0x1]
      %v2738 = vld [vmem:[%s750 + $0x3c] sm:$0xf]
      %v2739 = vld [vmem:[%s750 + $0x40] sm:$0xf]
      %v2740 = vld [vmem:[%s750 + $0x44] sm:$0x1]
      %v2741 = vld [vmem:[%s750 + $0x48] sm:$0xf]
      %v2742 = vld [vmem:[%s750 + $0x4c] sm:$0xf]
      %v2743 = vld [vmem:[%s750 + $0x50] sm:$0x1]
      %v2744 = vld [vmem:[%s750 + $0x54] sm:$0xf]
      %v2745 = vld [vmem:[%s750 + $0x58] sm:$0xf]
      %v2746 = vld [vmem:[%s750 + $0x5c] sm:$0x1]
      %v2747 = vld [vmem:[%s750 + $0x60] sm:$0xf]
      %v2748 = vld [vmem:[%s750 + $0x64] sm:$0xf]
      %v2749 = vld [vmem:[%s750 + $0x68] sm:$0x1]
      %v2750 = vld [vmem:[%s750 + $0x6c] sm:$0xf]
      %v2751 = vld [vmem:[%s750 + $0x70] sm:$0xf]
      %v2752 = vld [vmem:[%s750 + $0x74] sm:$0x1]
      %v2753 = vld [vmem:[%s750 + $0x78] sm:$0xf]
      %v2754 = vld [vmem:[%s750 + $0x7c] sm:$0xf]
      %v2755 = vld [vmem:[%s750 + $0x80] sm:$0x1]
      %v2756 = vld [vmem:[%s750 + $0x84] sm:$0xf]
      %v2757 = vld [vmem:[%s750 + $0x88] sm:$0xf]
      %v2758 = vld [vmem:[%s750 + $0x8c] sm:$0x1]
      %v2759 = vld [vmem:[%s750 + $0x90] sm:$0xf]
      %v2760 = vld [vmem:[%s750 + $0x94] sm:$0xf]
      %v2761 = vld [vmem:[%s750 + $0x98] sm:$0x1]
      %v2762 = vld [vmem:[%s750 + $0x9c] sm:$0xf]
      %v2763 = vld [vmem:[%s750 + $0xa0] sm:$0xf]
      %v2764 = vld [vmem:[%s750 + $0xa4] sm:$0x1]
      %v2765 = vld [vmem:[%s750 + $0xa8] sm:$0xf]
      %v2766 = vld [vmem:[%s750 + $0xac] sm:$0xf]
      %v2767 = vld [vmem:[%s750 + $0xb0] sm:$0x1]
      %v2768 = vld [vmem:[%s750 + $0xb4] sm:$0xf]
      %v2769 = vld [vmem:[%s750 + $0xb8] sm:$0xf]
      %v2770 = vld [vmem:[%s750 + $0xbc] sm:$0x1]
      %v2772 = vshrl.u32 %v2723, 16
      %v2774 = vrot.slane %v2772, 4
      %v2775 = vshll.u32 %v2723, 16
      %v2777 = vrot.slane %v2775, 5
      %v2778 = vor.u32 %v2774, %v2777
      %v2779 = vrot.slane %v2778, 4
      %v2781 = vshll.u32 %v2724, 16
      %v2783 = vrot.slane %v2781, 5
      %v2784 = vsel %vm872, %v2779, %v2783
      %v2785 = vshrl.u32 %v2724, 16
      %v2787 = vrot.slane %v2785, 4
      %v2788 = vor.u32 %v2787, %v2783
      %v2789 = vrot.slane %v2788, 4
      %v2791 = vshll.u32 %v2725, 16
      %v2793 = vrot.slane %v2791, 5
      %v2794 = vsel %vm872, %v2789, %v2793
      %v2796 = vshrl.u32 %v2726, 16
      %v2798 = vrot.slane %v2796, 4
      %v2799 = vshll.u32 %v2726, 16
      %v2801 = vrot.slane %v2799, 5
      %v2802 = vor.u32 %v2798, %v2801
      %v2803 = vrot.slane %v2802, 4
      %v2805 = vshll.u32 %v2727, 16
      %v2807 = vrot.slane %v2805, 5
      %v2808 = vsel %vm872, %v2803, %v2807
      %v2809 = vshrl.u32 %v2727, 16
      %v2811 = vrot.slane %v2809, 4
      %v2812 = vor.u32 %v2811, %v2807
      %v2813 = vrot.slane %v2812, 4
      %v2815 = vshll.u32 %v2728, 16
      %v2817 = vrot.slane %v2815, 5
      %v2818 = vsel %vm872, %v2813, %v2817
      %v2820 = vshrl.u32 %v2729, 16
      %v2822 = vrot.slane %v2820, 4
      %v2823 = vshll.u32 %v2729, 16
      %v2825 = vrot.slane %v2823, 5
      %v2826 = vor.u32 %v2822, %v2825
      %v2827 = vrot.slane %v2826, 4
      %v2829 = vshll.u32 %v2730, 16
      %v2831 = vrot.slane %v2829, 5
      %v2832 = vsel %vm872, %v2827, %v2831
      %v2833 = vshrl.u32 %v2730, 16
      %v2835 = vrot.slane %v2833, 4
      %v2836 = vor.u32 %v2835, %v2831
      %v2837 = vrot.slane %v2836, 4
      %v2839 = vshll.u32 %v2731, 16
      %v2841 = vrot.slane %v2839, 5
      %v2842 = vsel %vm872, %v2837, %v2841
      %v2844 = vshrl.u32 %v2732, 16
      %v2846 = vrot.slane %v2844, 4
      %v2847 = vshll.u32 %v2732, 16
      %v2849 = vrot.slane %v2847, 5
      %v2850 = vor.u32 %v2846, %v2849
      %v2851 = vrot.slane %v2850, 4
      %v2853 = vshll.u32 %v2733, 16
      %v2855 = vrot.slane %v2853, 5
      %v2856 = vsel %vm872, %v2851, %v2855
      %v2857 = vshrl.u32 %v2733, 16
      %v2859 = vrot.slane %v2857, 4
      %v2860 = vor.u32 %v2859, %v2855
      %v2861 = vrot.slane %v2860, 4
      %v2863 = vshll.u32 %v2734, 16
      %v2865 = vrot.slane %v2863, 5
      %v2866 = vsel %vm872, %v2861, %v2865
      %v2868 = vshrl.u32 %v2735, 16
      %v2870 = vrot.slane %v2868, 4
      %v2871 = vshll.u32 %v2735, 16
      %v2873 = vrot.slane %v2871, 5
      %v2874 = vor.u32 %v2870, %v2873
      %v2875 = vrot.slane %v2874, 4
      %v2877 = vshll.u32 %v2736, 16
      %v2879 = vrot.slane %v2877, 5
      %v2880 = vsel %vm872, %v2875, %v2879
      %v2881 = vshrl.u32 %v2736, 16
      %v2883 = vrot.slane %v2881, 4
      %v2884 = vor.u32 %v2883, %v2879
      %v2885 = vrot.slane %v2884, 4
      %v2887 = vshll.u32 %v2737, 16
      %v2889 = vrot.slane %v2887, 5
      %v2890 = vsel %vm872, %v2885, %v2889
      %v2892 = vshrl.u32 %v2738, 16
      %v2894 = vrot.slane %v2892, 4
      %v2895 = vshll.u32 %v2738, 16
      %v2897 = vrot.slane %v2895, 5
      %v2898 = vor.u32 %v2894, %v2897
      %v2899 = vrot.slane %v2898, 4
      %v2901 = vshll.u32 %v2739, 16
      %v2903 = vrot.slane %v2901, 5
      %v2904 = vsel %vm872, %v2899, %v2903
      %v2905 = vshrl.u32 %v2739, 16
      %v2907 = vrot.slane %v2905, 4
      %v2908 = vor.u32 %v2907, %v2903
      %v2909 = vrot.slane %v2908, 4
      %v2911 = vshll.u32 %v2740, 16
      %v2913 = vrot.slane %v2911, 5
      %v2914 = vsel %vm872, %v2909, %v2913
      %v2916 = vshrl.u32 %v2741, 16
      %v2918 = vrot.slane %v2916, 4
      %v2919 = vshll.u32 %v2741, 16
      %v2921 = vrot.slane %v2919, 5
      %v2922 = vor.u32 %v2918, %v2921
      %v2923 = vrot.slane %v2922, 4
      %v2925 = vshll.u32 %v2742, 16
      %v2927 = vrot.slane %v2925, 5
      %v2928 = vsel %vm872, %v2923, %v2927
      %v2929 = vshrl.u32 %v2742, 16
      %v2931 = vrot.slane %v2929, 4
      %v2932 = vor.u32 %v2931, %v2927
      %v2933 = vrot.slane %v2932, 4
      %v2935 = vshll.u32 %v2743, 16
      %v2937 = vrot.slane %v2935, 5
      %v2938 = vsel %vm872, %v2933, %v2937
      %v2940 = vshrl.u32 %v2744, 16
      %v2942 = vrot.slane %v2940, 4
      %v2943 = vshll.u32 %v2744, 16
      %v2945 = vrot.slane %v2943, 5
      %v2946 = vor.u32 %v2942, %v2945
      %v2947 = vrot.slane %v2946, 4
      %v2949 = vshll.u32 %v2745, 16
      %v2951 = vrot.slane %v2949, 5
      %v2952 = vsel %vm872, %v2947, %v2951
      %v2953 = vshrl.u32 %v2745, 16
      %v2955 = vrot.slane %v2953, 4
      %v2956 = vor.u32 %v2955, %v2951
      %v2957 = vrot.slane %v2956, 4
      %v2959 = vshll.u32 %v2746, 16
      %v2961 = vrot.slane %v2959, 5
      %v2962 = vsel %vm872, %v2957, %v2961
      %v2964 = vshrl.u32 %v2747, 16
      %v2966 = vrot.slane %v2964, 4
      %v2967 = vshll.u32 %v2747, 16
      %v2969 = vrot.slane %v2967, 5
      %v2970 = vor.u32 %v2966, %v2969
      %v2971 = vrot.slane %v2970, 4
      %v2973 = vshll.u32 %v2748, 16
      %v2975 = vrot.slane %v2973, 5
      %v2976 = vsel %vm872, %v2971, %v2975
      %v2977 = vshrl.u32 %v2748, 16
      %v2979 = vrot.slane %v2977, 4
      %v2980 = vor.u32 %v2979, %v2975
      %v2981 = vrot.slane %v2980, 4
      %v2983 = vshll.u32 %v2749, 16
      %v2985 = vrot.slane %v2983, 5
      %v2986 = vsel %vm872, %v2981, %v2985
      %v2988 = vshrl.u32 %v2750, 16
      %v2990 = vrot.slane %v2988, 4
      %v2991 = vshll.u32 %v2750, 16
      %v2993 = vrot.slane %v2991, 5
      %v2994 = vor.u32 %v2990, %v2993
      %v2995 = vrot.slane %v2994, 4
      %v2997 = vshll.u32 %v2751, 16
      %v2999 = vrot.slane %v2997, 5
      %v3000 = vsel %vm872, %v2995, %v2999
      %v3001 = vshrl.u32 %v2751, 16
      %v3003 = vrot.slane %v3001, 4
      %v3004 = vor.u32 %v3003, %v2999
      %v3005 = vrot.slane %v3004, 4
      %v3007 = vshll.u32 %v2752, 16
      %v3009 = vrot.slane %v3007, 5
      %v3010 = vsel %vm872, %v3005, %v3009
      %v3012 = vshrl.u32 %v2753, 16
      %v3014 = vrot.slane %v3012, 4
      %v3015 = vshll.u32 %v2753, 16
      %v3017 = vrot.slane %v3015, 5
      %v3018 = vor.u32 %v3014, %v3017
      %v3019 = vrot.slane %v3018, 4
      %v3021 = vshll.u32 %v2754, 16
      %v3023 = vrot.slane %v3021, 5
      %v3024 = vsel %vm872, %v3019, %v3023
      %v3025 = vshrl.u32 %v2754, 16
      %v3027 = vrot.slane %v3025, 4
      %v3028 = vor.u32 %v3027, %v3023
      %v3029 = vrot.slane %v3028, 4
      %v3031 = vshll.u32 %v2755, 16
      %v3033 = vrot.slane %v3031, 5
      %v3034 = vsel %vm872, %v3029, %v3033
      %v3036 = vshrl.u32 %v2756, 16
      %v3038 = vrot.slane %v3036, 4
      %v3039 = vshll.u32 %v2756, 16
      %v3041 = vrot.slane %v3039, 5
      %v3042 = vor.u32 %v3038, %v3041
      %v3043 = vrot.slane %v3042, 4
      %v3045 = vshll.u32 %v2757, 16
      %v3047 = vrot.slane %v3045, 5
      %v3048 = vsel %vm872, %v3043, %v3047
      %v3049 = vshrl.u32 %v2757, 16
      %v3051 = vrot.slane %v3049, 4
      %v3052 = vor.u32 %v3051, %v3047
      %v3053 = vrot.slane %v3052, 4
      %v3055 = vshll.u32 %v2758, 16
      %v3057 = vrot.slane %v3055, 5
      %v3058 = vsel %vm872, %v3053, %v3057
      %v3060 = vshrl.u32 %v2759, 16
      %v3062 = vrot.slane %v3060, 4
      %v3063 = vshll.u32 %v2759, 16
      %v3065 = vrot.slane %v3063, 5
      %v3066 = vor.u32 %v3062, %v3065
      %v3067 = vrot.slane %v3066, 4
      %v3069 = vshll.u32 %v2760, 16
      %v3071 = vrot.slane %v3069, 5
      %v3072 = vsel %vm872, %v3067, %v3071
      %v3073 = vshrl.u32 %v2760, 16
      %v3075 = vrot.slane %v3073, 4
      %v3076 = vor.u32 %v3075, %v3071
      %v3077 = vrot.slane %v3076, 4
      %v3079 = vshll.u32 %v2761, 16
      %v3081 = vrot.slane %v3079, 5
      %v3082 = vsel %vm872, %v3077, %v3081
      %v3084 = vshrl.u32 %v2762, 16
      %v3086 = vrot.slane %v3084, 4
      %v3087 = vshll.u32 %v2762, 16
      %v3089 = vrot.slane %v3087, 5
      %v3090 = vor.u32 %v3086, %v3089
      %v3091 = vrot.slane %v3090, 4
      %v3093 = vshll.u32 %v2763, 16
      %v3095 = vrot.slane %v3093, 5
      %v3096 = vsel %vm872, %v3091, %v3095
      %v3097 = vshrl.u32 %v2763, 16
      %v3099 = vrot.slane %v3097, 4
      %v3100 = vor.u32 %v3099, %v3095
      %v3101 = vrot.slane %v3100, 4
      %v3103 = vshll.u32 %v2764, 16
      %v3105 = vrot.slane %v3103, 5
      %v3106 = vsel %vm872, %v3101, %v3105
      %v3108 = vshrl.u32 %v2765, 16
      %v3110 = vrot.slane %v3108, 4
      %v3111 = vshll.u32 %v2765, 16
      %v3113 = vrot.slane %v3111, 5
      %v3114 = vor.u32 %v3110, %v3113
      %v3115 = vrot.slane %v3114, 4
      %v3117 = vshll.u32 %v2766, 16
      %v3119 = vrot.slane %v3117, 5
      %v3120 = vsel %vm872, %v3115, %v3119
      %v3121 = vshrl.u32 %v2766, 16
      %v3123 = vrot.slane %v3121, 4
      %v3124 = vor.u32 %v3123, %v3119
      %v3125 = vrot.slane %v3124, 4
      %v3127 = vshll.u32 %v2767, 16
      %v3129 = vrot.slane %v3127, 5
      %v3130 = vsel %vm872, %v3125, %v3129
      %v3132 = vshrl.u32 %v2768, 16
      %v3134 = vrot.slane %v3132, 4
      %v3135 = vshll.u32 %v2768, 16
      %v3137 = vrot.slane %v3135, 5
      %v3138 = vor.u32 %v3134, %v3137
      %v3139 = vrot.slane %v3138, 4
      %v3141 = vshll.u32 %v2769, 16
      %v3143 = vrot.slane %v3141, 5
      %v3144 = vsel %vm872, %v3139, %v3143
      %v3145 = vshrl.u32 %v2769, 16
      %v3147 = vrot.slane %v3145, 4
      %v3148 = vor.u32 %v3147, %v3143
      %v3149 = vrot.slane %v3148, 4
      %v3151 = vshll.u32 %v2770, 16
      %v3153 = vrot.slane %v3151, 5
      %v3154 = vsel %vm872, %v3149, %v3153
      %s3155 = scalar_lea.vmem %s3, 256
      %v3156 = vld [vmem:[%s3155] sm:$0xf]
      %v3157 = vld [vmem:[%s3155 + $0x4] sm:$0xf]
      %v3158 = vld [vmem:[%s3155 + $0x8] sm:$0xf]
      %v3159 = vld [vmem:[%s3155 + $0xc] sm:$0xf]
      %v3160 = vld [vmem:[%s3155 + $0x10] sm:$0xf]
      %v3161 = vld [vmem:[%s3155 + $0x14] sm:$0xf]
      %v3162 = vld [vmem:[%s3155 + $0x18] sm:$0xf]
      %v3163 = vld [vmem:[%s3155 + $0x1c] sm:$0xf]
      %v3164 = vld [vmem:[%s3155 + $0x20] sm:$0xf]
      %v3165 = vld [vmem:[%s3155 + $0x24] sm:$0xf]
      %v3166 = vld [vmem:[%s3155 + $0x28] sm:$0xf]
      %v3167 = vld [vmem:[%s3155 + $0x2c] sm:$0xf]
      %v3168 = vld [vmem:[%s3155 + $0x30] sm:$0xf]
      %v3169 = vld [vmem:[%s3155 + $0x34] sm:$0xf]
      %v3170 = vld [vmem:[%s3155 + $0x38] sm:$0xf]
      %v3171 = vld [vmem:[%s3155 + $0x3c] sm:$0xf]
      %v3172 = vunpack.c.l.b16 %v2784
      %v3173 = vunpack.c.l.b16 %v2794
      %v3174 = vunpack.c.l.b16 %v2808
      %v3175 = vunpack.c.l.b16 %v2818
      %v3176 = vunpack.c.l.b16 %v2832
      %v3177 = vunpack.c.l.b16 %v2842
      %v3178 = vunpack.c.l.b16 %v2856
      %v3179 = vunpack.c.l.b16 %v2866
      %v3180 = vunpack.c.l.b16 %v2880
      %v3181 = vunpack.c.l.b16 %v2890
      %v3182 = vunpack.c.l.b16 %v2904
      %v3183 = vunpack.c.l.b16 %v2914
      %v3184 = vunpack.c.l.b16 %v2928
      %v3185 = vunpack.c.l.b16 %v2938
      %v3186 = vunpack.c.l.b16 %v2952
      %v3187 = vunpack.c.l.b16 %v2962
      %v3188 = vunpack.c.l.b16 %v2976
      %v3189 = vunpack.c.l.b16 %v2986
      %v3190 = vunpack.c.l.b16 %v3000
      %v3191 = vunpack.c.l.b16 %v3010
      %v3192 = vunpack.c.l.b16 %v3024
      %v3193 = vunpack.c.l.b16 %v3034
      %v3194 = vunpack.c.l.b16 %v3048
      %v3195 = vunpack.c.l.b16 %v3058
      %v3196 = vunpack.c.l.b16 %v3072
      %v3197 = vunpack.c.l.b16 %v3082
      %v3198 = vunpack.c.l.b16 %v3096
      %v3199 = vunpack.c.l.b16 %v3106
      %v3200 = vunpack.c.l.b16 %v3120
      %v3201 = vunpack.c.l.b16 %v3130
      %v3202 = vunpack.c.l.b16 %v3144
      %v3203 = vunpack.c.l.b16 %v3154
      %v3204 = vpack.c.b16 %v3173, %v3172
      %v3205 = vpack.c.b16 %v3175, %v3174
      %v3206 = vpack.c.b16 %v3177, %v3176
      %v3207 = vpack.c.b16 %v3179, %v3178
      %v3208 = vpack.c.b16 %v3181, %v3180
      %v3209 = vpack.c.b16 %v3183, %v3182
      %v3210 = vpack.c.b16 %v3185, %v3184
      %v3211 = vpack.c.b16 %v3187, %v3186
      %v3212 = vpack.c.b16 %v3189, %v3188
      %v3213 = vpack.c.b16 %v3191, %v3190
      %v3214 = vpack.c.b16 %v3193, %v3192
      %v3215 = vpack.c.b16 %v3195, %v3194
      %v3216 = vpack.c.b16 %v3197, %v3196
      %v3217 = vpack.c.b16 %v3199, %v3198
      %v3218 = vpack.c.b16 %v3201, %v3200
      %v3219 = vpack.c.b16 %v3203, %v3202
      %v3252 = vunpack.c.l.b16 %v3156
      %v3253 = vunpack.c.l.b16 %v3157
      %v3254 = vunpack.c.l.b16 %v3158
      %v3255 = vunpack.c.l.b16 %v3159
      %v3256 = vunpack.c.l.b16 %v3160
      %v3257 = vunpack.c.l.b16 %v3161
      %v3258 = vunpack.c.l.b16 %v3162
      %v3259 = vunpack.c.l.b16 %v3163
      %v3260 = vunpack.c.l.b16 %v3164
      %v3261 = vunpack.c.l.b16 %v3165
      %v3262 = vunpack.c.l.b16 %v3166
      %v3263 = vunpack.c.l.b16 %v3167
      %v3264 = vunpack.c.l.b16 %v3168
      %v3265 = vunpack.c.l.b16 %v3169
      %v3266 = vunpack.c.l.b16 %v3170
      %v3267 = vunpack.c.l.b16 %v3171
      %v3268 = vpack.c.b16 %v3253, %v3252
      %v3269 = vpack.c.b16 %v3255, %v3254
      %v3270 = vpack.c.b16 %v3257, %v3256
      %v3271 = vpack.c.b16 %v3259, %v3258
      %v3272 = vpack.c.b16 %v3261, %v3260
      %v3273 = vpack.c.b16 %v3263, %v3262
      %v3274 = vpack.c.b16 %v3265, %v3264
      %v3275 = vpack.c.b16 %v3267, %v3266
      %3284 = vmatprep.subr.bf16.mxu0 0
      %3285 = vmatpush1.bf16.msra.mxu0 %v3268
      %3286 = vmatprep.subr.bf16.mxu0 0
      %3287 = vmatpush1.bf16.msra.mxu0 %v3269
      %3288 = vmatprep.subr.bf16.mxu0 0
      %3289 = vmatpush1.bf16.msra.mxu0 %v3270
      %3290 = vmatprep.subr.bf16.mxu0 0
      %3291 = vmatpush1.bf16.msra.mxu0 %v3271
      %3292 = vmatprep.subr.bf16.mxu0 0
      %3293 = vmatpush1.bf16.msra.mxu0 %v3272
      %3294 = vmatprep.subr.bf16.mxu0 0
      %3295 = vmatpush1.bf16.msra.mxu0 %v3273
      %3296 = vmatprep.subr.bf16.mxu0 0
      %3297 = vmatpush1.bf16.msra.mxu0 %v3274
      %3298 = vmatprep.subr.bf16.mxu0 0
      %3299 = vmatpush1.bf16.msra.mxu0 %v3275
      %3300 = vmatprep.subr.bf16.mxu0 0
      %3301 = vmatpush1.bf16.msra.mxu0 0
      %3302 = vmatprep.subr.bf16.mxu0 0
      %3303 = vmatpush1.bf16.msra.mxu0 0
      %3304 = vmatprep.subr.bf16.mxu0 0
      %3305 = vmatpush1.bf16.msra.mxu0 0
      %3306 = vmatprep.subr.bf16.mxu0 0
      %3307 = vmatpush1.bf16.msra.mxu0 0
      %3308 = vmatprep.subr.bf16.mxu0 0
      %3309 = vmatpush1.bf16.msra.mxu0 0
      %3310 = vmatprep.subr.bf16.mxu0 0
      %3311 = vmatpush1.bf16.msra.mxu0 0
      %3312 = vmatprep.subr.bf16.mxu0 0
      %3313 = vmatpush1.bf16.msra.mxu0 0
      %3314 = vmatprep.subr.bf16.mxu0 0
      %3315 = vmatpush1.bf16.msra.mxu0 0
      %3316 = vmatprep.mubr.bf16.mxu0 0
      %3317 = vmatmul.mubr.bf16.gmra.mrb[0].mxu0 %v3204
      %v3318 = vpop.f32.mrb[0].mxu0
      %v3319 = vadd.f32 0.0, %v3318
      %v3320 = vpop.f32.mrb[0].mxu0
      %v3321 = vpop.f32.mrb[0].mxu0
      %v3322 = vadd.f32 0.0, %v3321
      %v3323 = vpop.f32.mrb[0].mxu0
      %3324 = vmatprep.mubr.bf16.mxu0 0
      %3325 = vmatmul.mubr.bf16.gmra.mrb[0].mxu0 %v3205
      %v3326 = vpop.f32.mrb[0].mxu0
      %v3327 = vadd.f32 0.0, %v3326
      %v3328 = vpop.f32.mrb[0].mxu0
      %v3329 = vpop.f32.mrb[0].mxu0
      %v3330 = vadd.f32 0.0, %v3329
      %v3331 = vpop.f32.mrb[0].mxu0
      %3332 = vmatprep.mubr.bf16.mxu0 0
      %3333 = vmatmul.mubr.bf16.gmra.mrb[0].mxu0 %v3206
      %v3334 = vpop.f32.mrb[0].mxu0
      %v3335 = vadd.f32 0.0, %v3334
      %v3336 = vpop.f32.mrb[0].mxu0
      %v3337 = vpop.f32.mrb[0].mxu0
      %v3338 = vadd.f32 0.0, %v3337
      %v3339 = vpop.f32.mrb[0].mxu0
      %3340 = vmatprep.mubr.bf16.mxu0 0
      %3341 = vmatmul.mubr.bf16.gmra.mrb[0].mxu0 %v3207
      %v3342 = vpop.f32.mrb[0].mxu0
      %v3343 = vadd.f32 0.0, %v3342
      %v3344 = vpop.f32.mrb[0].mxu0
      %v3345 = vpop.f32.mrb[0].mxu0
      %v3346 = vadd.f32 0.0, %v3345
      %v3347 = vpop.f32.mrb[0].mxu0
      %3348 = vmatprep.mubr.bf16.mxu0 0
      %3349 = vmatmul.mubr.bf16.gmra.mrb[0].mxu0 %v3208
      %v3350 = vpop.f32.mrb[0].mxu0
      %v3351 = vadd.f32 0.0, %v3350
      %v3352 = vpop.f32.mrb[0].mxu0
      %v3353 = vpop.f32.mrb[0].mxu0
      %v3354 = vadd.f32 0.0, %v3353
      %v3355 = vpop.f32.mrb[0].mxu0
      %3356 = vmatprep.mubr.bf16.mxu0 0
      %3357 = vmatmul.mubr.bf16.gmra.mrb[0].mxu0 %v3209
      %v3358 = vpop.f32.mrb[0].mxu0
      %v3359 = vadd.f32 0.0, %v3358
      %v3360 = vpop.f32.mrb[0].mxu0
      %v3361 = vpop.f32.mrb[0].mxu0
      %v3362 = vadd.f32 0.0, %v3361
      %v3363 = vpop.f32.mrb[0].mxu0
      %3364 = vmatprep.mubr.bf16.mxu0 0
      %3365 = vmatmul.mubr.bf16.gmra.mrb[0].mxu0 %v3210
      %v3366 = vpop.f32.mrb[0].mxu0
      %v3367 = vadd.f32 0.0, %v3366
      %v3368 = vpop.f32.mrb[0].mxu0
      %v3369 = vpop.f32.mrb[0].mxu0
      %v3370 = vadd.f32 0.0, %v3369
      %v3371 = vpop.f32.mrb[0].mxu0
      %3372 = vmatprep.mubr.bf16.mxu0 0
      %3373 = vmatmul.mubr.bf16.gmra.mrb[0].mxu0 %v3211
      %v3374 = vpop.f32.mrb[0].mxu0
      %v3375 = vadd.f32 0.0, %v3374
      %v3376 = vpop.f32.mrb[0].mxu0
      %v3377 = vpop.f32.mrb[0].mxu0
      %v3378 = vadd.f32 0.0, %v3377
      %v3379 = vpop.f32.mrb[0].mxu0
      %3380 = vmatprep.mubr.bf16.mxu0 0
      %3381 = vmatmul.mubr.bf16.gmra.mrb[0].mxu0 %v3212
      %v3382 = vpop.f32.mrb[0].mxu0
      %v3383 = vadd.f32 0.0, %v3382
      %v3384 = vpop.f32.mrb[0].mxu0
      %v3385 = vpop.f32.mrb[0].mxu0
      %v3386 = vadd.f32 0.0, %v3385
      %v3387 = vpop.f32.mrb[0].mxu0
      %3388 = vmatprep.mubr.bf16.mxu0 0
      %3389 = vmatmul.mubr.bf16.gmra.mrb[0].mxu0 %v3213
      %v3390 = vpop.f32.mrb[0].mxu0
      %v3391 = vadd.f32 0.0, %v3390
      %v3392 = vpop.f32.mrb[0].mxu0
      %v3393 = vpop.f32.mrb[0].mxu0
      %v3394 = vadd.f32 0.0, %v3393
      %v3395 = vpop.f32.mrb[0].mxu0
      %3396 = vmatprep.mubr.bf16.mxu0 0
      %3397 = vmatmul.mubr.bf16.gmra.mrb[0].mxu0 %v3214
      %v3398 = vpop.f32.mrb[0].mxu0
      %v3399 = vadd.f32 0.0, %v3398
      %v3400 = vpop.f32.mrb[0].mxu0
      %v3401 = vpop.f32.mrb[0].mxu0
      %v3402 = vadd.f32 0.0, %v3401
      %v3403 = vpop.f32.mrb[0].mxu0
      %3404 = vmatprep.mubr.bf16.mxu0 0
      %3405 = vmatmul.mubr.bf16.gmra.mrb[0].mxu0 %v3215
      %v3406 = vpop.f32.mrb[0].mxu0
      %v3407 = vadd.f32 0.0, %v3406
      %v3408 = vpop.f32.mrb[0].mxu0
      %v3409 = vpop.f32.mrb[0].mxu0
      %v3410 = vadd.f32 0.0, %v3409
      %v3411 = vpop.f32.mrb[0].mxu0
      %3412 = vmatprep.mubr.bf16.mxu0 0
      %3413 = vmatmul.mubr.bf16.gmra.mrb[0].mxu0 %v3216
      %v3414 = vpop.f32.mrb[0].mxu0
      %v3415 = vadd.f32 0.0, %v3414
      %v3416 = vpop.f32.mrb[0].mxu0
      %v3417 = vpop.f32.mrb[0].mxu0
      %v3418 = vadd.f32 0.0, %v3417
      %v3419 = vpop.f32.mrb[0].mxu0
      %3420 = vmatprep.mubr.bf16.mxu0 0
      %3421 = vmatmul.mubr.bf16.gmra.mrb[0].mxu0 %v3217
      %v3422 = vpop.f32.mrb[0].mxu0
      %v3423 = vadd.f32 0.0, %v3422
      %v3424 = vpop.f32.mrb[0].mxu0
      %v3425 = vpop.f32.mrb[0].mxu0
      %v3426 = vadd.f32 0.0, %v3425
      %v3427 = vpop.f32.mrb[0].mxu0
      %3428 = vmatprep.mubr.bf16.mxu0 0
      %3429 = vmatmul.mubr.bf16.gmra.mrb[0].mxu0 %v3218
      %v3430 = vpop.f32.mrb[0].mxu0
      %v3431 = vadd.f32 0.0, %v3430
      %v3432 = vpop.f32.mrb[0].mxu0
      %v3433 = vpop.f32.mrb[0].mxu0
      %v3434 = vadd.f32 0.0, %v3433
      %v3435 = vpop.f32.mrb[0].mxu0
      %3436 = vmatprep.mubr.bf16.mxu0 0
      %3437 = vmatmul.mubr.bf16.gmra.mrb[0].mxu0 %v3219
      %v3438 = vpop.f32.mrb[0].mxu0
      %v3439 = vadd.f32 0.0, %v3438
      %v3440 = vpop.f32.mrb[0].mxu0
      %v3441 = vpop.f32.mrb[0].mxu0
      %v3442 = vadd.f32 0.0, %v3441
      %v3443 = vpop.f32.mrb[0].mxu0
      %3444 = vdwg.mxu0
      %v3445 = vadd.f32 %v2691, %v3319
      %v3446 = vadd.f32 %v2692, %v3322
      %v3447 = vadd.f32 %v2693, %v3327
      %v3448 = vadd.f32 %v2694, %v3330
      %v3449 = vadd.f32 %v2695, %v3335
      %v3450 = vadd.f32 %v2696, %v3338
      %v3451 = vadd.f32 %v2697, %v3343
      %v3452 = vadd.f32 %v2698, %v3346
      %v3453 = vadd.f32 %v2699, %v3351
      %v3454 = vadd.f32 %v2700, %v3354
      %v3455 = vadd.f32 %v2701, %v3359
      %v3456 = vadd.f32 %v2702, %v3362
      %v3457 = vadd.f32 %v2703, %v3367
      %v3458 = vadd.f32 %v2704, %v3370
      %v3459 = vadd.f32 %v2705, %v3375
      %v3460 = vadd.f32 %v2706, %v3378
      %v3461 = vadd.f32 %v2707, %v3383
      %v3462 = vadd.f32 %v2708, %v3386
      %v3463 = vadd.f32 %v2709, %v3391
      %v3464 = vadd.f32 %v2710, %v3394
      %v3465 = vadd.f32 %v2711, %v3399
      %v3466 = vadd.f32 %v2712, %v3402
      %v3467 = vadd.f32 %v2713, %v3407
      %v3468 = vadd.f32 %v2714, %v3410
      %v3469 = vadd.f32 %v2715, %v3415
      %v3470 = vadd.f32 %v2716, %v3418
      %v3471 = vadd.f32 %v2717, %v3423
      %v3472 = vadd.f32 %v2718, %v3426
      %v3473 = vadd.f32 %v2719, %v3431
      %v3474 = vadd.f32 %v2720, %v3434
      %v3475 = vadd.f32 %v2721, %v3439
      %v3476 = vadd.f32 %v2722, %v3442
      %v3477 = vld [vmem:[%s750] sm:$0xe]
      %v3478 = vld [vmem:[%s750 + $0xc] sm:$0xe]
      %v3479 = vld [vmem:[%s750 + $0x18] sm:$0xe]
      %v3480 = vld [vmem:[%s750 + $0x24] sm:$0xe]
      %v3481 = vld [vmem:[%s750 + $0x30] sm:$0xe]
      %v3482 = vld [vmem:[%s750 + $0x3c] sm:$0xe]
      %v3483 = vld [vmem:[%s750 + $0x48] sm:$0xe]
      %v3484 = vld [vmem:[%s750 + $0x54] sm:$0xe]
      %v3485 = vld [vmem:[%s750 + $0x60] sm:$0xe]
      %v3486 = vld [vmem:[%s750 + $0x6c] sm:$0xe]
      %v3487 = vld [vmem:[%s750 + $0x78] sm:$0xe]
      %v3488 = vld [vmem:[%s750 + $0x84] sm:$0xe]
      %v3489 = vld [vmem:[%s750 + $0x90] sm:$0xe]
      %v3490 = vld [vmem:[%s750 + $0x9c] sm:$0xe]
      %v3491 = vld [vmem:[%s750 + $0xa8] sm:$0xe]
      %v3492 = vld [vmem:[%s750 + $0xb4] sm:$0xe]
      %v3541 = vrot.slane %v3477, 5
      %v3542 = vrot.slane %v3541, 4
      %v3543 = vrot.slane %v2724, 5
      %v3544 = vsel %vm1902, %v3542, %v3543
      %v3545 = vrot.slane %v3543, 4
      %v3546 = vrot.slane %v2725, 5
      %v3547 = vsel %vm1902, %v3545, %v3546
      %v3548 = vrot.slane %v3478, 5
      %v3549 = vrot.slane %v3548, 4
      %v3550 = vrot.slane %v2727, 5
      %v3551 = vsel %vm1902, %v3549, %v3550
      %v3552 = vrot.slane %v3550, 4
      %v3553 = vrot.slane %v2728, 5
      %v3554 = vsel %vm1902, %v3552, %v3553
      %v3555 = vrot.slane %v3479, 5
      %v3556 = vrot.slane %v3555, 4
      %v3557 = vrot.slane %v2730, 5
      %v3558 = vsel %vm1902, %v3556, %v3557
      %v3559 = vrot.slane %v3557, 4
      %v3560 = vrot.slane %v2731, 5
      %v3561 = vsel %vm1902, %v3559, %v3560
      %v3562 = vrot.slane %v3480, 5
      %v3563 = vrot.slane %v3562, 4
      %v3564 = vrot.slane %v2733, 5
      %v3565 = vsel %vm1902, %v3563, %v3564
      %v3566 = vrot.slane %v3564, 4
      %v3567 = vrot.slane %v2734, 5
      %v3568 = vsel %vm1902, %v3566, %v3567
      %v3569 = vrot.slane %v3481, 5
      %v3570 = vrot.slane %v3569, 4
      %v3571 = vrot.slane %v2736, 5
      %v3572 = vsel %vm1902, %v3570, %v3571
      %v3573 = vrot.slane %v3571, 4
      %v3574 = vrot.slane %v2737, 5
      %v3575 = vsel %vm1902, %v3573, %v3574
      %v3576 = vrot.slane %v3482, 5
      %v3577 = vrot.slane %v3576, 4
      %v3578 = vrot.slane %v2739, 5
      %v3579 = vsel %vm1902, %v3577, %v3578
      %v3580 = vrot.slane %v3578, 4
      %v3581 = vrot.slane %v2740, 5
      %v3582 = vsel %vm1902, %v3580, %v3581
      %v3583 = vrot.slane %v3483, 5
      %v3584 = vrot.slane %v3583, 4
      %v3585 = vrot.slane %v2742, 5
      %v3586 = vsel %vm1902, %v3584, %v3585
      %v3587 = vrot.slane %v3585, 4
      %v3588 = vrot.slane %v2743, 5
      %v3589 = vsel %vm1902, %v3587, %v3588
      %v3590 = vrot.slane %v3484, 5
      %v3591 = vrot.slane %v3590, 4
      %v3592 = vrot.slane %v2745, 5
      %v3593 = vsel %vm1902, %v3591, %v3592
      %v3594 = vrot.slane %v3592, 4
      %v3595 = vrot.slane %v2746, 5
      %v3596 = vsel %vm1902, %v3594, %v3595
      %v3597 = vrot.slane %v3485, 5
      %v3598 = vrot.slane %v3597, 4
      %v3599 = vrot.slane %v2748, 5
      %v3600 = vsel %vm1902, %v3598, %v3599
      %v3601 = vrot.slane %v3599, 4
      %v3602 = vrot.slane %v2749, 5
      %v3603 = vsel %vm1902, %v3601, %v3602
      %v3604 = vrot.slane %v3486, 5
      %v3605 = vrot.slane %v3604, 4
      %v3606 = vrot.slane %v2751, 5
      %v3607 = vsel %vm1902, %v3605, %v3606
      %v3608 = vrot.slane %v3606, 4
      %v3609 = vrot.slane %v2752, 5
      %v3610 = vsel %vm1902, %v3608, %v3609
      %v3611 = vrot.slane %v3487, 5
      %v3612 = vrot.slane %v3611, 4
      %v3613 = vrot.slane %v2754, 5
      %v3614 = vsel %vm1902, %v3612, %v3613
      %v3615 = vrot.slane %v3613, 4
      %v3616 = vrot.slane %v2755, 5
      %v3617 = vsel %vm1902, %v3615, %v3616
      %v3618 = vrot.slane %v3488, 5
      %v3619 = vrot.slane %v3618, 4
      %v3620 = vrot.slane %v2757, 5
      %v3621 = vsel %vm1902, %v3619, %v3620
      %v3622 = vrot.slane %v3620, 4
      %v3623 = vrot.slane %v2758, 5
      %v3624 = vsel %vm1902, %v3622, %v3623
      %v3625 = vrot.slane %v3489, 5
      %v3626 = vrot.slane %v3625, 4
      %v3627 = vrot.slane %v2760, 5
      %v3628 = vsel %vm1902, %v3626, %v3627
      %v3629 = vrot.slane %v3627, 4
      %v3630 = vrot.slane %v2761, 5
      %v3631 = vsel %vm1902, %v3629, %v3630
      %v3632 = vrot.slane %v3490, 5
      %v3633 = vrot.slane %v3632, 4
      %v3634 = vrot.slane %v2763, 5
      %v3635 = vsel %vm1902, %v3633, %v3634
      %v3636 = vrot.slane %v3634, 4
      %v3637 = vrot.slane %v2764, 5
      %v3638 = vsel %vm1902, %v3636, %v3637
      %v3639 = vrot.slane %v3491, 5
      %v3640 = vrot.slane %v3639, 4
      %v3641 = vrot.slane %v2766, 5
      %v3642 = vsel %vm1902, %v3640, %v3641
      %v3643 = vrot.slane %v3641, 4
      %v3644 = vrot.slane %v2767, 5
      %v3645 = vsel %vm1902, %v3643, %v3644
      %v3646 = vrot.slane %v3492, 5
      %v3647 = vrot.slane %v3646, 4
      %v3648 = vrot.slane %v2769, 5
      %v3649 = vsel %vm1902, %v3647, %v3648
      %v3650 = vrot.slane %v3648, 4
      %v3651 = vrot.slane %v2770, 5
      %v3652 = vsel %vm1902, %v3650, %v3651
      %s3653 = scalar_lea.vmem %s3, 320
      %v3654 = vld [vmem:[%s3653] sm:$0xf]
      %v3655 = vld [vmem:[%s3653 + $0x4] sm:$0xf]
      %v3656 = vld [vmem:[%s3653 + $0x8] sm:$0xf]
      %v3657 = vld [vmem:[%s3653 + $0xc] sm:$0xf]
      %v3658 = vld [vmem:[%s3653 + $0x10] sm:$0xf]
      %v3659 = vld [vmem:[%s3653 + $0x14] sm:$0xf]
      %v3660 = vld [vmem:[%s3653 + $0x18] sm:$0xf]
      %v3661 = vld [vmem:[%s3653 + $0x1c] sm:$0xf]
      %v3662 = vld [vmem:[%s3653 + $0x20] sm:$0xf]
      %v3663 = vld [vmem:[%s3653 + $0x24] sm:$0xf]
      %v3664 = vld [vmem:[%s3653 + $0x28] sm:$0xf]
      %v3665 = vld [vmem:[%s3653 + $0x2c] sm:$0xf]
      %v3666 = vld [vmem:[%s3653 + $0x30] sm:$0xf]
      %v3667 = vld [vmem:[%s3653 + $0x34] sm:$0xf]
      %v3668 = vld [vmem:[%s3653 + $0x38] sm:$0xf]
      %v3669 = vld [vmem:[%s3653 + $0x3c] sm:$0xf]
      %v3670 = vunpack.c.l.b16 %v3544
      %v3671 = vunpack.c.l.b16 %v3547
      %v3672 = vunpack.c.l.b16 %v3551
      %v3673 = vunpack.c.l.b16 %v3554
      %v3674 = vunpack.c.l.b16 %v3558
      %v3675 = vunpack.c.l.b16 %v3561
      %v3676 = vunpack.c.l.b16 %v3565
      %v3677 = vunpack.c.l.b16 %v3568
      %v3678 = vunpack.c.l.b16 %v3572
      %v3679 = vunpack.c.l.b16 %v3575
      %v3680 = vunpack.c.l.b16 %v3579
      %v3681 = vunpack.c.l.b16 %v3582
      %v3682 = vunpack.c.l.b16 %v3586
      %v3683 = vunpack.c.l.b16 %v3589
      %v3684 = vunpack.c.l.b16 %v3593
      %v3685 = vunpack.c.l.b16 %v3596
      %v3686 = vunpack.c.l.b16 %v3600
      %v3687 = vunpack.c.l.b16 %v3603
      %v3688 = vunpack.c.l.b16 %v3607
      %v3689 = vunpack.c.l.b16 %v3610
      %v3690 = vunpack.c.l.b16 %v3614
      %v3691 = vunpack.c.l.b16 %v3617
      %v3692 = vunpack.c.l.b16 %v3621
      %v3693 = vunpack.c.l.b16 %v3624
      %v3694 = vunpack.c.l.b16 %v3628
      %v3695 = vunpack.c.l.b16 %v3631
      %v3696 = vunpack.c.l.b16 %v3635
      %v3697 = vunpack.c.l.b16 %v3638
      %v3698 = vunpack.c.l.b16 %v3642
      %v3699 = vunpack.c.l.b16 %v3645
      %v3700 = vunpack.c.l.b16 %v3649
      %v3701 = vunpack.c.l.b16 %v3652
      %v3702 = vpack.c.b16 %v3671, %v3670
      %v3703 = vpack.c.b16 %v3673, %v3672
      %v3704 = vpack.c.b16 %v3675, %v3674
      %v3705 = vpack.c.b16 %v3677, %v3676
      %v3706 = vpack.c.b16 %v3679, %v3678
      %v3707 = vpack.c.b16 %v3681, %v3680
      %v3708 = vpack.c.b16 %v3683, %v3682
      %v3709 = vpack.c.b16 %v3685, %v3684
      %v3710 = vpack.c.b16 %v3687, %v3686
      %v3711 = vpack.c.b16 %v3689, %v3688
      %v3712 = vpack.c.b16 %v3691, %v3690
      %v3713 = vpack.c.b16 %v3693, %v3692
      %v3714 = vpack.c.b16 %v3695, %v3694
      %v3715 = vpack.c.b16 %v3697, %v3696
      %v3716 = vpack.c.b16 %v3699, %v3698
      %v3717 = vpack.c.b16 %v3701, %v3700
      %v3750 = vunpack.c.l.b16 %v3654
      %v3751 = vunpack.c.l.b16 %v3655
      %v3752 = vunpack.c.l.b16 %v3656
      %v3753 = vunpack.c.l.b16 %v3657
      %v3754 = vunpack.c.l.b16 %v3658
      %v3755 = vunpack.c.l.b16 %v3659
      %v3756 = vunpack.c.l.b16 %v3660
      %v3757 = vunpack.c.l.b16 %v3661
      %v3758 = vunpack.c.l.b16 %v3662
      %v3759 = vunpack.c.l.b16 %v3663
      %v3760 = vunpack.c.l.b16 %v3664
      %v3761 = vunpack.c.l.b16 %v3665
      %v3762 = vunpack.c.l.b16 %v3666
      %v3763 = vunpack.c.l.b16 %v3667
      %v3764 = vunpack.c.l.b16 %v3668
      %v3765 = vunpack.c.l.b16 %v3669
      %v3766 = vpack.c.b16 %v3751, %v3750
      %v3767 = vpack.c.b16 %v3753, %v3752
      %v3768 = vpack.c.b16 %v3755, %v3754
      %v3769 = vpack.c.b16 %v3757, %v3756
      %v3770 = vpack.c.b16 %v3759, %v3758
      %v3771 = vpack.c.b16 %v3761, %v3760
      %v3772 = vpack.c.b16 %v3763, %v3762
      %v3773 = vpack.c.b16 %v3765, %v3764
      %3782 = vmatprep.subr.bf16.mxu0 0
      %3783 = vmatpush1.bf16.msra.mxu0 %v3766
      %3784 = vmatprep.subr.bf16.mxu0 0
      %3785 = vmatpush1.bf16.msra.mxu0 %v3767
      %3786 = vmatprep.subr.bf16.mxu0 0
      %3787 = vmatpush1.bf16.msra.mxu0 %v3768
      %3788 = vmatprep.subr.bf16.mxu0 0
      %3789 = vmatpush1.bf16.msra.mxu0 %v3769
      %3790 = vmatprep.subr.bf16.mxu0 0
      %3791 = vmatpush1.bf16.msra.mxu0 %v3770
      %3792 = vmatprep.subr.bf16.mxu0 0
      %3793 = vmatpush1.bf16.msra.mxu0 %v3771
      %3794 = vmatprep.subr.bf16.mxu0 0
      %3795 = vmatpush1.bf16.msra.mxu0 %v3772
      %3796 = vmatprep.subr.bf16.mxu0 0
      %3797 = vmatpush1.bf16.msra.mxu0 %v3773
      %3798 = vmatprep.subr.bf16.mxu0 0
      %3799 = vmatpush1.bf16.msra.mxu0 0
      %3800 = vmatprep.subr.bf16.mxu0 0
      %3801 = vmatpush1.bf16.msra.mxu0 0
      %3802 = vmatprep.subr.bf16.mxu0 0
      %3803 = vmatpush1.bf16.msra.mxu0 0
      %3804 = vmatprep.subr.bf16.mxu0 0
      %3805 = vmatpush1.bf16.msra.mxu0 0
      %3806 = vmatprep.subr.bf16.mxu0 0
      %3807 = vmatpush1.bf16.msra.mxu0 0
      %3808 = vmatprep.subr.bf16.mxu0 0
      %3809 = vmatpush1.bf16.msra.mxu0 0
      %3810 = vmatprep.subr.bf16.mxu0 0
      %3811 = vmatpush1.bf16.msra.mxu0 0
      %3812 = vmatprep.subr.bf16.mxu0 0
      %3813 = vmatpush1.bf16.msra.mxu0 0
      %3814 = vmatprep.mubr.bf16.mxu0 0
      %3815 = vmatmul.mubr.bf16.gmra.mrb[0].mxu0 %v3702
      %v3816 = vpop.f32.mrb[0].mxu0
      %v3817 = vadd.f32 0.0, %v3816
      %v3818 = vpop.f32.mrb[0].mxu0
      %v3819 = vpop.f32.mrb[0].mxu0
      %v3820 = vadd.f32 0.0, %v3819
      %v3821 = vpop.f32.mrb[0].mxu0
      %3822 = vmatprep.mubr.bf16.mxu0 0
      %3823 = vmatmul.mubr.bf16.gmra.mrb[0].mxu0 %v3703
      %v3824 = vpop.f32.mrb[0].mxu0
      %v3825 = vadd.f32 0.0, %v3824
      %v3826 = vpop.f32.mrb[0].mxu0
      %v3827 = vpop.f32.mrb[0].mxu0
      %v3828 = vadd.f32 0.0, %v3827
      %v3829 = vpop.f32.mrb[0].mxu0
      %3830 = vmatprep.mubr.bf16.mxu0 0
      %3831 = vmatmul.mubr.bf16.gmra.mrb[0].mxu0 %v3704
      %v3832 = vpop.f32.mrb[0].mxu0
      %v3833 = vadd.f32 0.0, %v3832
      %v3834 = vpop.f32.mrb[0].mxu0
      %v3835 = vpop.f32.mrb[0].mxu0
      %v3836 = vadd.f32 0.0, %v3835
      %v3837 = vpop.f32.mrb[0].mxu0
      %3838 = vmatprep.mubr.bf16.mxu0 0
      %3839 = vmatmul.mubr.bf16.gmra.mrb[0].mxu0 %v3705
      %v3840 = vpop.f32.mrb[0].mxu0
      %v3841 = vadd.f32 0.0, %v3840
      %v3842 = vpop.f32.mrb[0].mxu0
      %v3843 = vpop.f32.mrb[0].mxu0
      %v3844 = vadd.f32 0.0, %v3843
      %v3845 = vpop.f32.mrb[0].mxu0
      %3846 = vmatprep.mubr.bf16.mxu0 0
      %3847 = vmatmul.mubr.bf16.gmra.mrb[0].mxu0 %v3706
      %v3848 = vpop.f32.mrb[0].mxu0
      %v3849 = vadd.f32 0.0, %v3848
      %v3850 = vpop.f32.mrb[0].mxu0
      %v3851 = vpop.f32.mrb[0].mxu0
      %v3852 = vadd.f32 0.0, %v3851
      %v3853 = vpop.f32.mrb[0].mxu0
      %3854 = vmatprep.mubr.bf16.mxu0 0
      %3855 = vmatmul.mubr.bf16.gmra.mrb[0].mxu0 %v3707
      %v3856 = vpop.f32.mrb[0].mxu0
      %v3857 = vadd.f32 0.0, %v3856
      %v3858 = vpop.f32.mrb[0].mxu0
      %v3859 = vpop.f32.mrb[0].mxu0
      %v3860 = vadd.f32 0.0, %v3859
      %v3861 = vpop.f32.mrb[0].mxu0
      %3862 = vmatprep.mubr.bf16.mxu0 0
      %3863 = vmatmul.mubr.bf16.gmra.mrb[0].mxu0 %v3708
      %v3864 = vpop.f32.mrb[0].mxu0
      %v3865 = vadd.f32 0.0, %v3864
      %v3866 = vpop.f32.mrb[0].mxu0
      %v3867 = vpop.f32.mrb[0].mxu0
      %v3868 = vadd.f32 0.0, %v3867
      %v3869 = vpop.f32.mrb[0].mxu0
      %3870 = vmatprep.mubr.bf16.mxu0 0
      %3871 = vmatmul.mubr.bf16.gmra.mrb[0].mxu0 %v3709
      %v3872 = vpop.f32.mrb[0].mxu0
      %v3873 = vadd.f32 0.0, %v3872
      %v3874 = vpop.f32.mrb[0].mxu0
      %v3875 = vpop.f32.mrb[0].mxu0
      %v3876 = vadd.f32 0.0, %v3875
      %v3877 = vpop.f32.mrb[0].mxu0
      %3878 = vmatprep.mubr.bf16.mxu0 0
      %3879 = vmatmul.mubr.bf16.gmra.mrb[0].mxu0 %v3710
      %v3880 = vpop.f32.mrb[0].mxu0
      %v3881 = vadd.f32 0.0, %v3880
      %v3882 = vpop.f32.mrb[0].mxu0
      %v3883 = vpop.f32.mrb[0].mxu0
      %v3884 = vadd.f32 0.0, %v3883
      %v3885 = vpop.f32.mrb[0].mxu0
      %3886 = vmatprep.mubr.bf16.mxu0 0
      %3887 = vmatmul.mubr.bf16.gmra.mrb[0].mxu0 %v3711
      %v3888 = vpop.f32.mrb[0].mxu0
      %v3889 = vadd.f32 0.0, %v3888
      %v3890 = vpop.f32.mrb[0].mxu0
      %v3891 = vpop.f32.mrb[0].mxu0
      %v3892 = vadd.f32 0.0, %v3891
      %v3893 = vpop.f32.mrb[0].mxu0
      %3894 = vmatprep.mubr.bf16.mxu0 0
      %3895 = vmatmul.mubr.bf16.gmra.mrb[0].mxu0 %v3712
      %v3896 = vpop.f32.mrb[0].mxu0
      %v3897 = vadd.f32 0.0, %v3896
      %v3898 = vpop.f32.mrb[0].mxu0
      %v3899 = vpop.f32.mrb[0].mxu0
      %v3900 = vadd.f32 0.0, %v3899
      %v3901 = vpop.f32.mrb[0].mxu0
      %3902 = vmatprep.mubr.bf16.mxu0 0
      %3903 = vmatmul.mubr.bf16.gmra.mrb[0].mxu0 %v3713
      %v3904 = vpop.f32.mrb[0].mxu0
      %v3905 = vadd.f32 0.0, %v3904
      %v3906 = vpop.f32.mrb[0].mxu0
      %v3907 = vpop.f32.mrb[0].mxu0
      %v3908 = vadd.f32 0.0, %v3907
      %v3909 = vpop.f32.mrb[0].mxu0
      %3910 = vmatprep.mubr.bf16.mxu0 0
      %3911 = vmatmul.mubr.bf16.gmra.mrb[0].mxu0 %v3714
      %v3912 = vpop.f32.mrb[0].mxu0
      %v3913 = vadd.f32 0.0, %v3912
      %v3914 = vpop.f32.mrb[0].mxu0
      %v3915 = vpop.f32.mrb[0].mxu0
      %v3916 = vadd.f32 0.0, %v3915
      %v3917 = vpop.f32.mrb[0].mxu0
      %3918 = vmatprep.mubr.bf16.mxu0 0
      %3919 = vmatmul.mubr.bf16.gmra.mrb[0].mxu0 %v3715
      %v3920 = vpop.f32.mrb[0].mxu0
      %v3921 = vadd.f32 0.0, %v3920
      %v3922 = vpop.f32.mrb[0].mxu0
      %v3923 = vpop.f32.mrb[0].mxu0
      %v3924 = vadd.f32 0.0, %v3923
      %v3925 = vpop.f32.mrb[0].mxu0
      %3926 = vmatprep.mubr.bf16.mxu0 0
      %3927 = vmatmul.mubr.bf16.gmra.mrb[0].mxu0 %v3716
      %v3928 = vpop.f32.mrb[0].mxu0
      %v3929 = vadd.f32 0.0, %v3928
      %v3930 = vpop.f32.mrb[0].mxu0
      %v3931 = vpop.f32.mrb[0].mxu0
      %v3932 = vadd.f32 0.0, %v3931
      %v3933 = vpop.f32.mrb[0].mxu0
      %3934 = vmatprep.mubr.bf16.mxu0 0
      %3935 = vmatmul.mubr.bf16.gmra.mrb[0].mxu0 %v3717
      %v3936 = vpop.f32.mrb[0].mxu0
      %v3937 = vadd.f32 0.0, %v3936
      %v3938 = vpop.f32.mrb[0].mxu0
      %v3939 = vpop.f32.mrb[0].mxu0
      %v3940 = vadd.f32 0.0, %v3939
      %v3941 = vpop.f32.mrb[0].mxu0
      %3942 = vdwg.mxu0
      %v3943 = vadd.f32 %v3445, %v3817
      %v3944 = vadd.f32 %v3446, %v3820
      %v3945 = vadd.f32 %v3447, %v3825
      %v3946 = vadd.f32 %v3448, %v3828
      %v3947 = vadd.f32 %v3449, %v3833
      %v3948 = vadd.f32 %v3450, %v3836
      %v3949 = vadd.f32 %v3451, %v3841
      %v3950 = vadd.f32 %v3452, %v3844
      %v3951 = vadd.f32 %v3453, %v3849
      %v3952 = vadd.f32 %v3454, %v3852
      %v3953 = vadd.f32 %v3455, %v3857
      %v3954 = vadd.f32 %v3456, %v3860
      %v3955 = vadd.f32 %v3457, %v3865
      %v3956 = vadd.f32 %v3458, %v3868
      %v3957 = vadd.f32 %v3459, %v3873
      %v3958 = vadd.f32 %v3460, %v3876
      %v3959 = vadd.f32 %v3461, %v3881
      %v3960 = vadd.f32 %v3462, %v3884
      %v3961 = vadd.f32 %v3463, %v3889
      %v3962 = vadd.f32 %v3464, %v3892
      %v3963 = vadd.f32 %v3465, %v3897
      %v3964 = vadd.f32 %v3466, %v3900
      %v3965 = vadd.f32 %v3467, %v3905
      %v3966 = vadd.f32 %v3468, %v3908
      %v3967 = vadd.f32 %v3469, %v3913
      %v3968 = vadd.f32 %v3470, %v3916
      %v3969 = vadd.f32 %v3471, %v3921
      %v3970 = vadd.f32 %v3472, %v3924
      %v3971 = vadd.f32 %v3473, %v3929
      %v3972 = vadd.f32 %v3474, %v3932
      %v3973 = vadd.f32 %v3475, %v3937
      %v3974 = vadd.f32 %v3476, %v3940
      %s3975 = scalar_lea.vmem [#allocation2], 24
      %v3976 = vld [vmem:[%s3975] sm:$0xf]
      %v3977 = vld [vmem:[%s3975 + $0x4] sm:$0xf]
      %v3978 = vld [vmem:[%s3975 + $0xc] sm:$0xf]
      %v3979 = vld [vmem:[%s3975 + $0x10] sm:$0xf]
      %v3980 = vld [vmem:[%s3975 + $0x18] sm:$0xf]
      %v3981 = vld [vmem:[%s3975 + $0x1c] sm:$0xf]
      %v3982 = vld [vmem:[%s3975 + $0x24] sm:$0xf]
      %v3983 = vld [vmem:[%s3975 + $0x28] sm:$0xf]
      %v3984 = vld [vmem:[%s3975 + $0x30] sm:$0xf]
      %v3985 = vld [vmem:[%s3975 + $0x34] sm:$0xf]
      %v3986 = vld [vmem:[%s3975 + $0x3c] sm:$0xf]
      %v3987 = vld [vmem:[%s3975 + $0x40] sm:$0xf]
      %v3988 = vld [vmem:[%s3975 + $0x48] sm:$0xf]
      %v3989 = vld [vmem:[%s3975 + $0x4c] sm:$0xf]
      %v3990 = vld [vmem:[%s3975 + $0x54] sm:$0xf]
      %v3991 = vld [vmem:[%s3975 + $0x58] sm:$0xf]
      %v3992 = vld [vmem:[%s3975 + $0x60] sm:$0xf]
      %v3993 = vld [vmem:[%s3975 + $0x64] sm:$0xf]
      %v3994 = vld [vmem:[%s3975 + $0x6c] sm:$0xf]
      %v3995 = vld [vmem:[%s3975 + $0x70] sm:$0xf]
      %v3996 = vld [vmem:[%s3975 + $0x78] sm:$0xf]
      %v3997 = vld [vmem:[%s3975 + $0x7c] sm:$0xf]
      %v3998 = vld [vmem:[%s3975 + $0x84] sm:$0xf]
      %v3999 = vld [vmem:[%s3975 + $0x88] sm:$0xf]
      %v4000 = vld [vmem:[%s3975 + $0x90] sm:$0xf]
      %v4001 = vld [vmem:[%s3975 + $0x94] sm:$0xf]
      %v4002 = vld [vmem:[%s3975 + $0x9c] sm:$0xf]
      %v4003 = vld [vmem:[%s3975 + $0xa0] sm:$0xf]
      %v4004 = vld [vmem:[%s3975 + $0xa8] sm:$0xf]
      %v4005 = vld [vmem:[%s3975 + $0xac] sm:$0xf]
      %v4006 = vld [vmem:[%s3975 + $0xb4] sm:$0xf]
      %v4007 = vld [vmem:[%s3975 + $0xb8] sm:$0xf]
      %s4008 = scalar_lea.vmem %s3, 384
      %v4009 = vld [vmem:[%s4008] sm:$0xf]
      %v4010 = vld [vmem:[%s4008 + $0x4] sm:$0xf]
      %v4011 = vld [vmem:[%s4008 + $0x8] sm:$0xf]
      %v4012 = vld [vmem:[%s4008 + $0xc] sm:$0xf]
      %v4013 = vld [vmem:[%s4008 + $0x10] sm:$0xf]
      %v4014 = vld [vmem:[%s4008 + $0x14] sm:$0xf]
      %v4015 = vld [vmem:[%s4008 + $0x18] sm:$0xf]
      %v4016 = vld [vmem:[%s4008 + $0x1c] sm:$0xf]
      %v4017 = vld [vmem:[%s4008 + $0x20] sm:$0xf]
      %v4018 = vld [vmem:[%s4008 + $0x24] sm:$0xf]
      %v4019 = vld [vmem:[%s4008 + $0x28] sm:$0xf]
      %v4020 = vld [vmem:[%s4008 + $0x2c] sm:$0xf]
      %v4021 = vld [vmem:[%s4008 + $0x30] sm:$0xf]
      %v4022 = vld [vmem:[%s4008 + $0x34] sm:$0xf]
      %v4023 = vld [vmem:[%s4008 + $0x38] sm:$0xf]
      %v4024 = vld [vmem:[%s4008 + $0x3c] sm:$0xf]
      %v4057 = vunpack.c.l.b16 %v3976
      %v4058 = vunpack.c.l.b16 %v3977
      %v4059 = vunpack.c.l.b16 %v3978
      %v4060 = vunpack.c.l.b16 %v3979
      %v4061 = vunpack.c.l.b16 %v3980
      %v4062 = vunpack.c.l.b16 %v3981
      %v4063 = vunpack.c.l.b16 %v3982
      %v4064 = vunpack.c.l.b16 %v3983
      %v4065 = vunpack.c.l.b16 %v3984
      %v4066 = vunpack.c.l.b16 %v3985
      %v4067 = vunpack.c.l.b16 %v3986
      %v4068 = vunpack.c.l.b16 %v3987
      %v4069 = vunpack.c.l.b16 %v3988
      %v4070 = vunpack.c.l.b16 %v3989
      %v4071 = vunpack.c.l.b16 %v3990
      %v4072 = vunpack.c.l.b16 %v3991
      %v4073 = vunpack.c.l.b16 %v3992
      %v4074 = vunpack.c.l.b16 %v3993
      %v4075 = vunpack.c.l.b16 %v3994
      %v4076 = vunpack.c.l.b16 %v3995
      %v4077 = vunpack.c.l.b16 %v3996
      %v4078 = vunpack.c.l.b16 %v3997
      %v4079 = vunpack.c.l.b16 %v3998
      %v4080 = vunpack.c.l.b16 %v3999
      %v4081 = vunpack.c.l.b16 %v4000
      %v4082 = vunpack.c.l.b16 %v4001
      %v4083 = vunpack.c.l.b16 %v4002
      %v4084 = vunpack.c.l.b16 %v4003
      %v4085 = vunpack.c.l.b16 %v4004
      %v4086 = vunpack.c.l.b16 %v4005
      %v4087 = vunpack.c.l.b16 %v4006
      %v4088 = vunpack.c.l.b16 %v4007
      %v4089 = vpack.c.b16 %v4058, %v4057
      %v4090 = vpack.c.b16 %v4060, %v4059
      %v4091 = vpack.c.b16 %v4062, %v4061
      %v4092 = vpack.c.b16 %v4064, %v4063
      %v4093 = vpack.c.b16 %v4066, %v4065
      %v4094 = vpack.c.b16 %v4068, %v4067
      %v4095 = vpack.c.b16 %v4070, %v4069
      %v4096 = vpack.c.b16 %v4072, %v4071
      %v4097 = vpack.c.b16 %v4074, %v4073
      %v4098 = vpack.c.b16 %v4076, %v4075
      %v4099 = vpack.c.b16 %v4078, %v4077
      %v4100 = vpack.c.b16 %v4080, %v4079
      %v4101 = vpack.c.b16 %v4082, %v4081
      %v4102 = vpack.c.b16 %v4084, %v4083
      %v4103 = vpack.c.b16 %v4086, %v4085
      %v4104 = vpack.c.b16 %v4088, %v4087
      %v4137 = vunpack.c.l.b16 %v4009
      %v4138 = vunpack.c.l.b16 %v4010
      %v4139 = vunpack.c.l.b16 %v4011
      %v4140 = vunpack.c.l.b16 %v4012
      %v4141 = vunpack.c.l.b16 %v4013
      %v4142 = vunpack.c.l.b16 %v4014
      %v4143 = vunpack.c.l.b16 %v4015
      %v4144 = vunpack.c.l.b16 %v4016
      %v4145 = vunpack.c.l.b16 %v4017
      %v4146 = vunpack.c.l.b16 %v4018
      %v4147 = vunpack.c.l.b16 %v4019
      %v4148 = vunpack.c.l.b16 %v4020
      %v4149 = vunpack.c.l.b16 %v4021
      %v4150 = vunpack.c.l.b16 %v4022
      %v4151 = vunpack.c.l.b16 %v4023
      %v4152 = vunpack.c.l.b16 %v4024
      %v4153 = vpack.c.b16 %v4138, %v4137
      %v4154 = vpack.c.b16 %v4140, %v4139
      %v4155 = vpack.c.b16 %v4142, %v4141
      %v4156 = vpack.c.b16 %v4144, %v4143
      %v4157 = vpack.c.b16 %v4146, %v4145
      %v4158 = vpack.c.b16 %v4148, %v4147
      %v4159 = vpack.c.b16 %v4150, %v4149
      %v4160 = vpack.c.b16 %v4152, %v4151
      %4169 = vmatprep.subr.bf16.mxu0 0
      %4170 = vmatpush1.bf16.msra.mxu0 %v4153
      %4171 = vmatprep.subr.bf16.mxu0 0
      %4172 = vmatpush1.bf16.msra.mxu0 %v4154
      %4173 = vmatprep.subr.bf16.mxu0 0
      %4174 = vmatpush1.bf16.msra.mxu0 %v4155
      %4175 = vmatprep.subr.bf16.mxu0 0
      %4176 = vmatpush1.bf16.msra.mxu0 %v4156
      %4177 = vmatprep.subr.bf16.mxu0 0
      %4178 = vmatpush1.bf16.msra.mxu0 %v4157
      %4179 = vmatprep.subr.bf16.mxu0 0
      %4180 = vmatpush1.bf16.msra.mxu0 %v4158
      %4181 = vmatprep.subr.bf16.mxu0 0
      %4182 = vmatpush1.bf16.msra.mxu0 %v4159
      %4183 = vmatprep.subr.bf16.mxu0 0
      %4184 = vmatpush1.bf16.msra.mxu0 %v4160
      %4185 = vmatprep.subr.bf16.mxu0 0
      %4186 = vmatpush1.bf16.msra.mxu0 0
      %4187 = vmatprep.subr.bf16.mxu0 0
      %4188 = vmatpush1.bf16.msra.mxu0 0
      %4189 = vmatprep.subr.bf16.mxu0 0
      %4190 = vmatpush1.bf16.msra.mxu0 0
      %4191 = vmatprep.subr.bf16.mxu0 0
      %4192 = vmatpush1.bf16.msra.mxu0 0
      %4193 = vmatprep.subr.bf16.mxu0 0
      %4194 = vmatpush1.bf16.msra.mxu0 0
      %4195 = vmatprep.subr.bf16.mxu0 0
      %4196 = vmatpush1.bf16.msra.mxu0 0
      %4197 = vmatprep.subr.bf16.mxu0 0
      %4198 = vmatpush1.bf16.msra.mxu0 0
      %4199 = vmatprep.subr.bf16.mxu0 0
      %4200 = vmatpush1.bf16.msra.mxu0 0
      %4201 = vmatprep.mubr.bf16.mxu0 0
      %4202 = vmatmul.mubr.bf16.gmra.mrb[0].mxu0 %v4089
      %v4203 = vpop.f32.mrb[0].mxu0
      %v4204 = vadd.f32 0.0, %v4203
      %v4205 = vpop.f32.mrb[0].mxu0
      %v4206 = vpop.f32.mrb[0].mxu0
      %v4207 = vadd.f32 0.0, %v4206
      %v4208 = vpop.f32.mrb[0].mxu0
      %4209 = vmatprep.mubr.bf16.mxu0 0
      %4210 = vmatmul.mubr.bf16.gmra.mrb[0].mxu0 %v4090
      %v4211 = vpop.f32.mrb[0].mxu0
      %v4212 = vadd.f32 0.0, %v4211
      %v4213 = vpop.f32.mrb[0].mxu0
      %v4214 = vpop.f32.mrb[0].mxu0
      %v4215 = vadd.f32 0.0, %v4214
      %v4216 = vpop.f32.mrb[0].mxu0
      %4217 = vmatprep.mubr.bf16.mxu0 0
      %4218 = vmatmul.mubr.bf16.gmra.mrb[0].mxu0 %v4091
      %v4219 = vpop.f32.mrb[0].mxu0
      %v4220 = vadd.f32 0.0, %v4219
      %v4221 = vpop.f32.mrb[0].mxu0
      %v4222 = vpop.f32.mrb[0].mxu0
      %v4223 = vadd.f32 0.0, %v4222
      %v4224 = vpop.f32.mrb[0].mxu0
      %4225 = vmatprep.mubr.bf16.mxu0 0
      %4226 = vmatmul.mubr.bf16.gmra.mrb[0].mxu0 %v4092
      %v4227 = vpop.f32.mrb[0].mxu0
      %v4228 = vadd.f32 0.0, %v4227
      %v4229 = vpop.f32.mrb[0].mxu0
      %v4230 = vpop.f32.mrb[0].mxu0
      %v4231 = vadd.f32 0.0, %v4230
      %v4232 = vpop.f32.mrb[0].mxu0
      %4233 = vmatprep.mubr.bf16.mxu0 0
      %4234 = vmatmul.mubr.bf16.gmra.mrb[0].mxu0 %v4093
      %v4235 = vpop.f32.mrb[0].mxu0
      %v4236 = vadd.f32 0.0, %v4235
      %v4237 = vpop.f32.mrb[0].mxu0
      %v4238 = vpop.f32.mrb[0].mxu0
      %v4239 = vadd.f32 0.0, %v4238
      %v4240 = vpop.f32.mrb[0].mxu0
      %4241 = vmatprep.mubr.bf16.mxu0 0
      %4242 = vmatmul.mubr.bf16.gmra.mrb[0].mxu0 %v4094
      %v4243 = vpop.f32.mrb[0].mxu0
      %v4244 = vadd.f32 0.0, %v4243
      %v4245 = vpop.f32.mrb[0].mxu0
      %v4246 = vpop.f32.mrb[0].mxu0
      %v4247 = vadd.f32 0.0, %v4246
      %v4248 = vpop.f32.mrb[0].mxu0
      %4249 = vmatprep.mubr.bf16.mxu0 0
      %4250 = vmatmul.mubr.bf16.gmra.mrb[0].mxu0 %v4095
      %v4251 = vpop.f32.mrb[0].mxu0
      %v4252 = vadd.f32 0.0, %v4251
      %v4253 = vpop.f32.mrb[0].mxu0
      %v4254 = vpop.f32.mrb[0].mxu0
      %v4255 = vadd.f32 0.0, %v4254
      %v4256 = vpop.f32.mrb[0].mxu0
      %4257 = vmatprep.mubr.bf16.mxu0 0
      %4258 = vmatmul.mubr.bf16.gmra.mrb[0].mxu0 %v4096
      %v4259 = vpop.f32.mrb[0].mxu0
      %v4260 = vadd.f32 0.0, %v4259
      %v4261 = vpop.f32.mrb[0].mxu0
      %v4262 = vpop.f32.mrb[0].mxu0
      %v4263 = vadd.f32 0.0, %v4262
      %v4264 = vpop.f32.mrb[0].mxu0
      %4265 = vmatprep.mubr.bf16.mxu0 0
      %4266 = vmatmul.mubr.bf16.gmra.mrb[0].mxu0 %v4097
      %v4267 = vpop.f32.mrb[0].mxu0
      %v4268 = vadd.f32 0.0, %v4267
      %v4269 = vpop.f32.mrb[0].mxu0
      %v4270 = vpop.f32.mrb[0].mxu0
      %v4271 = vadd.f32 0.0, %v4270
      %v4272 = vpop.f32.mrb[0].mxu0
      %4273 = vmatprep.mubr.bf16.mxu0 0
      %4274 = vmatmul.mubr.bf16.gmra.mrb[0].mxu0 %v4098
      %v4275 = vpop.f32.mrb[0].mxu0
      %v4276 = vadd.f32 0.0, %v4275
      %v4277 = vpop.f32.mrb[0].mxu0
      %v4278 = vpop.f32.mrb[0].mxu0
      %v4279 = vadd.f32 0.0, %v4278
      %v4280 = vpop.f32.mrb[0].mxu0
      %4281 = vmatprep.mubr.bf16.mxu0 0
      %4282 = vmatmul.mubr.bf16.gmra.mrb[0].mxu0 %v4099
      %v4283 = vpop.f32.mrb[0].mxu0
      %v4284 = vadd.f32 0.0, %v4283
      %v4285 = vpop.f32.mrb[0].mxu0
      %v4286 = vpop.f32.mrb[0].mxu0
      %v4287 = vadd.f32 0.0, %v4286
      %v4288 = vpop.f32.mrb[0].mxu0
      %4289 = vmatprep.mubr.bf16.mxu0 0
      %4290 = vmatmul.mubr.bf16.gmra.mrb[0].mxu0 %v4100
      %v4291 = vpop.f32.mrb[0].mxu0
      %v4292 = vadd.f32 0.0, %v4291
      %v4293 = vpop.f32.mrb[0].mxu0
      %v4294 = vpop.f32.mrb[0].mxu0
      %v4295 = vadd.f32 0.0, %v4294
      %v4296 = vpop.f32.mrb[0].mxu0
      %4297 = vmatprep.mubr.bf16.mxu0 0
      %4298 = vmatmul.mubr.bf16.gmra.mrb[0].mxu0 %v4101
      %v4299 = vpop.f32.mrb[0].mxu0
      %v4300 = vadd.f32 0.0, %v4299
      %v4301 = vpop.f32.mrb[0].mxu0
      %v4302 = vpop.f32.mrb[0].mxu0
      %v4303 = vadd.f32 0.0, %v4302
      %v4304 = vpop.f32.mrb[0].mxu0
      %4305 = vmatprep.mubr.bf16.mxu0 0
      %4306 = vmatmul.mubr.bf16.gmra.mrb[0].mxu0 %v4102
      %v4307 = vpop.f32.mrb[0].mxu0
      %v4308 = vadd.f32 0.0, %v4307
      %v4309 = vpop.f32.mrb[0].mxu0
      %v4310 = vpop.f32.mrb[0].mxu0
      %v4311 = vadd.f32 0.0, %v4310
      %v4312 = vpop.f32.mrb[0].mxu0
      %4313 = vmatprep.mubr.bf16.mxu0 0
      %4314 = vmatmul.mubr.bf16.gmra.mrb[0].mxu0 %v4103
      %v4315 = vpop.f32.mrb[0].mxu0
      %v4316 = vadd.f32 0.0, %v4315
      %v4317 = vpop.f32.mrb[0].mxu0
      %v4318 = vpop.f32.mrb[0].mxu0
      %v4319 = vadd.f32 0.0, %v4318
      %v4320 = vpop.f32.mrb[0].mxu0
      %4321 = vmatprep.mubr.bf16.mxu0 0
      %4322 = vmatmul.mubr.bf16.gmra.mrb[0].mxu0 %v4104
      %v4323 = vpop.f32.mrb[0].mxu0
      %v4324 = vadd.f32 0.0, %v4323
      %v4325 = vpop.f32.mrb[0].mxu0
      %v4326 = vpop.f32.mrb[0].mxu0
      %v4327 = vadd.f32 0.0, %v4326
      %v4328 = vpop.f32.mrb[0].mxu0
      %4329 = vdwg.mxu0
      %v4330 = vadd.f32 %v3943, %v4204
      %v4331 = vadd.f32 %v3944, %v4207
      %v4332 = vadd.f32 %v3945, %v4212
      %v4333 = vadd.f32 %v3946, %v4215
      %v4334 = vadd.f32 %v3947, %v4220
      %v4335 = vadd.f32 %v3948, %v4223
      %v4336 = vadd.f32 %v3949, %v4228
      %v4337 = vadd.f32 %v3950, %v4231
      %v4338 = vadd.f32 %v3951, %v4236
      %v4339 = vadd.f32 %v3952, %v4239
      %v4340 = vadd.f32 %v3953, %v4244
      %v4341 = vadd.f32 %v3954, %v4247
      %v4342 = vadd.f32 %v3955, %v4252
      %v4343 = vadd.f32 %v3956, %v4255
      %v4344 = vadd.f32 %v3957, %v4260
      %v4345 = vadd.f32 %v3958, %v4263
      %v4346 = vadd.f32 %v3959, %v4268
      %v4347 = vadd.f32 %v3960, %v4271
      %v4348 = vadd.f32 %v3961, %v4276
      %v4349 = vadd.f32 %v3962, %v4279
      %v4350 = vadd.f32 %v3963, %v4284
      %v4351 = vadd.f32 %v3964, %v4287
      %v4352 = vadd.f32 %v3965, %v4292
      %v4353 = vadd.f32 %v3966, %v4295
      %v4354 = vadd.f32 %v3967, %v4300
      %v4355 = vadd.f32 %v3968, %v4303
      %v4356 = vadd.f32 %v3969, %v4308
      %v4357 = vadd.f32 %v3970, %v4311
      %v4358 = vadd.f32 %v3971, %v4316
      %v4359 = vadd.f32 %v3972, %v4319
      %v4360 = vadd.f32 %v3973, %v4324
      %v4361 = vadd.f32 %v3974, %v4327
      %v4362 = vld [vmem:[%s3975] sm:$0xf]
      %v4363 = vld [vmem:[%s3975 + $0x4] sm:$0xf]
      %v4364 = vld [vmem:[%s3975 + $0x8] sm:$0x1]
      %v4365 = vld [vmem:[%s3975 + $0xc] sm:$0xf]
      %v4366 = vld [vmem:[%s3975 + $0x10] sm:$0xf]
      %v4367 = vld [vmem:[%s3975 + $0x14] sm:$0x1]
      %v4368 = vld [vmem:[%s3975 + $0x18] sm:$0xf]
      %v4369 = vld [vmem:[%s3975 + $0x1c] sm:$0xf]
      %v4370 = vld [vmem:[%s3975 + $0x20] sm:$0x1]
      %v4371 = vld [vmem:[%s3975 + $0x24] sm:$0xf]
      %v4372 = vld [vmem:[%s3975 + $0x28] sm:$0xf]
      %v4373 = vld [vmem:[%s3975 + $0x2c] sm:$0x1]
      %v4374 = vld [vmem:[%s3975 + $0x30] sm:$0xf]
      %v4375 = vld [vmem:[%s3975 + $0x34] sm:$0xf]
      %v4376 = vld [vmem:[%s3975 + $0x38] sm:$0x1]
      %v4377 = vld [vmem:[%s3975 + $0x3c] sm:$0xf]
      %v4378 = vld [vmem:[%s3975 + $0x40] sm:$0xf]
      %v4379 = vld [vmem:[%s3975 + $0x44] sm:$0x1]
      %v4380 = vld [vmem:[%s3975 + $0x48] sm:$0xf]
      %v4381 = vld [vmem:[%s3975 + $0x4c] sm:$0xf]
      %v4382 = vld [vmem:[%s3975 + $0x50] sm:$0x1]
      %v4383 = vld [vmem:[%s3975 + $0x54] sm:$0xf]
      %v4384 = vld [vmem:[%s3975 + $0x58] sm:$0xf]
      %v4385 = vld [vmem:[%s3975 + $0x5c] sm:$0x1]
      %v4386 = vld [vmem:[%s3975 + $0x60] sm:$0xf]
      %v4387 = vld [vmem:[%s3975 + $0x64] sm:$0xf]
      %v4388 = vld [vmem:[%s3975 + $0x68] sm:$0x1]
      %v4389 = vld [vmem:[%s3975 + $0x6c] sm:$0xf]
      %v4390 = vld [vmem:[%s3975 + $0x70] sm:$0xf]
      %v4391 = vld [vmem:[%s3975 + $0x74] sm:$0x1]
      %v4392 = vld [vmem:[%s3975 + $0x78] sm:$0xf]
      %v4393 = vld [vmem:[%s3975 + $0x7c] sm:$0xf]
      %v4394 = vld [vmem:[%s3975 + $0x80] sm:$0x1]
      %v4395 = vld [vmem:[%s3975 + $0x84] sm:$0xf]
      %v4396 = vld [vmem:[%s3975 + $0x88] sm:$0xf]
      %v4397 = vld [vmem:[%s3975 + $0x8c] sm:$0x1]
      %v4398 = vld [vmem:[%s3975 + $0x90] sm:$0xf]
      %v4399 = vld [vmem:[%s3975 + $0x94] sm:$0xf]
      %v4400 = vld [vmem:[%s3975 + $0x98] sm:$0x1]
      %v4401 = vld [vmem:[%s3975 + $0x9c] sm:$0xf]
      %v4402 = vld [vmem:[%s3975 + $0xa0] sm:$0xf]
      %v4403 = vld [vmem:[%s3975 + $0xa4] sm:$0x1]
      %v4404 = vld [vmem:[%s3975 + $0xa8] sm:$0xf]
      %v4405 = vld [vmem:[%s3975 + $0xac] sm:$0xf]
      %v4406 = vld [vmem:[%s3975 + $0xb0] sm:$0x1]
      %v4407 = vld [vmem:[%s3975 + $0xb4] sm:$0xf]
      %v4408 = vld [vmem:[%s3975 + $0xb8] sm:$0xf]
      %v4409 = vld [vmem:[%s3975 + $0xbc] sm:$0x1]
      %v4411 = vshrl.u32 %v4362, 16
      %v4413 = vrot.slane %v4411, 4
      %v4414 = vshll.u32 %v4362, 16
      %v4416 = vrot.slane %v4414, 5
      %v4417 = vor.u32 %v4413, %v4416
      %v4418 = vrot.slane %v4417, 4
      %v4420 = vshll.u32 %v4363, 16
      %v4422 = vrot.slane %v4420, 5
      %v4423 = vsel %vm872, %v4418, %v4422
      %v4424 = vshrl.u32 %v4363, 16
      %v4426 = vrot.slane %v4424, 4
      %v4427 = vor.u32 %v4426, %v4422
      %v4428 = vrot.slane %v4427, 4
      %v4430 = vshll.u32 %v4364, 16
      %v4432 = vrot.slane %v4430, 5
      %v4433 = vsel %vm872, %v4428, %v4432
      %v4435 = vshrl.u32 %v4365, 16
      %v4437 = vrot.slane %v4435, 4
      %v4438 = vshll.u32 %v4365, 16
      %v4440 = vrot.slane %v4438, 5
      %v4441 = vor.u32 %v4437, %v4440
      %v4442 = vrot.slane %v4441, 4
      %v4444 = vshll.u32 %v4366, 16
      %v4446 = vrot.slane %v4444, 5
      %v4447 = vsel %vm872, %v4442, %v4446
      %v4448 = vshrl.u32 %v4366, 16
      %v4450 = vrot.slane %v4448, 4
      %v4451 = vor.u32 %v4450, %v4446
      %v4452 = vrot.slane %v4451, 4
      %v4454 = vshll.u32 %v4367, 16
      %v4456 = vrot.slane %v4454, 5
      %v4457 = vsel %vm872, %v4452, %v4456
      %v4459 = vshrl.u32 %v4368, 16
      %v4461 = vrot.slane %v4459, 4
      %v4462 = vshll.u32 %v4368, 16
      %v4464 = vrot.slane %v4462, 5
      %v4465 = vor.u32 %v4461, %v4464
      %v4466 = vrot.slane %v4465, 4
      %v4468 = vshll.u32 %v4369, 16
      %v4470 = vrot.slane %v4468, 5
      %v4471 = vsel %vm872, %v4466, %v4470
      %v4472 = vshrl.u32 %v4369, 16
      %v4474 = vrot.slane %v4472, 4
      %v4475 = vor.u32 %v4474, %v4470
      %v4476 = vrot.slane %v4475, 4
      %v4478 = vshll.u32 %v4370, 16
      %v4480 = vrot.slane %v4478, 5
      %v4481 = vsel %vm872, %v4476, %v4480
      %v4483 = vshrl.u32 %v4371, 16
      %v4485 = vrot.slane %v4483, 4
      %v4486 = vshll.u32 %v4371, 16
      %v4488 = vrot.slane %v4486, 5
      %v4489 = vor.u32 %v4485, %v4488
      %v4490 = vrot.slane %v4489, 4
      %v4492 = vshll.u32 %v4372, 16
      %v4494 = vrot.slane %v4492, 5
      %v4495 = vsel %vm872, %v4490, %v4494
      %v4496 = vshrl.u32 %v4372, 16
      %v4498 = vrot.slane %v4496, 4
      %v4499 = vor.u32 %v4498, %v4494
      %v4500 = vrot.slane %v4499, 4
      %v4502 = vshll.u32 %v4373, 16
      %v4504 = vrot.slane %v4502, 5
      %v4505 = vsel %vm872, %v4500, %v4504
      %v4507 = vshrl.u32 %v4374, 16
      %v4509 = vrot.slane %v4507, 4
      %v4510 = vshll.u32 %v4374, 16
      %v4512 = vrot.slane %v4510, 5
      %v4513 = vor.u32 %v4509, %v4512
      %v4514 = vrot.slane %v4513, 4
      %v4516 = vshll.u32 %v4375, 16
      %v4518 = vrot.slane %v4516, 5
      %v4519 = vsel %vm872, %v4514, %v4518
      %v4520 = vshrl.u32 %v4375, 16
      %v4522 = vrot.slane %v4520, 4
      %v4523 = vor.u32 %v4522, %v4518
      %v4524 = vrot.slane %v4523, 4
      %v4526 = vshll.u32 %v4376, 16
      %v4528 = vrot.slane %v4526, 5
      %v4529 = vsel %vm872, %v4524, %v4528
      %v4531 = vshrl.u32 %v4377, 16
      %v4533 = vrot.slane %v4531, 4
      %v4534 = vshll.u32 %v4377, 16
      %v4536 = vrot.slane %v4534, 5
      %v4537 = vor.u32 %v4533, %v4536
      %v4538 = vrot.slane %v4537, 4
      %v4540 = vshll.u32 %v4378, 16
      %v4542 = vrot.slane %v4540, 5
      %v4543 = vsel %vm872, %v4538, %v4542
      %v4544 = vshrl.u32 %v4378, 16
      %v4546 = vrot.slane %v4544, 4
      %v4547 = vor.u32 %v4546, %v4542
      %v4548 = vrot.slane %v4547, 4
      %v4550 = vshll.u32 %v4379, 16
      %v4552 = vrot.slane %v4550, 5
      %v4553 = vsel %vm872, %v4548, %v4552
      %v4555 = vshrl.u32 %v4380, 16
      %v4557 = vrot.slane %v4555, 4
      %v4558 = vshll.u32 %v4380, 16
      %v4560 = vrot.slane %v4558, 5
      %v4561 = vor.u32 %v4557, %v4560
      %v4562 = vrot.slane %v4561, 4
      %v4564 = vshll.u32 %v4381, 16
      %v4566 = vrot.slane %v4564, 5
      %v4567 = vsel %vm872, %v4562, %v4566
      %v4568 = vshrl.u32 %v4381, 16
      %v4570 = vrot.slane %v4568, 4
      %v4571 = vor.u32 %v4570, %v4566
      %v4572 = vrot.slane %v4571, 4
      %v4574 = vshll.u32 %v4382, 16
      %v4576 = vrot.slane %v4574, 5
      %v4577 = vsel %vm872, %v4572, %v4576
      %v4579 = vshrl.u32 %v4383, 16
      %v4581 = vrot.slane %v4579, 4
      %v4582 = vshll.u32 %v4383, 16
      %v4584 = vrot.slane %v4582, 5
      %v4585 = vor.u32 %v4581, %v4584
      %v4586 = vrot.slane %v4585, 4
      %v4588 = vshll.u32 %v4384, 16
      %v4590 = vrot.slane %v4588, 5
      %v4591 = vsel %vm872, %v4586, %v4590
      %v4592 = vshrl.u32 %v4384, 16
      %v4594 = vrot.slane %v4592, 4
      %v4595 = vor.u32 %v4594, %v4590
      %v4596 = vrot.slane %v4595, 4
      %v4598 = vshll.u32 %v4385, 16
      %v4600 = vrot.slane %v4598, 5
      %v4601 = vsel %vm872, %v4596, %v4600
      %v4603 = vshrl.u32 %v4386, 16
      %v4605 = vrot.slane %v4603, 4
      %v4606 = vshll.u32 %v4386, 16
      %v4608 = vrot.slane %v4606, 5
      %v4609 = vor.u32 %v4605, %v4608
      %v4610 = vrot.slane %v4609, 4
      %v4612 = vshll.u32 %v4387, 16
      %v4614 = vrot.slane %v4612, 5
      %v4615 = vsel %vm872, %v4610, %v4614
      %v4616 = vshrl.u32 %v4387, 16
      %v4618 = vrot.slane %v4616, 4
      %v4619 = vor.u32 %v4618, %v4614
      %v4620 = vrot.slane %v4619, 4
      %v4622 = vshll.u32 %v4388, 16
      %v4624 = vrot.slane %v4622, 5
      %v4625 = vsel %vm872, %v4620, %v4624
      %v4627 = vshrl.u32 %v4389, 16
      %v4629 = vrot.slane %v4627, 4
      %v4630 = vshll.u32 %v4389, 16
      %v4632 = vrot.slane %v4630, 5
      %v4633 = vor.u32 %v4629, %v4632
      %v4634 = vrot.slane %v4633, 4
      %v4636 = vshll.u32 %v4390, 16
      %v4638 = vrot.slane %v4636, 5
      %v4639 = vsel %vm872, %v4634, %v4638
      %v4640 = vshrl.u32 %v4390, 16
      %v4642 = vrot.slane %v4640, 4
      %v4643 = vor.u32 %v4642, %v4638
      %v4644 = vrot.slane %v4643, 4
      %v4646 = vshll.u32 %v4391, 16
      %v4648 = vrot.slane %v4646, 5
      %v4649 = vsel %vm872, %v4644, %v4648
      %v4651 = vshrl.u32 %v4392, 16
      %v4653 = vrot.slane %v4651, 4
      %v4654 = vshll.u32 %v4392, 16
      %v4656 = vrot.slane %v4654, 5
      %v4657 = vor.u32 %v4653, %v4656
      %v4658 = vrot.slane %v4657, 4
      %v4660 = vshll.u32 %v4393, 16
      %v4662 = vrot.slane %v4660, 5
      %v4663 = vsel %vm872, %v4658, %v4662
      %v4664 = vshrl.u32 %v4393, 16
      %v4666 = vrot.slane %v4664, 4
      %v4667 = vor.u32 %v4666, %v4662
      %v4668 = vrot.slane %v4667, 4
      %v4670 = vshll.u32 %v4394, 16
      %v4672 = vrot.slane %v4670, 5
      %v4673 = vsel %vm872, %v4668, %v4672
      %v4675 = vshrl.u32 %v4395, 16
      %v4677 = vrot.slane %v4675, 4
      %v4678 = vshll.u32 %v4395, 16
      %v4680 = vrot.slane %v4678, 5
      %v4681 = vor.u32 %v4677, %v4680
      %v4682 = vrot.slane %v4681, 4
      %v4684 = vshll.u32 %v4396, 16
      %v4686 = vrot.slane %v4684, 5
      %v4687 = vsel %vm872, %v4682, %v4686
      %v4688 = vshrl.u32 %v4396, 16
      %v4690 = vrot.slane %v4688, 4
      %v4691 = vor.u32 %v4690, %v4686
      %v4692 = vrot.slane %v4691, 4
      %v4694 = vshll.u32 %v4397, 16
      %v4696 = vrot.slane %v4694, 5
      %v4697 = vsel %vm872, %v4692, %v4696
      %v4699 = vshrl.u32 %v4398, 16
      %v4701 = vrot.slane %v4699, 4
      %v4702 = vshll.u32 %v4398, 16
      %v4704 = vrot.slane %v4702, 5
      %v4705 = vor.u32 %v4701, %v4704
      %v4706 = vrot.slane %v4705, 4
      %v4708 = vshll.u32 %v4399, 16
      %v4710 = vrot.slane %v4708, 5
      %v4711 = vsel %vm872, %v4706, %v4710
      %v4712 = vshrl.u32 %v4399, 16
      %v4714 = vrot.slane %v4712, 4
      %v4715 = vor.u32 %v4714, %v4710
      %v4716 = vrot.slane %v4715, 4
      %v4718 = vshll.u32 %v4400, 16
      %v4720 = vrot.slane %v4718, 5
      %v4721 = vsel %vm872, %v4716, %v4720
      %v4723 = vshrl.u32 %v4401, 16
      %v4725 = vrot.slane %v4723, 4
      %v4726 = vshll.u32 %v4401, 16
      %v4728 = vrot.slane %v4726, 5
      %v4729 = vor.u32 %v4725, %v4728
      %v4730 = vrot.slane %v4729, 4
      %v4732 = vshll.u32 %v4402, 16
      %v4734 = vrot.slane %v4732, 5
      %v4735 = vsel %vm872, %v4730, %v4734
      %v4736 = vshrl.u32 %v4402, 16
      %v4738 = vrot.slane %v4736, 4
      %v4739 = vor.u32 %v4738, %v4734
      %v4740 = vrot.slane %v4739, 4
      %v4742 = vshll.u32 %v4403, 16
      %v4744 = vrot.slane %v4742, 5
      %v4745 = vsel %vm872, %v4740, %v4744
      %v4747 = vshrl.u32 %v4404, 16
      %v4749 = vrot.slane %v4747, 4
      %v4750 = vshll.u32 %v4404, 16
      %v4752 = vrot.slane %v4750, 5
      %v4753 = vor.u32 %v4749, %v4752
      %v4754 = vrot.slane %v4753, 4
      %v4756 = vshll.u32 %v4405, 16
      %v4758 = vrot.slane %v4756, 5
      %v4759 = vsel %vm872, %v4754, %v4758
      %v4760 = vshrl.u32 %v4405, 16
      %v4762 = vrot.slane %v4760, 4
      %v4763 = vor.u32 %v4762, %v4758
      %v4764 = vrot.slane %v4763, 4
      %v4766 = vshll.u32 %v4406, 16
      %v4768 = vrot.slane %v4766, 5
      %v4769 = vsel %vm872, %v4764, %v4768
      %v4771 = vshrl.u32 %v4407, 16
      %v4773 = vrot.slane %v4771, 4
      %v4774 = vshll.u32 %v4407, 16
      %v4776 = vrot.slane %v4774, 5
      %v4777 = vor.u32 %v4773, %v4776
      %v4778 = vrot.slane %v4777, 4
      %v4780 = vshll.u32 %v4408, 16
      %v4782 = vrot.slane %v4780, 5
      %v4783 = vsel %vm872, %v4778, %v4782
      %v4784 = vshrl.u32 %v4408, 16
      %v4786 = vrot.slane %v4784, 4
      %v4787 = vor.u32 %v4786, %v4782
      %v4788 = vrot.slane %v4787, 4
      %v4790 = vshll.u32 %v4409, 16
      %v4792 = vrot.slane %v4790, 5
      %v4793 = vsel %vm872, %v4788, %v4792
      %s4794 = scalar_lea.vmem %s3, 448
      %v4795 = vld [vmem:[%s4794] sm:$0xf]
      %v4796 = vld [vmem:[%s4794 + $0x4] sm:$0xf]
      %v4797 = vld [vmem:[%s4794 + $0x8] sm:$0xf]
      %v4798 = vld [vmem:[%s4794 + $0xc] sm:$0xf]
      %v4799 = vld [vmem:[%s4794 + $0x10] sm:$0xf]
      %v4800 = vld [vmem:[%s4794 + $0x14] sm:$0xf]
      %v4801 = vld [vmem:[%s4794 + $0x18] sm:$0xf]
      %v4802 = vld [vmem:[%s4794 + $0x1c] sm:$0xf]
      %v4803 = vld [vmem:[%s4794 + $0x20] sm:$0xf]
      %v4804 = vld [vmem:[%s4794 + $0x24] sm:$0xf]
      %v4805 = vld [vmem:[%s4794 + $0x28] sm:$0xf]
      %v4806 = vld [vmem:[%s4794 + $0x2c] sm:$0xf]
      %v4807 = vld [vmem:[%s4794 + $0x30] sm:$0xf]
      %v4808 = vld [vmem:[%s4794 + $0x34] sm:$0xf]
      %v4809 = vld [vmem:[%s4794 + $0x38] sm:$0xf]
      %v4810 = vld [vmem:[%s4794 + $0x3c] sm:$0xf]
      %v4811 = vunpack.c.l.b16 %v4423
      %v4812 = vunpack.c.l.b16 %v4433
      %v4813 = vunpack.c.l.b16 %v4447
      %v4814 = vunpack.c.l.b16 %v4457
      %v4815 = vunpack.c.l.b16 %v4471
      %v4816 = vunpack.c.l.b16 %v4481
      %v4817 = vunpack.c.l.b16 %v4495
      %v4818 = vunpack.c.l.b16 %v4505
      %v4819 = vunpack.c.l.b16 %v4519
      %v4820 = vunpack.c.l.b16 %v4529
      %v4821 = vunpack.c.l.b16 %v4543
      %v4822 = vunpack.c.l.b16 %v4553
      %v4823 = vunpack.c.l.b16 %v4567
      %v4824 = vunpack.c.l.b16 %v4577
      %v4825 = vunpack.c.l.b16 %v4591
      %v4826 = vunpack.c.l.b16 %v4601
      %v4827 = vunpack.c.l.b16 %v4615
      %v4828 = vunpack.c.l.b16 %v4625
      %v4829 = vunpack.c.l.b16 %v4639
      %v4830 = vunpack.c.l.b16 %v4649
      %v4831 = vunpack.c.l.b16 %v4663
      %v4832 = vunpack.c.l.b16 %v4673
      %v4833 = vunpack.c.l.b16 %v4687
      %v4834 = vunpack.c.l.b16 %v4697
      %v4835 = vunpack.c.l.b16 %v4711
      %v4836 = vunpack.c.l.b16 %v4721
      %v4837 = vunpack.c.l.b16 %v4735
      %v4838 = vunpack.c.l.b16 %v4745
      %v4839 = vunpack.c.l.b16 %v4759
      %v4840 = vunpack.c.l.b16 %v4769
      %v4841 = vunpack.c.l.b16 %v4783
      %v4842 = vunpack.c.l.b16 %v4793
      %v4843 = vpack.c.b16 %v4812, %v4811
      %v4844 = vpack.c.b16 %v4814, %v4813
      %v4845 = vpack.c.b16 %v4816, %v4815
      %v4846 = vpack.c.b16 %v4818, %v4817
      %v4847 = vpack.c.b16 %v4820, %v4819
      %v4848 = vpack.c.b16 %v4822, %v4821
      %v4849 = vpack.c.b16 %v4824, %v4823
      %v4850 = vpack.c.b16 %v4826, %v4825
      %v4851 = vpack.c.b16 %v4828, %v4827
      %v4852 = vpack.c.b16 %v4830, %v4829
      %v4853 = vpack.c.b16 %v4832, %v4831
      %v4854 = vpack.c.b16 %v4834, %v4833
      %v4855 = vpack.c.b16 %v4836, %v4835
      %v4856 = vpack.c.b16 %v4838, %v4837
      %v4857 = vpack.c.b16 %v4840, %v4839
      %v4858 = vpack.c.b16 %v4842, %v4841
      %v4891 = vunpack.c.l.b16 %v4795
      %v4892 = vunpack.c.l.b16 %v4796
      %v4893 = vunpack.c.l.b16 %v4797
      %v4894 = vunpack.c.l.b16 %v4798
      %v4895 = vunpack.c.l.b16 %v4799
      %v4896 = vunpack.c.l.b16 %v4800
      %v4897 = vunpack.c.l.b16 %v4801
      %v4898 = vunpack.c.l.b16 %v4802
      %v4899 = vunpack.c.l.b16 %v4803
      %v4900 = vunpack.c.l.b16 %v4804
      %v4901 = vunpack.c.l.b16 %v4805
      %v4902 = vunpack.c.l.b16 %v4806
      %v4903 = vunpack.c.l.b16 %v4807
      %v4904 = vunpack.c.l.b16 %v4808
      %v4905 = vunpack.c.l.b16 %v4809
      %v4906 = vunpack.c.l.b16 %v4810
      %v4907 = vpack.c.b16 %v4892, %v4891
      %v4908 = vpack.c.b16 %v4894, %v4893
      %v4909 = vpack.c.b16 %v4896, %v4895
      %v4910 = vpack.c.b16 %v4898, %v4897
      %v4911 = vpack.c.b16 %v4900, %v4899
      %v4912 = vpack.c.b16 %v4902, %v4901
      %v4913 = vpack.c.b16 %v4904, %v4903
      %v4914 = vpack.c.b16 %v4906, %v4905
      %4923 = vmatprep.subr.bf16.mxu0 0
      %4924 = vmatpush1.bf16.msra.mxu0 %v4907
      %4925 = vmatprep.subr.bf16.mxu0 0
      %4926 = vmatpush1.bf16.msra.mxu0 %v4908
      %4927 = vmatprep.subr.bf16.mxu0 0
      %4928 = vmatpush1.bf16.msra.mxu0 %v4909
      %4929 = vmatprep.subr.bf16.mxu0 0
      %4930 = vmatpush1.bf16.msra.mxu0 %v4910
      %4931 = vmatprep.subr.bf16.mxu0 0
      %4932 = vmatpush1.bf16.msra.mxu0 %v4911
      %4933 = vmatprep.subr.bf16.mxu0 0
      %4934 = vmatpush1.bf16.msra.mxu0 %v4912
      %4935 = vmatprep.subr.bf16.mxu0 0
      %4936 = vmatpush1.bf16.msra.mxu0 %v4913
      %4937 = vmatprep.subr.bf16.mxu0 0
      %4938 = vmatpush1.bf16.msra.mxu0 %v4914
      %4939 = vmatprep.subr.bf16.mxu0 0
      %4940 = vmatpush1.bf16.msra.mxu0 0
      %4941 = vmatprep.subr.bf16.mxu0 0
      %4942 = vmatpush1.bf16.msra.mxu0 0
      %4943 = vmatprep.subr.bf16.mxu0 0
      %4944 = vmatpush1.bf16.msra.mxu0 0
      %4945 = vmatprep.subr.bf16.mxu0 0
      %4946 = vmatpush1.bf16.msra.mxu0 0
      %4947 = vmatprep.subr.bf16.mxu0 0
      %4948 = vmatpush1.bf16.msra.mxu0 0
      %4949 = vmatprep.subr.bf16.mxu0 0
      %4950 = vmatpush1.bf16.msra.mxu0 0
      %4951 = vmatprep.subr.bf16.mxu0 0
      %4952 = vmatpush1.bf16.msra.mxu0 0
      %4953 = vmatprep.subr.bf16.mxu0 0
      %4954 = vmatpush1.bf16.msra.mxu0 0
      %4955 = vmatprep.mubr.bf16.mxu0 0
      %4956 = vmatmul.mubr.bf16.gmra.mrb[0].mxu0 %v4843
      %v4957 = vpop.f32.mrb[0].mxu0
      %v4958 = vadd.f32 0.0, %v4957
      %v4959 = vpop.f32.mrb[0].mxu0
      %v4960 = vpop.f32.mrb[0].mxu0
      %v4961 = vadd.f32 0.0, %v4960
      %v4962 = vpop.f32.mrb[0].mxu0
      %4963 = vmatprep.mubr.bf16.mxu0 0
      %4964 = vmatmul.mubr.bf16.gmra.mrb[0].mxu0 %v4844
      %v4965 = vpop.f32.mrb[0].mxu0
      %v4966 = vadd.f32 0.0, %v4965
      %v4967 = vpop.f32.mrb[0].mxu0
      %v4968 = vpop.f32.mrb[0].mxu0
      %v4969 = vadd.f32 0.0, %v4968
      %v4970 = vpop.f32.mrb[0].mxu0
      %4971 = vmatprep.mubr.bf16.mxu0 0
      %4972 = vmatmul.mubr.bf16.gmra.mrb[0].mxu0 %v4845
      %v4973 = vpop.f32.mrb[0].mxu0
      %v4974 = vadd.f32 0.0, %v4973
      %v4975 = vpop.f32.mrb[0].mxu0
      %v4976 = vpop.f32.mrb[0].mxu0
      %v4977 = vadd.f32 0.0, %v4976
      %v4978 = vpop.f32.mrb[0].mxu0
      %4979 = vmatprep.mubr.bf16.mxu0 0
      %4980 = vmatmul.mubr.bf16.gmra.mrb[0].mxu0 %v4846
      %v4981 = vpop.f32.mrb[0].mxu0
      %v4982 = vadd.f32 0.0, %v4981
      %v4983 = vpop.f32.mrb[0].mxu0
      %v4984 = vpop.f32.mrb[0].mxu0
      %v4985 = vadd.f32 0.0, %v4984
      %v4986 = vpop.f32.mrb[0].mxu0
      %4987 = vmatprep.mubr.bf16.mxu0 0
      %4988 = vmatmul.mubr.bf16.gmra.mrb[0].mxu0 %v4847
      %v4989 = vpop.f32.mrb[0].mxu0
      %v4990 = vadd.f32 0.0, %v4989
      %v4991 = vpop.f32.mrb[0].mxu0
      %v4992 = vpop.f32.mrb[0].mxu0
      %v4993 = vadd.f32 0.0, %v4992
      %v4994 = vpop.f32.mrb[0].mxu0
      %4995 = vmatprep.mubr.bf16.mxu0 0
      %4996 = vmatmul.mubr.bf16.gmra.mrb[0].mxu0 %v4848
      %v4997 = vpop.f32.mrb[0].mxu0
      %v4998 = vadd.f32 0.0, %v4997
      %v4999 = vpop.f32.mrb[0].mxu0
      %v5000 = vpop.f32.mrb[0].mxu0
      %v5001 = vadd.f32 0.0, %v5000
      %v5002 = vpop.f32.mrb[0].mxu0
      %5003 = vmatprep.mubr.bf16.mxu0 0
      %5004 = vmatmul.mubr.bf16.gmra.mrb[0].mxu0 %v4849
      %v5005 = vpop.f32.mrb[0].mxu0
      %v5006 = vadd.f32 0.0, %v5005
      %v5007 = vpop.f32.mrb[0].mxu0
      %v5008 = vpop.f32.mrb[0].mxu0
      %v5009 = vadd.f32 0.0, %v5008
      %v5010 = vpop.f32.mrb[0].mxu0
      %5011 = vmatprep.mubr.bf16.mxu0 0
      %5012 = vmatmul.mubr.bf16.gmra.mrb[0].mxu0 %v4850
      %v5013 = vpop.f32.mrb[0].mxu0
      %v5014 = vadd.f32 0.0, %v5013
      %v5015 = vpop.f32.mrb[0].mxu0
      %v5016 = vpop.f32.mrb[0].mxu0
      %v5017 = vadd.f32 0.0, %v5016
      %v5018 = vpop.f32.mrb[0].mxu0
      %5019 = vmatprep.mubr.bf16.mxu0 0
      %5020 = vmatmul.mubr.bf16.gmra.mrb[0].mxu0 %v4851
      %v5021 = vpop.f32.mrb[0].mxu0
      %v5022 = vadd.f32 0.0, %v5021
      %v5023 = vpop.f32.mrb[0].mxu0
      %v5024 = vpop.f32.mrb[0].mxu0
      %v5025 = vadd.f32 0.0, %v5024
      %v5026 = vpop.f32.mrb[0].mxu0
      %5027 = vmatprep.mubr.bf16.mxu0 0
      %5028 = vmatmul.mubr.bf16.gmra.mrb[0].mxu0 %v4852
      %v5029 = vpop.f32.mrb[0].mxu0
      %v5030 = vadd.f32 0.0, %v5029
      %v5031 = vpop.f32.mrb[0].mxu0
      %v5032 = vpop.f32.mrb[0].mxu0
      %v5033 = vadd.f32 0.0, %v5032
      %v5034 = vpop.f32.mrb[0].mxu0
      %5035 = vmatprep.mubr.bf16.mxu0 0
      %5036 = vmatmul.mubr.bf16.gmra.mrb[0].mxu0 %v4853
      %v5037 = vpop.f32.mrb[0].mxu0
      %v5038 = vadd.f32 0.0, %v5037
      %v5039 = vpop.f32.mrb[0].mxu0
      %v5040 = vpop.f32.mrb[0].mxu0
      %v5041 = vadd.f32 0.0, %v5040
      %v5042 = vpop.f32.mrb[0].mxu0
      %5043 = vmatprep.mubr.bf16.mxu0 0
      %5044 = vmatmul.mubr.bf16.gmra.mrb[0].mxu0 %v4854
      %v5045 = vpop.f32.mrb[0].mxu0
      %v5046 = vadd.f32 0.0, %v5045
      %v5047 = vpop.f32.mrb[0].mxu0
      %v5048 = vpop.f32.mrb[0].mxu0
      %v5049 = vadd.f32 0.0, %v5048
      %v5050 = vpop.f32.mrb[0].mxu0
      %5051 = vmatprep.mubr.bf16.mxu0 0
      %5052 = vmatmul.mubr.bf16.gmra.mrb[0].mxu0 %v4855
      %v5053 = vpop.f32.mrb[0].mxu0
      %v5054 = vadd.f32 0.0, %v5053
      %v5055 = vpop.f32.mrb[0].mxu0
      %v5056 = vpop.f32.mrb[0].mxu0
      %v5057 = vadd.f32 0.0, %v5056
      %v5058 = vpop.f32.mrb[0].mxu0
      %5059 = vmatprep.mubr.bf16.mxu0 0
      %5060 = vmatmul.mubr.bf16.gmra.mrb[0].mxu0 %v4856
      %v5061 = vpop.f32.mrb[0].mxu0
      %v5062 = vadd.f32 0.0, %v5061
      %v5063 = vpop.f32.mrb[0].mxu0
      %v5064 = vpop.f32.mrb[0].mxu0
      %v5065 = vadd.f32 0.0, %v5064
      %v5066 = vpop.f32.mrb[0].mxu0
      %5067 = vmatprep.mubr.bf16.mxu0 0
      %5068 = vmatmul.mubr.bf16.gmra.mrb[0].mxu0 %v4857
      %v5069 = vpop.f32.mrb[0].mxu0
      %v5070 = vadd.f32 0.0, %v5069
      %v5071 = vpop.f32.mrb[0].mxu0
      %v5072 = vpop.f32.mrb[0].mxu0
      %v5073 = vadd.f32 0.0, %v5072
      %v5074 = vpop.f32.mrb[0].mxu0
      %5075 = vmatprep.mubr.bf16.mxu0 0
      %5076 = vmatmul.mubr.bf16.gmra.mrb[0].mxu0 %v4858
      %v5077 = vpop.f32.mrb[0].mxu0
      %v5078 = vadd.f32 0.0, %v5077
      %v5079 = vpop.f32.mrb[0].mxu0
      %v5080 = vpop.f32.mrb[0].mxu0
      %v5081 = vadd.f32 0.0, %v5080
      %v5082 = vpop.f32.mrb[0].mxu0
      %5083 = vdwg.mxu0
      %v5084 = vadd.f32 %v4330, %v4958
      %v5085 = vadd.f32 %v4331, %v4961
      %v5086 = vadd.f32 %v4332, %v4966
      %v5087 = vadd.f32 %v4333, %v4969
      %v5088 = vadd.f32 %v4334, %v4974
      %v5089 = vadd.f32 %v4335, %v4977
      %v5090 = vadd.f32 %v4336, %v4982
      %v5091 = vadd.f32 %v4337, %v4985
      %v5092 = vadd.f32 %v4338, %v4990
      %v5093 = vadd.f32 %v4339, %v4993
      %v5094 = vadd.f32 %v4340, %v4998
      %v5095 = vadd.f32 %v4341, %v5001
      %v5096 = vadd.f32 %v4342, %v5006
      %v5097 = vadd.f32 %v4343, %v5009
      %v5098 = vadd.f32 %v4344, %v5014
      %v5099 = vadd.f32 %v4345, %v5017
      %v5100 = vadd.f32 %v4346, %v5022
      %v5101 = vadd.f32 %v4347, %v5025
      %v5102 = vadd.f32 %v4348, %v5030
      %v5103 = vadd.f32 %v4349, %v5033
      %v5104 = vadd.f32 %v4350, %v5038
      %v5105 = vadd.f32 %v4351, %v5041
      %v5106 = vadd.f32 %v4352, %v5046
      %v5107 = vadd.f32 %v4353, %v5049
      %v5108 = vadd.f32 %v4354, %v5054
      %v5109 = vadd.f32 %v4355, %v5057
      %v5110 = vadd.f32 %v4356, %v5062
      %v5111 = vadd.f32 %v4357, %v5065
      %v5112 = vadd.f32 %v4358, %v5070
      %v5113 = vadd.f32 %v4359, %v5073
      %v5114 = vadd.f32 %v4360, %v5078
      %v5115 = vadd.f32 %v4361, %v5081
      %v5116 = vld [vmem:[%s3975] sm:$0xe]
      %v5117 = vld [vmem:[%s3975 + $0xc] sm:$0xe]
      %v5118 = vld [vmem:[%s3975 + $0x18] sm:$0xe]
      %v5119 = vld [vmem:[%s3975 + $0x24] sm:$0xe]
      %v5120 = vld [vmem:[%s3975 + $0x30] sm:$0xe]
      %v5121 = vld [vmem:[%s3975 + $0x3c] sm:$0xe]
      %v5122 = vld [vmem:[%s3975 + $0x48] sm:$0xe]
      %v5123 = vld [vmem:[%s3975 + $0x54] sm:$0xe]
      %v5124 = vld [vmem:[%s3975 + $0x60] sm:$0xe]
      %v5125 = vld [vmem:[%s3975 + $0x6c] sm:$0xe]
      %v5126 = vld [vmem:[%s3975 + $0x78] sm:$0xe]
      %v5127 = vld [vmem:[%s3975 + $0x84] sm:$0xe]
      %v5128 = vld [vmem:[%s3975 + $0x90] sm:$0xe]
      %v5129 = vld [vmem:[%s3975 + $0x9c] sm:$0xe]
      %v5130 = vld [vmem:[%s3975 + $0xa8] sm:$0xe]
      %v5131 = vld [vmem:[%s3975 + $0xb4] sm:$0xe]
      %v5180 = vrot.slane %v5116, 5
      %v5181 = vrot.slane %v5180, 4
      %v5182 = vrot.slane %v4363, 5
      %v5183 = vsel %vm1902, %v5181, %v5182
      %v5184 = vrot.slane %v5182, 4
      %v5185 = vrot.slane %v4364, 5
      %v5186 = vsel %vm1902, %v5184, %v5185
      %v5187 = vrot.slane %v5117, 5
      %v5188 = vrot.slane %v5187, 4
      %v5189 = vrot.slane %v4366, 5
      %v5190 = vsel %vm1902, %v5188, %v5189
      %v5191 = vrot.slane %v5189, 4
      %v5192 = vrot.slane %v4367, 5
      %v5193 = vsel %vm1902, %v5191, %v5192
      %v5194 = vrot.slane %v5118, 5
      %v5195 = vrot.slane %v5194, 4
      %v5196 = vrot.slane %v4369, 5
      %v5197 = vsel %vm1902, %v5195, %v5196
      %v5198 = vrot.slane %v5196, 4
      %v5199 = vrot.slane %v4370, 5
      %v5200 = vsel %vm1902, %v5198, %v5199
      %v5201 = vrot.slane %v5119, 5
      %v5202 = vrot.slane %v5201, 4
      %v5203 = vrot.slane %v4372, 5
      %v5204 = vsel %vm1902, %v5202, %v5203
      %v5205 = vrot.slane %v5203, 4
      %v5206 = vrot.slane %v4373, 5
      %v5207 = vsel %vm1902, %v5205, %v5206
      %v5208 = vrot.slane %v5120, 5
      %v5209 = vrot.slane %v5208, 4
      %v5210 = vrot.slane %v4375, 5
      %v5211 = vsel %vm1902, %v5209, %v5210
      %v5212 = vrot.slane %v5210, 4
      %v5213 = vrot.slane %v4376, 5
      %v5214 = vsel %vm1902, %v5212, %v5213
      %v5215 = vrot.slane %v5121, 5
      %v5216 = vrot.slane %v5215, 4
      %v5217 = vrot.slane %v4378, 5
      %v5218 = vsel %vm1902, %v5216, %v5217
      %v5219 = vrot.slane %v5217, 4
      %v5220 = vrot.slane %v4379, 5
      %v5221 = vsel %vm1902, %v5219, %v5220
      %v5222 = vrot.slane %v5122, 5
      %v5223 = vrot.slane %v5222, 4
      %v5224 = vrot.slane %v4381, 5
      %v5225 = vsel %vm1902, %v5223, %v5224
      %v5226 = vrot.slane %v5224, 4
      %v5227 = vrot.slane %v4382, 5
      %v5228 = vsel %vm1902, %v5226, %v5227
      %v5229 = vrot.slane %v5123, 5
      %v5230 = vrot.slane %v5229, 4
      %v5231 = vrot.slane %v4384, 5
      %v5232 = vsel %vm1902, %v5230, %v5231
      %v5233 = vrot.slane %v5231, 4
      %v5234 = vrot.slane %v4385, 5
      %v5235 = vsel %vm1902, %v5233, %v5234
      %v5236 = vrot.slane %v5124, 5
      %v5237 = vrot.slane %v5236, 4
      %v5238 = vrot.slane %v4387, 5
      %v5239 = vsel %vm1902, %v5237, %v5238
      %v5240 = vrot.slane %v5238, 4
      %v5241 = vrot.slane %v4388, 5
      %v5242 = vsel %vm1902, %v5240, %v5241
      %v5243 = vrot.slane %v5125, 5
      %v5244 = vrot.slane %v5243, 4
      %v5245 = vrot.slane %v4390, 5
      %v5246 = vsel %vm1902, %v5244, %v5245
      %v5247 = vrot.slane %v5245, 4
      %v5248 = vrot.slane %v4391, 5
      %v5249 = vsel %vm1902, %v5247, %v5248
      %v5250 = vrot.slane %v5126, 5
      %v5251 = vrot.slane %v5250, 4
      %v5252 = vrot.slane %v4393, 5
      %v5253 = vsel %vm1902, %v5251, %v5252
      %v5254 = vrot.slane %v5252, 4
      %v5255 = vrot.slane %v4394, 5
      %v5256 = vsel %vm1902, %v5254, %v5255
      %v5257 = vrot.slane %v5127, 5
      %v5258 = vrot.slane %v5257, 4
      %v5259 = vrot.slane %v4396, 5
      %v5260 = vsel %vm1902, %v5258, %v5259
      %v5261 = vrot.slane %v5259, 4
      %v5262 = vrot.slane %v4397, 5
      %v5263 = vsel %vm1902, %v5261, %v5262
      %v5264 = vrot.slane %v5128, 5
      %v5265 = vrot.slane %v5264, 4
      %v5266 = vrot.slane %v4399, 5
      %v5267 = vsel %vm1902, %v5265, %v5266
      %v5268 = vrot.slane %v5266, 4
      %v5269 = vrot.slane %v4400, 5
      %v5270 = vsel %vm1902, %v5268, %v5269
      %v5271 = vrot.slane %v5129, 5
      %v5272 = vrot.slane %v5271, 4
      %v5273 = vrot.slane %v4402, 5
      %v5274 = vsel %vm1902, %v5272, %v5273
      %v5275 = vrot.slane %v5273, 4
      %v5276 = vrot.slane %v4403, 5
      %v5277 = vsel %vm1902, %v5275, %v5276
      %v5278 = vrot.slane %v5130, 5
      %v5279 = vrot.slane %v5278, 4
      %v5280 = vrot.slane %v4405, 5
      %v5281 = vsel %vm1902, %v5279, %v5280
      %v5282 = vrot.slane %v5280, 4
      %v5283 = vrot.slane %v4406, 5
      %v5284 = vsel %vm1902, %v5282, %v5283
      %v5285 = vrot.slane %v5131, 5
      %v5286 = vrot.slane %v5285, 4
      %v5287 = vrot.slane %v4408, 5
      %v5288 = vsel %vm1902, %v5286, %v5287
      %v5289 = vrot.slane %v5287, 4
      %v5290 = vrot.slane %v4409, 5
      %v5291 = vsel %vm1902, %v5289, %v5290
      %s5292 = scalar_lea.vmem %s3, 512
      %v5293 = vld [vmem:[%s5292] sm:$0xf]
      %v5294 = vld [vmem:[%s5292 + $0x4] sm:$0xf]
      %v5295 = vld [vmem:[%s5292 + $0x8] sm:$0xf]
      %v5296 = vld [vmem:[%s5292 + $0xc] sm:$0xf]
      %v5297 = vld [vmem:[%s5292 + $0x10] sm:$0xf]
      %v5298 = vld [vmem:[%s5292 + $0x14] sm:$0xf]
      %v5299 = vld [vmem:[%s5292 + $0x18] sm:$0xf]
      %v5300 = vld [vmem:[%s5292 + $0x1c] sm:$0xf]
      %v5301 = vld [vmem:[%s5292 + $0x20] sm:$0xf]
      %v5302 = vld [vmem:[%s5292 + $0x24] sm:$0xf]
      %v5303 = vld [vmem:[%s5292 + $0x28] sm:$0xf]
      %v5304 = vld [vmem:[%s5292 + $0x2c] sm:$0xf]
      %v5305 = vld [vmem:[%s5292 + $0x30] sm:$0xf]
      %v5306 = vld [vmem:[%s5292 + $0x34] sm:$0xf]
      %v5307 = vld [vmem:[%s5292 + $0x38] sm:$0xf]
      %v5308 = vld [vmem:[%s5292 + $0x3c] sm:$0xf]
      %v5309 = vunpack.c.l.b16 %v5183
      %v5310 = vunpack.c.l.b16 %v5186
      %v5311 = vunpack.c.l.b16 %v5190
      %v5312 = vunpack.c.l.b16 %v5193
      %v5313 = vunpack.c.l.b16 %v5197
      %v5314 = vunpack.c.l.b16 %v5200
      %v5315 = vunpack.c.l.b16 %v5204
      %v5316 = vunpack.c.l.b16 %v5207
      %v5317 = vunpack.c.l.b16 %v5211
      %v5318 = vunpack.c.l.b16 %v5214
      %v5319 = vunpack.c.l.b16 %v5218
      %v5320 = vunpack.c.l.b16 %v5221
      %v5321 = vunpack.c.l.b16 %v5225
      %v5322 = vunpack.c.l.b16 %v5228
      %v5323 = vunpack.c.l.b16 %v5232
      %v5324 = vunpack.c.l.b16 %v5235
      %v5325 = vunpack.c.l.b16 %v5239
      %v5326 = vunpack.c.l.b16 %v5242
      %v5327 = vunpack.c.l.b16 %v5246
      %v5328 = vunpack.c.l.b16 %v5249
      %v5329 = vunpack.c.l.b16 %v5253
      %v5330 = vunpack.c.l.b16 %v5256
      %v5331 = vunpack.c.l.b16 %v5260
      %v5332 = vunpack.c.l.b16 %v5263
      %v5333 = vunpack.c.l.b16 %v5267
      %v5334 = vunpack.c.l.b16 %v5270
      %v5335 = vunpack.c.l.b16 %v5274
      %v5336 = vunpack.c.l.b16 %v5277
      %v5337 = vunpack.c.l.b16 %v5281
      %v5338 = vunpack.c.l.b16 %v5284
      %v5339 = vunpack.c.l.b16 %v5288
      %v5340 = vunpack.c.l.b16 %v5291
      %v5341 = vpack.c.b16 %v5310, %v5309
      %v5342 = vpack.c.b16 %v5312, %v5311
      %v5343 = vpack.c.b16 %v5314, %v5313
      %v5344 = vpack.c.b16 %v5316, %v5315
      %v5345 = vpack.c.b16 %v5318, %v5317
      %v5346 = vpack.c.b16 %v5320, %v5319
      %v5347 = vpack.c.b16 %v5322, %v5321
      %v5348 = vpack.c.b16 %v5324, %v5323
      %v5349 = vpack.c.b16 %v5326, %v5325
      %v5350 = vpack.c.b16 %v5328, %v5327
      %v5351 = vpack.c.b16 %v5330, %v5329
      %v5352 = vpack.c.b16 %v5332, %v5331
      %v5353 = vpack.c.b16 %v5334, %v5333
      %v5354 = vpack.c.b16 %v5336, %v5335
      %v5355 = vpack.c.b16 %v5338, %v5337
      %v5356 = vpack.c.b16 %v5340, %v5339
      %v5389 = vunpack.c.l.b16 %v5293
      %v5390 = vunpack.c.l.b16 %v5294
      %v5391 = vunpack.c.l.b16 %v5295
      %v5392 = vunpack.c.l.b16 %v5296
      %v5393 = vunpack.c.l.b16 %v5297
      %v5394 = vunpack.c.l.b16 %v5298
      %v5395 = vunpack.c.l.b16 %v5299
      %v5396 = vunpack.c.l.b16 %v5300
      %v5397 = vunpack.c.l.b16 %v5301
      %v5398 = vunpack.c.l.b16 %v5302
      %v5399 = vunpack.c.l.b16 %v5303
      %v5400 = vunpack.c.l.b16 %v5304
      %v5401 = vunpack.c.l.b16 %v5305
      %v5402 = vunpack.c.l.b16 %v5306
      %v5403 = vunpack.c.l.b16 %v5307
      %v5404 = vunpack.c.l.b16 %v5308
      %v5405 = vpack.c.b16 %v5390, %v5389
      %v5406 = vpack.c.b16 %v5392, %v5391
      %v5407 = vpack.c.b16 %v5394, %v5393
      %v5408 = vpack.c.b16 %v5396, %v5395
      %v5409 = vpack.c.b16 %v5398, %v5397
      %v5410 = vpack.c.b16 %v5400, %v5399
      %v5411 = vpack.c.b16 %v5402, %v5401
      %v5412 = vpack.c.b16 %v5404, %v5403
      %5421 = vmatprep.subr.bf16.mxu0 0
      %5422 = vmatpush1.bf16.msra.mxu0 %v5405
      %5423 = vmatprep.subr.bf16.mxu0 0
      %5424 = vmatpush1.bf16.msra.mxu0 %v5406
      %5425 = vmatprep.subr.bf16.mxu0 0
      %5426 = vmatpush1.bf16.msra.mxu0 %v5407
      %5427 = vmatprep.subr.bf16.mxu0 0
      %5428 = vmatpush1.bf16.msra.mxu0 %v5408
      %5429 = vmatprep.subr.bf16.mxu0 0
      %5430 = vmatpush1.bf16.msra.mxu0 %v5409
      %5431 = vmatprep.subr.bf16.mxu0 0
      %5432 = vmatpush1.bf16.msra.mxu0 %v5410
      %5433 = vmatprep.subr.bf16.mxu0 0
      %5434 = vmatpush1.bf16.msra.mxu0 %v5411
      %5435 = vmatprep.subr.bf16.mxu0 0
      %5436 = vmatpush1.bf16.msra.mxu0 %v5412
      %5437 = vmatprep.subr.bf16.mxu0 0
      %5438 = vmatpush1.bf16.msra.mxu0 0
      %5439 = vmatprep.subr.bf16.mxu0 0
      %5440 = vmatpush1.bf16.msra.mxu0 0
      %5441 = vmatprep.subr.bf16.mxu0 0
      %5442 = vmatpush1.bf16.msra.mxu0 0
      %5443 = vmatprep.subr.bf16.mxu0 0
      %5444 = vmatpush1.bf16.msra.mxu0 0
      %5445 = vmatprep.subr.bf16.mxu0 0
      %5446 = vmatpush1.bf16.msra.mxu0 0
      %5447 = vmatprep.subr.bf16.mxu0 0
      %5448 = vmatpush1.bf16.msra.mxu0 0
      %5449 = vmatprep.subr.bf16.mxu0 0
      %5450 = vmatpush1.bf16.msra.mxu0 0
      %5451 = vmatprep.subr.bf16.mxu0 0
      %5452 = vmatpush1.bf16.msra.mxu0 0
      %5453 = vmatprep.mubr.bf16.mxu0 0
      %5454 = vmatmul.mubr.bf16.gmra.mrb[0].mxu0 %v5341
      %v5455 = vpop.f32.mrb[0].mxu0
      %v5456 = vadd.f32 0.0, %v5455
      %v5457 = vpop.f32.mrb[0].mxu0
      %v5458 = vpop.f32.mrb[0].mxu0
      %v5459 = vadd.f32 0.0, %v5458
      %v5460 = vpop.f32.mrb[0].mxu0
      %5461 = vmatprep.mubr.bf16.mxu0 0
      %5462 = vmatmul.mubr.bf16.gmra.mrb[0].mxu0 %v5342
      %v5463 = vpop.f32.mrb[0].mxu0
      %v5464 = vadd.f32 0.0, %v5463
      %v5465 = vpop.f32.mrb[0].mxu0
      %v5466 = vpop.f32.mrb[0].mxu0
      %v5467 = vadd.f32 0.0, %v5466
      %v5468 = vpop.f32.mrb[0].mxu0
      %5469 = vmatprep.mubr.bf16.mxu0 0
      %5470 = vmatmul.mubr.bf16.gmra.mrb[0].mxu0 %v5343
      %v5471 = vpop.f32.mrb[0].mxu0
      %v5472 = vadd.f32 0.0, %v5471
      %v5473 = vpop.f32.mrb[0].mxu0
      %v5474 = vpop.f32.mrb[0].mxu0
      %v5475 = vadd.f32 0.0, %v5474
      %v5476 = vpop.f32.mrb[0].mxu0
      %5477 = vmatprep.mubr.bf16.mxu0 0
      %5478 = vmatmul.mubr.bf16.gmra.mrb[0].mxu0 %v5344
      %v5479 = vpop.f32.mrb[0].mxu0
      %v5480 = vadd.f32 0.0, %v5479
      %v5481 = vpop.f32.mrb[0].mxu0
      %v5482 = vpop.f32.mrb[0].mxu0
      %v5483 = vadd.f32 0.0, %v5482
      %v5484 = vpop.f32.mrb[0].mxu0
      %5485 = vmatprep.mubr.bf16.mxu0 0
      %5486 = vmatmul.mubr.bf16.gmra.mrb[0].mxu0 %v5345
      %v5487 = vpop.f32.mrb[0].mxu0
      %v5488 = vadd.f32 0.0, %v5487
      %v5489 = vpop.f32.mrb[0].mxu0
      %v5490 = vpop.f32.mrb[0].mxu0
      %v5491 = vadd.f32 0.0, %v5490
      %v5492 = vpop.f32.mrb[0].mxu0
      %5493 = vmatprep.mubr.bf16.mxu0 0
      %5494 = vmatmul.mubr.bf16.gmra.mrb[0].mxu0 %v5346
      %v5495 = vpop.f32.mrb[0].mxu0
      %v5496 = vadd.f32 0.0, %v5495
      %v5497 = vpop.f32.mrb[0].mxu0
      %v5498 = vpop.f32.mrb[0].mxu0
      %v5499 = vadd.f32 0.0, %v5498
      %v5500 = vpop.f32.mrb[0].mxu0
      %5501 = vmatprep.mubr.bf16.mxu0 0
      %5502 = vmatmul.mubr.bf16.gmra.mrb[0].mxu0 %v5347
      %v5503 = vpop.f32.mrb[0].mxu0
      %v5504 = vadd.f32 0.0, %v5503
      %v5505 = vpop.f32.mrb[0].mxu0
      %v5506 = vpop.f32.mrb[0].mxu0
      %v5507 = vadd.f32 0.0, %v5506
      %v5508 = vpop.f32.mrb[0].mxu0
      %5509 = vmatprep.mubr.bf16.mxu0 0
      %5510 = vmatmul.mubr.bf16.gmra.mrb[0].mxu0 %v5348
      %v5511 = vpop.f32.mrb[0].mxu0
      %v5512 = vadd.f32 0.0, %v5511
      %v5513 = vpop.f32.mrb[0].mxu0
      %v5514 = vpop.f32.mrb[0].mxu0
      %v5515 = vadd.f32 0.0, %v5514
      %v5516 = vpop.f32.mrb[0].mxu0
      %5517 = vmatprep.mubr.bf16.mxu0 0
      %5518 = vmatmul.mubr.bf16.gmra.mrb[0].mxu0 %v5349
      %v5519 = vpop.f32.mrb[0].mxu0
      %v5520 = vadd.f32 0.0, %v5519
      %v5521 = vpop.f32.mrb[0].mxu0
      %v5522 = vpop.f32.mrb[0].mxu0
      %v5523 = vadd.f32 0.0, %v5522
      %v5524 = vpop.f32.mrb[0].mxu0
      %5525 = vmatprep.mubr.bf16.mxu0 0
      %5526 = vmatmul.mubr.bf16.gmra.mrb[0].mxu0 %v5350
      %v5527 = vpop.f32.mrb[0].mxu0
      %v5528 = vadd.f32 0.0, %v5527
      %v5529 = vpop.f32.mrb[0].mxu0
      %v5530 = vpop.f32.mrb[0].mxu0
      %v5531 = vadd.f32 0.0, %v5530
      %v5532 = vpop.f32.mrb[0].mxu0
      %5533 = vmatprep.mubr.bf16.mxu0 0
      %5534 = vmatmul.mubr.bf16.gmra.mrb[0].mxu0 %v5351
      %v5535 = vpop.f32.mrb[0].mxu0
      %v5536 = vadd.f32 0.0, %v5535
      %v5537 = vpop.f32.mrb[0].mxu0
      %v5538 = vpop.f32.mrb[0].mxu0
      %v5539 = vadd.f32 0.0, %v5538
      %v5540 = vpop.f32.mrb[0].mxu0
      %5541 = vmatprep.mubr.bf16.mxu0 0
      %5542 = vmatmul.mubr.bf16.gmra.mrb[0].mxu0 %v5352
      %v5543 = vpop.f32.mrb[0].mxu0
      %v5544 = vadd.f32 0.0, %v5543
      %v5545 = vpop.f32.mrb[0].mxu0
      %v5546 = vpop.f32.mrb[0].mxu0
      %v5547 = vadd.f32 0.0, %v5546
      %v5548 = vpop.f32.mrb[0].mxu0
      %5549 = vmatprep.mubr.bf16.mxu0 0
      %5550 = vmatmul.mubr.bf16.gmra.mrb[0].mxu0 %v5353
      %v5551 = vpop.f32.mrb[0].mxu0
      %v5552 = vadd.f32 0.0, %v5551
      %v5553 = vpop.f32.mrb[0].mxu0
      %v5554 = vpop.f32.mrb[0].mxu0
      %v5555 = vadd.f32 0.0, %v5554
      %v5556 = vpop.f32.mrb[0].mxu0
      %5557 = vmatprep.mubr.bf16.mxu0 0
      %5558 = vmatmul.mubr.bf16.gmra.mrb[0].mxu0 %v5354
      %v5559 = vpop.f32.mrb[0].mxu0
      %v5560 = vadd.f32 0.0, %v5559
      %v5561 = vpop.f32.mrb[0].mxu0
      %v5562 = vpop.f32.mrb[0].mxu0
      %v5563 = vadd.f32 0.0, %v5562
      %v5564 = vpop.f32.mrb[0].mxu0
      %5565 = vmatprep.mubr.bf16.mxu0 0
      %5566 = vmatmul.mubr.bf16.gmra.mrb[0].mxu0 %v5355
      %v5567 = vpop.f32.mrb[0].mxu0
      %v5568 = vadd.f32 0.0, %v5567
      %v5569 = vpop.f32.mrb[0].mxu0
      %v5570 = vpop.f32.mrb[0].mxu0
      %v5571 = vadd.f32 0.0, %v5570
      %v5572 = vpop.f32.mrb[0].mxu0
      %5573 = vmatprep.mubr.bf16.mxu0 0
      %5574 = vmatmul.mubr.bf16.gmra.mrb[0].mxu0 %v5356
      %v5575 = vpop.f32.mrb[0].mxu0
      %v5576 = vadd.f32 0.0, %v5575
      %v5577 = vpop.f32.mrb[0].mxu0
      %v5578 = vpop.f32.mrb[0].mxu0
      %v5579 = vadd.f32 0.0, %v5578
      %v5580 = vpop.f32.mrb[0].mxu0
      %5581 = vdwg.mxu0
      %v5582 = vadd.f32 %v5084, %v5456
      %v5583 = vadd.f32 %v5085, %v5459
      %v5584 = vadd.f32 %v5086, %v5464
      %v5585 = vadd.f32 %v5087, %v5467
      %v5586 = vadd.f32 %v5088, %v5472
      %v5587 = vadd.f32 %v5089, %v5475
      %v5588 = vadd.f32 %v5090, %v5480
      %v5589 = vadd.f32 %v5091, %v5483
      %v5590 = vadd.f32 %v5092, %v5488
      %v5591 = vadd.f32 %v5093, %v5491
      %v5592 = vadd.f32 %v5094, %v5496
      %v5593 = vadd.f32 %v5095, %v5499
      %v5594 = vadd.f32 %v5096, %v5504
      %v5595 = vadd.f32 %v5097, %v5507
      %v5596 = vadd.f32 %v5098, %v5512
      %v5597 = vadd.f32 %v5099, %v5515
      %v5598 = vadd.f32 %v5100, %v5520
      %v5599 = vadd.f32 %v5101, %v5523
      %v5600 = vadd.f32 %v5102, %v5528
      %v5601 = vadd.f32 %v5103, %v5531
      %v5602 = vadd.f32 %v5104, %v5536
      %v5603 = vadd.f32 %v5105, %v5539
      %v5604 = vadd.f32 %v5106, %v5544
      %v5605 = vadd.f32 %v5107, %v5547
      %v5606 = vadd.f32 %v5108, %v5552
      %v5607 = vadd.f32 %v5109, %v5555
      %v5608 = vadd.f32 %v5110, %v5560
      %v5609 = vadd.f32 %v5111, %v5563
      %v5610 = vadd.f32 %v5112, %v5568
      %v5611 = vadd.f32 %v5113, %v5571
      %v5612 = vadd.f32 %v5114, %v5576
      %v5613 = vadd.f32 %v5115, %v5579
      %v5614 = vadd.f32 %v5582, %v5583
      %v5615 = vadd.f32 %v5614, %v5584
      %v5616 = vadd.f32 %v5615, %v5585
      %v5617 = vadd.f32 %v5616, %v5586
      %v5618 = vadd.f32 %v5617, %v5587
      %v5619 = vadd.f32 %v5618, %v5588
      %v5620 = vadd.f32 %v5619, %v5589
      %v5621 = vadd.f32 %v5620, %v5590
      %v5622 = vadd.f32 %v5621, %v5591
      %v5623 = vadd.f32 %v5622, %v5592
      %v5624 = vadd.f32 %v5623, %v5593
      %v5625 = vadd.f32 %v5624, %v5594
      %v5626 = vadd.f32 %v5625, %v5595
      %v5627 = vadd.f32 %v5626, %v5596
      %v5628 = vadd.f32 %v5627, %v5597
      %v5629 = vadd.f32 %v5628, %v5598
      %v5630 = vadd.f32 %v5629, %v5599
      %v5631 = vadd.f32 %v5630, %v5600
      %v5632 = vadd.f32 %v5631, %v5601
      %v5633 = vadd.f32 %v5632, %v5602
      %v5634 = vadd.f32 %v5633, %v5603
      %v5635 = vadd.f32 %v5634, %v5604
      %v5636 = vadd.f32 %v5635, %v5605
      %v5637 = vadd.f32 %v5636, %v5606
      %v5638 = vadd.f32 %v5637, %v5607
      %v5639 = vadd.f32 %v5638, %v5608
      %v5640 = vadd.f32 %v5639, %v5609
      %v5641 = vadd.f32 %v5640, %v5610
      %v5642 = vadd.f32 %v5641, %v5611
      %v5643 = vadd.f32 %v5642, %v5612
      %v5644 = vadd.f32 %v5643, %v5613
      %v5645 = vrot.slane %v5644, 4
      %v5646 = vadd.f32 %v5644, %v5645
      %v5647 = vrot.slane %v5646, 2
      %v5648 = vadd.f32 %v5646, %v5647
      %v5649 = vrot.slane %v5648, 1
      %v5650 = vadd.f32 %v5648, %v5649
      %v5651 = vmul.f32 %v5650, 0.00390625
      %v5652 = vsub.f32 %v5582, %v5651
      %v5653 = vsub.f32 %v5583, %v5651
      %v5654 = vsub.f32 %v5584, %v5651
      %v5655 = vsub.f32 %v5585, %v5651
      %v5656 = vsub.f32 %v5586, %v5651
      %v5657 = vsub.f32 %v5587, %v5651
      %v5658 = vsub.f32 %v5588, %v5651
      %v5659 = vsub.f32 %v5589, %v5651
      %v5660 = vsub.f32 %v5590, %v5651
      %v5661 = vsub.f32 %v5591, %v5651
      %v5662 = vsub.f32 %v5592, %v5651
      %v5663 = vsub.f32 %v5593, %v5651
      %v5664 = vsub.f32 %v5594, %v5651
      %v5665 = vsub.f32 %v5595, %v5651
      %v5666 = vsub.f32 %v5596, %v5651
      %v5667 = vsub.f32 %v5597, %v5651
      %v5668 = vsub.f32 %v5598, %v5651
      %v5669 = vsub.f32 %v5599, %v5651
      %v5670 = vsub.f32 %v5600, %v5651
      %v5671 = vsub.f32 %v5601, %v5651
      %v5672 = vsub.f32 %v5602, %v5651
      %v5673 = vsub.f32 %v5603, %v5651
      %v5674 = vsub.f32 %v5604, %v5651
      %v5675 = vsub.f32 %v5605, %v5651
      %v5676 = vsub.f32 %v5606, %v5651
      %v5677 = vsub.f32 %v5607, %v5651
      %v5678 = vsub.f32 %v5608, %v5651
      %v5679 = vsub.f32 %v5609, %v5651
      %v5680 = vsub.f32 %v5610, %v5651
      %v5681 = vsub.f32 %v5611, %v5651
      %v5682 = vsub.f32 %v5612, %v5651
      %v5683 = vsub.f32 %v5613, %v5651
      %v5684 = vmul.f32 %v5652, %v5652
      %v5685 = vmul.f32 %v5653, %v5653
      %v5686 = vmul.f32 %v5654, %v5654
      %v5687 = vmul.f32 %v5655, %v5655
      %v5688 = vmul.f32 %v5656, %v5656
      %v5689 = vmul.f32 %v5657, %v5657
      %v5690 = vmul.f32 %v5658, %v5658
      %v5691 = vmul.f32 %v5659, %v5659
      %v5692 = vmul.f32 %v5660, %v5660
      %v5693 = vmul.f32 %v5661, %v5661
      %v5694 = vmul.f32 %v5662, %v5662
      %v5695 = vmul.f32 %v5663, %v5663
      %v5696 = vmul.f32 %v5664, %v5664
      %v5697 = vmul.f32 %v5665, %v5665
      %v5698 = vmul.f32 %v5666, %v5666
      %v5699 = vmul.f32 %v5667, %v5667
      %v5700 = vmul.f32 %v5668, %v5668
      %v5701 = vmul.f32 %v5669, %v5669
      %v5702 = vmul.f32 %v5670, %v5670
      %v5703 = vmul.f32 %v5671, %v5671
      %v5704 = vmul.f32 %v5672, %v5672
      %v5705 = vmul.f32 %v5673, %v5673
      %v5706 = vmul.f32 %v5674, %v5674
      %v5707 = vmul.f32 %v5675, %v5675
      %v5708 = vmul.f32 %v5676, %v5676
      %v5709 = vmul.f32 %v5677, %v5677
      %v5710 = vmul.f32 %v5678, %v5678
      %v5711 = vmul.f32 %v5679, %v5679
      %v5712 = vmul.f32 %v5680, %v5680
      %v5713 = vmul.f32 %v5681, %v5681
      %v5714 = vmul.f32 %v5682, %v5682
      %v5715 = vmul.f32 %v5683, %v5683
      %v5716 = vadd.f32 %v5684, %v5685
      %v5717 = vadd.f32 %v5716, %v5686
      %v5718 = vadd.f32 %v5717, %v5687
      %v5719 = vadd.f32 %v5718, %v5688
      %v5720 = vadd.f32 %v5719, %v5689
      %v5721 = vadd.f32 %v5720, %v5690
      %v5722 = vadd.f32 %v5721, %v5691
      %v5723 = vadd.f32 %v5722, %v5692
      %v5724 = vadd.f32 %v5723, %v5693
      %v5725 = vadd.f32 %v5724, %v5694
      %v5726 = vadd.f32 %v5725, %v5695
      %v5727 = vadd.f32 %v5726, %v5696
      %v5728 = vadd.f32 %v5727, %v5697
      %v5729 = vadd.f32 %v5728, %v5698
      %v5730 = vadd.f32 %v5729, %v5699
      %v5731 = vadd.f32 %v5730, %v5700
      %v5732 = vadd.f32 %v5731, %v5701
      %v5733 = vadd.f32 %v5732, %v5702
      %v5734 = vadd.f32 %v5733, %v5703
      %v5735 = vadd.f32 %v5734, %v5704
      %v5736 = vadd.f32 %v5735, %v5705
      %v5737 = vadd.f32 %v5736, %v5706
      %v5738 = vadd.f32 %v5737, %v5707
      %v5739 = vadd.f32 %v5738, %v5708
      %v5740 = vadd.f32 %v5739, %v5709
      %v5741 = vadd.f32 %v5740, %v5710
      %v5742 = vadd.f32 %v5741, %v5711
      %v5743 = vadd.f32 %v5742, %v5712
      %v5744 = vadd.f32 %v5743, %v5713
      %v5745 = vadd.f32 %v5744, %v5714
      %v5746 = vadd.f32 %v5745, %v5715
      %v5747 = vrot.slane %v5746, 4
      %v5748 = vadd.f32 %v5746, %v5747
      %v5749 = vrot.slane %v5748, 2
      %v5750 = vadd.f32 %v5748, %v5749
      %v5751 = vrot.slane %v5750, 1
      %v5752 = vadd.f32 %v5750, %v5751
      %vm5753 = vcmask 1040384
      %v5754 = vsel %vm5753, %v5650, %v5752
      %5755 = vst [vmem:[%s235] sm:$0x3] %v5754
      %v5756 = vpack.c.bf16 %v5583, %v5582
      %v5757 = vpack.c.bf16 %v5585, %v5584
      %v5758 = vpack.c.bf16 %v5587, %v5586
      %v5759 = vpack.c.bf16 %v5589, %v5588
      %v5760 = vpack.c.bf16 %v5591, %v5590
      %v5761 = vpack.c.bf16 %v5593, %v5592
      %v5762 = vpack.c.bf16 %v5595, %v5594
      %v5763 = vpack.c.bf16 %v5597, %v5596
      %v5764 = vpack.c.bf16 %v5599, %v5598
      %v5765 = vpack.c.bf16 %v5601, %v5600
      %v5766 = vpack.c.bf16 %v5603, %v5602
      %v5767 = vpack.c.bf16 %v5605, %v5604
      %v5768 = vpack.c.bf16 %v5607, %v5606
      %v5769 = vpack.c.bf16 %v5609, %v5608
      %v5770 = vpack.c.bf16 %v5611, %v5610
      %v5771 = vpack.c.bf16 %v5613, %v5612
      %v5788 = vunpack.c.l.b16 %v5756
      %v5789 = vunpack.c.h.b16 %v5756
      %v5790 = vunpack.c.l.b16 %v5757
      %v5791 = vunpack.c.h.b16 %v5757
      %v5792 = vunpack.c.l.b16 %v5758
      %v5793 = vunpack.c.h.b16 %v5758
      %v5794 = vunpack.c.l.b16 %v5759
      %v5795 = vunpack.c.h.b16 %v5759
      %v5796 = vunpack.c.l.b16 %v5760
      %v5797 = vunpack.c.h.b16 %v5760
      %v5798 = vunpack.c.l.b16 %v5761
      %v5799 = vunpack.c.h.b16 %v5761
      %v5800 = vunpack.c.l.b16 %v5762
      %v5801 = vunpack.c.h.b16 %v5762
      %v5802 = vunpack.c.l.b16 %v5763
      %v5803 = vunpack.c.h.b16 %v5763
      %v5804 = vunpack.c.l.b16 %v5764
      %v5805 = vunpack.c.h.b16 %v5764
      %v5806 = vunpack.c.l.b16 %v5765
      %v5807 = vunpack.c.h.b16 %v5765
      %v5808 = vunpack.c.l.b16 %v5766
      %v5809 = vunpack.c.h.b16 %v5766
      %v5810 = vunpack.c.l.b16 %v5767
      %v5811 = vunpack.c.h.b16 %v5767
      %v5812 = vunpack.c.l.b16 %v5768
      %v5813 = vunpack.c.h.b16 %v5768
      %v5814 = vunpack.c.l.b16 %v5769
      %v5815 = vunpack.c.h.b16 %v5769
      %v5816 = vunpack.c.l.b16 %v5770
      %v5817 = vunpack.c.h.b16 %v5770
      %v5818 = vunpack.c.l.b16 %v5771
      %v5819 = vunpack.c.h.b16 %v5771
      %v5820 = vpack.c.b16 %v5788, %v5788
      %v5821 = vpack.c.b16 %v5789, %v5789
      %v5822 = vpack.c.b16 %v5790, %v5790
      %v5823 = vpack.c.b16 %v5791, %v5791
      %v5824 = vpack.c.b16 %v5792, %v5792
      %v5825 = vpack.c.b16 %v5793, %v5793
      %v5826 = vpack.c.b16 %v5794, %v5794
      %v5827 = vpack.c.b16 %v5795, %v5795
      %v5828 = vpack.c.b16 %v5796, %v5796
      %v5829 = vpack.c.b16 %v5797, %v5797
      %v5830 = vpack.c.b16 %v5798, %v5798
      %v5831 = vpack.c.b16 %v5799, %v5799
      %v5832 = vpack.c.b16 %v5800, %v5800
      %v5833 = vpack.c.b16 %v5801, %v5801
      %v5834 = vpack.c.b16 %v5802, %v5802
      %v5835 = vpack.c.b16 %v5803, %v5803
      %v5836 = vpack.c.b16 %v5804, %v5804
      %v5837 = vpack.c.b16 %v5805, %v5805
      %v5838 = vpack.c.b16 %v5806, %v5806
      %v5839 = vpack.c.b16 %v5807, %v5807
      %v5840 = vpack.c.b16 %v5808, %v5808
      %v5841 = vpack.c.b16 %v5809, %v5809
      %v5842 = vpack.c.b16 %v5810, %v5810
      %v5843 = vpack.c.b16 %v5811, %v5811
      %v5844 = vpack.c.b16 %v5812, %v5812
      %v5845 = vpack.c.b16 %v5813, %v5813
      %v5846 = vpack.c.b16 %v5814, %v5814
      %v5847 = vpack.c.b16 %v5815, %v5815
      %v5848 = vpack.c.b16 %v5816, %v5816
      %v5849 = vpack.c.b16 %v5817, %v5817
      %v5850 = vpack.c.b16 %v5818, %v5818
      %v5851 = vpack.c.b16 %v5819, %v5819
      %5884 = vst [vmem:[%s231] sm:$0xf] %v5820
      %5885 = vst [vmem:[%s231 + $0x4] sm:$0xf] %v5821
      %5886 = vst [vmem:[%s231 + $0x8] sm:$0xf] %v5822
      %5887 = vst [vmem:[%s231 + $0xc] sm:$0xf] %v5823
      %5888 = vst [vmem:[%s231 + $0x10] sm:$0xf] %v5824
      %5889 = vst [vmem:[%s231 + $0x14] sm:$0xf] %v5825
      %5890 = vst [vmem:[%s231 + $0x18] sm:$0xf] %v5826
      %5891 = vst [vmem:[%s231 + $0x1c] sm:$0xf] %v5827
      %5892 = vst [vmem:[%s231 + $0x20] sm:$0xf] %v5828
      %5893 = vst [vmem:[%s231 + $0x24] sm:$0xf] %v5829
      %5894 = vst [vmem:[%s231 + $0x28] sm:$0xf] %v5830
      %5895 = vst [vmem:[%s231 + $0x2c] sm:$0xf] %v5831
      %5896 = vst [vmem:[%s231 + $0x30] sm:$0xf] %v5832
      %5897 = vst [vmem:[%s231 + $0x34] sm:$0xf] %v5833
      %5898 = vst [vmem:[%s231 + $0x38] sm:$0xf] %v5834
      %5899 = vst [vmem:[%s231 + $0x3c] sm:$0xf] %v5835
      %5900 = vst [vmem:[%s231 + $0x40] sm:$0xf] %v5836
      %5901 = vst [vmem:[%s231 + $0x44] sm:$0xf] %v5837
      %5902 = vst [vmem:[%s231 + $0x48] sm:$0xf] %v5838
      %5903 = vst [vmem:[%s231 + $0x4c] sm:$0xf] %v5839
      %5904 = vst [vmem:[%s231 + $0x50] sm:$0xf] %v5840
      %5905 = vst [vmem:[%s231 + $0x54] sm:$0xf] %v5841
      %5906 = vst [vmem:[%s231 + $0x58] sm:$0xf] %v5842
      %5907 = vst [vmem:[%s231 + $0x5c] sm:$0xf] %v5843
      %5908 = vst [vmem:[%s231 + $0x60] sm:$0xf] %v5844
      %5909 = vst [vmem:[%s231 + $0x64] sm:$0xf] %v5845
      %5910 = vst [vmem:[%s231 + $0x68] sm:$0xf] %v5846
      %5911 = vst [vmem:[%s231 + $0x6c] sm:$0xf] %v5847
      %5912 = vst [vmem:[%s231 + $0x70] sm:$0xf] %v5848
      %5913 = vst [vmem:[%s231 + $0x74] sm:$0xf] %v5849
      %5914 = vst [vmem:[%s231 + $0x78] sm:$0xf] %v5850
      %5915 = vst [vmem:[%s231 + $0x7c] sm:$0xf] %v5851
      %p5916 = scmp.lt.s32.totalorder %s17, 1
      %s5917 = scalar_select %p5916, %s17, 1
      %s5918 = smul.addr %s5917, 32
      %s5919 = smul.addr %s5918, 4
      %s5920 = scalar_lea.vmem %s4, %s5919
      %p5921 = scmp.lt.s32.totalorder %s17, 1
      %s5922 = scalar_select %p5921, %s17, 1
      %s5923 = smul.addr %s5922, 2
      %s5924 = scalar_lea.vmem %s5, %s5923
      // Predicated region
      $region37: #{basic_block_forward.2} parent=35 // pred_check
        %p5925 = pneg %p124
      $region38: #{basic_block_forward.2} parent=35 // pred_check_branch
        %5927 = sbr.rel (%p5925) target = $region40
      $region39: #{basic_block_forward.2} parent=35 // pred_region
        _
      $region40: #{basic_block_forward.2} parent=35 // pred_fallthru
        _
      // Predicated region
      $region41: #{basic_block_forward.2} parent=35 // pred_check
        %p5928 = pneg %p150
      $region42: #{basic_block_forward.2} parent=35 // pred_check_branch
        %5930 = sbr.rel (%p5928) target = $region44
      $region43: #{basic_block_forward.2} parent=35 // pred_region
        _
      $region44: #{basic_block_forward.2} parent=35 // pred_fallthru
        _
    $region36: #{basic_block_forward.2} parent=5 // pred_fallthru
      _
    %p5931 = scmp.le.s32.totalorder 2, %s12
    // Predicated region
    $region45: #{basic_block_forward.2} parent=5 // pred_check
      %p5932 = pneg %p5931
    $region46: #{basic_block_forward.2} parent=5 // pred_check_branch
      %5934 = sbr.rel (%p5932) target = $region48
    $region47: #{basic_block_forward.2} parent=5 // pred_region
      %s5935 = ssub.s32 %s12, 2
      // Predicated region
      $region49: #{basic_block_forward.2} parent=47 // pred_check
        %p5936 = pneg %p130
      $region50: #{basic_block_forward.2} parent=47 // pred_check_branch
        %5938 = sbr.rel (%p5936) target = $region52
      $region51: #{basic_block_forward.2} parent=47 // pred_region
        %p5939 = scmp.lt.s32.totalorder %s18, 1
        %s5940 = scalar_select %p5939, %s18, 1
        %s5941 = smul.addr %s5940, 32
        %s5942 = smul.addr %s5941, 4
        %s5943 = scalar_lea.vmem %s4, %s5942
      $region52: #{basic_block_forward.2} parent=47 // pred_fallthru
        _
      // Predicated region
      $region53: #{basic_block_forward.2} parent=47 // pred_check
        %p5944 = pneg %p156
      $region54: #{basic_block_forward.2} parent=47 // pred_check_branch
        %5946 = sbr.rel (%p5944) target = $region56
      $region55: #{basic_block_forward.2} parent=47 // pred_region
        %p5947 = scmp.lt.s32.totalorder %s18, 1
        %s5948 = scalar_select %p5947, %s18, 1
        %s5949 = smul.addr %s5948, 2
        %s5950 = scalar_lea.vmem %s5, %s5949
      $region56: #{basic_block_forward.2} parent=47 // pred_fallthru
        _
    $region48: #{basic_block_forward.2} parent=5 // pred_fallthru
      _
  $region6: #{basic_block_forward.2} parent=0 // loop_footer
    %s16 = sadd.s32 1, %s12
  $region7: #{basic_block_forward.2} parent=0 // loop_footer_branch
    %11 = sbr.rel target = $region3
  $region8: #{basic_block_forward.2} parent=0 // loop_exit
    _

// kernel: basic_block_forward.3
$region0: #{basic_block_forward.3}
  #allocation0 [shape = 'u32[]', space=smem, size = 0x4, offset = 0x4, fixed_abs, tag = 'smem constant byte address 0x4 - core index']
  #allocation1 [shape = 'u32[144,128]{1,0:T(1,128)}', space=vmem, size = 0x12000, scoped, tag = 'internal scratch']
  #allocation2 [shape = 'bf16[18,18,128]{2,1,0:T(8,128)(2,1)}', space=vmem, size = 0x1b000, scoped, tag = 'scratch operand']
  %s0 = inlined_call_operand.vmem [shape: bf16[2,16,16,128], index: 0, kind: input, shape index: {}]
  %s1 = inlined_call_operand.vmem [shape: f32[1,128], index: 1, kind: input, shape index: {}]
  %s2 = inlined_call_operand.vmem [shape: f32[1,128], index: 2, kind: input, shape index: {}]
  %s3 = inlined_call_operand.vmem [shape: bf16[9,128,128], index: 3, kind: input, shape index: {}]
  %s4 = inlined_call_operand.vmem [shape: f32[2,16,16,128], index: 4, kind: input, shape index: {}]
  %s5 = inlined_call_operand.vmem [shape: f32[2,16,16,128], index: 5, kind: output, shape index: {}]
  %s6 = sld [smem:[#allocation0]]
  $region53: #{basic_block_forward.3} parent=0
    _
  %s8 = ssub.s32 1, %s6
  %s9 = scalar_select 0, %s8, %s6
  loop: start=0, step=1, limit=4
  $region2: #{basic_block_forward.3} parent=0 // loop_pre_header
    _
  $region3: #{basic_block_forward.3} parent=0 // loop_header
    %s11 = sphi 0, %s15
    %p12 = scmp.ge.s32.totalorder %s11, 4
    %s21 = sphi 0, %s23
    %s24 = sphi 0, %s21
    %s25 = sphi 0, %s24
    %s41 = sphi 0, %s25
    %s45 = sphi 0, %s45
    %s47 = sphi 0, %s45
    %s48 = sphi 0, %s47
    %s62 = sphi 0, %s48
    %s66 = sphi 0, %s66
    %s68 = sphi 0, %s66
    %s69 = sphi 0, %s68
    %s83 = sphi 0, %s69
    %s87 = sphi 0, %s87
    %s89 = sphi 0, %s87
    %s90 = sphi 0, %s89
    %s104 = sphi 0, %s90
    %s110 = sphi 0, %s112
    %s113 = sphi 0, %s110
    %s114 = sphi 0, %s113
    %s130 = sphi 0, %s114
    %s136 = sphi 0, %s138
    %s139 = sphi 0, %s136
    %s140 = sphi 0, %s139
    %s156 = sphi 0, %s140
  $region4: #{basic_block_forward.3} parent=0 // loop_header_branch
    %14 = sbr.rel (%p12) target = $region8
  $region5: #{basic_block_forward.3} parent=0 // loop_body
    %s16 = ssub.s32 %s11, 1
    %s17 = ssub.s32 %s11, 2
    %s18 = sadd.s32 %s11, 1
    %s19 = ssub.s32 %s11, %s18
    %p20 = scmp.eq.s32.totalorder %s19, 0
    %s22 = sadd.s32 %s21, 1
    %s23 = scalar_select %p20, %s21, %s22
    %p26 = pneg %p20
    %p27 = scmp.eq.s32.totalorder %s11, 1
    %p28 = por %p26, %p27
    %p29 = scmp.ne.s32.totalorder %s21, %s24
    %p30 = scmp.eq.s32.totalorder %s11, 0
    %p31 = por %p29, %p30
    %p32 = scmp.ne.s32.totalorder %s21, %s24
    %p33 = scmp.eq.s32.totalorder %s16, 1
    %p34 = por %p32, %p33
    %p35 = scmp.ne.s32.totalorder %s24, %s25
    %p36 = scmp.eq.s32.totalorder %s16, 0
    %p37 = por %p35, %p36
    %p38 = scmp.ne.s32.totalorder %s24, %s25
    %p39 = scmp.eq.s32.totalorder %s17, 1
    %p40 = por %p38, %p39
    %p42 = scmp.ne.s32.totalorder %s25, %s41
    %p43 = scmp.eq.s32.totalorder %s17, 0
    %p44 = por %p42, %p43
    %s46 = sadd.s32 %s45, 1
    %p49 = scmp.eq.s32.totalorder %s11, 1
    %p50 = scmp.ne.s32.totalorder %s45, %s47
    %p51 = scmp.eq.s32.totalorder %s11, 0
    %p52 = por %p50, %p51
    %p53 = scmp.ne.s32.totalorder %s45, %s47
    %p54 = scmp.eq.s32.totalorder %s16, 1
    %p55 = por %p53, %p54
    %p56 = scmp.ne.s32.totalorder %s47, %s48
    %p57 = scmp.eq.s32.totalorder %s16, 0
    %p58 = por %p56, %p57
    %p59 = scmp.ne.s32.totalorder %s47, %s48
    %p60 = scmp.eq.s32.totalorder %s17, 1
    %p61 = por %p59, %p60
    %p63 = scmp.ne.s32.totalorder %s48, %s62
    %p64 = scmp.eq.s32.totalorder %s17, 0
    %p65 = por %p63, %p64
    %s67 = sadd.s32 %s66, 1
    %p70 = scmp.eq.s32.totalorder %s11, 1
    %p71 = scmp.ne.s32.totalorder %s66, %s68
    %p72 = scmp.eq.s32.totalorder %s11, 0
    %p73 = por %p71, %p72
    %p74 = scmp.ne.s32.totalorder %s66, %s68
    %p75 = scmp.eq.s32.totalorder %s16, 1
    %p76 = por %p74, %p75
    %p77 = scmp.ne.s32.totalorder %s68, %s69
    %p78 = scmp.eq.s32.totalorder %s16, 0
    %p79 = por %p77, %p78
    %p80 = scmp.ne.s32.totalorder %s68, %s69
    %p81 = scmp.eq.s32.totalorder %s17, 1
    %p82 = por %p80, %p81
    %p84 = scmp.ne.s32.totalorder %s69, %s83
    %p85 = scmp.eq.s32.totalorder %s17, 0
    %p86 = por %p84, %p85
    %s88 = sadd.s32 %s87, 1
    %p91 = scmp.eq.s32.totalorder %s11, 1
    %p92 = scmp.ne.s32.totalorder %s87, %s89
    %p93 = scmp.eq.s32.totalorder %s11, 0
    %p94 = por %p92, %p93
    %p95 = scmp.ne.s32.totalorder %s87, %s89
    %p96 = scmp.eq.s32.totalorder %s16, 1
    %p97 = por %p95, %p96
    %p98 = scmp.ne.s32.totalorder %s89, %s90
    %p99 = scmp.eq.s32.totalorder %s16, 0
    %p100 = por %p98, %p99
    %p101 = scmp.ne.s32.totalorder %s89, %s90
    %p102 = scmp.eq.s32.totalorder %s17, 1
    %p103 = por %p101, %p102
    %p105 = scmp.ne.s32.totalorder %s90, %s104
    %p106 = scmp.eq.s32.totalorder %s17, 0
    %p107 = por %p105, %p106
    %s108 = ssub.s32 %s11, %s18
    %p109 = scmp.eq.s32.totalorder %s108, 0
    %s111 = sadd.s32 %s110, 1
    %s112 = scalar_select %p109, %s110, %s111
    %p115 = pneg %p109
    %p116 = scmp.eq.s32.totalorder %s11, 1
    %p117 = por %p115, %p116
    %p118 = scmp.ne.s32.totalorder %s110, %s113
    %p119 = scmp.eq.s32.totalorder %s11, 0
    %p120 = por %p118, %p119
    %p121 = scmp.ne.s32.totalorder %s110, %s113
    %p122 = scmp.eq.s32.totalorder %s16, 1
    %p123 = por %p121, %p122
    %p124 = scmp.ne.s32.totalorder %s113, %s114
    %p125 = scmp.eq.s32.totalorder %s16, 0
    %p126 = por %p124, %p125
    %p127 = scmp.ne.s32.totalorder %s113, %s114
    %p128 = scmp.eq.s32.totalorder %s17, 1
    %p129 = por %p127, %p128
    %p131 = scmp.ne.s32.totalorder %s114, %s130
    %p132 = scmp.eq.s32.totalorder %s17, 0
    %p133 = por %p131, %p132
    %s134 = ssub.s32 %s11, %s18
    %p135 = scmp.eq.s32.totalorder %s134, 0
    %s137 = sadd.s32 %s136, 1
    %s138 = scalar_select %p135, %s136, %s137
    %p141 = pneg %p135
    %p142 = scmp.eq.s32.totalorder %s11, 1
    %p143 = por %p141, %p142
    %p144 = scmp.ne.s32.totalorder %s136, %s139
    %p145 = scmp.eq.s32.totalorder %s11, 0
    %p146 = por %p144, %p145
    %p147 = scmp.ne.s32.totalorder %s136, %s139
    %p148 = scmp.eq.s32.totalorder %s16, 1
    %p149 = por %p147, %p148
    %p150 = scmp.ne.s32.totalorder %s139, %s140
    %p151 = scmp.eq.s32.totalorder %s16, 0
    %p152 = por %p150, %p151
    %p153 = scmp.ne.s32.totalorder %s139, %s140
    %p154 = scmp.eq.s32.totalorder %s17, 1
    %p155 = por %p153, %p154
    %p157 = scmp.ne.s32.totalorder %s140, %s156
    %p158 = scmp.eq.s32.totalorder %s17, 0
    %p159 = por %p157, %p158
    %p160 = scmp.le.s32.totalorder 1, %s11
    %p161 = scmp.lt.s32.totalorder %s11, 3
    %p162 = pnand %p160, %p161
    %p163 = pneg %p162
    // Predicated region
    $region9: #{basic_block_forward.3} parent=5 // pred_check
      _
    $region10: #{basic_block_forward.3} parent=5 // pred_check_branch
      %165 = sbr.rel (%p162) target = $region12
    $region11: #{basic_block_forward.3} parent=5 // pred_region
      %s166 = ssub.s32 %s11, 1
      // Predicated region
      $region13: #{basic_block_forward.3} parent=11 // pred_check
        %p167 = pneg %p58
      $region14: #{basic_block_forward.3} parent=11 // pred_check_branch
        %169 = sbr.rel (%p167) target = $region16
      $region15: #{basic_block_forward.3} parent=11 // pred_region
        _
      $region16: #{basic_block_forward.3} parent=11 // pred_fallthru
        _
      // Predicated region
      $region17: #{basic_block_forward.3} parent=11 // pred_check
        %p170 = pneg %p79
      $region18: #{basic_block_forward.3} parent=11 // pred_check_branch
        %172 = sbr.rel (%p170) target = $region20
      $region19: #{basic_block_forward.3} parent=11 // pred_region
        _
      $region20: #{basic_block_forward.3} parent=11 // pred_fallthru
        _
      // Predicated region
      $region21: #{basic_block_forward.3} parent=11 // pred_check
        %p173 = pneg %p100
      $region22: #{basic_block_forward.3} parent=11 // pred_check_branch
        %175 = sbr.rel (%p173) target = $region24
      $region23: #{basic_block_forward.3} parent=11 // pred_region
        _
      $region24: #{basic_block_forward.3} parent=11 // pred_fallthru
        _
    $region12: #{basic_block_forward.3} parent=5 // pred_fallthru
      _
    %p176 = scmp.lt.s32.totalorder %s11, 2
    // Predicated region
    $region25: #{basic_block_forward.3} parent=5 // pred_check
      %p177 = pneg %p176
    $region26: #{basic_block_forward.3} parent=5 // pred_check_branch
      %179 = sbr.rel (%p177) target = $region28
    $region27: #{basic_block_forward.3} parent=5 // pred_region
      // Predicated region
      $region29: #{basic_block_forward.3} parent=27 // pred_check
        %p180 = pneg %p31
      $region30: #{basic_block_forward.3} parent=27 // pred_check_branch
        %182 = sbr.rel (%p180) target = $region32
      $region31: #{basic_block_forward.3} parent=27 // pred_region
        %p183 = scmp.lt.s32.totalorder %s11, 1
        %s184 = scalar_select %p183, %s11, 1
        %s185 = smul.addr %s184, 32
        %s186 = smul.addr %s185, 4
        %s187 = scalar_lea.vmem %s0, %s186
      $region32: #{basic_block_forward.3} parent=27 // pred_fallthru
        _
      // Predicated region
      $region33: #{basic_block_forward.3} parent=27 // pred_check
        %p188 = pneg %p120
      $region34: #{basic_block_forward.3} parent=27 // pred_check_branch
        %190 = sbr.rel (%p188) target = $region36
      $region35: #{basic_block_forward.3} parent=27 // pred_region
        %p191 = scmp.lt.s32.totalorder %s11, 1
        %s192 = scalar_select %p191, %s11, 1
        %s193 = smul.addr %s192, 32
        %s194 = smul.addr %s193, 8
        %s195 = scalar_lea.vmem %s4, %s194
      $region36: #{basic_block_forward.3} parent=27 // pred_fallthru
        _
    $region28: #{basic_block_forward.3} parent=5 // pred_fallthru
      _
    %p196 = scmp.le.s32.totalorder 1, %s11
    %p197 = scmp.lt.s32.totalorder %s11, 3
    %p198 = pnand %p196, %p197
    %p199 = pneg %p198
    // Predicated region
    $region37: #{basic_block_forward.3} parent=5 // pred_check
      _
    $region38: #{basic_block_forward.3} parent=5 // pred_check_branch
      %201 = sbr.rel (%p198) target = $region40
    $region39: #{basic_block_forward.3} parent=5 // pred_region
      %s202 = ssub.s32 %s11, 1
      %p203 = scmp.lt.s32.totalorder %s16, 1
      %s204 = scalar_select %p203, %s16, 1
      %s205 = smul.addr %s204, 32
      %s206 = smul.addr %s205, 4
      %s207 = scalar_lea.vmem %s0, %s206
      %p208 = pneg %p37
      %p209 = pneg %p34
      %p210 = pneg %p58
      %p211 = pneg %p55
      %p212 = pneg %p79
      %p213 = pneg %p76
      %p214 = pneg %p100
      %p215 = pneg %p97
      %p216 = scmp.lt.s32.totalorder %s16, 1
      %s217 = scalar_select %p216, %s16, 1
      %s218 = smul.addr %s217, 32
      %s219 = smul.addr %s218, 8
      %s220 = scalar_lea.vmem %s4, %s219
      %p221 = pneg %p126
      %p222 = pneg %p123
      %p223 = pneg %p152
      %p224 = pneg %p149
      %p225 = scmp.lt.s32.totalorder %s16, 1
      %s226 = scalar_select %p225, %s16, 1
      %s227 = smul.addr %s226, 32
      %s228 = smul.addr %s227, 8
      %s229 = scalar_lea.vmem %s5, %s228
      %p230 = scmp.lt.s32.totalorder %s16, 1
      %s231 = scalar_select %p230, %s16, 1
      %s232 = smul.addr %s231, 32
      %s233 = smul.addr %s232, 4
      %s234 = scalar_lea.vmem %s0, %s233
      %p235 = scmp.lt.s32.totalorder %s16, 1
      %s236 = scalar_select %p235, %s16, 1
      %s237 = smul.addr %s236, 32
      %s238 = smul.addr %s237, 8
      %s239 = scalar_lea.vmem %s4, %s238
      %p240 = scmp.lt.s32.totalorder %s16, 1
      %s241 = scalar_select %p240, %s16, 1
      %s242 = smul.addr %s241, 32
      %s243 = smul.addr %s242, 8
      %s244 = scalar_lea.vmem %s5, %s243
      %v246 = vld [vmem:[%s234] sm:$0xf]
      %v247 = vld [vmem:[%s234 + $0x4] sm:$0xf]
      %v248 = vld [vmem:[%s234 + $0x8] sm:$0xf]
      %v249 = vld [vmem:[%s234 + $0xc] sm:$0xf]
      %v250 = vld [vmem:[%s234 + $0x10] sm:$0xf]
      %v251 = vld [vmem:[%s234 + $0x14] sm:$0xf]
      %v252 = vld [vmem:[%s234 + $0x18] sm:$0xf]
      %v253 = vld [vmem:[%s234 + $0x1c] sm:$0xf]
      %v254 = vld [vmem:[%s234 + $0x20] sm:$0xf]
      %v255 = vld [vmem:[%s234 + $0x24] sm:$0xf]
      %v256 = vld [vmem:[%s234 + $0x28] sm:$0xf]
      %v257 = vld [vmem:[%s234 + $0x2c] sm:$0xf]
      %v258 = vld [vmem:[%s234 + $0x30] sm:$0xf]
      %v259 = vld [vmem:[%s234 + $0x34] sm:$0xf]
      %v260 = vld [vmem:[%s234 + $0x38] sm:$0xf]
      %v261 = vld [vmem:[%s234 + $0x3c] sm:$0xf]
      %v262 = vld [vmem:[%s234 + $0x40] sm:$0xf]
      %v263 = vld [vmem:[%s234 + $0x44] sm:$0xf]
      %v264 = vld [vmem:[%s234 + $0x48] sm:$0xf]
      %v265 = vld [vmem:[%s234 + $0x4c] sm:$0xf]
      %v266 = vld [vmem:[%s234 + $0x50] sm:$0xf]
      %v267 = vld [vmem:[%s234 + $0x54] sm:$0xf]
      %v268 = vld [vmem:[%s234 + $0x58] sm:$0xf]
      %v269 = vld [vmem:[%s234 + $0x5c] sm:$0xf]
      %v270 = vld [vmem:[%s234 + $0x60] sm:$0xf]
      %v271 = vld [vmem:[%s234 + $0x64] sm:$0xf]
      %v272 = vld [vmem:[%s234 + $0x68] sm:$0xf]
      %v273 = vld [vmem:[%s234 + $0x6c] sm:$0xf]
      %v274 = vld [vmem:[%s234 + $0x70] sm:$0xf]
      %v275 = vld [vmem:[%s234 + $0x74] sm:$0xf]
      %v276 = vld [vmem:[%s234 + $0x78] sm:$0xf]
      %v277 = vld [vmem:[%s234 + $0x7c] sm:$0xf]
      %v278 = vunpack.c.l.bf16 %v246
      %v279 = vunpack.c.l.bf16 %v247
      %v280 = vunpack.c.l.bf16 %v248
      %v281 = vunpack.c.l.bf16 %v249
      %v282 = vunpack.c.l.bf16 %v250
      %v283 = vunpack.c.l.bf16 %v251
      %v284 = vunpack.c.l.bf16 %v252
      %v285 = vunpack.c.l.bf16 %v253
      %v286 = vunpack.c.l.bf16 %v254
      %v287 = vunpack.c.l.bf16 %v255
      %v288 = vunpack.c.l.bf16 %v256
      %v289 = vunpack.c.l.bf16 %v257
      %v290 = vunpack.c.l.bf16 %v258
      %v291 = vunpack.c.l.bf16 %v259
      %v292 = vunpack.c.l.bf16 %v260
      %v293 = vunpack.c.l.bf16 %v261
      %v294 = vunpack.c.l.bf16 %v262
      %v295 = vunpack.c.l.bf16 %v263
      %v296 = vunpack.c.l.bf16 %v264
      %v297 = vunpack.c.l.bf16 %v265
      %v298 = vunpack.c.l.bf16 %v266
      %v299 = vunpack.c.l.bf16 %v267
      %v300 = vunpack.c.l.bf16 %v268
      %v301 = vunpack.c.l.bf16 %v269
      %v302 = vunpack.c.l.bf16 %v270
      %v303 = vunpack.c.l.bf16 %v271
      %v304 = vunpack.c.l.bf16 %v272
      %v305 = vunpack.c.l.bf16 %v273
      %v306 = vunpack.c.l.bf16 %v274
      %v307 = vunpack.c.l.bf16 %v275
      %v308 = vunpack.c.l.bf16 %v276
      %v309 = vunpack.c.l.bf16 %v277
      %v310 = vld [vmem:[%s1] sm:$0x1]
      %v312 = vlaneseq
      %v313 = vshrl.u32 %v312, 7
      %v314 = vsub.s32 0, %v313
      %v315 = vrot.slane %v310, %v314
      %v317 = vmul.f32 %v278, %v315
      %v318 = vmul.f32 %v279, %v315
      %v319 = vmul.f32 %v280, %v315
      %v320 = vmul.f32 %v281, %v315
      %v321 = vmul.f32 %v282, %v315
      %v322 = vmul.f32 %v283, %v315
      %v323 = vmul.f32 %v284, %v315
      %v324 = vmul.f32 %v285, %v315
      %v325 = vmul.f32 %v286, %v315
      %v326 = vmul.f32 %v287, %v315
      %v327 = vmul.f32 %v288, %v315
      %v328 = vmul.f32 %v289, %v315
      %v329 = vmul.f32 %v290, %v315
      %v330 = vmul.f32 %v291, %v315
      %v331 = vmul.f32 %v292, %v315
      %v332 = vmul.f32 %v293, %v315
      %v333 = vmul.f32 %v294, %v315
      %v334 = vmul.f32 %v295, %v315
      %v335 = vmul.f32 %v296, %v315
      %v336 = vmul.f32 %v297, %v315
      %v337 = vmul.f32 %v298, %v315
      %v338 = vmul.f32 %v299, %v315
      %v339 = vmul.f32 %v300, %v315
      %v340 = vmul.f32 %v301, %v315
      %v341 = vmul.f32 %v302, %v315
      %v342 = vmul.f32 %v303, %v315
      %v343 = vmul.f32 %v304, %v315
      %v344 = vmul.f32 %v305, %v315
      %v345 = vmul.f32 %v306, %v315
      %v346 = vmul.f32 %v307, %v315
      %v347 = vmul.f32 %v308, %v315
      %v348 = vmul.f32 %v309, %v315
      %v349 = vld [vmem:[%s2] sm:$0x1]
      %v351 = vlaneseq
      %v352 = vshrl.u32 %v351, 7
      %v353 = vsub.s32 0, %v352
      %v354 = vrot.slane %v349, %v353
      %v356 = vadd.f32 %v317, %v354
      %v357 = vadd.f32 %v318, %v354
      %v358 = vadd.f32 %v319, %v354
      %v359 = vadd.f32 %v320, %v354
      %v360 = vadd.f32 %v321, %v354
      %v361 = vadd.f32 %v322, %v354
      %v362 = vadd.f32 %v323, %v354
      %v363 = vadd.f32 %v324, %v354
      %v364 = vadd.f32 %v325, %v354
      %v365 = vadd.f32 %v326, %v354
      %v366 = vadd.f32 %v327, %v354
      %v367 = vadd.f32 %v328, %v354
      %v368 = vadd.f32 %v329, %v354
      %v369 = vadd.f32 %v330, %v354
      %v370 = vadd.f32 %v331, %v354
      %v371 = vadd.f32 %v332, %v354
      %v372 = vadd.f32 %v333, %v354
      %v373 = vadd.f32 %v334, %v354
      %v374 = vadd.f32 %v335, %v354
      %v375 = vadd.f32 %v336, %v354
      %v376 = vadd.f32 %v337, %v354
      %v377 = vadd.f32 %v338, %v354
      %v378 = vadd.f32 %v339, %v354
      %v379 = vadd.f32 %v340, %v354
      %v380 = vadd.f32 %v341, %v354
      %v381 = vadd.f32 %v342, %v354
      %v382 = vadd.f32 %v343, %v354
      %v383 = vadd.f32 %v344, %v354
      %v384 = vadd.f32 %v345, %v354
      %v385 = vadd.f32 %v346, %v354
      %v386 = vadd.f32 %v347, %v354
      %v387 = vadd.f32 %v348, %v354
      %v388 = vmax.f32 %v356, 0.0
      %v389 = vmax.f32 %v357, 0.0
      %v390 = vmax.f32 %v358, 0.0
      %v391 = vmax.f32 %v359, 0.0
      %v392 = vmax.f32 %v360, 0.0
      %v393 = vmax.f32 %v361, 0.0
      %v394 = vmax.f32 %v362, 0.0
      %v395 = vmax.f32 %v363, 0.0
      %v396 = vmax.f32 %v364, 0.0
      %v397 = vmax.f32 %v365, 0.0
      %v398 = vmax.f32 %v366, 0.0
      %v399 = vmax.f32 %v367, 0.0
      %v400 = vmax.f32 %v368, 0.0
      %v401 = vmax.f32 %v369, 0.0
      %v402 = vmax.f32 %v370, 0.0
      %v403 = vmax.f32 %v371, 0.0
      %v404 = vmax.f32 %v372, 0.0
      %v405 = vmax.f32 %v373, 0.0
      %v406 = vmax.f32 %v374, 0.0
      %v407 = vmax.f32 %v375, 0.0
      %v408 = vmax.f32 %v376, 0.0
      %v409 = vmax.f32 %v377, 0.0
      %v410 = vmax.f32 %v378, 0.0
      %v411 = vmax.f32 %v379, 0.0
      %v412 = vmax.f32 %v380, 0.0
      %v413 = vmax.f32 %v381, 0.0
      %v414 = vmax.f32 %v382, 0.0
      %v415 = vmax.f32 %v383, 0.0
      %v416 = vmax.f32 %v384, 0.0
      %v417 = vmax.f32 %v385, 0.0
      %v418 = vmax.f32 %v386, 0.0
      %v419 = vmax.f32 %v387, 0.0
      %v420 = vpack.c.bf16 %v389, %v388
      %v421 = vpack.c.bf16 %v391, %v390
      %v422 = vpack.c.bf16 %v393, %v392
      %v423 = vpack.c.bf16 %v395, %v394
      %v424 = vpack.c.bf16 %v397, %v396
      %v425 = vpack.c.bf16 %v399, %v398
      %v426 = vpack.c.bf16 %v401, %v400
      %v427 = vpack.c.bf16 %v403, %v402
      %v428 = vpack.c.bf16 %v405, %v404
      %v429 = vpack.c.bf16 %v407, %v406
      %v430 = vpack.c.bf16 %v409, %v408
      %v431 = vpack.c.bf16 %v411, %v410
      %v432 = vpack.c.bf16 %v413, %v412
      %v433 = vpack.c.bf16 %v415, %v414
      %v434 = vpack.c.bf16 %v417, %v416
      %v435 = vpack.c.bf16 %v419, %v418
      %v437 = vshrl.u32 %v420, 16
      %v439 = vrot.slane %v437, 7
      %v440 = vshll.u32 %v420, 16
      %v442 = vor.u32 %v439, %v440
      %v444 = vshrl.u32 %v421, 16
      %v446 = vrot.slane %v444, 7
      %v447 = vshll.u32 %v421, 16
      %v449 = vor.u32 %v446, %v447
      %v451 = vshrl.u32 %v422, 16
      %v453 = vrot.slane %v451, 7
      %v454 = vshll.u32 %v422, 16
      %v456 = vor.u32 %v453, %v454
      %v458 = vshrl.u32 %v423, 16
      %v460 = vrot.slane %v458, 7
      %v461 = vshll.u32 %v423, 16
      %v463 = vor.u32 %v460, %v461
      %v465 = vshrl.u32 %v424, 16
      %v467 = vrot.slane %v465, 7
      %v468 = vshll.u32 %v424, 16
      %v470 = vor.u32 %v467, %v468
      %v472 = vshrl.u32 %v425, 16
      %v474 = vrot.slane %v472, 7
      %v475 = vshll.u32 %v425, 16
      %v477 = vor.u32 %v474, %v475
      %v479 = vshrl.u32 %v426, 16
      %v481 = vrot.slane %v479, 7
      %v482 = vshll.u32 %v426, 16
      %v484 = vor.u32 %v481, %v482
      %v486 = vshrl.u32 %v427, 16
      %v488 = vrot.slane %v486, 7
      %v489 = vshll.u32 %v427, 16
      %v491 = vor.u32 %v488, %v489
      %v493 = vshrl.u32 %v428, 16
      %v495 = vrot.slane %v493, 7
      %v496 = vshll.u32 %v428, 16
      %v498 = vor.u32 %v495, %v496
      %v500 = vshrl.u32 %v429, 16
      %v502 = vrot.slane %v500, 7
      %v503 = vshll.u32 %v429, 16
      %v505 = vor.u32 %v502, %v503
      %v507 = vshrl.u32 %v430, 16
      %v509 = vrot.slane %v507, 7
      %v510 = vshll.u32 %v430, 16
      %v512 = vor.u32 %v509, %v510
      %v514 = vshrl.u32 %v431, 16
      %v516 = vrot.slane %v514, 7
      %v517 = vshll.u32 %v431, 16
      %v519 = vor.u32 %v516, %v517
      %v521 = vshrl.u32 %v432, 16
      %v523 = vrot.slane %v521, 7
      %v524 = vshll.u32 %v432, 16
      %v526 = vor.u32 %v523, %v524
      %v528 = vshrl.u32 %v433, 16
      %v530 = vrot.slane %v528, 7
      %v531 = vshll.u32 %v433, 16
      %v533 = vor.u32 %v530, %v531
      %v535 = vshrl.u32 %v434, 16
      %v537 = vrot.slane %v535, 7
      %v538 = vshll.u32 %v434, 16
      %v540 = vor.u32 %v537, %v538
      %v542 = vshrl.u32 %v435, 16
      %v544 = vrot.slane %v542, 7
      %v545 = vshll.u32 %v435, 16
      %v547 = vor.u32 %v544, %v545
      %vm580 = vcmask 1040384
      %vm581 = vsmask.f32 256
      %vm582 = vmand %vm580, %vm581
      %v583 = vsel %vm582, 0, %v442
      %v584 = vsel %vm582, 0, %v449
      %v585 = vsel %vm582, 0, %v456
      %v586 = vsel %vm582, 0, %v463
      %v587 = vsel %vm582, 0, %v470
      %v588 = vsel %vm582, 0, %v477
      %v589 = vsel %vm582, 0, %v484
      %v590 = vsel %vm582, 0, %v491
      %v591 = vsel %vm582, 0, %v498
      %v592 = vsel %vm582, 0, %v505
      %v593 = vsel %vm582, 0, %v512
      %v594 = vsel %vm582, 0, %v519
      %v595 = vsel %vm582, 0, %v526
      %v596 = vsel %vm582, 0, %v533
      %v597 = vsel %vm582, 0, %v540
      %v598 = vsel %vm582, 0, %v547
      %v599 = vsel %vm582, %v439, 0
      %v600 = vsel %vm582, %v446, 0
      %v601 = vsel %vm582, %v453, 0
      %v602 = vsel %vm582, %v460, 0
      %v603 = vsel %vm582, %v467, 0
      %v604 = vsel %vm582, %v474, 0
      %v605 = vsel %vm582, %v481, 0
      %v606 = vsel %vm582, %v488, 0
      %v607 = vsel %vm582, %v495, 0
      %v608 = vsel %vm582, %v502, 0
      %v609 = vsel %vm582, %v509, 0
      %v610 = vsel %vm582, %v516, 0
      %v611 = vsel %vm582, %v523, 0
      %v612 = vsel %vm582, %v530, 0
      %v613 = vsel %vm582, %v537, 0
      %v614 = vsel %vm582, %v544, 0
      %v647 = vunpack.c.l.b16 %v583
      %v648 = vunpack.c.h.b16 %v583
      %v649 = vunpack.c.l.b16 %v599
      %v650 = vunpack.c.l.b16 %v584
      %v651 = vunpack.c.h.b16 %v584
      %v652 = vunpack.c.l.b16 %v600
      %v653 = vunpack.c.l.b16 %v585
      %v654 = vunpack.c.h.b16 %v585
      %v655 = vunpack.c.l.b16 %v601
      %v656 = vunpack.c.l.b16 %v586
      %v657 = vunpack.c.h.b16 %v586
      %v658 = vunpack.c.l.b16 %v602
      %v659 = vunpack.c.l.b16 %v587
      %v660 = vunpack.c.h.b16 %v587
      %v661 = vunpack.c.l.b16 %v603
      %v662 = vunpack.c.l.b16 %v588
      %v663 = vunpack.c.h.b16 %v588
      %v664 = vunpack.c.l.b16 %v604
      %v665 = vunpack.c.l.b16 %v589
      %v666 = vunpack.c.h.b16 %v589
      %v667 = vunpack.c.l.b16 %v605
      %v668 = vunpack.c.l.b16 %v590
      %v669 = vunpack.c.h.b16 %v590
      %v670 = vunpack.c.l.b16 %v606
      %v671 = vunpack.c.l.b16 %v591
      %v672 = vunpack.c.h.b16 %v591
      %v673 = vunpack.c.l.b16 %v607
      %v674 = vunpack.c.l.b16 %v592
      %v675 = vunpack.c.h.b16 %v592
      %v676 = vunpack.c.l.b16 %v608
      %v677 = vunpack.c.l.b16 %v593
      %v678 = vunpack.c.h.b16 %v593
      %v679 = vunpack.c.l.b16 %v609
      %v680 = vunpack.c.l.b16 %v594
      %v681 = vunpack.c.h.b16 %v594
      %v682 = vunpack.c.l.b16 %v610
      %v683 = vunpack.c.l.b16 %v595
      %v684 = vunpack.c.h.b16 %v595
      %v685 = vunpack.c.l.b16 %v611
      %v686 = vunpack.c.l.b16 %v596
      %v687 = vunpack.c.h.b16 %v596
      %v688 = vunpack.c.l.b16 %v612
      %v689 = vunpack.c.l.b16 %v597
      %v690 = vunpack.c.h.b16 %v597
      %v691 = vunpack.c.l.b16 %v613
      %v692 = vunpack.c.l.b16 %v598
      %v693 = vunpack.c.h.b16 %v598
      %v694 = vunpack.c.l.b16 %v614
      %v695 = vpack.c.b16 %v647, %v647
      %v696 = vpack.c.b16 %v648, %v648
      %v697 = vpack.c.b16 %v649, %v649
      %v698 = vpack.c.b16 %v650, %v650
      %v699 = vpack.c.b16 %v651, %v651
      %v700 = vpack.c.b16 %v652, %v652
      %v701 = vpack.c.b16 %v653, %v653
      %v702 = vpack.c.b16 %v654, %v654
      %v703 = vpack.c.b16 %v655, %v655
      %v704 = vpack.c.b16 %v656, %v656
      %v705 = vpack.c.b16 %v657, %v657
      %v706 = vpack.c.b16 %v658, %v658
      %v707 = vpack.c.b16 %v659, %v659
      %v708 = vpack.c.b16 %v660, %v660
      %v709 = vpack.c.b16 %v661, %v661
      %v710 = vpack.c.b16 %v662, %v662
      %v711 = vpack.c.b16 %v663, %v663
      %v712 = vpack.c.b16 %v664, %v664
      %v713 = vpack.c.b16 %v665, %v665
      %v714 = vpack.c.b16 %v666, %v666
      %v715 = vpack.c.b16 %v667, %v667
      %v716 = vpack.c.b16 %v668, %v668
      %v717 = vpack.c.b16 %v669, %v669
      %v718 = vpack.c.b16 %v670, %v670
      %v719 = vpack.c.b16 %v671, %v671
      %v720 = vpack.c.b16 %v672, %v672
      %v721 = vpack.c.b16 %v673, %v673
      %v722 = vpack.c.b16 %v674, %v674
      %v723 = vpack.c.b16 %v675, %v675
      %v724 = vpack.c.b16 %v676, %v676
      %v725 = vpack.c.b16 %v677, %v677
      %v726 = vpack.c.b16 %v678, %v678
      %v727 = vpack.c.b16 %v679, %v679
      %v728 = vpack.c.b16 %v680, %v680
      %v729 = vpack.c.b16 %v681, %v681
      %v730 = vpack.c.b16 %v682, %v682
      %v731 = vpack.c.b16 %v683, %v683
      %v732 = vpack.c.b16 %v684, %v684
      %v733 = vpack.c.b16 %v685, %v685
      %v734 = vpack.c.b16 %v686, %v686
      %v735 = vpack.c.b16 %v687, %v687
      %v736 = vpack.c.b16 %v688, %v688
      %v737 = vpack.c.b16 %v689, %v689
      %v738 = vpack.c.b16 %v690, %v690
      %v739 = vpack.c.b16 %v691, %v691
      %v740 = vpack.c.b16 %v692, %v692
      %v741 = vpack.c.b16 %v693, %v693
      %v742 = vpack.c.b16 %v694, %v694
      %s791 = scalar_lea.vmem [#allocation2], 12
      %792 = vst [vmem:[%s791] sm:$0xf] %v695
      %793 = vst [vmem:[%s791 + $0x4] sm:$0xf] %v696
      %794 = vst [vmem:[%s791 + $0x8] sm:$0x1] %v697
      %795 = vst [vmem:[%s791 + $0xc] sm:$0xf] %v698
      %796 = vst [vmem:[%s791 + $0x10] sm:$0xf] %v699
      %797 = vst [vmem:[%s791 + $0x14] sm:$0x1] %v700
      %798 = vst [vmem:[%s791 + $0x18] sm:$0xf] %v701
      %799 = vst [vmem:[%s791 + $0x1c] sm:$0xf] %v702
      %800 = vst [vmem:[%s791 + $0x20] sm:$0x1] %v703
      %801 = vst [vmem:[%s791 + $0x24] sm:$0xf] %v704
      %802 = vst [vmem:[%s791 + $0x28] sm:$0xf] %v705
      %803 = vst [vmem:[%s791 + $0x2c] sm:$0x1] %v706
      %804 = vst [vmem:[%s791 + $0x30] sm:$0xf] %v707
      %805 = vst [vmem:[%s791 + $0x34] sm:$0xf] %v708
      %806 = vst [vmem:[%s791 + $0x38] sm:$0x1] %v709
      %807 = vst [vmem:[%s791 + $0x3c] sm:$0xf] %v710
      %808 = vst [vmem:[%s791 + $0x40] sm:$0xf] %v711
      %809 = vst [vmem:[%s791 + $0x44] sm:$0x1] %v712
      %810 = vst [vmem:[%s791 + $0x48] sm:$0xf] %v713
      %811 = vst [vmem:[%s791 + $0x4c] sm:$0xf] %v714
      %812 = vst [vmem:[%s791 + $0x50] sm:$0x1] %v715
      %813 = vst [vmem:[%s791 + $0x54] sm:$0xf] %v716
      %814 = vst [vmem:[%s791 + $0x58] sm:$0xf] %v717
      %815 = vst [vmem:[%s791 + $0x5c] sm:$0x1] %v718
      %816 = vst [vmem:[%s791 + $0x60] sm:$0xf] %v719
      %817 = vst [vmem:[%s791 + $0x64] sm:$0xf] %v720
      %818 = vst [vmem:[%s791 + $0x68] sm:$0x1] %v721
      %819 = vst [vmem:[%s791 + $0x6c] sm:$0xf] %v722
      %820 = vst [vmem:[%s791 + $0x70] sm:$0xf] %v723
      %821 = vst [vmem:[%s791 + $0x74] sm:$0x1] %v724
      %822 = vst [vmem:[%s791 + $0x78] sm:$0xf] %v725
      %823 = vst [vmem:[%s791 + $0x7c] sm:$0xf] %v726
      %824 = vst [vmem:[%s791 + $0x80] sm:$0x1] %v727
      %825 = vst [vmem:[%s791 + $0x84] sm:$0xf] %v728
      %826 = vst [vmem:[%s791 + $0x88] sm:$0xf] %v729
      %827 = vst [vmem:[%s791 + $0x8c] sm:$0x1] %v730
      %828 = vst [vmem:[%s791 + $0x90] sm:$0xf] %v731
      %829 = vst [vmem:[%s791 + $0x94] sm:$0xf] %v732
      %830 = vst [vmem:[%s791 + $0x98] sm:$0x1] %v733
      %831 = vst [vmem:[%s791 + $0x9c] sm:$0xf] %v734
      %832 = vst [vmem:[%s791 + $0xa0] sm:$0xf] %v735
      %833 = vst [vmem:[%s791 + $0xa4] sm:$0x1] %v736
      %834 = vst [vmem:[%s791 + $0xa8] sm:$0xf] %v737
      %835 = vst [vmem:[%s791 + $0xac] sm:$0xf] %v738
      %836 = vst [vmem:[%s791 + $0xb0] sm:$0x1] %v739
      %837 = vst [vmem:[%s791 + $0xb4] sm:$0xf] %v740
      %838 = vst [vmem:[%s791 + $0xb8] sm:$0xf] %v741
      %839 = vst [vmem:[%s791 + $0xbc] sm:$0x1] %v742
      %840 = vst [vmem:[#allocation2] sm:$0xf] 0
      %841 = vst [vmem:[#allocation2 + $0x4] sm:$0xf] 0
      %842 = vst [vmem:[#allocation2 + $0x8] sm:$0x1] 0
      %s843 = scalar_lea.vmem [#allocation2], 204
      %844 = vst [vmem:[%s843] sm:$0xf] 0
      %845 = vst [vmem:[%s843 + $0x4] sm:$0xf] 0
      %846 = vst [vmem:[%s843 + $0x8] sm:$0x1] 0
      %v847 = vld [vmem:[#allocation2] sm:$0xf]
      %v848 = vld [vmem:[#allocation2 + $0x4] sm:$0xf]
      %v849 = vld [vmem:[#allocation2 + $0xc] sm:$0xf]
      %v850 = vld [vmem:[#allocation2 + $0x10] sm:$0xf]
      %v851 = vld [vmem:[#allocation2 + $0x18] sm:$0xf]
      %v852 = vld [vmem:[#allocation2 + $0x1c] sm:$0xf]
      %v853 = vld [vmem:[#allocation2 + $0x24] sm:$0xf]
      %v854 = vld [vmem:[#allocation2 + $0x28] sm:$0xf]
      %v855 = vld [vmem:[#allocation2 + $0x30] sm:$0xf]
      %v856 = vld [vmem:[#allocation2 + $0x34] sm:$0xf]
      %v857 = vld [vmem:[#allocation2 + $0x3c] sm:$0xf]
      %v858 = vld [vmem:[#allocation2 + $0x40] sm:$0xf]
      %v859 = vld [vmem:[#allocation2 + $0x48] sm:$0xf]
      %v860 = vld [vmem:[#allocation2 + $0x4c] sm:$0xf]
      %v861 = vld [vmem:[#allocation2 + $0x54] sm:$0xf]
      %v862 = vld [vmem:[#allocation2 + $0x58] sm:$0xf]
      %v863 = vld [vmem:[#allocation2 + $0x60] sm:$0xf]
      %v864 = vld [vmem:[#allocation2 + $0x64] sm:$0xf]
      %v865 = vld [vmem:[#allocation2 + $0x6c] sm:$0xf]
      %v866 = vld [vmem:[#allocation2 + $0x70] sm:$0xf]
      %v867 = vld [vmem:[#allocation2 + $0x78] sm:$0xf]
      %v868 = vld [vmem:[#allocation2 + $0x7c] sm:$0xf]
      %v869 = vld [vmem:[#allocation2 + $0x84] sm:$0xf]
      %v870 = vld [vmem:[#allocation2 + $0x88] sm:$0xf]
      %v871 = vld [vmem:[#allocation2 + $0x90] sm:$0xf]
      %v872 = vld [vmem:[#allocation2 + $0x94] sm:$0xf]
      %v873 = vld [vmem:[#allocation2 + $0x9c] sm:$0xf]
      %v874 = vld [vmem:[#allocation2 + $0xa0] sm:$0xf]
      %v875 = vld [vmem:[#allocation2 + $0xa8] sm:$0xf]
      %v876 = vld [vmem:[#allocation2 + $0xac] sm:$0xf]
      %v877 = vld [vmem:[#allocation2 + $0xb4] sm:$0xf]
      %v878 = vld [vmem:[#allocation2 + $0xb8] sm:$0xf]
      %v879 = vld [vmem:[%s3] sm:$0xf]
      %v880 = vld [vmem:[%s3 + $0x4] sm:$0xf]
      %v881 = vld [vmem:[%s3 + $0x8] sm:$0xf]
      %v882 = vld [vmem:[%s3 + $0xc] sm:$0xf]
      %v883 = vld [vmem:[%s3 + $0x10] sm:$0xf]
      %v884 = vld [vmem:[%s3 + $0x14] sm:$0xf]
      %v885 = vld [vmem:[%s3 + $0x18] sm:$0xf]
      %v886 = vld [vmem:[%s3 + $0x1c] sm:$0xf]
      %v887 = vld [vmem:[%s3 + $0x20] sm:$0xf]
      %v888 = vld [vmem:[%s3 + $0x24] sm:$0xf]
      %v889 = vld [vmem:[%s3 + $0x28] sm:$0xf]
      %v890 = vld [vmem:[%s3 + $0x2c] sm:$0xf]
      %v891 = vld [vmem:[%s3 + $0x30] sm:$0xf]
      %v892 = vld [vmem:[%s3 + $0x34] sm:$0xf]
      %v893 = vld [vmem:[%s3 + $0x38] sm:$0xf]
      %v894 = vld [vmem:[%s3 + $0x3c] sm:$0xf]
      %v895 = vld [vmem:[#allocation2 + $0x8] sm:$0x1]
      %v896 = vld [vmem:[#allocation2 + $0x14] sm:$0x1]
      %v897 = vld [vmem:[#allocation2 + $0x20] sm:$0x1]
      %v898 = vld [vmem:[#allocation2 + $0x2c] sm:$0x1]
      %v899 = vld [vmem:[#allocation2 + $0x38] sm:$0x1]
      %v900 = vld [vmem:[#allocation2 + $0x44] sm:$0x1]
      %v901 = vld [vmem:[#allocation2 + $0x50] sm:$0x1]
      %v902 = vld [vmem:[#allocation2 + $0x5c] sm:$0x1]
      %v903 = vld [vmem:[#allocation2 + $0x68] sm:$0x1]
      %v904 = vld [vmem:[#allocation2 + $0x74] sm:$0x1]
      %v905 = vld [vmem:[#allocation2 + $0x80] sm:$0x1]
      %v906 = vld [vmem:[#allocation2 + $0x8c] sm:$0x1]
      %v907 = vld [vmem:[#allocation2 + $0x98] sm:$0x1]
      %v908 = vld [vmem:[#allocation2 + $0xa4] sm:$0x1]
      %v909 = vld [vmem:[#allocation2 + $0xb0] sm:$0x1]
      %v910 = vld [vmem:[#allocation2 + $0xbc] sm:$0x1]
      %vm911 = vsmask.f32 3328
      %vm912 = vsmask.f32 7440
      %vm913 = vmor %vm911, %vm912
      %v915 = vshrl.u32 %v847, 16
      %v917 = vrot.slane %v915, 4
      %v918 = vshll.u32 %v847, 16
      %v920 = vrot.slane %v918, 5
      %v921 = vor.u32 %v917, %v920
      %v922 = vrot.slane %v921, 4
      %v924 = vshll.u32 %v848, 16
      %v926 = vrot.slane %v924, 5
      %v927 = vsel %vm913, %v922, %v926
      %v928 = vshrl.u32 %v848, 16
      %v930 = vrot.slane %v928, 4
      %v931 = vor.u32 %v930, %v926
      %v932 = vrot.slane %v931, 4
      %v934 = vshll.u32 %v895, 16
      %v936 = vrot.slane %v934, 5
      %v937 = vsel %vm913, %v932, %v936
      %v939 = vshrl.u32 %v849, 16
      %v941 = vrot.slane %v939, 4
      %v942 = vshll.u32 %v849, 16
      %v944 = vrot.slane %v942, 5
      %v945 = vor.u32 %v941, %v944
      %v946 = vrot.slane %v945, 4
      %v948 = vshll.u32 %v850, 16
      %v950 = vrot.slane %v948, 5
      %v951 = vsel %vm913, %v946, %v950
      %v952 = vshrl.u32 %v850, 16
      %v954 = vrot.slane %v952, 4
      %v955 = vor.u32 %v954, %v950
      %v956 = vrot.slane %v955, 4
      %v958 = vshll.u32 %v896, 16
      %v960 = vrot.slane %v958, 5
      %v961 = vsel %vm913, %v956, %v960
      %v963 = vshrl.u32 %v851, 16
      %v965 = vrot.slane %v963, 4
      %v966 = vshll.u32 %v851, 16
      %v968 = vrot.slane %v966, 5
      %v969 = vor.u32 %v965, %v968
      %v970 = vrot.slane %v969, 4
      %v972 = vshll.u32 %v852, 16
      %v974 = vrot.slane %v972, 5
      %v975 = vsel %vm913, %v970, %v974
      %v976 = vshrl.u32 %v852, 16
      %v978 = vrot.slane %v976, 4
      %v979 = vor.u32 %v978, %v974
      %v980 = vrot.slane %v979, 4
      %v982 = vshll.u32 %v897, 16
      %v984 = vrot.slane %v982, 5
      %v985 = vsel %vm913, %v980, %v984
      %v987 = vshrl.u32 %v853, 16
      %v989 = vrot.slane %v987, 4
      %v990 = vshll.u32 %v853, 16
      %v992 = vrot.slane %v990, 5
      %v993 = vor.u32 %v989, %v992
      %v994 = vrot.slane %v993, 4
      %v996 = vshll.u32 %v854, 16
      %v998 = vrot.slane %v996, 5
      %v999 = vsel %vm913, %v994, %v998
      %v1000 = vshrl.u32 %v854, 16
      %v1002 = vrot.slane %v1000, 4
      %v1003 = vor.u32 %v1002, %v998
      %v1004 = vrot.slane %v1003, 4
      %v1006 = vshll.u32 %v898, 16
      %v1008 = vrot.slane %v1006, 5
      %v1009 = vsel %vm913, %v1004, %v1008
      %v1011 = vshrl.u32 %v855, 16
      %v1013 = vrot.slane %v1011, 4
      %v1014 = vshll.u32 %v855, 16
      %v1016 = vrot.slane %v1014, 5
      %v1017 = vor.u32 %v1013, %v1016
      %v1018 = vrot.slane %v1017, 4
      %v1020 = vshll.u32 %v856, 16
      %v1022 = vrot.slane %v1020, 5
      %v1023 = vsel %vm913, %v1018, %v1022
      %v1024 = vshrl.u32 %v856, 16
      %v1026 = vrot.slane %v1024, 4
      %v1027 = vor.u32 %v1026, %v1022
      %v1028 = vrot.slane %v1027, 4
      %v1030 = vshll.u32 %v899, 16
      %v1032 = vrot.slane %v1030, 5
      %v1033 = vsel %vm913, %v1028, %v1032
      %v1035 = vshrl.u32 %v857, 16
      %v1037 = vrot.slane %v1035, 4
      %v1038 = vshll.u32 %v857, 16
      %v1040 = vrot.slane %v1038, 5
      %v1041 = vor.u32 %v1037, %v1040
      %v1042 = vrot.slane %v1041, 4
      %v1044 = vshll.u32 %v858, 16
      %v1046 = vrot.slane %v1044, 5
      %v1047 = vsel %vm913, %v1042, %v1046
      %v1048 = vshrl.u32 %v858, 16
      %v1050 = vrot.slane %v1048, 4
      %v1051 = vor.u32 %v1050, %v1046
      %v1052 = vrot.slane %v1051, 4
      %v1054 = vshll.u32 %v900, 16
      %v1056 = vrot.slane %v1054, 5
      %v1057 = vsel %vm913, %v1052, %v1056
      %v1059 = vshrl.u32 %v859, 16
      %v1061 = vrot.slane %v1059, 4
      %v1062 = vshll.u32 %v859, 16
      %v1064 = vrot.slane %v1062, 5
      %v1065 = vor.u32 %v1061, %v1064
      %v1066 = vrot.slane %v1065, 4
      %v1068 = vshll.u32 %v860, 16
      %v1070 = vrot.slane %v1068, 5
      %v1071 = vsel %vm913, %v1066, %v1070
      %v1072 = vshrl.u32 %v860, 16
      %v1074 = vrot.slane %v1072, 4
      %v1075 = vor.u32 %v1074, %v1070
      %v1076 = vrot.slane %v1075, 4
      %v1078 = vshll.u32 %v901, 16
      %v1080 = vrot.slane %v1078, 5
      %v1081 = vsel %vm913, %v1076, %v1080
      %v1083 = vshrl.u32 %v861, 16
      %v1085 = vrot.slane %v1083, 4
      %v1086 = vshll.u32 %v861, 16
      %v1088 = vrot.slane %v1086, 5
      %v1089 = vor.u32 %v1085, %v1088
      %v1090 = vrot.slane %v1089, 4
      %v1092 = vshll.u32 %v862, 16
      %v1094 = vrot.slane %v1092, 5
      %v1095 = vsel %vm913, %v1090, %v1094
      %v1096 = vshrl.u32 %v862, 16
      %v1098 = vrot.slane %v1096, 4
      %v1099 = vor.u32 %v1098, %v1094
      %v1100 = vrot.slane %v1099, 4
      %v1102 = vshll.u32 %v902, 16
      %v1104 = vrot.slane %v1102, 5
      %v1105 = vsel %vm913, %v1100, %v1104
      %v1107 = vshrl.u32 %v863, 16
      %v1109 = vrot.slane %v1107, 4
      %v1110 = vshll.u32 %v863, 16
      %v1112 = vrot.slane %v1110, 5
      %v1113 = vor.u32 %v1109, %v1112
      %v1114 = vrot.slane %v1113, 4
      %v1116 = vshll.u32 %v864, 16
      %v1118 = vrot.slane %v1116, 5
      %v1119 = vsel %vm913, %v1114, %v1118
      %v1120 = vshrl.u32 %v864, 16
      %v1122 = vrot.slane %v1120, 4
      %v1123 = vor.u32 %v1122, %v1118
      %v1124 = vrot.slane %v1123, 4
      %v1126 = vshll.u32 %v903, 16
      %v1128 = vrot.slane %v1126, 5
      %v1129 = vsel %vm913, %v1124, %v1128
      %v1131 = vshrl.u32 %v865, 16
      %v1133 = vrot.slane %v1131, 4
      %v1134 = vshll.u32 %v865, 16
      %v1136 = vrot.slane %v1134, 5
      %v1137 = vor.u32 %v1133, %v1136
      %v1138 = vrot.slane %v1137, 4
      %v1140 = vshll.u32 %v866, 16
      %v1142 = vrot.slane %v1140, 5
      %v1143 = vsel %vm913, %v1138, %v1142
      %v1144 = vshrl.u32 %v866, 16
      %v1146 = vrot.slane %v1144, 4
      %v1147 = vor.u32 %v1146, %v1142
      %v1148 = vrot.slane %v1147, 4
      %v1150 = vshll.u32 %v904, 16
      %v1152 = vrot.slane %v1150, 5
      %v1153 = vsel %vm913, %v1148, %v1152
      %v1155 = vshrl.u32 %v867, 16
      %v1157 = vrot.slane %v1155, 4
      %v1158 = vshll.u32 %v867, 16
      %v1160 = vrot.slane %v1158, 5
      %v1161 = vor.u32 %v1157, %v1160
      %v1162 = vrot.slane %v1161, 4
      %v1164 = vshll.u32 %v868, 16
      %v1166 = vrot.slane %v1164, 5
      %v1167 = vsel %vm913, %v1162, %v1166
      %v1168 = vshrl.u32 %v868, 16
      %v1170 = vrot.slane %v1168, 4
      %v1171 = vor.u32 %v1170, %v1166
      %v1172 = vrot.slane %v1171, 4
      %v1174 = vshll.u32 %v905, 16
      %v1176 = vrot.slane %v1174, 5
      %v1177 = vsel %vm913, %v1172, %v1176
      %v1179 = vshrl.u32 %v869, 16
      %v1181 = vrot.slane %v1179, 4
      %v1182 = vshll.u32 %v869, 16
      %v1184 = vrot.slane %v1182, 5
      %v1185 = vor.u32 %v1181, %v1184
      %v1186 = vrot.slane %v1185, 4
      %v1188 = vshll.u32 %v870, 16
      %v1190 = vrot.slane %v1188, 5
      %v1191 = vsel %vm913, %v1186, %v1190
      %v1192 = vshrl.u32 %v870, 16
      %v1194 = vrot.slane %v1192, 4
      %v1195 = vor.u32 %v1194, %v1190
      %v1196 = vrot.slane %v1195, 4
      %v1198 = vshll.u32 %v906, 16
      %v1200 = vrot.slane %v1198, 5
      %v1201 = vsel %vm913, %v1196, %v1200
      %v1203 = vshrl.u32 %v871, 16
      %v1205 = vrot.slane %v1203, 4
      %v1206 = vshll.u32 %v871, 16
      %v1208 = vrot.slane %v1206, 5
      %v1209 = vor.u32 %v1205, %v1208
      %v1210 = vrot.slane %v1209, 4
      %v1212 = vshll.u32 %v872, 16
      %v1214 = vrot.slane %v1212, 5
      %v1215 = vsel %vm913, %v1210, %v1214
      %v1216 = vshrl.u32 %v872, 16
      %v1218 = vrot.slane %v1216, 4
      %v1219 = vor.u32 %v1218, %v1214
      %v1220 = vrot.slane %v1219, 4
      %v1222 = vshll.u32 %v907, 16
      %v1224 = vrot.slane %v1222, 5
      %v1225 = vsel %vm913, %v1220, %v1224
      %v1227 = vshrl.u32 %v873, 16
      %v1229 = vrot.slane %v1227, 4
      %v1230 = vshll.u32 %v873, 16
      %v1232 = vrot.slane %v1230, 5
      %v1233 = vor.u32 %v1229, %v1232
      %v1234 = vrot.slane %v1233, 4
      %v1236 = vshll.u32 %v874, 16
      %v1238 = vrot.slane %v1236, 5
      %v1239 = vsel %vm913, %v1234, %v1238
      %v1240 = vshrl.u32 %v874, 16
      %v1242 = vrot.slane %v1240, 4
      %v1243 = vor.u32 %v1242, %v1238
      %v1244 = vrot.slane %v1243, 4
      %v1246 = vshll.u32 %v908, 16
      %v1248 = vrot.slane %v1246, 5
      %v1249 = vsel %vm913, %v1244, %v1248
      %v1251 = vshrl.u32 %v875, 16
      %v1253 = vrot.slane %v1251, 4
      %v1254 = vshll.u32 %v875, 16
      %v1256 = vrot.slane %v1254, 5
      %v1257 = vor.u32 %v1253, %v1256
      %v1258 = vrot.slane %v1257, 4
      %v1260 = vshll.u32 %v876, 16
      %v1262 = vrot.slane %v1260, 5
      %v1263 = vsel %vm913, %v1258, %v1262
      %v1264 = vshrl.u32 %v876, 16
      %v1266 = vrot.slane %v1264, 4
      %v1267 = vor.u32 %v1266, %v1262
      %v1268 = vrot.slane %v1267, 4
      %v1270 = vshll.u32 %v909, 16
      %v1272 = vrot.slane %v1270, 5
      %v1273 = vsel %vm913, %v1268, %v1272
      %v1275 = vshrl.u32 %v877, 16
      %v1277 = vrot.slane %v1275, 4
      %v1278 = vshll.u32 %v877, 16
      %v1280 = vrot.slane %v1278, 5
      %v1281 = vor.u32 %v1277, %v1280
      %v1282 = vrot.slane %v1281, 4
      %v1284 = vshll.u32 %v878, 16
      %v1286 = vrot.slane %v1284, 5
      %v1287 = vsel %vm913, %v1282, %v1286
      %v1288 = vshrl.u32 %v878, 16
      %v1290 = vrot.slane %v1288, 4
      %v1291 = vor.u32 %v1290, %v1286
      %v1292 = vrot.slane %v1291, 4
      %v1294 = vshll.u32 %v910, 16
      %v1296 = vrot.slane %v1294, 5
      %v1297 = vsel %vm913, %v1292, %v1296
      %s1298 = scalar_lea.vmem %s3, 64
      %v1299 = vld [vmem:[%s1298] sm:$0xf]
      %v1300 = vld [vmem:[%s1298 + $0x4] sm:$0xf]
      %v1301 = vld [vmem:[%s1298 + $0x8] sm:$0xf]
      %v1302 = vld [vmem:[%s1298 + $0xc] sm:$0xf]
      %v1303 = vld [vmem:[%s1298 + $0x10] sm:$0xf]
      %v1304 = vld [vmem:[%s1298 + $0x14] sm:$0xf]
      %v1305 = vld [vmem:[%s1298 + $0x18] sm:$0xf]
      %v1306 = vld [vmem:[%s1298 + $0x1c] sm:$0xf]
      %v1307 = vld [vmem:[%s1298 + $0x20] sm:$0xf]
      %v1308 = vld [vmem:[%s1298 + $0x24] sm:$0xf]
      %v1309 = vld [vmem:[%s1298 + $0x28] sm:$0xf]
      %v1310 = vld [vmem:[%s1298 + $0x2c] sm:$0xf]
      %v1311 = vld [vmem:[%s1298 + $0x30] sm:$0xf]
      %v1312 = vld [vmem:[%s1298 + $0x34] sm:$0xf]
      %v1313 = vld [vmem:[%s1298 + $0x38] sm:$0xf]
      %v1314 = vld [vmem:[%s1298 + $0x3c] sm:$0xf]
      %v1315 = vunpack.c.l.b16 %v927
      %v1316 = vunpack.c.l.b16 %v937
      %v1317 = vunpack.c.l.b16 %v951
      %v1318 = vunpack.c.l.b16 %v961
      %v1319 = vunpack.c.l.b16 %v975
      %v1320 = vunpack.c.l.b16 %v985
      %v1321 = vunpack.c.l.b16 %v999
      %v1322 = vunpack.c.l.b16 %v1009
      %v1323 = vunpack.c.l.b16 %v1023
      %v1324 = vunpack.c.l.b16 %v1033
      %v1325 = vunpack.c.l.b16 %v1047
      %v1326 = vunpack.c.l.b16 %v1057
      %v1327 = vunpack.c.l.b16 %v1071
      %v1328 = vunpack.c.l.b16 %v1081
      %v1329 = vunpack.c.l.b16 %v1095
      %v1330 = vunpack.c.l.b16 %v1105
      %v1331 = vunpack.c.l.b16 %v1119
      %v1332 = vunpack.c.l.b16 %v1129
      %v1333 = vunpack.c.l.b16 %v1143
      %v1334 = vunpack.c.l.b16 %v1153
      %v1335 = vunpack.c.l.b16 %v1167
      %v1336 = vunpack.c.l.b16 %v1177
      %v1337 = vunpack.c.l.b16 %v1191
      %v1338 = vunpack.c.l.b16 %v1201
      %v1339 = vunpack.c.l.b16 %v1215
      %v1340 = vunpack.c.l.b16 %v1225
      %v1341 = vunpack.c.l.b16 %v1239
      %v1342 = vunpack.c.l.b16 %v1249
      %v1343 = vunpack.c.l.b16 %v1263
      %v1344 = vunpack.c.l.b16 %v1273
      %v1345 = vunpack.c.l.b16 %v1287
      %v1346 = vunpack.c.l.b16 %v1297
      %v1347 = vpack.c.b16 %v1316, %v1315
      %v1348 = vpack.c.b16 %v1318, %v1317
      %v1349 = vpack.c.b16 %v1320, %v1319
      %v1350 = vpack.c.b16 %v1322, %v1321
      %v1351 = vpack.c.b16 %v1324, %v1323
      %v1352 = vpack.c.b16 %v1326, %v1325
      %v1353 = vpack.c.b16 %v1328, %v1327
      %v1354 = vpack.c.b16 %v1330, %v1329
      %v1355 = vpack.c.b16 %v1332, %v1331
      %v1356 = vpack.c.b16 %v1334, %v1333
      %v1357 = vpack.c.b16 %v1336, %v1335
      %v1358 = vpack.c.b16 %v1338, %v1337
      %v1359 = vpack.c.b16 %v1340, %v1339
      %v1360 = vpack.c.b16 %v1342, %v1341
      %v1361 = vpack.c.b16 %v1344, %v1343
      %v1362 = vpack.c.b16 %v1346, %v1345
      %v1395 = vunpack.c.l.b16 %v1299
      %v1396 = vunpack.c.l.b16 %v1300
      %v1397 = vunpack.c.l.b16 %v1301
      %v1398 = vunpack.c.l.b16 %v1302
      %v1399 = vunpack.c.l.b16 %v1303
      %v1400 = vunpack.c.l.b16 %v1304
      %v1401 = vunpack.c.l.b16 %v1305
      %v1402 = vunpack.c.l.b16 %v1306
      %v1403 = vunpack.c.l.b16 %v1307
      %v1404 = vunpack.c.l.b16 %v1308
      %v1405 = vunpack.c.l.b16 %v1309
      %v1406 = vunpack.c.l.b16 %v1310
      %v1407 = vunpack.c.l.b16 %v1311
      %v1408 = vunpack.c.l.b16 %v1312
      %v1409 = vunpack.c.l.b16 %v1313
      %v1410 = vunpack.c.l.b16 %v1314
      %v1411 = vpack.c.b16 %v1396, %v1395
      %v1412 = vpack.c.b16 %v1398, %v1397
      %v1413 = vpack.c.b16 %v1400, %v1399
      %v1414 = vpack.c.b16 %v1402, %v1401
      %v1415 = vpack.c.b16 %v1404, %v1403
      %v1416 = vpack.c.b16 %v1406, %v1405
      %v1417 = vpack.c.b16 %v1408, %v1407
      %v1418 = vpack.c.b16 %v1410, %v1409
      %1427 = vmatprep.subr.bf16.mxu0 0
      %1428 = vmatpush1.bf16.msra.mxu0 %v1411
      %1429 = vmatprep.subr.bf16.mxu0 0
      %1430 = vmatpush1.bf16.msra.mxu0 %v1412
      %1431 = vmatprep.subr.bf16.mxu0 0
      %1432 = vmatpush1.bf16.msra.mxu0 %v1413
      %1433 = vmatprep.subr.bf16.mxu0 0
      %1434 = vmatpush1.bf16.msra.mxu0 %v1414
      %1435 = vmatprep.subr.bf16.mxu0 0
      %1436 = vmatpush1.bf16.msra.mxu0 %v1415
      %1437 = vmatprep.subr.bf16.mxu0 0
      %1438 = vmatpush1.bf16.msra.mxu0 %v1416
      %1439 = vmatprep.subr.bf16.mxu0 0
      %1440 = vmatpush1.bf16.msra.mxu0 %v1417
      %1441 = vmatprep.subr.bf16.mxu0 0
      %1442 = vmatpush1.bf16.msra.mxu0 %v1418
      %1443 = vmatprep.subr.bf16.mxu0 0
      %1444 = vmatpush1.bf16.msra.mxu0 0
      %1445 = vmatprep.subr.bf16.mxu0 0
      %1446 = vmatpush1.bf16.msra.mxu0 0
      %1447 = vmatprep.subr.bf16.mxu0 0
      %1448 = vmatpush1.bf16.msra.mxu0 0
      %1449 = vmatprep.subr.bf16.mxu0 0
      %1450 = vmatpush1.bf16.msra.mxu0 0
      %1451 = vmatprep.subr.bf16.mxu0 0
      %1452 = vmatpush1.bf16.msra.mxu0 0
      %1453 = vmatprep.subr.bf16.mxu0 0
      %1454 = vmatpush1.bf16.msra.mxu0 0
      %1455 = vmatprep.subr.bf16.mxu0 0
      %1456 = vmatpush1.bf16.msra.mxu0 0
      %1457 = vmatprep.subr.bf16.mxu0 0
      %1458 = vmatpush1.bf16.msra.mxu0 0
      %1459 = vmatprep.mubr.bf16.mxu0 0
      %1460 = vmatmul.mubr.bf16.gmra.mrb[0].mxu0 %v1347
      %v1461 = vpop.f32.mrb[0].mxu0
      %v1462 = vadd.f32 0.0, %v1461
      %v1463 = vpop.f32.mrb[0].mxu0
      %v1464 = vpop.f32.mrb[0].mxu0
      %v1465 = vadd.f32 0.0, %v1464
      %v1466 = vpop.f32.mrb[0].mxu0
      %1467 = vmatprep.mubr.bf16.mxu0 0
      %1468 = vmatmul.mubr.bf16.gmra.mrb[0].mxu0 %v1348
      %v1469 = vpop.f32.mrb[0].mxu0
      %v1470 = vadd.f32 0.0, %v1469
      %v1471 = vpop.f32.mrb[0].mxu0
      %v1472 = vpop.f32.mrb[0].mxu0
      %v1473 = vadd.f32 0.0, %v1472
      %v1474 = vpop.f32.mrb[0].mxu0
      %1475 = vmatprep.mubr.bf16.mxu0 0
      %1476 = vmatmul.mubr.bf16.gmra.mrb[0].mxu0 %v1349
      %v1477 = vpop.f32.mrb[0].mxu0
      %v1478 = vadd.f32 0.0, %v1477
      %v1479 = vpop.f32.mrb[0].mxu0
      %v1480 = vpop.f32.mrb[0].mxu0
      %v1481 = vadd.f32 0.0, %v1480
      %v1482 = vpop.f32.mrb[0].mxu0
      %1483 = vmatprep.mubr.bf16.mxu0 0
      %1484 = vmatmul.mubr.bf16.gmra.mrb[0].mxu0 %v1350
      %v1485 = vpop.f32.mrb[0].mxu0
      %v1486 = vadd.f32 0.0, %v1485
      %v1487 = vpop.f32.mrb[0].mxu0
      %v1488 = vpop.f32.mrb[0].mxu0
      %v1489 = vadd.f32 0.0, %v1488
      %v1490 = vpop.f32.mrb[0].mxu0
      %1491 = vmatprep.mubr.bf16.mxu0 0
      %1492 = vmatmul.mubr.bf16.gmra.mrb[0].mxu0 %v1351
      %v1493 = vpop.f32.mrb[0].mxu0
      %v1494 = vadd.f32 0.0, %v1493
      %v1495 = vpop.f32.mrb[0].mxu0
      %v1496 = vpop.f32.mrb[0].mxu0
      %v1497 = vadd.f32 0.0, %v1496
      %v1498 = vpop.f32.mrb[0].mxu0
      %1499 = vmatprep.mubr.bf16.mxu0 0
      %1500 = vmatmul.mubr.bf16.gmra.mrb[0].mxu0 %v1352
      %v1501 = vpop.f32.mrb[0].mxu0
      %v1502 = vadd.f32 0.0, %v1501
      %v1503 = vpop.f32.mrb[0].mxu0
      %v1504 = vpop.f32.mrb[0].mxu0
      %v1505 = vadd.f32 0.0, %v1504
      %v1506 = vpop.f32.mrb[0].mxu0
      %1507 = vmatprep.mubr.bf16.mxu0 0
      %1508 = vmatmul.mubr.bf16.gmra.mrb[0].mxu0 %v1353
      %v1509 = vpop.f32.mrb[0].mxu0
      %v1510 = vadd.f32 0.0, %v1509
      %v1511 = vpop.f32.mrb[0].mxu0
      %v1512 = vpop.f32.mrb[0].mxu0
      %v1513 = vadd.f32 0.0, %v1512
      %v1514 = vpop.f32.mrb[0].mxu0
      %1515 = vmatprep.mubr.bf16.mxu0 0
      %1516 = vmatmul.mubr.bf16.gmra.mrb[0].mxu0 %v1354
      %v1517 = vpop.f32.mrb[0].mxu0
      %v1518 = vadd.f32 0.0, %v1517
      %v1519 = vpop.f32.mrb[0].mxu0
      %v1520 = vpop.f32.mrb[0].mxu0
      %v1521 = vadd.f32 0.0, %v1520
      %v1522 = vpop.f32.mrb[0].mxu0
      %1523 = vmatprep.mubr.bf16.mxu0 0
      %1524 = vmatmul.mubr.bf16.gmra.mrb[0].mxu0 %v1355
      %v1525 = vpop.f32.mrb[0].mxu0
      %v1526 = vadd.f32 0.0, %v1525
      %v1527 = vpop.f32.mrb[0].mxu0
      %v1528 = vpop.f32.mrb[0].mxu0
      %v1529 = vadd.f32 0.0, %v1528
      %v1530 = vpop.f32.mrb[0].mxu0
      %1531 = vmatprep.mubr.bf16.mxu0 0
      %1532 = vmatmul.mubr.bf16.gmra.mrb[0].mxu0 %v1356
      %v1533 = vpop.f32.mrb[0].mxu0
      %v1534 = vadd.f32 0.0, %v1533
      %v1535 = vpop.f32.mrb[0].mxu0
      %v1536 = vpop.f32.mrb[0].mxu0
      %v1537 = vadd.f32 0.0, %v1536
      %v1538 = vpop.f32.mrb[0].mxu0
      %1539 = vmatprep.mubr.bf16.mxu0 0
      %1540 = vmatmul.mubr.bf16.gmra.mrb[0].mxu0 %v1357
      %v1541 = vpop.f32.mrb[0].mxu0
      %v1542 = vadd.f32 0.0, %v1541
      %v1543 = vpop.f32.mrb[0].mxu0
      %v1544 = vpop.f32.mrb[0].mxu0
      %v1545 = vadd.f32 0.0, %v1544
      %v1546 = vpop.f32.mrb[0].mxu0
      %1547 = vmatprep.mubr.bf16.mxu0 0
      %1548 = vmatmul.mubr.bf16.gmra.mrb[0].mxu0 %v1358
      %v1549 = vpop.f32.mrb[0].mxu0
      %v1550 = vadd.f32 0.0, %v1549
      %v1551 = vpop.f32.mrb[0].mxu0
      %v1552 = vpop.f32.mrb[0].mxu0
      %v1553 = vadd.f32 0.0, %v1552
      %v1554 = vpop.f32.mrb[0].mxu0
      %1555 = vmatprep.mubr.bf16.mxu0 0
      %1556 = vmatmul.mubr.bf16.gmra.mrb[0].mxu0 %v1359
      %v1557 = vpop.f32.mrb[0].mxu0
      %v1558 = vadd.f32 0.0, %v1557
      %v1559 = vpop.f32.mrb[0].mxu0
      %v1560 = vpop.f32.mrb[0].mxu0
      %v1561 = vadd.f32 0.0, %v1560
      %v1562 = vpop.f32.mrb[0].mxu0
      %1563 = vmatprep.mubr.bf16.mxu0 0
      %1564 = vmatmul.mubr.bf16.gmra.mrb[0].mxu0 %v1360
      %v1565 = vpop.f32.mrb[0].mxu0
      %v1566 = vadd.f32 0.0, %v1565
      %v1567 = vpop.f32.mrb[0].mxu0
      %v1568 = vpop.f32.mrb[0].mxu0
      %v1569 = vadd.f32 0.0, %v1568
      %v1570 = vpop.f32.mrb[0].mxu0
      %1571 = vmatprep.mubr.bf16.mxu0 0
      %1572 = vmatmul.mubr.bf16.gmra.mrb[0].mxu0 %v1361
      %v1573 = vpop.f32.mrb[0].mxu0
      %v1574 = vadd.f32 0.0, %v1573
      %v1575 = vpop.f32.mrb[0].mxu0
      %v1576 = vpop.f32.mrb[0].mxu0
      %v1577 = vadd.f32 0.0, %v1576
      %v1578 = vpop.f32.mrb[0].mxu0
      %1579 = vmatprep.mubr.bf16.mxu0 0
      %1580 = vmatmul.mubr.bf16.gmra.mrb[0].mxu0 %v1362
      %v1581 = vpop.f32.mrb[0].mxu0
      %v1582 = vadd.f32 0.0, %v1581
      %v1583 = vpop.f32.mrb[0].mxu0
      %v1584 = vpop.f32.mrb[0].mxu0
      %v1585 = vadd.f32 0.0, %v1584
      %v1586 = vpop.f32.mrb[0].mxu0
      %1587 = vdwg.mxu0
      %v1620 = vunpack.c.l.b16 %v847
      %v1621 = vunpack.c.l.b16 %v848
      %v1622 = vunpack.c.l.b16 %v849
      %v1623 = vunpack.c.l.b16 %v850
      %v1624 = vunpack.c.l.b16 %v851
      %v1625 = vunpack.c.l.b16 %v852
      %v1626 = vunpack.c.l.b16 %v853
      %v1627 = vunpack.c.l.b16 %v854
      %v1628 = vunpack.c.l.b16 %v855
      %v1629 = vunpack.c.l.b16 %v856
      %v1630 = vunpack.c.l.b16 %v857
      %v1631 = vunpack.c.l.b16 %v858
      %v1632 = vunpack.c.l.b16 %v859
      %v1633 = vunpack.c.l.b16 %v860
      %v1634 = vunpack.c.l.b16 %v861
      %v1635 = vunpack.c.l.b16 %v862
      %v1636 = vunpack.c.l.b16 %v863
      %v1637 = vunpack.c.l.b16 %v864
      %v1638 = vunpack.c.l.b16 %v865
      %v1639 = vunpack.c.l.b16 %v866
      %v1640 = vunpack.c.l.b16 %v867
      %v1641 = vunpack.c.l.b16 %v868
      %v1642 = vunpack.c.l.b16 %v869
      %v1643 = vunpack.c.l.b16 %v870
      %v1644 = vunpack.c.l.b16 %v871
      %v1645 = vunpack.c.l.b16 %v872
      %v1646 = vunpack.c.l.b16 %v873
      %v1647 = vunpack.c.l.b16 %v874
      %v1648 = vunpack.c.l.b16 %v875
      %v1649 = vunpack.c.l.b16 %v876
      %v1650 = vunpack.c.l.b16 %v877
      %v1651 = vunpack.c.l.b16 %v878
      %v1652 = vpack.c.b16 %v1621, %v1620
      %v1653 = vpack.c.b16 %v1623, %v1622
      %v1654 = vpack.c.b16 %v1625, %v1624
      %v1655 = vpack.c.b16 %v1627, %v1626
      %v1656 = vpack.c.b16 %v1629, %v1628
      %v1657 = vpack.c.b16 %v1631, %v1630
      %v1658 = vpack.c.b16 %v1633, %v1632
      %v1659 = vpack.c.b16 %v1635, %v1634
      %v1660 = vpack.c.b16 %v1637, %v1636
      %v1661 = vpack.c.b16 %v1639, %v1638
      %v1662 = vpack.c.b16 %v1641, %v1640
      %v1663 = vpack.c.b16 %v1643, %v1642
      %v1664 = vpack.c.b16 %v1645, %v1644
      %v1665 = vpack.c.b16 %v1647, %v1646
      %v1666 = vpack.c.b16 %v1649, %v1648
      %v1667 = vpack.c.b16 %v1651, %v1650
      %v1700 = vunpack.c.l.b16 %v879
      %v1701 = vunpack.c.l.b16 %v880
      %v1702 = vunpack.c.l.b16 %v881
      %v1703 = vunpack.c.l.b16 %v882
      %v1704 = vunpack.c.l.b16 %v883
      %v1705 = vunpack.c.l.b16 %v884
      %v1706 = vunpack.c.l.b16 %v885
      %v1707 = vunpack.c.l.b16 %v886
      %v1708 = vunpack.c.l.b16 %v887
      %v1709 = vunpack.c.l.b16 %v888
      %v1710 = vunpack.c.l.b16 %v889
      %v1711 = vunpack.c.l.b16 %v890
      %v1712 = vunpack.c.l.b16 %v891
      %v1713 = vunpack.c.l.b16 %v892
      %v1714 = vunpack.c.l.b16 %v893
      %v1715 = vunpack.c.l.b16 %v894
      %v1716 = vpack.c.b16 %v1701, %v1700
      %v1717 = vpack.c.b16 %v1703, %v1702
      %v1718 = vpack.c.b16 %v1705, %v1704
      %v1719 = vpack.c.b16 %v1707, %v1706
      %v1720 = vpack.c.b16 %v1709, %v1708
      %v1721 = vpack.c.b16 %v1711, %v1710
      %v1722 = vpack.c.b16 %v1713, %v1712
      %v1723 = vpack.c.b16 %v1715, %v1714
      %1732 = vmatprep.subr.bf16.mxu0 0
      %1733 = vmatpush1.bf16.msra.mxu0 %v1716
      %1734 = vmatprep.subr.bf16.mxu0 0
      %1735 = vmatpush1.bf16.msra.mxu0 %v1717
      %1736 = vmatprep.subr.bf16.mxu0 0
      %1737 = vmatpush1.bf16.msra.mxu0 %v1718
      %1738 = vmatprep.subr.bf16.mxu0 0
      %1739 = vmatpush1.bf16.msra.mxu0 %v1719
      %1740 = vmatprep.subr.bf16.mxu0 0
      %1741 = vmatpush1.bf16.msra.mxu0 %v1720
      %1742 = vmatprep.subr.bf16.mxu0 0
      %1743 = vmatpush1.bf16.msra.mxu0 %v1721
      %1744 = vmatprep.subr.bf16.mxu0 0
      %1745 = vmatpush1.bf16.msra.mxu0 %v1722
      %1746 = vmatprep.subr.bf16.mxu0 0
      %1747 = vmatpush1.bf16.msra.mxu0 %v1723
      %1748 = vmatprep.subr.bf16.mxu0 0
      %1749 = vmatpush1.bf16.msra.mxu0 0
      %1750 = vmatprep.subr.bf16.mxu0 0
      %1751 = vmatpush1.bf16.msra.mxu0 0
      %1752 = vmatprep.subr.bf16.mxu0 0
      %1753 = vmatpush1.bf16.msra.mxu0 0
      %1754 = vmatprep.subr.bf16.mxu0 0
      %1755 = vmatpush1.bf16.msra.mxu0 0
      %1756 = vmatprep.subr.bf16.mxu0 0
      %1757 = vmatpush1.bf16.msra.mxu0 0
      %1758 = vmatprep.subr.bf16.mxu0 0
      %1759 = vmatpush1.bf16.msra.mxu0 0
      %1760 = vmatprep.subr.bf16.mxu0 0
      %1761 = vmatpush1.bf16.msra.mxu0 0
      %1762 = vmatprep.subr.bf16.mxu0 0
      %1763 = vmatpush1.bf16.msra.mxu0 0
      %1764 = vmatprep.mubr.bf16.mxu0 0
      %1765 = vmatmul.mubr.bf16.gmra.mrb[0].mxu0 %v1652
      %v1766 = vpop.f32.mrb[0].mxu0
      %v1767 = vadd.f32 %v1462, %v1766
      %v1768 = vpop.f32.mrb[0].mxu0
      %v1769 = vpop.f32.mrb[0].mxu0
      %v1770 = vadd.f32 %v1465, %v1769
      %v1771 = vpop.f32.mrb[0].mxu0
      %1772 = vmatprep.mubr.bf16.mxu0 0
      %1773 = vmatmul.mubr.bf16.gmra.mrb[0].mxu0 %v1653
      %v1774 = vpop.f32.mrb[0].mxu0
      %v1775 = vadd.f32 %v1470, %v1774
      %v1776 = vpop.f32.mrb[0].mxu0
      %v1777 = vpop.f32.mrb[0].mxu0
      %v1778 = vadd.f32 %v1473, %v1777
      %v1779 = vpop.f32.mrb[0].mxu0
      %1780 = vmatprep.mubr.bf16.mxu0 0
      %1781 = vmatmul.mubr.bf16.gmra.mrb[0].mxu0 %v1654
      %v1782 = vpop.f32.mrb[0].mxu0
      %v1783 = vadd.f32 %v1478, %v1782
      %v1784 = vpop.f32.mrb[0].mxu0
      %v1785 = vpop.f32.mrb[0].mxu0
      %v1786 = vadd.f32 %v1481, %v1785
      %v1787 = vpop.f32.mrb[0].mxu0
      %1788 = vmatprep.mubr.bf16.mxu0 0
      %1789 = vmatmul.mubr.bf16.gmra.mrb[0].mxu0 %v1655
      %v1790 = vpop.f32.mrb[0].mxu0
      %v1791 = vadd.f32 %v1486, %v1790
      %v1792 = vpop.f32.mrb[0].mxu0
      %v1793 = vpop.f32.mrb[0].mxu0
      %v1794 = vadd.f32 %v1489, %v1793
      %v1795 = vpop.f32.mrb[0].mxu0
      %1796 = vmatprep.mubr.bf16.mxu0 0
      %1797 = vmatmul.mubr.bf16.gmra.mrb[0].mxu0 %v1656
      %v1798 = vpop.f32.mrb[0].mxu0
      %v1799 = vadd.f32 %v1494, %v1798
      %v1800 = vpop.f32.mrb[0].mxu0
      %v1801 = vpop.f32.mrb[0].mxu0
      %v1802 = vadd.f32 %v1497, %v1801
      %v1803 = vpop.f32.mrb[0].mxu0
      %1804 = vmatprep.mubr.bf16.mxu0 0
      %1805 = vmatmul.mubr.bf16.gmra.mrb[0].mxu0 %v1657
      %v1806 = vpop.f32.mrb[0].mxu0
      %v1807 = vadd.f32 %v1502, %v1806
      %v1808 = vpop.f32.mrb[0].mxu0
      %v1809 = vpop.f32.mrb[0].mxu0
      %v1810 = vadd.f32 %v1505, %v1809
      %v1811 = vpop.f32.mrb[0].mxu0
      %1812 = vmatprep.mubr.bf16.mxu0 0
      %1813 = vmatmul.mubr.bf16.gmra.mrb[0].mxu0 %v1658
      %v1814 = vpop.f32.mrb[0].mxu0
      %v1815 = vadd.f32 %v1510, %v1814
      %v1816 = vpop.f32.mrb[0].mxu0
      %v1817 = vpop.f32.mrb[0].mxu0
      %v1818 = vadd.f32 %v1513, %v1817
      %v1819 = vpop.f32.mrb[0].mxu0
      %1820 = vmatprep.mubr.bf16.mxu0 0
      %1821 = vmatmul.mubr.bf16.gmra.mrb[0].mxu0 %v1659
      %v1822 = vpop.f32.mrb[0].mxu0
      %v1823 = vadd.f32 %v1518, %v1822
      %v1824 = vpop.f32.mrb[0].mxu0
      %v1825 = vpop.f32.mrb[0].mxu0
      %v1826 = vadd.f32 %v1521, %v1825
      %v1827 = vpop.f32.mrb[0].mxu0
      %1828 = vmatprep.mubr.bf16.mxu0 0
      %1829 = vmatmul.mubr.bf16.gmra.mrb[0].mxu0 %v1660
      %v1830 = vpop.f32.mrb[0].mxu0
      %v1831 = vadd.f32 %v1526, %v1830
      %v1832 = vpop.f32.mrb[0].mxu0
      %v1833 = vpop.f32.mrb[0].mxu0
      %v1834 = vadd.f32 %v1529, %v1833
      %v1835 = vpop.f32.mrb[0].mxu0
      %1836 = vmatprep.mubr.bf16.mxu0 0
      %1837 = vmatmul.mubr.bf16.gmra.mrb[0].mxu0 %v1661
      %v1838 = vpop.f32.mrb[0].mxu0
      %v1839 = vadd.f32 %v1534, %v1838
      %v1840 = vpop.f32.mrb[0].mxu0
      %v1841 = vpop.f32.mrb[0].mxu0
      %v1842 = vadd.f32 %v1537, %v1841
      %v1843 = vpop.f32.mrb[0].mxu0
      %1844 = vmatprep.mubr.bf16.mxu0 0
      %1845 = vmatmul.mubr.bf16.gmra.mrb[0].mxu0 %v1662
      %v1846 = vpop.f32.mrb[0].mxu0
      %v1847 = vadd.f32 %v1542, %v1846
      %v1848 = vpop.f32.mrb[0].mxu0
      %v1849 = vpop.f32.mrb[0].mxu0
      %v1850 = vadd.f32 %v1545, %v1849
      %v1851 = vpop.f32.mrb[0].mxu0
      %1852 = vmatprep.mubr.bf16.mxu0 0
      %1853 = vmatmul.mubr.bf16.gmra.mrb[0].mxu0 %v1663
      %v1854 = vpop.f32.mrb[0].mxu0
      %v1855 = vadd.f32 %v1550, %v1854
      %v1856 = vpop.f32.mrb[0].mxu0
      %v1857 = vpop.f32.mrb[0].mxu0
      %v1858 = vadd.f32 %v1553, %v1857
      %v1859 = vpop.f32.mrb[0].mxu0
      %1860 = vmatprep.mubr.bf16.mxu0 0
      %1861 = vmatmul.mubr.bf16.gmra.mrb[0].mxu0 %v1664
      %v1862 = vpop.f32.mrb[0].mxu0
      %v1863 = vadd.f32 %v1558, %v1862
      %v1864 = vpop.f32.mrb[0].mxu0
      %v1865 = vpop.f32.mrb[0].mxu0
      %v1866 = vadd.f32 %v1561, %v1865
      %v1867 = vpop.f32.mrb[0].mxu0
      %1868 = vmatprep.mubr.bf16.mxu0 0
      %1869 = vmatmul.mubr.bf16.gmra.mrb[0].mxu0 %v1665
      %v1870 = vpop.f32.mrb[0].mxu0
      %v1871 = vadd.f32 %v1566, %v1870
      %v1872 = vpop.f32.mrb[0].mxu0
      %v1873 = vpop.f32.mrb[0].mxu0
      %v1874 = vadd.f32 %v1569, %v1873
      %v1875 = vpop.f32.mrb[0].mxu0
      %1876 = vmatprep.mubr.bf16.mxu0 0
      %1877 = vmatmul.mubr.bf16.gmra.mrb[0].mxu0 %v1666
      %v1878 = vpop.f32.mrb[0].mxu0
      %v1879 = vadd.f32 %v1574, %v1878
      %v1880 = vpop.f32.mrb[0].mxu0
      %v1881 = vpop.f32.mrb[0].mxu0
      %v1882 = vadd.f32 %v1577, %v1881
      %v1883 = vpop.f32.mrb[0].mxu0
      %1884 = vmatprep.mubr.bf16.mxu0 0
      %1885 = vmatmul.mubr.bf16.gmra.mrb[0].mxu0 %v1667
      %v1886 = vpop.f32.mrb[0].mxu0
      %v1887 = vadd.f32 %v1582, %v1886
      %v1888 = vpop.f32.mrb[0].mxu0
      %v1889 = vpop.f32.mrb[0].mxu0
      %v1890 = vadd.f32 %v1585, %v1889
      %v1891 = vpop.f32.mrb[0].mxu0
      %1892 = vdwg.mxu0
      %v1893 = vld [vmem:[#allocation2] sm:$0xe]
      %v1894 = vld [vmem:[#allocation2 + $0xc] sm:$0xe]
      %v1895 = vld [vmem:[#allocation2 + $0x18] sm:$0xe]
      %v1896 = vld [vmem:[#allocation2 + $0x24] sm:$0xe]
      %v1897 = vld [vmem:[#allocation2 + $0x30] sm:$0xe]
      %v1898 = vld [vmem:[#allocation2 + $0x3c] sm:$0xe]
      %v1899 = vld [vmem:[#allocation2 + $0x48] sm:$0xe]
      %v1900 = vld [vmem:[#allocation2 + $0x54] sm:$0xe]
      %v1901 = vld [vmem:[#allocation2 + $0x60] sm:$0xe]
      %v1902 = vld [vmem:[#allocation2 + $0x6c] sm:$0xe]
      %v1903 = vld [vmem:[#allocation2 + $0x78] sm:$0xe]
      %v1904 = vld [vmem:[#allocation2 + $0x84] sm:$0xe]
      %v1905 = vld [vmem:[#allocation2 + $0x90] sm:$0xe]
      %v1906 = vld [vmem:[#allocation2 + $0x9c] sm:$0xe]
      %v1907 = vld [vmem:[#allocation2 + $0xa8] sm:$0xe]
      %v1908 = vld [vmem:[#allocation2 + $0xb4] sm:$0xe]
      %vm1941 = vcmask 1042432
      %vm1942 = vcmask 1046532
      %vm1943 = vmor %vm1941, %vm1942
      %v1944 = vrot.slane %v1893, 5
      %v1945 = vrot.slane %v1944, 4
      %v1946 = vrot.slane %v848, 5
      %v1947 = vsel %vm1943, %v1945, %v1946
      %v1948 = vrot.slane %v1946, 4
      %v1949 = vrot.slane %v895, 5
      %v1950 = vsel %vm1943, %v1948, %v1949
      %v1951 = vrot.slane %v1894, 5
      %v1952 = vrot.slane %v1951, 4
      %v1953 = vrot.slane %v850, 5
      %v1954 = vsel %vm1943, %v1952, %v1953
      %v1955 = vrot.slane %v1953, 4
      %v1956 = vrot.slane %v896, 5
      %v1957 = vsel %vm1943, %v1955, %v1956
      %v1958 = vrot.slane %v1895, 5
      %v1959 = vrot.slane %v1958, 4
      %v1960 = vrot.slane %v852, 5
      %v1961 = vsel %vm1943, %v1959, %v1960
      %v1962 = vrot.slane %v1960, 4
      %v1963 = vrot.slane %v897, 5
      %v1964 = vsel %vm1943, %v1962, %v1963
      %v1965 = vrot.slane %v1896, 5
      %v1966 = vrot.slane %v1965, 4
      %v1967 = vrot.slane %v854, 5
      %v1968 = vsel %vm1943, %v1966, %v1967
      %v1969 = vrot.slane %v1967, 4
      %v1970 = vrot.slane %v898, 5
      %v1971 = vsel %vm1943, %v1969, %v1970
      %v1972 = vrot.slane %v1897, 5
      %v1973 = vrot.slane %v1972, 4
      %v1974 = vrot.slane %v856, 5
      %v1975 = vsel %vm1943, %v1973, %v1974
      %v1976 = vrot.slane %v1974, 4
      %v1977 = vrot.slane %v899, 5
      %v1978 = vsel %vm1943, %v1976, %v1977
      %v1979 = vrot.slane %v1898, 5
      %v1980 = vrot.slane %v1979, 4
      %v1981 = vrot.slane %v858, 5
      %v1982 = vsel %vm1943, %v1980, %v1981
      %v1983 = vrot.slane %v1981, 4
      %v1984 = vrot.slane %v900, 5
      %v1985 = vsel %vm1943, %v1983, %v1984
      %v1986 = vrot.slane %v1899, 5
      %v1987 = vrot.slane %v1986, 4
      %v1988 = vrot.slane %v860, 5
      %v1989 = vsel %vm1943, %v1987, %v1988
      %v1990 = vrot.slane %v1988, 4
      %v1991 = vrot.slane %v901, 5
      %v1992 = vsel %vm1943, %v1990, %v1991
      %v1993 = vrot.slane %v1900, 5
      %v1994 = vrot.slane %v1993, 4
      %v1995 = vrot.slane %v862, 5
      %v1996 = vsel %vm1943, %v1994, %v1995
      %v1997 = vrot.slane %v1995, 4
      %v1998 = vrot.slane %v902, 5
      %v1999 = vsel %vm1943, %v1997, %v1998
      %v2000 = vrot.slane %v1901, 5
      %v2001 = vrot.slane %v2000, 4
      %v2002 = vrot.slane %v864, 5
      %v2003 = vsel %vm1943, %v2001, %v2002
      %v2004 = vrot.slane %v2002, 4
      %v2005 = vrot.slane %v903, 5
      %v2006 = vsel %vm1943, %v2004, %v2005
      %v2007 = vrot.slane %v1902, 5
      %v2008 = vrot.slane %v2007, 4
      %v2009 = vrot.slane %v866, 5
      %v2010 = vsel %vm1943, %v2008, %v2009
      %v2011 = vrot.slane %v2009, 4
      %v2012 = vrot.slane %v904, 5
      %v2013 = vsel %vm1943, %v2011, %v2012
      %v2014 = vrot.slane %v1903, 5
      %v2015 = vrot.slane %v2014, 4
      %v2016 = vrot.slane %v868, 5
      %v2017 = vsel %vm1943, %v2015, %v2016
      %v2018 = vrot.slane %v2016, 4
      %v2019 = vrot.slane %v905, 5
      %v2020 = vsel %vm1943, %v2018, %v2019
      %v2021 = vrot.slane %v1904, 5
      %v2022 = vrot.slane %v2021, 4
      %v2023 = vrot.slane %v870, 5
      %v2024 = vsel %vm1943, %v2022, %v2023
      %v2025 = vrot.slane %v2023, 4
      %v2026 = vrot.slane %v906, 5
      %v2027 = vsel %vm1943, %v2025, %v2026
      %v2028 = vrot.slane %v1905, 5
      %v2029 = vrot.slane %v2028, 4
      %v2030 = vrot.slane %v872, 5
      %v2031 = vsel %vm1943, %v2029, %v2030
      %v2032 = vrot.slane %v2030, 4
      %v2033 = vrot.slane %v907, 5
      %v2034 = vsel %vm1943, %v2032, %v2033
      %v2035 = vrot.slane %v1906, 5
      %v2036 = vrot.slane %v2035, 4
      %v2037 = vrot.slane %v874, 5
      %v2038 = vsel %vm1943, %v2036, %v2037
      %v2039 = vrot.slane %v2037, 4
      %v2040 = vrot.slane %v908, 5
      %v2041 = vsel %vm1943, %v2039, %v2040
      %v2042 = vrot.slane %v1907, 5
      %v2043 = vrot.slane %v2042, 4
      %v2044 = vrot.slane %v876, 5
      %v2045 = vsel %vm1943, %v2043, %v2044
      %v2046 = vrot.slane %v2044, 4
      %v2047 = vrot.slane %v909, 5
      %v2048 = vsel %vm1943, %v2046, %v2047
      %v2049 = vrot.slane %v1908, 5
      %v2050 = vrot.slane %v2049, 4
      %v2051 = vrot.slane %v878, 5
      %v2052 = vsel %vm1943, %v2050, %v2051
      %v2053 = vrot.slane %v2051, 4
      %v2054 = vrot.slane %v910, 5
      %v2055 = vsel %vm1943, %v2053, %v2054
      %s2056 = scalar_lea.vmem %s3, 128
      %v2057 = vld [vmem:[%s2056] sm:$0xf]
      %v2058 = vld [vmem:[%s2056 + $0x4] sm:$0xf]
      %v2059 = vld [vmem:[%s2056 + $0x8] sm:$0xf]
      %v2060 = vld [vmem:[%s2056 + $0xc] sm:$0xf]
      %v2061 = vld [vmem:[%s2056 + $0x10] sm:$0xf]
      %v2062 = vld [vmem:[%s2056 + $0x14] sm:$0xf]
      %v2063 = vld [vmem:[%s2056 + $0x18] sm:$0xf]
      %v2064 = vld [vmem:[%s2056 + $0x1c] sm:$0xf]
      %v2065 = vld [vmem:[%s2056 + $0x20] sm:$0xf]
      %v2066 = vld [vmem:[%s2056 + $0x24] sm:$0xf]
      %v2067 = vld [vmem:[%s2056 + $0x28] sm:$0xf]
      %v2068 = vld [vmem:[%s2056 + $0x2c] sm:$0xf]
      %v2069 = vld [vmem:[%s2056 + $0x30] sm:$0xf]
      %v2070 = vld [vmem:[%s2056 + $0x34] sm:$0xf]
      %v2071 = vld [vmem:[%s2056 + $0x38] sm:$0xf]
      %v2072 = vld [vmem:[%s2056 + $0x3c] sm:$0xf]
      %v2073 = vunpack.c.l.b16 %v1947
      %v2074 = vunpack.c.l.b16 %v1950
      %v2075 = vunpack.c.l.b16 %v1954
      %v2076 = vunpack.c.l.b16 %v1957
      %v2077 = vunpack.c.l.b16 %v1961
      %v2078 = vunpack.c.l.b16 %v1964
      %v2079 = vunpack.c.l.b16 %v1968
      %v2080 = vunpack.c.l.b16 %v1971
      %v2081 = vunpack.c.l.b16 %v1975
      %v2082 = vunpack.c.l.b16 %v1978
      %v2083 = vunpack.c.l.b16 %v1982
      %v2084 = vunpack.c.l.b16 %v1985
      %v2085 = vunpack.c.l.b16 %v1989
      %v2086 = vunpack.c.l.b16 %v1992
      %v2087 = vunpack.c.l.b16 %v1996
      %v2088 = vunpack.c.l.b16 %v1999
      %v2089 = vunpack.c.l.b16 %v2003
      %v2090 = vunpack.c.l.b16 %v2006
      %v2091 = vunpack.c.l.b16 %v2010
      %v2092 = vunpack.c.l.b16 %v2013
      %v2093 = vunpack.c.l.b16 %v2017
      %v2094 = vunpack.c.l.b16 %v2020
      %v2095 = vunpack.c.l.b16 %v2024
      %v2096 = vunpack.c.l.b16 %v2027
      %v2097 = vunpack.c.l.b16 %v2031
      %v2098 = vunpack.c.l.b16 %v2034
      %v2099 = vunpack.c.l.b16 %v2038
      %v2100 = vunpack.c.l.b16 %v2041
      %v2101 = vunpack.c.l.b16 %v2045
      %v2102 = vunpack.c.l.b16 %v2048
      %v2103 = vunpack.c.l.b16 %v2052
      %v2104 = vunpack.c.l.b16 %v2055
      %v2105 = vpack.c.b16 %v2074, %v2073
      %v2106 = vpack.c.b16 %v2076, %v2075
      %v2107 = vpack.c.b16 %v2078, %v2077
      %v2108 = vpack.c.b16 %v2080, %v2079
      %v2109 = vpack.c.b16 %v2082, %v2081
      %v2110 = vpack.c.b16 %v2084, %v2083
      %v2111 = vpack.c.b16 %v2086, %v2085
      %v2112 = vpack.c.b16 %v2088, %v2087
      %v2113 = vpack.c.b16 %v2090, %v2089
      %v2114 = vpack.c.b16 %v2092, %v2091
      %v2115 = vpack.c.b16 %v2094, %v2093
      %v2116 = vpack.c.b16 %v2096, %v2095
      %v2117 = vpack.c.b16 %v2098, %v2097
      %v2118 = vpack.c.b16 %v2100, %v2099
      %v2119 = vpack.c.b16 %v2102, %v2101
      %v2120 = vpack.c.b16 %v2104, %v2103
      %v2153 = vunpack.c.l.b16 %v2057
      %v2154 = vunpack.c.l.b16 %v2058
      %v2155 = vunpack.c.l.b16 %v2059
      %v2156 = vunpack.c.l.b16 %v2060
      %v2157 = vunpack.c.l.b16 %v2061
      %v2158 = vunpack.c.l.b16 %v2062
      %v2159 = vunpack.c.l.b16 %v2063
      %v2160 = vunpack.c.l.b16 %v2064
      %v2161 = vunpack.c.l.b16 %v2065
      %v2162 = vunpack.c.l.b16 %v2066
      %v2163 = vunpack.c.l.b16 %v2067
      %v2164 = vunpack.c.l.b16 %v2068
      %v2165 = vunpack.c.l.b16 %v2069
      %v2166 = vunpack.c.l.b16 %v2070
      %v2167 = vunpack.c.l.b16 %v2071
      %v2168 = vunpack.c.l.b16 %v2072
      %v2169 = vpack.c.b16 %v2154, %v2153
      %v2170 = vpack.c.b16 %v2156, %v2155
      %v2171 = vpack.c.b16 %v2158, %v2157
      %v2172 = vpack.c.b16 %v2160, %v2159
      %v2173 = vpack.c.b16 %v2162, %v2161
      %v2174 = vpack.c.b16 %v2164, %v2163
      %v2175 = vpack.c.b16 %v2166, %v2165
      %v2176 = vpack.c.b16 %v2168, %v2167
      %2185 = vmatprep.subr.bf16.mxu0 0
      %2186 = vmatpush1.bf16.msra.mxu0 %v2169
      %2187 = vmatprep.subr.bf16.mxu0 0
      %2188 = vmatpush1.bf16.msra.mxu0 %v2170
      %2189 = vmatprep.subr.bf16.mxu0 0
      %2190 = vmatpush1.bf16.msra.mxu0 %v2171
      %2191 = vmatprep.subr.bf16.mxu0 0
      %2192 = vmatpush1.bf16.msra.mxu0 %v2172
      %2193 = vmatprep.subr.bf16.mxu0 0
      %2194 = vmatpush1.bf16.msra.mxu0 %v2173
      %2195 = vmatprep.subr.bf16.mxu0 0
      %2196 = vmatpush1.bf16.msra.mxu0 %v2174
      %2197 = vmatprep.subr.bf16.mxu0 0
      %2198 = vmatpush1.bf16.msra.mxu0 %v2175
      %2199 = vmatprep.subr.bf16.mxu0 0
      %2200 = vmatpush1.bf16.msra.mxu0 %v2176
      %2201 = vmatprep.subr.bf16.mxu0 0
      %2202 = vmatpush1.bf16.msra.mxu0 0
      %2203 = vmatprep.subr.bf16.mxu0 0
      %2204 = vmatpush1.bf16.msra.mxu0 0
      %2205 = vmatprep.subr.bf16.mxu0 0
      %2206 = vmatpush1.bf16.msra.mxu0 0
      %2207 = vmatprep.subr.bf16.mxu0 0
      %2208 = vmatpush1.bf16.msra.mxu0 0
      %2209 = vmatprep.subr.bf16.mxu0 0
      %2210 = vmatpush1.bf16.msra.mxu0 0
      %2211 = vmatprep.subr.bf16.mxu0 0
      %2212 = vmatpush1.bf16.msra.mxu0 0
      %2213 = vmatprep.subr.bf16.mxu0 0
      %2214 = vmatpush1.bf16.msra.mxu0 0
      %2215 = vmatprep.subr.bf16.mxu0 0
      %2216 = vmatpush1.bf16.msra.mxu0 0
      %2217 = vmatprep.mubr.bf16.mxu0 0
      %2218 = vmatmul.mubr.bf16.gmra.mrb[0].mxu0 %v2105
      %v2219 = vpop.f32.mrb[0].mxu0
      %v2220 = vadd.f32 0.0, %v2219
      %v2221 = vpop.f32.mrb[0].mxu0
      %v2222 = vpop.f32.mrb[0].mxu0
      %v2223 = vadd.f32 0.0, %v2222
      %v2224 = vpop.f32.mrb[0].mxu0
      %2225 = vmatprep.mubr.bf16.mxu0 0
      %2226 = vmatmul.mubr.bf16.gmra.mrb[0].mxu0 %v2106
      %v2227 = vpop.f32.mrb[0].mxu0
      %v2228 = vadd.f32 0.0, %v2227
      %v2229 = vpop.f32.mrb[0].mxu0
      %v2230 = vpop.f32.mrb[0].mxu0
      %v2231 = vadd.f32 0.0, %v2230
      %v2232 = vpop.f32.mrb[0].mxu0
      %2233 = vmatprep.mubr.bf16.mxu0 0
      %2234 = vmatmul.mubr.bf16.gmra.mrb[0].mxu0 %v2107
      %v2235 = vpop.f32.mrb[0].mxu0
      %v2236 = vadd.f32 0.0, %v2235
      %v2237 = vpop.f32.mrb[0].mxu0
      %v2238 = vpop.f32.mrb[0].mxu0
      %v2239 = vadd.f32 0.0, %v2238
      %v2240 = vpop.f32.mrb[0].mxu0
      %2241 = vmatprep.mubr.bf16.mxu0 0
      %2242 = vmatmul.mubr.bf16.gmra.mrb[0].mxu0 %v2108
      %v2243 = vpop.f32.mrb[0].mxu0
      %v2244 = vadd.f32 0.0, %v2243
      %v2245 = vpop.f32.mrb[0].mxu0
      %v2246 = vpop.f32.mrb[0].mxu0
      %v2247 = vadd.f32 0.0, %v2246
      %v2248 = vpop.f32.mrb[0].mxu0
      %2249 = vmatprep.mubr.bf16.mxu0 0
      %2250 = vmatmul.mubr.bf16.gmra.mrb[0].mxu0 %v2109
      %v2251 = vpop.f32.mrb[0].mxu0
      %v2252 = vadd.f32 0.0, %v2251
      %v2253 = vpop.f32.mrb[0].mxu0
      %v2254 = vpop.f32.mrb[0].mxu0
      %v2255 = vadd.f32 0.0, %v2254
      %v2256 = vpop.f32.mrb[0].mxu0
      %2257 = vmatprep.mubr.bf16.mxu0 0
      %2258 = vmatmul.mubr.bf16.gmra.mrb[0].mxu0 %v2110
      %v2259 = vpop.f32.mrb[0].mxu0
      %v2260 = vadd.f32 0.0, %v2259
      %v2261 = vpop.f32.mrb[0].mxu0
      %v2262 = vpop.f32.mrb[0].mxu0
      %v2263 = vadd.f32 0.0, %v2262
      %v2264 = vpop.f32.mrb[0].mxu0
      %2265 = vmatprep.mubr.bf16.mxu0 0
      %2266 = vmatmul.mubr.bf16.gmra.mrb[0].mxu0 %v2111
      %v2267 = vpop.f32.mrb[0].mxu0
      %v2268 = vadd.f32 0.0, %v2267
      %v2269 = vpop.f32.mrb[0].mxu0
      %v2270 = vpop.f32.mrb[0].mxu0
      %v2271 = vadd.f32 0.0, %v2270
      %v2272 = vpop.f32.mrb[0].mxu0
      %2273 = vmatprep.mubr.bf16.mxu0 0
      %2274 = vmatmul.mubr.bf16.gmra.mrb[0].mxu0 %v2112
      %v2275 = vpop.f32.mrb[0].mxu0
      %v2276 = vadd.f32 0.0, %v2275
      %v2277 = vpop.f32.mrb[0].mxu0
      %v2278 = vpop.f32.mrb[0].mxu0
      %v2279 = vadd.f32 0.0, %v2278
      %v2280 = vpop.f32.mrb[0].mxu0
      %2281 = vmatprep.mubr.bf16.mxu0 0
      %2282 = vmatmul.mubr.bf16.gmra.mrb[0].mxu0 %v2113
      %v2283 = vpop.f32.mrb[0].mxu0
      %v2284 = vadd.f32 0.0, %v2283
      %v2285 = vpop.f32.mrb[0].mxu0
      %v2286 = vpop.f32.mrb[0].mxu0
      %v2287 = vadd.f32 0.0, %v2286
      %v2288 = vpop.f32.mrb[0].mxu0
      %2289 = vmatprep.mubr.bf16.mxu0 0
      %2290 = vmatmul.mubr.bf16.gmra.mrb[0].mxu0 %v2114
      %v2291 = vpop.f32.mrb[0].mxu0
      %v2292 = vadd.f32 0.0, %v2291
      %v2293 = vpop.f32.mrb[0].mxu0
      %v2294 = vpop.f32.mrb[0].mxu0
      %v2295 = vadd.f32 0.0, %v2294
      %v2296 = vpop.f32.mrb[0].mxu0
      %2297 = vmatprep.mubr.bf16.mxu0 0
      %2298 = vmatmul.mubr.bf16.gmra.mrb[0].mxu0 %v2115
      %v2299 = vpop.f32.mrb[0].mxu0
      %v2300 = vadd.f32 0.0, %v2299
      %v2301 = vpop.f32.mrb[0].mxu0
      %v2302 = vpop.f32.mrb[0].mxu0
      %v2303 = vadd.f32 0.0, %v2302
      %v2304 = vpop.f32.mrb[0].mxu0
      %2305 = vmatprep.mubr.bf16.mxu0 0
      %2306 = vmatmul.mubr.bf16.gmra.mrb[0].mxu0 %v2116
      %v2307 = vpop.f32.mrb[0].mxu0
      %v2308 = vadd.f32 0.0, %v2307
      %v2309 = vpop.f32.mrb[0].mxu0
      %v2310 = vpop.f32.mrb[0].mxu0
      %v2311 = vadd.f32 0.0, %v2310
      %v2312 = vpop.f32.mrb[0].mxu0
      %2313 = vmatprep.mubr.bf16.mxu0 0
      %2314 = vmatmul.mubr.bf16.gmra.mrb[0].mxu0 %v2117
      %v2315 = vpop.f32.mrb[0].mxu0
      %v2316 = vadd.f32 0.0, %v2315
      %v2317 = vpop.f32.mrb[0].mxu0
      %v2318 = vpop.f32.mrb[0].mxu0
      %v2319 = vadd.f32 0.0, %v2318
      %v2320 = vpop.f32.mrb[0].mxu0
      %2321 = vmatprep.mubr.bf16.mxu0 0
      %2322 = vmatmul.mubr.bf16.gmra.mrb[0].mxu0 %v2118
      %v2323 = vpop.f32.mrb[0].mxu0
      %v2324 = vadd.f32 0.0, %v2323
      %v2325 = vpop.f32.mrb[0].mxu0
      %v2326 = vpop.f32.mrb[0].mxu0
      %v2327 = vadd.f32 0.0, %v2326
      %v2328 = vpop.f32.mrb[0].mxu0
      %2329 = vmatprep.mubr.bf16.mxu0 0
      %2330 = vmatmul.mubr.bf16.gmra.mrb[0].mxu0 %v2119
      %v2331 = vpop.f32.mrb[0].mxu0
      %v2332 = vadd.f32 0.0, %v2331
      %v2333 = vpop.f32.mrb[0].mxu0
      %v2334 = vpop.f32.mrb[0].mxu0
      %v2335 = vadd.f32 0.0, %v2334
      %v2336 = vpop.f32.mrb[0].mxu0
      %2337 = vmatprep.mubr.bf16.mxu0 0
      %2338 = vmatmul.mubr.bf16.gmra.mrb[0].mxu0 %v2120
      %v2339 = vpop.f32.mrb[0].mxu0
      %v2340 = vadd.f32 0.0, %v2339
      %v2341 = vpop.f32.mrb[0].mxu0
      %v2342 = vpop.f32.mrb[0].mxu0
      %v2343 = vadd.f32 0.0, %v2342
      %v2344 = vpop.f32.mrb[0].mxu0
      %2345 = vdwg.mxu0
      %v2346 = vadd.f32 %v1767, %v2220
      %v2347 = vadd.f32 %v1770, %v2223
      %v2348 = vadd.f32 %v1775, %v2228
      %v2349 = vadd.f32 %v1778, %v2231
      %v2350 = vadd.f32 %v1783, %v2236
      %v2351 = vadd.f32 %v1786, %v2239
      %v2352 = vadd.f32 %v1791, %v2244
      %v2353 = vadd.f32 %v1794, %v2247
      %v2354 = vadd.f32 %v1799, %v2252
      %v2355 = vadd.f32 %v1802, %v2255
      %v2356 = vadd.f32 %v1807, %v2260
      %v2357 = vadd.f32 %v1810, %v2263
      %v2358 = vadd.f32 %v1815, %v2268
      %v2359 = vadd.f32 %v1818, %v2271
      %v2360 = vadd.f32 %v1823, %v2276
      %v2361 = vadd.f32 %v1826, %v2279
      %v2362 = vadd.f32 %v1831, %v2284
      %v2363 = vadd.f32 %v1834, %v2287
      %v2364 = vadd.f32 %v1839, %v2292
      %v2365 = vadd.f32 %v1842, %v2295
      %v2366 = vadd.f32 %v1847, %v2300
      %v2367 = vadd.f32 %v1850, %v2303
      %v2368 = vadd.f32 %v1855, %v2308
      %v2369 = vadd.f32 %v1858, %v2311
      %v2370 = vadd.f32 %v1863, %v2316
      %v2371 = vadd.f32 %v1866, %v2319
      %v2372 = vadd.f32 %v1871, %v2324
      %v2373 = vadd.f32 %v1874, %v2327
      %v2374 = vadd.f32 %v1879, %v2332
      %v2375 = vadd.f32 %v1882, %v2335
      %v2376 = vadd.f32 %v1887, %v2340
      %v2377 = vadd.f32 %v1890, %v2343
      %v2378 = vld [vmem:[%s791] sm:$0xf]
      %v2379 = vld [vmem:[%s791 + $0x4] sm:$0xf]
      %v2380 = vld [vmem:[%s791 + $0xc] sm:$0xf]
      %v2381 = vld [vmem:[%s791 + $0x10] sm:$0xf]
      %v2382 = vld [vmem:[%s791 + $0x18] sm:$0xf]
      %v2383 = vld [vmem:[%s791 + $0x1c] sm:$0xf]
      %v2384 = vld [vmem:[%s791 + $0x24] sm:$0xf]
      %v2385 = vld [vmem:[%s791 + $0x28] sm:$0xf]
      %v2386 = vld [vmem:[%s791 + $0x30] sm:$0xf]
      %v2387 = vld [vmem:[%s791 + $0x34] sm:$0xf]
      %v2388 = vld [vmem:[%s791 + $0x3c] sm:$0xf]
      %v2389 = vld [vmem:[%s791 + $0x40] sm:$0xf]
      %v2390 = vld [vmem:[%s791 + $0x48] sm:$0xf]
      %v2391 = vld [vmem:[%s791 + $0x4c] sm:$0xf]
      %v2392 = vld [vmem:[%s791 + $0x54] sm:$0xf]
      %v2393 = vld [vmem:[%s791 + $0x58] sm:$0xf]
      %v2394 = vld [vmem:[%s791 + $0x60] sm:$0xf]
      %v2395 = vld [vmem:[%s791 + $0x64] sm:$0xf]
      %v2396 = vld [vmem:[%s791 + $0x6c] sm:$0xf]
      %v2397 = vld [vmem:[%s791 + $0x70] sm:$0xf]
      %v2398 = vld [vmem:[%s791 + $0x78] sm:$0xf]
      %v2399 = vld [vmem:[%s791 + $0x7c] sm:$0xf]
      %v2400 = vld [vmem:[%s791 + $0x84] sm:$0xf]
      %v2401 = vld [vmem:[%s791 + $0x88] sm:$0xf]
      %v2402 = vld [vmem:[%s791 + $0x90] sm:$0xf]
      %v2403 = vld [vmem:[%s791 + $0x94] sm:$0xf]
      %v2404 = vld [vmem:[%s791 + $0x9c] sm:$0xf]
      %v2405 = vld [vmem:[%s791 + $0xa0] sm:$0xf]
      %v2406 = vld [vmem:[%s791 + $0xa8] sm:$0xf]
      %v2407 = vld [vmem:[%s791 + $0xac] sm:$0xf]
      %v2408 = vld [vmem:[%s791 + $0xb4] sm:$0xf]
      %v2409 = vld [vmem:[%s791 + $0xb8] sm:$0xf]
      %s2410 = scalar_lea.vmem %s3, 192
      %v2411 = vld [vmem:[%s2410] sm:$0xf]
      %v2412 = vld [vmem:[%s2410 + $0x4] sm:$0xf]
      %v2413 = vld [vmem:[%s2410 + $0x8] sm:$0xf]
      %v2414 = vld [vmem:[%s2410 + $0xc] sm:$0xf]
      %v2415 = vld [vmem:[%s2410 + $0x10] sm:$0xf]
      %v2416 = vld [vmem:[%s2410 + $0x14] sm:$0xf]
      %v2417 = vld [vmem:[%s2410 + $0x18] sm:$0xf]
      %v2418 = vld [vmem:[%s2410 + $0x1c] sm:$0xf]
      %v2419 = vld [vmem:[%s2410 + $0x20] sm:$0xf]
      %v2420 = vld [vmem:[%s2410 + $0x24] sm:$0xf]
      %v2421 = vld [vmem:[%s2410 + $0x28] sm:$0xf]
      %v2422 = vld [vmem:[%s2410 + $0x2c] sm:$0xf]
      %v2423 = vld [vmem:[%s2410 + $0x30] sm:$0xf]
      %v2424 = vld [vmem:[%s2410 + $0x34] sm:$0xf]
      %v2425 = vld [vmem:[%s2410 + $0x38] sm:$0xf]
      %v2426 = vld [vmem:[%s2410 + $0x3c] sm:$0xf]
      %v2459 = vunpack.c.l.b16 %v2378
      %v2460 = vunpack.c.l.b16 %v2379
      %v2461 = vunpack.c.l.b16 %v2380
      %v2462 = vunpack.c.l.b16 %v2381
      %v2463 = vunpack.c.l.b16 %v2382
      %v2464 = vunpack.c.l.b16 %v2383
      %v2465 = vunpack.c.l.b16 %v2384
      %v2466 = vunpack.c.l.b16 %v2385
      %v2467 = vunpack.c.l.b16 %v2386
      %v2468 = vunpack.c.l.b16 %v2387
      %v2469 = vunpack.c.l.b16 %v2388
      %v2470 = vunpack.c.l.b16 %v2389
      %v2471 = vunpack.c.l.b16 %v2390
      %v2472 = vunpack.c.l.b16 %v2391
      %v2473 = vunpack.c.l.b16 %v2392
      %v2474 = vunpack.c.l.b16 %v2393
      %v2475 = vunpack.c.l.b16 %v2394
      %v2476 = vunpack.c.l.b16 %v2395
      %v2477 = vunpack.c.l.b16 %v2396
      %v2478 = vunpack.c.l.b16 %v2397
      %v2479 = vunpack.c.l.b16 %v2398
      %v2480 = vunpack.c.l.b16 %v2399
      %v2481 = vunpack.c.l.b16 %v2400
      %v2482 = vunpack.c.l.b16 %v2401
      %v2483 = vunpack.c.l.b16 %v2402
      %v2484 = vunpack.c.l.b16 %v2403
      %v2485 = vunpack.c.l.b16 %v2404
      %v2486 = vunpack.c.l.b16 %v2405
      %v2487 = vunpack.c.l.b16 %v2406
      %v2488 = vunpack.c.l.b16 %v2407
      %v2489 = vunpack.c.l.b16 %v2408
      %v2490 = vunpack.c.l.b16 %v2409
      %v2491 = vpack.c.b16 %v2460, %v2459
      %v2492 = vpack.c.b16 %v2462, %v2461
      %v2493 = vpack.c.b16 %v2464, %v2463
      %v2494 = vpack.c.b16 %v2466, %v2465
      %v2495 = vpack.c.b16 %v2468, %v2467
      %v2496 = vpack.c.b16 %v2470, %v2469
      %v2497 = vpack.c.b16 %v2472, %v2471
      %v2498 = vpack.c.b16 %v2474, %v2473
      %v2499 = vpack.c.b16 %v2476, %v2475
      %v2500 = vpack.c.b16 %v2478, %v2477
      %v2501 = vpack.c.b16 %v2480, %v2479
      %v2502 = vpack.c.b16 %v2482, %v2481
      %v2503 = vpack.c.b16 %v2484, %v2483
      %v2504 = vpack.c.b16 %v2486, %v2485
      %v2505 = vpack.c.b16 %v2488, %v2487
      %v2506 = vpack.c.b16 %v2490, %v2489
      %v2539 = vunpack.c.l.b16 %v2411
      %v2540 = vunpack.c.l.b16 %v2412
      %v2541 = vunpack.c.l.b16 %v2413
      %v2542 = vunpack.c.l.b16 %v2414
      %v2543 = vunpack.c.l.b16 %v2415
      %v2544 = vunpack.c.l.b16 %v2416
      %v2545 = vunpack.c.l.b16 %v2417
      %v2546 = vunpack.c.l.b16 %v2418
      %v2547 = vunpack.c.l.b16 %v2419
      %v2548 = vunpack.c.l.b16 %v2420
      %v2549 = vunpack.c.l.b16 %v2421
      %v2550 = vunpack.c.l.b16 %v2422
      %v2551 = vunpack.c.l.b16 %v2423
      %v2552 = vunpack.c.l.b16 %v2424
      %v2553 = vunpack.c.l.b16 %v2425
      %v2554 = vunpack.c.l.b16 %v2426
      %v2555 = vpack.c.b16 %v2540, %v2539
      %v2556 = vpack.c.b16 %v2542, %v2541
      %v2557 = vpack.c.b16 %v2544, %v2543
      %v2558 = vpack.c.b16 %v2546, %v2545
      %v2559 = vpack.c.b16 %v2548, %v2547
      %v2560 = vpack.c.b16 %v2550, %v2549
      %v2561 = vpack.c.b16 %v2552, %v2551
      %v2562 = vpack.c.b16 %v2554, %v2553
      %2571 = vmatprep.subr.bf16.mxu0 0
      %2572 = vmatpush1.bf16.msra.mxu0 %v2555
      %2573 = vmatprep.subr.bf16.mxu0 0
      %2574 = vmatpush1.bf16.msra.mxu0 %v2556
      %2575 = vmatprep.subr.bf16.mxu0 0
      %2576 = vmatpush1.bf16.msra.mxu0 %v2557
      %2577 = vmatprep.subr.bf16.mxu0 0
      %2578 = vmatpush1.bf16.msra.mxu0 %v2558
      %2579 = vmatprep.subr.bf16.mxu0 0
      %2580 = vmatpush1.bf16.msra.mxu0 %v2559
      %2581 = vmatprep.subr.bf16.mxu0 0
      %2582 = vmatpush1.bf16.msra.mxu0 %v2560
      %2583 = vmatprep.subr.bf16.mxu0 0
      %2584 = vmatpush1.bf16.msra.mxu0 %v2561
      %2585 = vmatprep.subr.bf16.mxu0 0
      %2586 = vmatpush1.bf16.msra.mxu0 %v2562
      %2587 = vmatprep.subr.bf16.mxu0 0
      %2588 = vmatpush1.bf16.msra.mxu0 0
      %2589 = vmatprep.subr.bf16.mxu0 0
      %2590 = vmatpush1.bf16.msra.mxu0 0
      %2591 = vmatprep.subr.bf16.mxu0 0
      %2592 = vmatpush1.bf16.msra.mxu0 0
      %2593 = vmatprep.subr.bf16.mxu0 0
      %2594 = vmatpush1.bf16.msra.mxu0 0
      %2595 = vmatprep.subr.bf16.mxu0 0
      %2596 = vmatpush1.bf16.msra.mxu0 0
      %2597 = vmatprep.subr.bf16.mxu0 0
      %2598 = vmatpush1.bf16.msra.mxu0 0
      %2599 = vmatprep.subr.bf16.mxu0 0
      %2600 = vmatpush1.bf16.msra.mxu0 0
      %2601 = vmatprep.subr.bf16.mxu0 0
      %2602 = vmatpush1.bf16.msra.mxu0 0
      %2603 = vmatprep.mubr.bf16.mxu0 0
      %2604 = vmatmul.mubr.bf16.gmra.mrb[0].mxu0 %v2491
      %v2605 = vpop.f32.mrb[0].mxu0
      %v2606 = vadd.f32 0.0, %v2605
      %v2607 = vpop.f32.mrb[0].mxu0
      %v2608 = vpop.f32.mrb[0].mxu0
      %v2609 = vadd.f32 0.0, %v2608
      %v2610 = vpop.f32.mrb[0].mxu0
      %2611 = vmatprep.mubr.bf16.mxu0 0
      %2612 = vmatmul.mubr.bf16.gmra.mrb[0].mxu0 %v2492
      %v2613 = vpop.f32.mrb[0].mxu0
      %v2614 = vadd.f32 0.0, %v2613
      %v2615 = vpop.f32.mrb[0].mxu0
      %v2616 = vpop.f32.mrb[0].mxu0
      %v2617 = vadd.f32 0.0, %v2616
      %v2618 = vpop.f32.mrb[0].mxu0
      %2619 = vmatprep.mubr.bf16.mxu0 0
      %2620 = vmatmul.mubr.bf16.gmra.mrb[0].mxu0 %v2493
      %v2621 = vpop.f32.mrb[0].mxu0
      %v2622 = vadd.f32 0.0, %v2621
      %v2623 = vpop.f32.mrb[0].mxu0
      %v2624 = vpop.f32.mrb[0].mxu0
      %v2625 = vadd.f32 0.0, %v2624
      %v2626 = vpop.f32.mrb[0].mxu0
      %2627 = vmatprep.mubr.bf16.mxu0 0
      %2628 = vmatmul.mubr.bf16.gmra.mrb[0].mxu0 %v2494
      %v2629 = vpop.f32.mrb[0].mxu0
      %v2630 = vadd.f32 0.0, %v2629
      %v2631 = vpop.f32.mrb[0].mxu0
      %v2632 = vpop.f32.mrb[0].mxu0
      %v2633 = vadd.f32 0.0, %v2632
      %v2634 = vpop.f32.mrb[0].mxu0
      %2635 = vmatprep.mubr.bf16.mxu0 0
      %2636 = vmatmul.mubr.bf16.gmra.mrb[0].mxu0 %v2495
      %v2637 = vpop.f32.mrb[0].mxu0
      %v2638 = vadd.f32 0.0, %v2637
      %v2639 = vpop.f32.mrb[0].mxu0
      %v2640 = vpop.f32.mrb[0].mxu0
      %v2641 = vadd.f32 0.0, %v2640
      %v2642 = vpop.f32.mrb[0].mxu0
      %2643 = vmatprep.mubr.bf16.mxu0 0
      %2644 = vmatmul.mubr.bf16.gmra.mrb[0].mxu0 %v2496
      %v2645 = vpop.f32.mrb[0].mxu0
      %v2646 = vadd.f32 0.0, %v2645
      %v2647 = vpop.f32.mrb[0].mxu0
      %v2648 = vpop.f32.mrb[0].mxu0
      %v2649 = vadd.f32 0.0, %v2648
      %v2650 = vpop.f32.mrb[0].mxu0
      %2651 = vmatprep.mubr.bf16.mxu0 0
      %2652 = vmatmul.mubr.bf16.gmra.mrb[0].mxu0 %v2497
      %v2653 = vpop.f32.mrb[0].mxu0
      %v2654 = vadd.f32 0.0, %v2653
      %v2655 = vpop.f32.mrb[0].mxu0
      %v2656 = vpop.f32.mrb[0].mxu0
      %v2657 = vadd.f32 0.0, %v2656
      %v2658 = vpop.f32.mrb[0].mxu0
      %2659 = vmatprep.mubr.bf16.mxu0 0
      %2660 = vmatmul.mubr.bf16.gmra.mrb[0].mxu0 %v2498
      %v2661 = vpop.f32.mrb[0].mxu0
      %v2662 = vadd.f32 0.0, %v2661
      %v2663 = vpop.f32.mrb[0].mxu0
      %v2664 = vpop.f32.mrb[0].mxu0
      %v2665 = vadd.f32 0.0, %v2664
      %v2666 = vpop.f32.mrb[0].mxu0
      %2667 = vmatprep.mubr.bf16.mxu0 0
      %2668 = vmatmul.mubr.bf16.gmra.mrb[0].mxu0 %v2499
      %v2669 = vpop.f32.mrb[0].mxu0
      %v2670 = vadd.f32 0.0, %v2669
      %v2671 = vpop.f32.mrb[0].mxu0
      %v2672 = vpop.f32.mrb[0].mxu0
      %v2673 = vadd.f32 0.0, %v2672
      %v2674 = vpop.f32.mrb[0].mxu0
      %2675 = vmatprep.mubr.bf16.mxu0 0
      %2676 = vmatmul.mubr.bf16.gmra.mrb[0].mxu0 %v2500
      %v2677 = vpop.f32.mrb[0].mxu0
      %v2678 = vadd.f32 0.0, %v2677
      %v2679 = vpop.f32.mrb[0].mxu0
      %v2680 = vpop.f32.mrb[0].mxu0
      %v2681 = vadd.f32 0.0, %v2680
      %v2682 = vpop.f32.mrb[0].mxu0
      %2683 = vmatprep.mubr.bf16.mxu0 0
      %2684 = vmatmul.mubr.bf16.gmra.mrb[0].mxu0 %v2501
      %v2685 = vpop.f32.mrb[0].mxu0
      %v2686 = vadd.f32 0.0, %v2685
      %v2687 = vpop.f32.mrb[0].mxu0
      %v2688 = vpop.f32.mrb[0].mxu0
      %v2689 = vadd.f32 0.0, %v2688
      %v2690 = vpop.f32.mrb[0].mxu0
      %2691 = vmatprep.mubr.bf16.mxu0 0
      %2692 = vmatmul.mubr.bf16.gmra.mrb[0].mxu0 %v2502
      %v2693 = vpop.f32.mrb[0].mxu0
      %v2694 = vadd.f32 0.0, %v2693
      %v2695 = vpop.f32.mrb[0].mxu0
      %v2696 = vpop.f32.mrb[0].mxu0
      %v2697 = vadd.f32 0.0, %v2696
      %v2698 = vpop.f32.mrb[0].mxu0
      %2699 = vmatprep.mubr.bf16.mxu0 0
      %2700 = vmatmul.mubr.bf16.gmra.mrb[0].mxu0 %v2503
      %v2701 = vpop.f32.mrb[0].mxu0
      %v2702 = vadd.f32 0.0, %v2701
      %v2703 = vpop.f32.mrb[0].mxu0
      %v2704 = vpop.f32.mrb[0].mxu0
      %v2705 = vadd.f32 0.0, %v2704
      %v2706 = vpop.f32.mrb[0].mxu0
      %2707 = vmatprep.mubr.bf16.mxu0 0
      %2708 = vmatmul.mubr.bf16.gmra.mrb[0].mxu0 %v2504
      %v2709 = vpop.f32.mrb[0].mxu0
      %v2710 = vadd.f32 0.0, %v2709
      %v2711 = vpop.f32.mrb[0].mxu0
      %v2712 = vpop.f32.mrb[0].mxu0
      %v2713 = vadd.f32 0.0, %v2712
      %v2714 = vpop.f32.mrb[0].mxu0
      %2715 = vmatprep.mubr.bf16.mxu0 0
      %2716 = vmatmul.mubr.bf16.gmra.mrb[0].mxu0 %v2505
      %v2717 = vpop.f32.mrb[0].mxu0
      %v2718 = vadd.f32 0.0, %v2717
      %v2719 = vpop.f32.mrb[0].mxu0
      %v2720 = vpop.f32.mrb[0].mxu0
      %v2721 = vadd.f32 0.0, %v2720
      %v2722 = vpop.f32.mrb[0].mxu0
      %2723 = vmatprep.mubr.bf16.mxu0 0
      %2724 = vmatmul.mubr.bf16.gmra.mrb[0].mxu0 %v2506
      %v2725 = vpop.f32.mrb[0].mxu0
      %v2726 = vadd.f32 0.0, %v2725
      %v2727 = vpop.f32.mrb[0].mxu0
      %v2728 = vpop.f32.mrb[0].mxu0
      %v2729 = vadd.f32 0.0, %v2728
      %v2730 = vpop.f32.mrb[0].mxu0
      %2731 = vdwg.mxu0
      %v2732 = vadd.f32 %v2346, %v2606
      %v2733 = vadd.f32 %v2347, %v2609
      %v2734 = vadd.f32 %v2348, %v2614
      %v2735 = vadd.f32 %v2349, %v2617
      %v2736 = vadd.f32 %v2350, %v2622
      %v2737 = vadd.f32 %v2351, %v2625
      %v2738 = vadd.f32 %v2352, %v2630
      %v2739 = vadd.f32 %v2353, %v2633
      %v2740 = vadd.f32 %v2354, %v2638
      %v2741 = vadd.f32 %v2355, %v2641
      %v2742 = vadd.f32 %v2356, %v2646
      %v2743 = vadd.f32 %v2357, %v2649
      %v2744 = vadd.f32 %v2358, %v2654
      %v2745 = vadd.f32 %v2359, %v2657
      %v2746 = vadd.f32 %v2360, %v2662
      %v2747 = vadd.f32 %v2361, %v2665
      %v2748 = vadd.f32 %v2362, %v2670
      %v2749 = vadd.f32 %v2363, %v2673
      %v2750 = vadd.f32 %v2364, %v2678
      %v2751 = vadd.f32 %v2365, %v2681
      %v2752 = vadd.f32 %v2366, %v2686
      %v2753 = vadd.f32 %v2367, %v2689
      %v2754 = vadd.f32 %v2368, %v2694
      %v2755 = vadd.f32 %v2369, %v2697
      %v2756 = vadd.f32 %v2370, %v2702
      %v2757 = vadd.f32 %v2371, %v2705
      %v2758 = vadd.f32 %v2372, %v2710
      %v2759 = vadd.f32 %v2373, %v2713
      %v2760 = vadd.f32 %v2374, %v2718
      %v2761 = vadd.f32 %v2375, %v2721
      %v2762 = vadd.f32 %v2376, %v2726
      %v2763 = vadd.f32 %v2377, %v2729
      %v2764 = vld [vmem:[%s791] sm:$0xf]
      %v2765 = vld [vmem:[%s791 + $0x4] sm:$0xf]
      %v2766 = vld [vmem:[%s791 + $0x8] sm:$0x1]
      %v2767 = vld [vmem:[%s791 + $0xc] sm:$0xf]
      %v2768 = vld [vmem:[%s791 + $0x10] sm:$0xf]
      %v2769 = vld [vmem:[%s791 + $0x14] sm:$0x1]
      %v2770 = vld [vmem:[%s791 + $0x18] sm:$0xf]
      %v2771 = vld [vmem:[%s791 + $0x1c] sm:$0xf]
      %v2772 = vld [vmem:[%s791 + $0x20] sm:$0x1]
      %v2773 = vld [vmem:[%s791 + $0x24] sm:$0xf]
      %v2774 = vld [vmem:[%s791 + $0x28] sm:$0xf]
      %v2775 = vld [vmem:[%s791 + $0x2c] sm:$0x1]
      %v2776 = vld [vmem:[%s791 + $0x30] sm:$0xf]
      %v2777 = vld [vmem:[%s791 + $0x34] sm:$0xf]
      %v2778 = vld [vmem:[%s791 + $0x38] sm:$0x1]
      %v2779 = vld [vmem:[%s791 + $0x3c] sm:$0xf]
      %v2780 = vld [vmem:[%s791 + $0x40] sm:$0xf]
      %v2781 = vld [vmem:[%s791 + $0x44] sm:$0x1]
      %v2782 = vld [vmem:[%s791 + $0x48] sm:$0xf]
      %v2783 = vld [vmem:[%s791 + $0x4c] sm:$0xf]
      %v2784 = vld [vmem:[%s791 + $0x50] sm:$0x1]
      %v2785 = vld [vmem:[%s791 + $0x54] sm:$0xf]
      %v2786 = vld [vmem:[%s791 + $0x58] sm:$0xf]
      %v2787 = vld [vmem:[%s791 + $0x5c] sm:$0x1]
      %v2788 = vld [vmem:[%s791 + $0x60] sm:$0xf]
      %v2789 = vld [vmem:[%s791 + $0x64] sm:$0xf]
      %v2790 = vld [vmem:[%s791 + $0x68] sm:$0x1]
      %v2791 = vld [vmem:[%s791 + $0x6c] sm:$0xf]
      %v2792 = vld [vmem:[%s791 + $0x70] sm:$0xf]
      %v2793 = vld [vmem:[%s791 + $0x74] sm:$0x1]
      %v2794 = vld [vmem:[%s791 + $0x78] sm:$0xf]
      %v2795 = vld [vmem:[%s791 + $0x7c] sm:$0xf]
      %v2796 = vld [vmem:[%s791 + $0x80] sm:$0x1]
      %v2797 = vld [vmem:[%s791 + $0x84] sm:$0xf]
      %v2798 = vld [vmem:[%s791 + $0x88] sm:$0xf]
      %v2799 = vld [vmem:[%s791 + $0x8c] sm:$0x1]
      %v2800 = vld [vmem:[%s791 + $0x90] sm:$0xf]
      %v2801 = vld [vmem:[%s791 + $0x94] sm:$0xf]
      %v2802 = vld [vmem:[%s791 + $0x98] sm:$0x1]
      %v2803 = vld [vmem:[%s791 + $0x9c] sm:$0xf]
      %v2804 = vld [vmem:[%s791 + $0xa0] sm:$0xf]
      %v2805 = vld [vmem:[%s791 + $0xa4] sm:$0x1]
      %v2806 = vld [vmem:[%s791 + $0xa8] sm:$0xf]
      %v2807 = vld [vmem:[%s791 + $0xac] sm:$0xf]
      %v2808 = vld [vmem:[%s791 + $0xb0] sm:$0x1]
      %v2809 = vld [vmem:[%s791 + $0xb4] sm:$0xf]
      %v2810 = vld [vmem:[%s791 + $0xb8] sm:$0xf]
      %v2811 = vld [vmem:[%s791 + $0xbc] sm:$0x1]
      %v2813 = vshrl.u32 %v2764, 16
      %v2815 = vrot.slane %v2813, 4
      %v2816 = vshll.u32 %v2764, 16
      %v2818 = vrot.slane %v2816, 5
      %v2819 = vor.u32 %v2815, %v2818
      %v2820 = vrot.slane %v2819, 4
      %v2822 = vshll.u32 %v2765, 16
      %v2824 = vrot.slane %v2822, 5
      %v2825 = vsel %vm913, %v2820, %v2824
      %v2826 = vshrl.u32 %v2765, 16
      %v2828 = vrot.slane %v2826, 4
      %v2829 = vor.u32 %v2828, %v2824
      %v2830 = vrot.slane %v2829, 4
      %v2832 = vshll.u32 %v2766, 16
      %v2834 = vrot.slane %v2832, 5
      %v2835 = vsel %vm913, %v2830, %v2834
      %v2837 = vshrl.u32 %v2767, 16
      %v2839 = vrot.slane %v2837, 4
      %v2840 = vshll.u32 %v2767, 16
      %v2842 = vrot.slane %v2840, 5
      %v2843 = vor.u32 %v2839, %v2842
      %v2844 = vrot.slane %v2843, 4
      %v2846 = vshll.u32 %v2768, 16
      %v2848 = vrot.slane %v2846, 5
      %v2849 = vsel %vm913, %v2844, %v2848
      %v2850 = vshrl.u32 %v2768, 16
      %v2852 = vrot.slane %v2850, 4
      %v2853 = vor.u32 %v2852, %v2848
      %v2854 = vrot.slane %v2853, 4
      %v2856 = vshll.u32 %v2769, 16
      %v2858 = vrot.slane %v2856, 5
      %v2859 = vsel %vm913, %v2854, %v2858
      %v2861 = vshrl.u32 %v2770, 16
      %v2863 = vrot.slane %v2861, 4
      %v2864 = vshll.u32 %v2770, 16
      %v2866 = vrot.slane %v2864, 5
      %v2867 = vor.u32 %v2863, %v2866
      %v2868 = vrot.slane %v2867, 4
      %v2870 = vshll.u32 %v2771, 16
      %v2872 = vrot.slane %v2870, 5
      %v2873 = vsel %vm913, %v2868, %v2872
      %v2874 = vshrl.u32 %v2771, 16
      %v2876 = vrot.slane %v2874, 4
      %v2877 = vor.u32 %v2876, %v2872
      %v2878 = vrot.slane %v2877, 4
      %v2880 = vshll.u32 %v2772, 16
      %v2882 = vrot.slane %v2880, 5
      %v2883 = vsel %vm913, %v2878, %v2882
      %v2885 = vshrl.u32 %v2773, 16
      %v2887 = vrot.slane %v2885, 4
      %v2888 = vshll.u32 %v2773, 16
      %v2890 = vrot.slane %v2888, 5
      %v2891 = vor.u32 %v2887, %v2890
      %v2892 = vrot.slane %v2891, 4
      %v2894 = vshll.u32 %v2774, 16
      %v2896 = vrot.slane %v2894, 5
      %v2897 = vsel %vm913, %v2892, %v2896
      %v2898 = vshrl.u32 %v2774, 16
      %v2900 = vrot.slane %v2898, 4
      %v2901 = vor.u32 %v2900, %v2896
      %v2902 = vrot.slane %v2901, 4
      %v2904 = vshll.u32 %v2775, 16
      %v2906 = vrot.slane %v2904, 5
      %v2907 = vsel %vm913, %v2902, %v2906
      %v2909 = vshrl.u32 %v2776, 16
      %v2911 = vrot.slane %v2909, 4
      %v2912 = vshll.u32 %v2776, 16
      %v2914 = vrot.slane %v2912, 5
      %v2915 = vor.u32 %v2911, %v2914
      %v2916 = vrot.slane %v2915, 4
      %v2918 = vshll.u32 %v2777, 16
      %v2920 = vrot.slane %v2918, 5
      %v2921 = vsel %vm913, %v2916, %v2920
      %v2922 = vshrl.u32 %v2777, 16
      %v2924 = vrot.slane %v2922, 4
      %v2925 = vor.u32 %v2924, %v2920
      %v2926 = vrot.slane %v2925, 4
      %v2928 = vshll.u32 %v2778, 16
      %v2930 = vrot.slane %v2928, 5
      %v2931 = vsel %vm913, %v2926, %v2930
      %v2933 = vshrl.u32 %v2779, 16
      %v2935 = vrot.slane %v2933, 4
      %v2936 = vshll.u32 %v2779, 16
      %v2938 = vrot.slane %v2936, 5
      %v2939 = vor.u32 %v2935, %v2938
      %v2940 = vrot.slane %v2939, 4
      %v2942 = vshll.u32 %v2780, 16
      %v2944 = vrot.slane %v2942, 5
      %v2945 = vsel %vm913, %v2940, %v2944
      %v2946 = vshrl.u32 %v2780, 16
      %v2948 = vrot.slane %v2946, 4
      %v2949 = vor.u32 %v2948, %v2944
      %v2950 = vrot.slane %v2949, 4
      %v2952 = vshll.u32 %v2781, 16
      %v2954 = vrot.slane %v2952, 5
      %v2955 = vsel %vm913, %v2950, %v2954
      %v2957 = vshrl.u32 %v2782, 16
      %v2959 = vrot.slane %v2957, 4
      %v2960 = vshll.u32 %v2782, 16
      %v2962 = vrot.slane %v2960, 5
      %v2963 = vor.u32 %v2959, %v2962
      %v2964 = vrot.slane %v2963, 4
      %v2966 = vshll.u32 %v2783, 16
      %v2968 = vrot.slane %v2966, 5
      %v2969 = vsel %vm913, %v2964, %v2968
      %v2970 = vshrl.u32 %v2783, 16
      %v2972 = vrot.slane %v2970, 4
      %v2973 = vor.u32 %v2972, %v2968
      %v2974 = vrot.slane %v2973, 4
      %v2976 = vshll.u32 %v2784, 16
      %v2978 = vrot.slane %v2976, 5
      %v2979 = vsel %vm913, %v2974, %v2978
      %v2981 = vshrl.u32 %v2785, 16
      %v2983 = vrot.slane %v2981, 4
      %v2984 = vshll.u32 %v2785, 16
      %v2986 = vrot.slane %v2984, 5
      %v2987 = vor.u32 %v2983, %v2986
      %v2988 = vrot.slane %v2987, 4
      %v2990 = vshll.u32 %v2786, 16
      %v2992 = vrot.slane %v2990, 5
      %v2993 = vsel %vm913, %v2988, %v2992
      %v2994 = vshrl.u32 %v2786, 16
      %v2996 = vrot.slane %v2994, 4
      %v2997 = vor.u32 %v2996, %v2992
      %v2998 = vrot.slane %v2997, 4
      %v3000 = vshll.u32 %v2787, 16
      %v3002 = vrot.slane %v3000, 5
      %v3003 = vsel %vm913, %v2998, %v3002
      %v3005 = vshrl.u32 %v2788, 16
      %v3007 = vrot.slane %v3005, 4
      %v3008 = vshll.u32 %v2788, 16
      %v3010 = vrot.slane %v3008, 5
      %v3011 = vor.u32 %v3007, %v3010
      %v3012 = vrot.slane %v3011, 4
      %v3014 = vshll.u32 %v2789, 16
      %v3016 = vrot.slane %v3014, 5
      %v3017 = vsel %vm913, %v3012, %v3016
      %v3018 = vshrl.u32 %v2789, 16
      %v3020 = vrot.slane %v3018, 4
      %v3021 = vor.u32 %v3020, %v3016
      %v3022 = vrot.slane %v3021, 4
      %v3024 = vshll.u32 %v2790, 16
      %v3026 = vrot.slane %v3024, 5
      %v3027 = vsel %vm913, %v3022, %v3026
      %v3029 = vshrl.u32 %v2791, 16
      %v3031 = vrot.slane %v3029, 4
      %v3032 = vshll.u32 %v2791, 16
      %v3034 = vrot.slane %v3032, 5
      %v3035 = vor.u32 %v3031, %v3034
      %v3036 = vrot.slane %v3035, 4
      %v3038 = vshll.u32 %v2792, 16
      %v3040 = vrot.slane %v3038, 5
      %v3041 = vsel %vm913, %v3036, %v3040
      %v3042 = vshrl.u32 %v2792, 16
      %v3044 = vrot.slane %v3042, 4
      %v3045 = vor.u32 %v3044, %v3040
      %v3046 = vrot.slane %v3045, 4
      %v3048 = vshll.u32 %v2793, 16
      %v3050 = vrot.slane %v3048, 5
      %v3051 = vsel %vm913, %v3046, %v3050
      %v3053 = vshrl.u32 %v2794, 16
      %v3055 = vrot.slane %v3053, 4
      %v3056 = vshll.u32 %v2794, 16
      %v3058 = vrot.slane %v3056, 5
      %v3059 = vor.u32 %v3055, %v3058
      %v3060 = vrot.slane %v3059, 4
      %v3062 = vshll.u32 %v2795, 16
      %v3064 = vrot.slane %v3062, 5
      %v3065 = vsel %vm913, %v3060, %v3064
      %v3066 = vshrl.u32 %v2795, 16
      %v3068 = vrot.slane %v3066, 4
      %v3069 = vor.u32 %v3068, %v3064
      %v3070 = vrot.slane %v3069, 4
      %v3072 = vshll.u32 %v2796, 16
      %v3074 = vrot.slane %v3072, 5
      %v3075 = vsel %vm913, %v3070, %v3074
      %v3077 = vshrl.u32 %v2797, 16
      %v3079 = vrot.slane %v3077, 4
      %v3080 = vshll.u32 %v2797, 16
      %v3082 = vrot.slane %v3080, 5
      %v3083 = vor.u32 %v3079, %v3082
      %v3084 = vrot.slane %v3083, 4
      %v3086 = vshll.u32 %v2798, 16
      %v3088 = vrot.slane %v3086, 5
      %v3089 = vsel %vm913, %v3084, %v3088
      %v3090 = vshrl.u32 %v2798, 16
      %v3092 = vrot.slane %v3090, 4
      %v3093 = vor.u32 %v3092, %v3088
      %v3094 = vrot.slane %v3093, 4
      %v3096 = vshll.u32 %v2799, 16
      %v3098 = vrot.slane %v3096, 5
      %v3099 = vsel %vm913, %v3094, %v3098
      %v3101 = vshrl.u32 %v2800, 16
      %v3103 = vrot.slane %v3101, 4
      %v3104 = vshll.u32 %v2800, 16
      %v3106 = vrot.slane %v3104, 5
      %v3107 = vor.u32 %v3103, %v3106
      %v3108 = vrot.slane %v3107, 4
      %v3110 = vshll.u32 %v2801, 16
      %v3112 = vrot.slane %v3110, 5
      %v3113 = vsel %vm913, %v3108, %v3112
      %v3114 = vshrl.u32 %v2801, 16
      %v3116 = vrot.slane %v3114, 4
      %v3117 = vor.u32 %v3116, %v3112
      %v3118 = vrot.slane %v3117, 4
      %v3120 = vshll.u32 %v2802, 16
      %v3122 = vrot.slane %v3120, 5
      %v3123 = vsel %vm913, %v3118, %v3122
      %v3125 = vshrl.u32 %v2803, 16
      %v3127 = vrot.slane %v3125, 4
      %v3128 = vshll.u32 %v2803, 16
      %v3130 = vrot.slane %v3128, 5
      %v3131 = vor.u32 %v3127, %v3130
      %v3132 = vrot.slane %v3131, 4
      %v3134 = vshll.u32 %v2804, 16
      %v3136 = vrot.slane %v3134, 5
      %v3137 = vsel %vm913, %v3132, %v3136
      %v3138 = vshrl.u32 %v2804, 16
      %v3140 = vrot.slane %v3138, 4
      %v3141 = vor.u32 %v3140, %v3136
      %v3142 = vrot.slane %v3141, 4
      %v3144 = vshll.u32 %v2805, 16
      %v3146 = vrot.slane %v3144, 5
      %v3147 = vsel %vm913, %v3142, %v3146
      %v3149 = vshrl.u32 %v2806, 16
      %v3151 = vrot.slane %v3149, 4
      %v3152 = vshll.u32 %v2806, 16
      %v3154 = vrot.slane %v3152, 5
      %v3155 = vor.u32 %v3151, %v3154
      %v3156 = vrot.slane %v3155, 4
      %v3158 = vshll.u32 %v2807, 16
      %v3160 = vrot.slane %v3158, 5
      %v3161 = vsel %vm913, %v3156, %v3160
      %v3162 = vshrl.u32 %v2807, 16
      %v3164 = vrot.slane %v3162, 4
      %v3165 = vor.u32 %v3164, %v3160
      %v3166 = vrot.slane %v3165, 4
      %v3168 = vshll.u32 %v2808, 16
      %v3170 = vrot.slane %v3168, 5
      %v3171 = vsel %vm913, %v3166, %v3170
      %v3173 = vshrl.u32 %v2809, 16
      %v3175 = vrot.slane %v3173, 4
      %v3176 = vshll.u32 %v2809, 16
      %v3178 = vrot.slane %v3176, 5
      %v3179 = vor.u32 %v3175, %v3178
      %v3180 = vrot.slane %v3179, 4
      %v3182 = vshll.u32 %v2810, 16
      %v3184 = vrot.slane %v3182, 5
      %v3185 = vsel %vm913, %v3180, %v3184
      %v3186 = vshrl.u32 %v2810, 16
      %v3188 = vrot.slane %v3186, 4
      %v3189 = vor.u32 %v3188, %v3184
      %v3190 = vrot.slane %v3189, 4
      %v3192 = vshll.u32 %v2811, 16
      %v3194 = vrot.slane %v3192, 5
      %v3195 = vsel %vm913, %v3190, %v3194
      %s3196 = scalar_lea.vmem %s3, 256
      %v3197 = vld [vmem:[%s3196] sm:$0xf]
      %v3198 = vld [vmem:[%s3196 + $0x4] sm:$0xf]
      %v3199 = vld [vmem:[%s3196 + $0x8] sm:$0xf]
      %v3200 = vld [vmem:[%s3196 + $0xc] sm:$0xf]
      %v3201 = vld [vmem:[%s3196 + $0x10] sm:$0xf]
      %v3202 = vld [vmem:[%s3196 + $0x14] sm:$0xf]
      %v3203 = vld [vmem:[%s3196 + $0x18] sm:$0xf]
      %v3204 = vld [vmem:[%s3196 + $0x1c] sm:$0xf]
      %v3205 = vld [vmem:[%s3196 + $0x20] sm:$0xf]
      %v3206 = vld [vmem:[%s3196 + $0x24] sm:$0xf]
      %v3207 = vld [vmem:[%s3196 + $0x28] sm:$0xf]
      %v3208 = vld [vmem:[%s3196 + $0x2c] sm:$0xf]
      %v3209 = vld [vmem:[%s3196 + $0x30] sm:$0xf]
      %v3210 = vld [vmem:[%s3196 + $0x34] sm:$0xf]
      %v3211 = vld [vmem:[%s3196 + $0x38] sm:$0xf]
      %v3212 = vld [vmem:[%s3196 + $0x3c] sm:$0xf]
      %v3213 = vunpack.c.l.b16 %v2825
      %v3214 = vunpack.c.l.b16 %v2835
      %v3215 = vunpack.c.l.b16 %v2849
      %v3216 = vunpack.c.l.b16 %v2859
      %v3217 = vunpack.c.l.b16 %v2873
      %v3218 = vunpack.c.l.b16 %v2883
      %v3219 = vunpack.c.l.b16 %v2897
      %v3220 = vunpack.c.l.b16 %v2907
      %v3221 = vunpack.c.l.b16 %v2921
      %v3222 = vunpack.c.l.b16 %v2931
      %v3223 = vunpack.c.l.b16 %v2945
      %v3224 = vunpack.c.l.b16 %v2955
      %v3225 = vunpack.c.l.b16 %v2969
      %v3226 = vunpack.c.l.b16 %v2979
      %v3227 = vunpack.c.l.b16 %v2993
      %v3228 = vunpack.c.l.b16 %v3003
      %v3229 = vunpack.c.l.b16 %v3017
      %v3230 = vunpack.c.l.b16 %v3027
      %v3231 = vunpack.c.l.b16 %v3041
      %v3232 = vunpack.c.l.b16 %v3051
      %v3233 = vunpack.c.l.b16 %v3065
      %v3234 = vunpack.c.l.b16 %v3075
      %v3235 = vunpack.c.l.b16 %v3089
      %v3236 = vunpack.c.l.b16 %v3099
      %v3237 = vunpack.c.l.b16 %v3113
      %v3238 = vunpack.c.l.b16 %v3123
      %v3239 = vunpack.c.l.b16 %v3137
      %v3240 = vunpack.c.l.b16 %v3147
      %v3241 = vunpack.c.l.b16 %v3161
      %v3242 = vunpack.c.l.b16 %v3171
      %v3243 = vunpack.c.l.b16 %v3185
      %v3244 = vunpack.c.l.b16 %v3195
      %v3245 = vpack.c.b16 %v3214, %v3213
      %v3246 = vpack.c.b16 %v3216, %v3215
      %v3247 = vpack.c.b16 %v3218, %v3217
      %v3248 = vpack.c.b16 %v3220, %v3219
      %v3249 = vpack.c.b16 %v3222, %v3221
      %v3250 = vpack.c.b16 %v3224, %v3223
      %v3251 = vpack.c.b16 %v3226, %v3225
      %v3252 = vpack.c.b16 %v3228, %v3227
      %v3253 = vpack.c.b16 %v3230, %v3229
      %v3254 = vpack.c.b16 %v3232, %v3231
      %v3255 = vpack.c.b16 %v3234, %v3233
      %v3256 = vpack.c.b16 %v3236, %v3235
      %v3257 = vpack.c.b16 %v3238, %v3237
      %v3258 = vpack.c.b16 %v3240, %v3239
      %v3259 = vpack.c.b16 %v3242, %v3241
      %v3260 = vpack.c.b16 %v3244, %v3243
      %v3293 = vunpack.c.l.b16 %v3197
      %v3294 = vunpack.c.l.b16 %v3198
      %v3295 = vunpack.c.l.b16 %v3199
      %v3296 = vunpack.c.l.b16 %v3200
      %v3297 = vunpack.c.l.b16 %v3201
      %v3298 = vunpack.c.l.b16 %v3202
      %v3299 = vunpack.c.l.b16 %v3203
      %v3300 = vunpack.c.l.b16 %v3204
      %v3301 = vunpack.c.l.b16 %v3205
      %v3302 = vunpack.c.l.b16 %v3206
      %v3303 = vunpack.c.l.b16 %v3207
      %v3304 = vunpack.c.l.b16 %v3208
      %v3305 = vunpack.c.l.b16 %v3209
      %v3306 = vunpack.c.l.b16 %v3210
      %v3307 = vunpack.c.l.b16 %v3211
      %v3308 = vunpack.c.l.b16 %v3212
      %v3309 = vpack.c.b16 %v3294, %v3293
      %v3310 = vpack.c.b16 %v3296, %v3295
      %v3311 = vpack.c.b16 %v3298, %v3297
      %v3312 = vpack.c.b16 %v3300, %v3299
      %v3313 = vpack.c.b16 %v3302, %v3301
      %v3314 = vpack.c.b16 %v3304, %v3303
      %v3315 = vpack.c.b16 %v3306, %v3305
      %v3316 = vpack.c.b16 %v3308, %v3307
      %3325 = vmatprep.subr.bf16.mxu0 0
      %3326 = vmatpush1.bf16.msra.mxu0 %v3309
      %3327 = vmatprep.subr.bf16.mxu0 0
      %3328 = vmatpush1.bf16.msra.mxu0 %v3310
      %3329 = vmatprep.subr.bf16.mxu0 0
      %3330 = vmatpush1.bf16.msra.mxu0 %v3311
      %3331 = vmatprep.subr.bf16.mxu0 0
      %3332 = vmatpush1.bf16.msra.mxu0 %v3312
      %3333 = vmatprep.subr.bf16.mxu0 0
      %3334 = vmatpush1.bf16.msra.mxu0 %v3313
      %3335 = vmatprep.subr.bf16.mxu0 0
      %3336 = vmatpush1.bf16.msra.mxu0 %v3314
      %3337 = vmatprep.subr.bf16.mxu0 0
      %3338 = vmatpush1.bf16.msra.mxu0 %v3315
      %3339 = vmatprep.subr.bf16.mxu0 0
      %3340 = vmatpush1.bf16.msra.mxu0 %v3316
      %3341 = vmatprep.subr.bf16.mxu0 0
      %3342 = vmatpush1.bf16.msra.mxu0 0
      %3343 = vmatprep.subr.bf16.mxu0 0
      %3344 = vmatpush1.bf16.msra.mxu0 0
      %3345 = vmatprep.subr.bf16.mxu0 0
      %3346 = vmatpush1.bf16.msra.mxu0 0
      %3347 = vmatprep.subr.bf16.mxu0 0
      %3348 = vmatpush1.bf16.msra.mxu0 0
      %3349 = vmatprep.subr.bf16.mxu0 0
      %3350 = vmatpush1.bf16.msra.mxu0 0
      %3351 = vmatprep.subr.bf16.mxu0 0
      %3352 = vmatpush1.bf16.msra.mxu0 0
      %3353 = vmatprep.subr.bf16.mxu0 0
      %3354 = vmatpush1.bf16.msra.mxu0 0
      %3355 = vmatprep.subr.bf16.mxu0 0
      %3356 = vmatpush1.bf16.msra.mxu0 0
      %3357 = vmatprep.mubr.bf16.mxu0 0
      %3358 = vmatmul.mubr.bf16.gmra.mrb[0].mxu0 %v3245
      %v3359 = vpop.f32.mrb[0].mxu0
      %v3360 = vadd.f32 0.0, %v3359
      %v3361 = vpop.f32.mrb[0].mxu0
      %v3362 = vpop.f32.mrb[0].mxu0
      %v3363 = vadd.f32 0.0, %v3362
      %v3364 = vpop.f32.mrb[0].mxu0
      %3365 = vmatprep.mubr.bf16.mxu0 0
      %3366 = vmatmul.mubr.bf16.gmra.mrb[0].mxu0 %v3246
      %v3367 = vpop.f32.mrb[0].mxu0
      %v3368 = vadd.f32 0.0, %v3367
      %v3369 = vpop.f32.mrb[0].mxu0
      %v3370 = vpop.f32.mrb[0].mxu0
      %v3371 = vadd.f32 0.0, %v3370
      %v3372 = vpop.f32.mrb[0].mxu0
      %3373 = vmatprep.mubr.bf16.mxu0 0
      %3374 = vmatmul.mubr.bf16.gmra.mrb[0].mxu0 %v3247
      %v3375 = vpop.f32.mrb[0].mxu0
      %v3376 = vadd.f32 0.0, %v3375
      %v3377 = vpop.f32.mrb[0].mxu0
      %v3378 = vpop.f32.mrb[0].mxu0
      %v3379 = vadd.f32 0.0, %v3378
      %v3380 = vpop.f32.mrb[0].mxu0
      %3381 = vmatprep.mubr.bf16.mxu0 0
      %3382 = vmatmul.mubr.bf16.gmra.mrb[0].mxu0 %v3248
      %v3383 = vpop.f32.mrb[0].mxu0
      %v3384 = vadd.f32 0.0, %v3383
      %v3385 = vpop.f32.mrb[0].mxu0
      %v3386 = vpop.f32.mrb[0].mxu0
      %v3387 = vadd.f32 0.0, %v3386
      %v3388 = vpop.f32.mrb[0].mxu0
      %3389 = vmatprep.mubr.bf16.mxu0 0
      %3390 = vmatmul.mubr.bf16.gmra.mrb[0].mxu0 %v3249
      %v3391 = vpop.f32.mrb[0].mxu0
      %v3392 = vadd.f32 0.0, %v3391
      %v3393 = vpop.f32.mrb[0].mxu0
      %v3394 = vpop.f32.mrb[0].mxu0
      %v3395 = vadd.f32 0.0, %v3394
      %v3396 = vpop.f32.mrb[0].mxu0
      %3397 = vmatprep.mubr.bf16.mxu0 0
      %3398 = vmatmul.mubr.bf16.gmra.mrb[0].mxu0 %v3250
      %v3399 = vpop.f32.mrb[0].mxu0
      %v3400 = vadd.f32 0.0, %v3399
      %v3401 = vpop.f32.mrb[0].mxu0
      %v3402 = vpop.f32.mrb[0].mxu0
      %v3403 = vadd.f32 0.0, %v3402
      %v3404 = vpop.f32.mrb[0].mxu0
      %3405 = vmatprep.mubr.bf16.mxu0 0
      %3406 = vmatmul.mubr.bf16.gmra.mrb[0].mxu0 %v3251
      %v3407 = vpop.f32.mrb[0].mxu0
      %v3408 = vadd.f32 0.0, %v3407
      %v3409 = vpop.f32.mrb[0].mxu0
      %v3410 = vpop.f32.mrb[0].mxu0
      %v3411 = vadd.f32 0.0, %v3410
      %v3412 = vpop.f32.mrb[0].mxu0
      %3413 = vmatprep.mubr.bf16.mxu0 0
      %3414 = vmatmul.mubr.bf16.gmra.mrb[0].mxu0 %v3252
      %v3415 = vpop.f32.mrb[0].mxu0
      %v3416 = vadd.f32 0.0, %v3415
      %v3417 = vpop.f32.mrb[0].mxu0
      %v3418 = vpop.f32.mrb[0].mxu0
      %v3419 = vadd.f32 0.0, %v3418
      %v3420 = vpop.f32.mrb[0].mxu0
      %3421 = vmatprep.mubr.bf16.mxu0 0
      %3422 = vmatmul.mubr.bf16.gmra.mrb[0].mxu0 %v3253
      %v3423 = vpop.f32.mrb[0].mxu0
      %v3424 = vadd.f32 0.0, %v3423
      %v3425 = vpop.f32.mrb[0].mxu0
      %v3426 = vpop.f32.mrb[0].mxu0
      %v3427 = vadd.f32 0.0, %v3426
      %v3428 = vpop.f32.mrb[0].mxu0
      %3429 = vmatprep.mubr.bf16.mxu0 0
      %3430 = vmatmul.mubr.bf16.gmra.mrb[0].mxu0 %v3254
      %v3431 = vpop.f32.mrb[0].mxu0
      %v3432 = vadd.f32 0.0, %v3431
      %v3433 = vpop.f32.mrb[0].mxu0
      %v3434 = vpop.f32.mrb[0].mxu0
      %v3435 = vadd.f32 0.0, %v3434
      %v3436 = vpop.f32.mrb[0].mxu0
      %3437 = vmatprep.mubr.bf16.mxu0 0
      %3438 = vmatmul.mubr.bf16.gmra.mrb[0].mxu0 %v3255
      %v3439 = vpop.f32.mrb[0].mxu0
      %v3440 = vadd.f32 0.0, %v3439
      %v3441 = vpop.f32.mrb[0].mxu0
      %v3442 = vpop.f32.mrb[0].mxu0
      %v3443 = vadd.f32 0.0, %v3442
      %v3444 = vpop.f32.mrb[0].mxu0
      %3445 = vmatprep.mubr.bf16.mxu0 0
      %3446 = vmatmul.mubr.bf16.gmra.mrb[0].mxu0 %v3256
      %v3447 = vpop.f32.mrb[0].mxu0
      %v3448 = vadd.f32 0.0, %v3447
      %v3449 = vpop.f32.mrb[0].mxu0
      %v3450 = vpop.f32.mrb[0].mxu0
      %v3451 = vadd.f32 0.0, %v3450
      %v3452 = vpop.f32.mrb[0].mxu0
      %3453 = vmatprep.mubr.bf16.mxu0 0
      %3454 = vmatmul.mubr.bf16.gmra.mrb[0].mxu0 %v3257
      %v3455 = vpop.f32.mrb[0].mxu0
      %v3456 = vadd.f32 0.0, %v3455
      %v3457 = vpop.f32.mrb[0].mxu0
      %v3458 = vpop.f32.mrb[0].mxu0
      %v3459 = vadd.f32 0.0, %v3458
      %v3460 = vpop.f32.mrb[0].mxu0
      %3461 = vmatprep.mubr.bf16.mxu0 0
      %3462 = vmatmul.mubr.bf16.gmra.mrb[0].mxu0 %v3258
      %v3463 = vpop.f32.mrb[0].mxu0
      %v3464 = vadd.f32 0.0, %v3463
      %v3465 = vpop.f32.mrb[0].mxu0
      %v3466 = vpop.f32.mrb[0].mxu0
      %v3467 = vadd.f32 0.0, %v3466
      %v3468 = vpop.f32.mrb[0].mxu0
      %3469 = vmatprep.mubr.bf16.mxu0 0
      %3470 = vmatmul.mubr.bf16.gmra.mrb[0].mxu0 %v3259
      %v3471 = vpop.f32.mrb[0].mxu0
      %v3472 = vadd.f32 0.0, %v3471
      %v3473 = vpop.f32.mrb[0].mxu0
      %v3474 = vpop.f32.mrb[0].mxu0
      %v3475 = vadd.f32 0.0, %v3474
      %v3476 = vpop.f32.mrb[0].mxu0
      %3477 = vmatprep.mubr.bf16.mxu0 0
      %3478 = vmatmul.mubr.bf16.gmra.mrb[0].mxu0 %v3260
      %v3479 = vpop.f32.mrb[0].mxu0
      %v3480 = vadd.f32 0.0, %v3479
      %v3481 = vpop.f32.mrb[0].mxu0
      %v3482 = vpop.f32.mrb[0].mxu0
      %v3483 = vadd.f32 0.0, %v3482
      %v3484 = vpop.f32.mrb[0].mxu0
      %3485 = vdwg.mxu0
      %v3486 = vadd.f32 %v2732, %v3360
      %v3487 = vadd.f32 %v2733, %v3363
      %v3488 = vadd.f32 %v2734, %v3368
      %v3489 = vadd.f32 %v2735, %v3371
      %v3490 = vadd.f32 %v2736, %v3376
      %v3491 = vadd.f32 %v2737, %v3379
      %v3492 = vadd.f32 %v2738, %v3384
      %v3493 = vadd.f32 %v2739, %v3387
      %v3494 = vadd.f32 %v2740, %v3392
      %v3495 = vadd.f32 %v2741, %v3395
      %v3496 = vadd.f32 %v2742, %v3400
      %v3497 = vadd.f32 %v2743, %v3403
      %v3498 = vadd.f32 %v2744, %v3408
      %v3499 = vadd.f32 %v2745, %v3411
      %v3500 = vadd.f32 %v2746, %v3416
      %v3501 = vadd.f32 %v2747, %v3419
      %v3502 = vadd.f32 %v2748, %v3424
      %v3503 = vadd.f32 %v2749, %v3427
      %v3504 = vadd.f32 %v2750, %v3432
      %v3505 = vadd.f32 %v2751, %v3435
      %v3506 = vadd.f32 %v2752, %v3440
      %v3507 = vadd.f32 %v2753, %v3443
      %v3508 = vadd.f32 %v2754, %v3448
      %v3509 = vadd.f32 %v2755, %v3451
      %v3510 = vadd.f32 %v2756, %v3456
      %v3511 = vadd.f32 %v2757, %v3459
      %v3512 = vadd.f32 %v2758, %v3464
      %v3513 = vadd.f32 %v2759, %v3467
      %v3514 = vadd.f32 %v2760, %v3472
      %v3515 = vadd.f32 %v2761, %v3475
      %v3516 = vadd.f32 %v2762, %v3480
      %v3517 = vadd.f32 %v2763, %v3483
      %v3518 = vld [vmem:[%s791] sm:$0xe]
      %v3519 = vld [vmem:[%s791 + $0xc] sm:$0xe]
      %v3520 = vld [vmem:[%s791 + $0x18] sm:$0xe]
      %v3521 = vld [vmem:[%s791 + $0x24] sm:$0xe]
      %v3522 = vld [vmem:[%s791 + $0x30] sm:$0xe]
      %v3523 = vld [vmem:[%s791 + $0x3c] sm:$0xe]
      %v3524 = vld [vmem:[%s791 + $0x48] sm:$0xe]
      %v3525 = vld [vmem:[%s791 + $0x54] sm:$0xe]
      %v3526 = vld [vmem:[%s791 + $0x60] sm:$0xe]
      %v3527 = vld [vmem:[%s791 + $0x6c] sm:$0xe]
      %v3528 = vld [vmem:[%s791 + $0x78] sm:$0xe]
      %v3529 = vld [vmem:[%s791 + $0x84] sm:$0xe]
      %v3530 = vld [vmem:[%s791 + $0x90] sm:$0xe]
      %v3531 = vld [vmem:[%s791 + $0x9c] sm:$0xe]
      %v3532 = vld [vmem:[%s791 + $0xa8] sm:$0xe]
      %v3533 = vld [vmem:[%s791 + $0xb4] sm:$0xe]
      %v3582 = vrot.slane %v3518, 5
      %v3583 = vrot.slane %v3582, 4
      %v3584 = vrot.slane %v2765, 5
      %v3585 = vsel %vm1943, %v3583, %v3584
      %v3586 = vrot.slane %v3584, 4
      %v3587 = vrot.slane %v2766, 5
      %v3588 = vsel %vm1943, %v3586, %v3587
      %v3589 = vrot.slane %v3519, 5
      %v3590 = vrot.slane %v3589, 4
      %v3591 = vrot.slane %v2768, 5
      %v3592 = vsel %vm1943, %v3590, %v3591
      %v3593 = vrot.slane %v3591, 4
      %v3594 = vrot.slane %v2769, 5
      %v3595 = vsel %vm1943, %v3593, %v3594
      %v3596 = vrot.slane %v3520, 5
      %v3597 = vrot.slane %v3596, 4
      %v3598 = vrot.slane %v2771, 5
      %v3599 = vsel %vm1943, %v3597, %v3598
      %v3600 = vrot.slane %v3598, 4
      %v3601 = vrot.slane %v2772, 5
      %v3602 = vsel %vm1943, %v3600, %v3601
      %v3603 = vrot.slane %v3521, 5
      %v3604 = vrot.slane %v3603, 4
      %v3605 = vrot.slane %v2774, 5
      %v3606 = vsel %vm1943, %v3604, %v3605
      %v3607 = vrot.slane %v3605, 4
      %v3608 = vrot.slane %v2775, 5
      %v3609 = vsel %vm1943, %v3607, %v3608
      %v3610 = vrot.slane %v3522, 5
      %v3611 = vrot.slane %v3610, 4
      %v3612 = vrot.slane %v2777, 5
      %v3613 = vsel %vm1943, %v3611, %v3612
      %v3614 = vrot.slane %v3612, 4
      %v3615 = vrot.slane %v2778, 5
      %v3616 = vsel %vm1943, %v3614, %v3615
      %v3617 = vrot.slane %v3523, 5
      %v3618 = vrot.slane %v3617, 4
      %v3619 = vrot.slane %v2780, 5
      %v3620 = vsel %vm1943, %v3618, %v3619
      %v3621 = vrot.slane %v3619, 4
      %v3622 = vrot.slane %v2781, 5
      %v3623 = vsel %vm1943, %v3621, %v3622
      %v3624 = vrot.slane %v3524, 5
      %v3625 = vrot.slane %v3624, 4
      %v3626 = vrot.slane %v2783, 5
      %v3627 = vsel %vm1943, %v3625, %v3626
      %v3628 = vrot.slane %v3626, 4
      %v3629 = vrot.slane %v2784, 5
      %v3630 = vsel %vm1943, %v3628, %v3629
      %v3631 = vrot.slane %v3525, 5
      %v3632 = vrot.slane %v3631, 4
      %v3633 = vrot.slane %v2786, 5
      %v3634 = vsel %vm1943, %v3632, %v3633
      %v3635 = vrot.slane %v3633, 4
      %v3636 = vrot.slane %v2787, 5
      %v3637 = vsel %vm1943, %v3635, %v3636
      %v3638 = vrot.slane %v3526, 5
      %v3639 = vrot.slane %v3638, 4
      %v3640 = vrot.slane %v2789, 5
      %v3641 = vsel %vm1943, %v3639, %v3640
      %v3642 = vrot.slane %v3640, 4
      %v3643 = vrot.slane %v2790, 5
      %v3644 = vsel %vm1943, %v3642, %v3643
      %v3645 = vrot.slane %v3527, 5
      %v3646 = vrot.slane %v3645, 4
      %v3647 = vrot.slane %v2792, 5
      %v3648 = vsel %vm1943, %v3646, %v3647
      %v3649 = vrot.slane %v3647, 4
      %v3650 = vrot.slane %v2793, 5
      %v3651 = vsel %vm1943, %v3649, %v3650
      %v3652 = vrot.slane %v3528, 5
      %v3653 = vrot.slane %v3652, 4
      %v3654 = vrot.slane %v2795, 5
      %v3655 = vsel %vm1943, %v3653, %v3654
      %v3656 = vrot.slane %v3654, 4
      %v3657 = vrot.slane %v2796, 5
      %v3658 = vsel %vm1943, %v3656, %v3657
      %v3659 = vrot.slane %v3529, 5
      %v3660 = vrot.slane %v3659, 4
      %v3661 = vrot.slane %v2798, 5
      %v3662 = vsel %vm1943, %v3660, %v3661
      %v3663 = vrot.slane %v3661, 4
      %v3664 = vrot.slane %v2799, 5
      %v3665 = vsel %vm1943, %v3663, %v3664
      %v3666 = vrot.slane %v3530, 5
      %v3667 = vrot.slane %v3666, 4
      %v3668 = vrot.slane %v2801, 5
      %v3669 = vsel %vm1943, %v3667, %v3668
      %v3670 = vrot.slane %v3668, 4
      %v3671 = vrot.slane %v2802, 5
      %v3672 = vsel %vm1943, %v3670, %v3671
      %v3673 = vrot.slane %v3531, 5
      %v3674 = vrot.slane %v3673, 4
      %v3675 = vrot.slane %v2804, 5
      %v3676 = vsel %vm1943, %v3674, %v3675
      %v3677 = vrot.slane %v3675, 4
      %v3678 = vrot.slane %v2805, 5
      %v3679 = vsel %vm1943, %v3677, %v3678
      %v3680 = vrot.slane %v3532, 5
      %v3681 = vrot.slane %v3680, 4
      %v3682 = vrot.slane %v2807, 5
      %v3683 = vsel %vm1943, %v3681, %v3682
      %v3684 = vrot.slane %v3682, 4
      %v3685 = vrot.slane %v2808, 5
      %v3686 = vsel %vm1943, %v3684, %v3685
      %v3687 = vrot.slane %v3533, 5
      %v3688 = vrot.slane %v3687, 4
      %v3689 = vrot.slane %v2810, 5
      %v3690 = vsel %vm1943, %v3688, %v3689
      %v3691 = vrot.slane %v3689, 4
      %v3692 = vrot.slane %v2811, 5
      %v3693 = vsel %vm1943, %v3691, %v3692
      %s3694 = scalar_lea.vmem %s3, 320
      %v3695 = vld [vmem:[%s3694] sm:$0xf]
      %v3696 = vld [vmem:[%s3694 + $0x4] sm:$0xf]
      %v3697 = vld [vmem:[%s3694 + $0x8] sm:$0xf]
      %v3698 = vld [vmem:[%s3694 + $0xc] sm:$0xf]
      %v3699 = vld [vmem:[%s3694 + $0x10] sm:$0xf]
      %v3700 = vld [vmem:[%s3694 + $0x14] sm:$0xf]
      %v3701 = vld [vmem:[%s3694 + $0x18] sm:$0xf]
      %v3702 = vld [vmem:[%s3694 + $0x1c] sm:$0xf]
      %v3703 = vld [vmem:[%s3694 + $0x20] sm:$0xf]
      %v3704 = vld [vmem:[%s3694 + $0x24] sm:$0xf]
      %v3705 = vld [vmem:[%s3694 + $0x28] sm:$0xf]
      %v3706 = vld [vmem:[%s3694 + $0x2c] sm:$0xf]
      %v3707 = vld [vmem:[%s3694 + $0x30] sm:$0xf]
      %v3708 = vld [vmem:[%s3694 + $0x34] sm:$0xf]
      %v3709 = vld [vmem:[%s3694 + $0x38] sm:$0xf]
      %v3710 = vld [vmem:[%s3694 + $0x3c] sm:$0xf]
      %v3711 = vunpack.c.l.b16 %v3585
      %v3712 = vunpack.c.l.b16 %v3588
      %v3713 = vunpack.c.l.b16 %v3592
      %v3714 = vunpack.c.l.b16 %v3595
      %v3715 = vunpack.c.l.b16 %v3599
      %v3716 = vunpack.c.l.b16 %v3602
      %v3717 = vunpack.c.l.b16 %v3606
      %v3718 = vunpack.c.l.b16 %v3609
      %v3719 = vunpack.c.l.b16 %v3613
      %v3720 = vunpack.c.l.b16 %v3616
      %v3721 = vunpack.c.l.b16 %v3620
      %v3722 = vunpack.c.l.b16 %v3623
      %v3723 = vunpack.c.l.b16 %v3627
      %v3724 = vunpack.c.l.b16 %v3630
      %v3725 = vunpack.c.l.b16 %v3634
      %v3726 = vunpack.c.l.b16 %v3637
      %v3727 = vunpack.c.l.b16 %v3641
      %v3728 = vunpack.c.l.b16 %v3644
      %v3729 = vunpack.c.l.b16 %v3648
      %v3730 = vunpack.c.l.b16 %v3651
      %v3731 = vunpack.c.l.b16 %v3655
      %v3732 = vunpack.c.l.b16 %v3658
      %v3733 = vunpack.c.l.b16 %v3662
      %v3734 = vunpack.c.l.b16 %v3665
      %v3735 = vunpack.c.l.b16 %v3669
      %v3736 = vunpack.c.l.b16 %v3672
      %v3737 = vunpack.c.l.b16 %v3676
      %v3738 = vunpack.c.l.b16 %v3679
      %v3739 = vunpack.c.l.b16 %v3683
      %v3740 = vunpack.c.l.b16 %v3686
      %v3741 = vunpack.c.l.b16 %v3690
      %v3742 = vunpack.c.l.b16 %v3693
      %v3743 = vpack.c.b16 %v3712, %v3711
      %v3744 = vpack.c.b16 %v3714, %v3713
      %v3745 = vpack.c.b16 %v3716, %v3715
      %v3746 = vpack.c.b16 %v3718, %v3717
      %v3747 = vpack.c.b16 %v3720, %v3719
      %v3748 = vpack.c.b16 %v3722, %v3721
      %v3749 = vpack.c.b16 %v3724, %v3723
      %v3750 = vpack.c.b16 %v3726, %v3725
      %v3751 = vpack.c.b16 %v3728, %v3727
      %v3752 = vpack.c.b16 %v3730, %v3729
      %v3753 = vpack.c.b16 %v3732, %v3731
      %v3754 = vpack.c.b16 %v3734, %v3733
      %v3755 = vpack.c.b16 %v3736, %v3735
      %v3756 = vpack.c.b16 %v3738, %v3737
      %v3757 = vpack.c.b16 %v3740, %v3739
      %v3758 = vpack.c.b16 %v3742, %v3741
      %v3791 = vunpack.c.l.b16 %v3695
      %v3792 = vunpack.c.l.b16 %v3696
      %v3793 = vunpack.c.l.b16 %v3697
      %v3794 = vunpack.c.l.b16 %v3698
      %v3795 = vunpack.c.l.b16 %v3699
      %v3796 = vunpack.c.l.b16 %v3700
      %v3797 = vunpack.c.l.b16 %v3701
      %v3798 = vunpack.c.l.b16 %v3702
      %v3799 = vunpack.c.l.b16 %v3703
      %v3800 = vunpack.c.l.b16 %v3704
      %v3801 = vunpack.c.l.b16 %v3705
      %v3802 = vunpack.c.l.b16 %v3706
      %v3803 = vunpack.c.l.b16 %v3707
      %v3804 = vunpack.c.l.b16 %v3708
      %v3805 = vunpack.c.l.b16 %v3709
      %v3806 = vunpack.c.l.b16 %v3710
      %v3807 = vpack.c.b16 %v3792, %v3791
      %v3808 = vpack.c.b16 %v3794, %v3793
      %v3809 = vpack.c.b16 %v3796, %v3795
      %v3810 = vpack.c.b16 %v3798, %v3797
      %v3811 = vpack.c.b16 %v3800, %v3799
      %v3812 = vpack.c.b16 %v3802, %v3801
      %v3813 = vpack.c.b16 %v3804, %v3803
      %v3814 = vpack.c.b16 %v3806, %v3805
      %3823 = vmatprep.subr.bf16.mxu0 0
      %3824 = vmatpush1.bf16.msra.mxu0 %v3807
      %3825 = vmatprep.subr.bf16.mxu0 0
      %3826 = vmatpush1.bf16.msra.mxu0 %v3808
      %3827 = vmatprep.subr.bf16.mxu0 0
      %3828 = vmatpush1.bf16.msra.mxu0 %v3809
      %3829 = vmatprep.subr.bf16.mxu0 0
      %3830 = vmatpush1.bf16.msra.mxu0 %v3810
      %3831 = vmatprep.subr.bf16.mxu0 0
      %3832 = vmatpush1.bf16.msra.mxu0 %v3811
      %3833 = vmatprep.subr.bf16.mxu0 0
      %3834 = vmatpush1.bf16.msra.mxu0 %v3812
      %3835 = vmatprep.subr.bf16.mxu0 0
      %3836 = vmatpush1.bf16.msra.mxu0 %v3813
      %3837 = vmatprep.subr.bf16.mxu0 0
      %3838 = vmatpush1.bf16.msra.mxu0 %v3814
      %3839 = vmatprep.subr.bf16.mxu0 0
      %3840 = vmatpush1.bf16.msra.mxu0 0
      %3841 = vmatprep.subr.bf16.mxu0 0
      %3842 = vmatpush1.bf16.msra.mxu0 0
      %3843 = vmatprep.subr.bf16.mxu0 0
      %3844 = vmatpush1.bf16.msra.mxu0 0
      %3845 = vmatprep.subr.bf16.mxu0 0
      %3846 = vmatpush1.bf16.msra.mxu0 0
      %3847 = vmatprep.subr.bf16.mxu0 0
      %3848 = vmatpush1.bf16.msra.mxu0 0
      %3849 = vmatprep.subr.bf16.mxu0 0
      %3850 = vmatpush1.bf16.msra.mxu0 0
      %3851 = vmatprep.subr.bf16.mxu0 0
      %3852 = vmatpush1.bf16.msra.mxu0 0
      %3853 = vmatprep.subr.bf16.mxu0 0
      %3854 = vmatpush1.bf16.msra.mxu0 0
      %3855 = vmatprep.mubr.bf16.mxu0 0
      %3856 = vmatmul.mubr.bf16.gmra.mrb[0].mxu0 %v3743
      %v3857 = vpop.f32.mrb[0].mxu0
      %v3858 = vadd.f32 0.0, %v3857
      %v3859 = vpop.f32.mrb[0].mxu0
      %v3860 = vpop.f32.mrb[0].mxu0
      %v3861 = vadd.f32 0.0, %v3860
      %v3862 = vpop.f32.mrb[0].mxu0
      %3863 = vmatprep.mubr.bf16.mxu0 0
      %3864 = vmatmul.mubr.bf16.gmra.mrb[0].mxu0 %v3744
      %v3865 = vpop.f32.mrb[0].mxu0
      %v3866 = vadd.f32 0.0, %v3865
      %v3867 = vpop.f32.mrb[0].mxu0
      %v3868 = vpop.f32.mrb[0].mxu0
      %v3869 = vadd.f32 0.0, %v3868
      %v3870 = vpop.f32.mrb[0].mxu0
      %3871 = vmatprep.mubr.bf16.mxu0 0
      %3872 = vmatmul.mubr.bf16.gmra.mrb[0].mxu0 %v3745
      %v3873 = vpop.f32.mrb[0].mxu0
      %v3874 = vadd.f32 0.0, %v3873
      %v3875 = vpop.f32.mrb[0].mxu0
      %v3876 = vpop.f32.mrb[0].mxu0
      %v3877 = vadd.f32 0.0, %v3876
      %v3878 = vpop.f32.mrb[0].mxu0
      %3879 = vmatprep.mubr.bf16.mxu0 0
      %3880 = vmatmul.mubr.bf16.gmra.mrb[0].mxu0 %v3746
      %v3881 = vpop.f32.mrb[0].mxu0
      %v3882 = vadd.f32 0.0, %v3881
      %v3883 = vpop.f32.mrb[0].mxu0
      %v3884 = vpop.f32.mrb[0].mxu0
      %v3885 = vadd.f32 0.0, %v3884
      %v3886 = vpop.f32.mrb[0].mxu0
      %3887 = vmatprep.mubr.bf16.mxu0 0
      %3888 = vmatmul.mubr.bf16.gmra.mrb[0].mxu0 %v3747
      %v3889 = vpop.f32.mrb[0].mxu0
      %v3890 = vadd.f32 0.0, %v3889
      %v3891 = vpop.f32.mrb[0].mxu0
      %v3892 = vpop.f32.mrb[0].mxu0
      %v3893 = vadd.f32 0.0, %v3892
      %v3894 = vpop.f32.mrb[0].mxu0
      %3895 = vmatprep.mubr.bf16.mxu0 0
      %3896 = vmatmul.mubr.bf16.gmra.mrb[0].mxu0 %v3748
      %v3897 = vpop.f32.mrb[0].mxu0
      %v3898 = vadd.f32 0.0, %v3897
      %v3899 = vpop.f32.mrb[0].mxu0
      %v3900 = vpop.f32.mrb[0].mxu0
      %v3901 = vadd.f32 0.0, %v3900
      %v3902 = vpop.f32.mrb[0].mxu0
      %3903 = vmatprep.mubr.bf16.mxu0 0
      %3904 = vmatmul.mubr.bf16.gmra.mrb[0].mxu0 %v3749
      %v3905 = vpop.f32.mrb[0].mxu0
      %v3906 = vadd.f32 0.0, %v3905
      %v3907 = vpop.f32.mrb[0].mxu0
      %v3908 = vpop.f32.mrb[0].mxu0
      %v3909 = vadd.f32 0.0, %v3908
      %v3910 = vpop.f32.mrb[0].mxu0
      %3911 = vmatprep.mubr.bf16.mxu0 0
      %3912 = vmatmul.mubr.bf16.gmra.mrb[0].mxu0 %v3750
      %v3913 = vpop.f32.mrb[0].mxu0
      %v3914 = vadd.f32 0.0, %v3913
      %v3915 = vpop.f32.mrb[0].mxu0
      %v3916 = vpop.f32.mrb[0].mxu0
      %v3917 = vadd.f32 0.0, %v3916
      %v3918 = vpop.f32.mrb[0].mxu0
      %3919 = vmatprep.mubr.bf16.mxu0 0
      %3920 = vmatmul.mubr.bf16.gmra.mrb[0].mxu0 %v3751
      %v3921 = vpop.f32.mrb[0].mxu0
      %v3922 = vadd.f32 0.0, %v3921
      %v3923 = vpop.f32.mrb[0].mxu0
      %v3924 = vpop.f32.mrb[0].mxu0
      %v3925 = vadd.f32 0.0, %v3924
      %v3926 = vpop.f32.mrb[0].mxu0
      %3927 = vmatprep.mubr.bf16.mxu0 0
      %3928 = vmatmul.mubr.bf16.gmra.mrb[0].mxu0 %v3752
      %v3929 = vpop.f32.mrb[0].mxu0
      %v3930 = vadd.f32 0.0, %v3929
      %v3931 = vpop.f32.mrb[0].mxu0
      %v3932 = vpop.f32.mrb[0].mxu0
      %v3933 = vadd.f32 0.0, %v3932
      %v3934 = vpop.f32.mrb[0].mxu0
      %3935 = vmatprep.mubr.bf16.mxu0 0
      %3936 = vmatmul.mubr.bf16.gmra.mrb[0].mxu0 %v3753
      %v3937 = vpop.f32.mrb[0].mxu0
      %v3938 = vadd.f32 0.0, %v3937
      %v3939 = vpop.f32.mrb[0].mxu0
      %v3940 = vpop.f32.mrb[0].mxu0
      %v3941 = vadd.f32 0.0, %v3940
      %v3942 = vpop.f32.mrb[0].mxu0
      %3943 = vmatprep.mubr.bf16.mxu0 0
      %3944 = vmatmul.mubr.bf16.gmra.mrb[0].mxu0 %v3754
      %v3945 = vpop.f32.mrb[0].mxu0
      %v3946 = vadd.f32 0.0, %v3945
      %v3947 = vpop.f32.mrb[0].mxu0
      %v3948 = vpop.f32.mrb[0].mxu0
      %v3949 = vadd.f32 0.0, %v3948
      %v3950 = vpop.f32.mrb[0].mxu0
      %3951 = vmatprep.mubr.bf16.mxu0 0
      %3952 = vmatmul.mubr.bf16.gmra.mrb[0].mxu0 %v3755
      %v3953 = vpop.f32.mrb[0].mxu0
      %v3954 = vadd.f32 0.0, %v3953
      %v3955 = vpop.f32.mrb[0].mxu0
      %v3956 = vpop.f32.mrb[0].mxu0
      %v3957 = vadd.f32 0.0, %v3956
      %v3958 = vpop.f32.mrb[0].mxu0
      %3959 = vmatprep.mubr.bf16.mxu0 0
      %3960 = vmatmul.mubr.bf16.gmra.mrb[0].mxu0 %v3756
      %v3961 = vpop.f32.mrb[0].mxu0
      %v3962 = vadd.f32 0.0, %v3961
      %v3963 = vpop.f32.mrb[0].mxu0
      %v3964 = vpop.f32.mrb[0].mxu0
      %v3965 = vadd.f32 0.0, %v3964
      %v3966 = vpop.f32.mrb[0].mxu0
      %3967 = vmatprep.mubr.bf16.mxu0 0
      %3968 = vmatmul.mubr.bf16.gmra.mrb[0].mxu0 %v3757
      %v3969 = vpop.f32.mrb[0].mxu0
      %v3970 = vadd.f32 0.0, %v3969
      %v3971 = vpop.f32.mrb[0].mxu0
      %v3972 = vpop.f32.mrb[0].mxu0
      %v3973 = vadd.f32 0.0, %v3972
      %v3974 = vpop.f32.mrb[0].mxu0
      %3975 = vmatprep.mubr.bf16.mxu0 0
      %3976 = vmatmul.mubr.bf16.gmra.mrb[0].mxu0 %v3758
      %v3977 = vpop.f32.mrb[0].mxu0
      %v3978 = vadd.f32 0.0, %v3977
      %v3979 = vpop.f32.mrb[0].mxu0
      %v3980 = vpop.f32.mrb[0].mxu0
      %v3981 = vadd.f32 0.0, %v3980
      %v3982 = vpop.f32.mrb[0].mxu0
      %3983 = vdwg.mxu0
      %v3984 = vadd.f32 %v3486, %v3858
      %v3985 = vadd.f32 %v3487, %v3861
      %v3986 = vadd.f32 %v3488, %v3866
      %v3987 = vadd.f32 %v3489, %v3869
      %v3988 = vadd.f32 %v3490, %v3874
      %v3989 = vadd.f32 %v3491, %v3877
      %v3990 = vadd.f32 %v3492, %v3882
      %v3991 = vadd.f32 %v3493, %v3885
      %v3992 = vadd.f32 %v3494, %v3890
      %v3993 = vadd.f32 %v3495, %v3893
      %v3994 = vadd.f32 %v3496, %v3898
      %v3995 = vadd.f32 %v3497, %v3901
      %v3996 = vadd.f32 %v3498, %v3906
      %v3997 = vadd.f32 %v3499, %v3909
      %v3998 = vadd.f32 %v3500, %v3914
      %v3999 = vadd.f32 %v3501, %v3917
      %v4000 = vadd.f32 %v3502, %v3922
      %v4001 = vadd.f32 %v3503, %v3925
      %v4002 = vadd.f32 %v3504, %v3930
      %v4003 = vadd.f32 %v3505, %v3933
      %v4004 = vadd.f32 %v3506, %v3938
      %v4005 = vadd.f32 %v3507, %v3941
      %v4006 = vadd.f32 %v3508, %v3946
      %v4007 = vadd.f32 %v3509, %v3949
      %v4008 = vadd.f32 %v3510, %v3954
      %v4009 = vadd.f32 %v3511, %v3957
      %v4010 = vadd.f32 %v3512, %v3962
      %v4011 = vadd.f32 %v3513, %v3965
      %v4012 = vadd.f32 %v3514, %v3970
      %v4013 = vadd.f32 %v3515, %v3973
      %v4014 = vadd.f32 %v3516, %v3978
      %v4015 = vadd.f32 %v3517, %v3981
      %s4016 = scalar_lea.vmem [#allocation2], 24
      %v4017 = vld [vmem:[%s4016] sm:$0xf]
      %v4018 = vld [vmem:[%s4016 + $0x4] sm:$0xf]
      %v4019 = vld [vmem:[%s4016 + $0xc] sm:$0xf]
      %v4020 = vld [vmem:[%s4016 + $0x10] sm:$0xf]
      %v4021 = vld [vmem:[%s4016 + $0x18] sm:$0xf]
      %v4022 = vld [vmem:[%s4016 + $0x1c] sm:$0xf]
      %v4023 = vld [vmem:[%s4016 + $0x24] sm:$0xf]
      %v4024 = vld [vmem:[%s4016 + $0x28] sm:$0xf]
      %v4025 = vld [vmem:[%s4016 + $0x30] sm:$0xf]
      %v4026 = vld [vmem:[%s4016 + $0x34] sm:$0xf]
      %v4027 = vld [vmem:[%s4016 + $0x3c] sm:$0xf]
      %v4028 = vld [vmem:[%s4016 + $0x40] sm:$0xf]
      %v4029 = vld [vmem:[%s4016 + $0x48] sm:$0xf]
      %v4030 = vld [vmem:[%s4016 + $0x4c] sm:$0xf]
      %v4031 = vld [vmem:[%s4016 + $0x54] sm:$0xf]
      %v4032 = vld [vmem:[%s4016 + $0x58] sm:$0xf]
      %v4033 = vld [vmem:[%s4016 + $0x60] sm:$0xf]
      %v4034 = vld [vmem:[%s4016 + $0x64] sm:$0xf]
      %v4035 = vld [vmem:[%s4016 + $0x6c] sm:$0xf]
      %v4036 = vld [vmem:[%s4016 + $0x70] sm:$0xf]
      %v4037 = vld [vmem:[%s4016 + $0x78] sm:$0xf]
      %v4038 = vld [vmem:[%s4016 + $0x7c] sm:$0xf]
      %v4039 = vld [vmem:[%s4016 + $0x84] sm:$0xf]
      %v4040 = vld [vmem:[%s4016 + $0x88] sm:$0xf]
      %v4041 = vld [vmem:[%s4016 + $0x90] sm:$0xf]
      %v4042 = vld [vmem:[%s4016 + $0x94] sm:$0xf]
      %v4043 = vld [vmem:[%s4016 + $0x9c] sm:$0xf]
      %v4044 = vld [vmem:[%s4016 + $0xa0] sm:$0xf]
      %v4045 = vld [vmem:[%s4016 + $0xa8] sm:$0xf]
      %v4046 = vld [vmem:[%s4016 + $0xac] sm:$0xf]
      %v4047 = vld [vmem:[%s4016 + $0xb4] sm:$0xf]
      %v4048 = vld [vmem:[%s4016 + $0xb8] sm:$0xf]
      %s4049 = scalar_lea.vmem %s3, 384
      %v4050 = vld [vmem:[%s4049] sm:$0xf]
      %v4051 = vld [vmem:[%s4049 + $0x4] sm:$0xf]
      %v4052 = vld [vmem:[%s4049 + $0x8] sm:$0xf]
      %v4053 = vld [vmem:[%s4049 + $0xc] sm:$0xf]
      %v4054 = vld [vmem:[%s4049 + $0x10] sm:$0xf]
      %v4055 = vld [vmem:[%s4049 + $0x14] sm:$0xf]
      %v4056 = vld [vmem:[%s4049 + $0x18] sm:$0xf]
      %v4057 = vld [vmem:[%s4049 + $0x1c] sm:$0xf]
      %v4058 = vld [vmem:[%s4049 + $0x20] sm:$0xf]
      %v4059 = vld [vmem:[%s4049 + $0x24] sm:$0xf]
      %v4060 = vld [vmem:[%s4049 + $0x28] sm:$0xf]
      %v4061 = vld [vmem:[%s4049 + $0x2c] sm:$0xf]
      %v4062 = vld [vmem:[%s4049 + $0x30] sm:$0xf]
      %v4063 = vld [vmem:[%s4049 + $0x34] sm:$0xf]
      %v4064 = vld [vmem:[%s4049 + $0x38] sm:$0xf]
      %v4065 = vld [vmem:[%s4049 + $0x3c] sm:$0xf]
      %v4098 = vunpack.c.l.b16 %v4017
      %v4099 = vunpack.c.l.b16 %v4018
      %v4100 = vunpack.c.l.b16 %v4019
      %v4101 = vunpack.c.l.b16 %v4020
      %v4102 = vunpack.c.l.b16 %v4021
      %v4103 = vunpack.c.l.b16 %v4022
      %v4104 = vunpack.c.l.b16 %v4023
      %v4105 = vunpack.c.l.b16 %v4024
      %v4106 = vunpack.c.l.b16 %v4025
      %v4107 = vunpack.c.l.b16 %v4026
      %v4108 = vunpack.c.l.b16 %v4027
      %v4109 = vunpack.c.l.b16 %v4028
      %v4110 = vunpack.c.l.b16 %v4029
      %v4111 = vunpack.c.l.b16 %v4030
      %v4112 = vunpack.c.l.b16 %v4031
      %v4113 = vunpack.c.l.b16 %v4032
      %v4114 = vunpack.c.l.b16 %v4033
      %v4115 = vunpack.c.l.b16 %v4034
      %v4116 = vunpack.c.l.b16 %v4035
      %v4117 = vunpack.c.l.b16 %v4036
      %v4118 = vunpack.c.l.b16 %v4037
      %v4119 = vunpack.c.l.b16 %v4038
      %v4120 = vunpack.c.l.b16 %v4039
      %v4121 = vunpack.c.l.b16 %v4040
      %v4122 = vunpack.c.l.b16 %v4041
      %v4123 = vunpack.c.l.b16 %v4042
      %v4124 = vunpack.c.l.b16 %v4043
      %v4125 = vunpack.c.l.b16 %v4044
      %v4126 = vunpack.c.l.b16 %v4045
      %v4127 = vunpack.c.l.b16 %v4046
      %v4128 = vunpack.c.l.b16 %v4047
      %v4129 = vunpack.c.l.b16 %v4048
      %v4130 = vpack.c.b16 %v4099, %v4098
      %v4131 = vpack.c.b16 %v4101, %v4100
      %v4132 = vpack.c.b16 %v4103, %v4102
      %v4133 = vpack.c.b16 %v4105, %v4104
      %v4134 = vpack.c.b16 %v4107, %v4106
      %v4135 = vpack.c.b16 %v4109, %v4108
      %v4136 = vpack.c.b16 %v4111, %v4110
      %v4137 = vpack.c.b16 %v4113, %v4112
      %v4138 = vpack.c.b16 %v4115, %v4114
      %v4139 = vpack.c.b16 %v4117, %v4116
      %v4140 = vpack.c.b16 %v4119, %v4118
      %v4141 = vpack.c.b16 %v4121, %v4120
      %v4142 = vpack.c.b16 %v4123, %v4122
      %v4143 = vpack.c.b16 %v4125, %v4124
      %v4144 = vpack.c.b16 %v4127, %v4126
      %v4145 = vpack.c.b16 %v4129, %v4128
      %v4178 = vunpack.c.l.b16 %v4050
      %v4179 = vunpack.c.l.b16 %v4051
      %v4180 = vunpack.c.l.b16 %v4052
      %v4181 = vunpack.c.l.b16 %v4053
      %v4182 = vunpack.c.l.b16 %v4054
      %v4183 = vunpack.c.l.b16 %v4055
      %v4184 = vunpack.c.l.b16 %v4056
      %v4185 = vunpack.c.l.b16 %v4057
      %v4186 = vunpack.c.l.b16 %v4058
      %v4187 = vunpack.c.l.b16 %v4059
      %v4188 = vunpack.c.l.b16 %v4060
      %v4189 = vunpack.c.l.b16 %v4061
      %v4190 = vunpack.c.l.b16 %v4062
      %v4191 = vunpack.c.l.b16 %v4063
      %v4192 = vunpack.c.l.b16 %v4064
      %v4193 = vunpack.c.l.b16 %v4065
      %v4194 = vpack.c.b16 %v4179, %v4178
      %v4195 = vpack.c.b16 %v4181, %v4180
      %v4196 = vpack.c.b16 %v4183, %v4182
      %v4197 = vpack.c.b16 %v4185, %v4184
      %v4198 = vpack.c.b16 %v4187, %v4186
      %v4199 = vpack.c.b16 %v4189, %v4188
      %v4200 = vpack.c.b16 %v4191, %v4190
      %v4201 = vpack.c.b16 %v4193, %v4192
      %4210 = vmatprep.subr.bf16.mxu0 0
      %4211 = vmatpush1.bf16.msra.mxu0 %v4194
      %4212 = vmatprep.subr.bf16.mxu0 0
      %4213 = vmatpush1.bf16.msra.mxu0 %v4195
      %4214 = vmatprep.subr.bf16.mxu0 0
      %4215 = vmatpush1.bf16.msra.mxu0 %v4196
      %4216 = vmatprep.subr.bf16.mxu0 0
      %4217 = vmatpush1.bf16.msra.mxu0 %v4197
      %4218 = vmatprep.subr.bf16.mxu0 0
      %4219 = vmatpush1.bf16.msra.mxu0 %v4198
      %4220 = vmatprep.subr.bf16.mxu0 0
      %4221 = vmatpush1.bf16.msra.mxu0 %v4199
      %4222 = vmatprep.subr.bf16.mxu0 0
      %4223 = vmatpush1.bf16.msra.mxu0 %v4200
      %4224 = vmatprep.subr.bf16.mxu0 0
      %4225 = vmatpush1.bf16.msra.mxu0 %v4201
      %4226 = vmatprep.subr.bf16.mxu0 0
      %4227 = vmatpush1.bf16.msra.mxu0 0
      %4228 = vmatprep.subr.bf16.mxu0 0
      %4229 = vmatpush1.bf16.msra.mxu0 0
      %4230 = vmatprep.subr.bf16.mxu0 0
      %4231 = vmatpush1.bf16.msra.mxu0 0
      %4232 = vmatprep.subr.bf16.mxu0 0
      %4233 = vmatpush1.bf16.msra.mxu0 0
      %4234 = vmatprep.subr.bf16.mxu0 0
      %4235 = vmatpush1.bf16.msra.mxu0 0
      %4236 = vmatprep.subr.bf16.mxu0 0
      %4237 = vmatpush1.bf16.msra.mxu0 0
      %4238 = vmatprep.subr.bf16.mxu0 0
      %4239 = vmatpush1.bf16.msra.mxu0 0
      %4240 = vmatprep.subr.bf16.mxu0 0
      %4241 = vmatpush1.bf16.msra.mxu0 0
      %4242 = vmatprep.mubr.bf16.mxu0 0
      %4243 = vmatmul.mubr.bf16.gmra.mrb[0].mxu0 %v4130
      %v4244 = vpop.f32.mrb[0].mxu0
      %v4245 = vadd.f32 0.0, %v4244
      %v4246 = vpop.f32.mrb[0].mxu0
      %v4247 = vpop.f32.mrb[0].mxu0
      %v4248 = vadd.f32 0.0, %v4247
      %v4249 = vpop.f32.mrb[0].mxu0
      %4250 = vmatprep.mubr.bf16.mxu0 0
      %4251 = vmatmul.mubr.bf16.gmra.mrb[0].mxu0 %v4131
      %v4252 = vpop.f32.mrb[0].mxu0
      %v4253 = vadd.f32 0.0, %v4252
      %v4254 = vpop.f32.mrb[0].mxu0
      %v4255 = vpop.f32.mrb[0].mxu0
      %v4256 = vadd.f32 0.0, %v4255
      %v4257 = vpop.f32.mrb[0].mxu0
      %4258 = vmatprep.mubr.bf16.mxu0 0
      %4259 = vmatmul.mubr.bf16.gmra.mrb[0].mxu0 %v4132
      %v4260 = vpop.f32.mrb[0].mxu0
      %v4261 = vadd.f32 0.0, %v4260
      %v4262 = vpop.f32.mrb[0].mxu0
      %v4263 = vpop.f32.mrb[0].mxu0
      %v4264 = vadd.f32 0.0, %v4263
      %v4265 = vpop.f32.mrb[0].mxu0
      %4266 = vmatprep.mubr.bf16.mxu0 0
      %4267 = vmatmul.mubr.bf16.gmra.mrb[0].mxu0 %v4133
      %v4268 = vpop.f32.mrb[0].mxu0
      %v4269 = vadd.f32 0.0, %v4268
      %v4270 = vpop.f32.mrb[0].mxu0
      %v4271 = vpop.f32.mrb[0].mxu0
      %v4272 = vadd.f32 0.0, %v4271
      %v4273 = vpop.f32.mrb[0].mxu0
      %4274 = vmatprep.mubr.bf16.mxu0 0
      %4275 = vmatmul.mubr.bf16.gmra.mrb[0].mxu0 %v4134
      %v4276 = vpop.f32.mrb[0].mxu0
      %v4277 = vadd.f32 0.0, %v4276
      %v4278 = vpop.f32.mrb[0].mxu0
      %v4279 = vpop.f32.mrb[0].mxu0
      %v4280 = vadd.f32 0.0, %v4279
      %v4281 = vpop.f32.mrb[0].mxu0
      %4282 = vmatprep.mubr.bf16.mxu0 0
      %4283 = vmatmul.mubr.bf16.gmra.mrb[0].mxu0 %v4135
      %v4284 = vpop.f32.mrb[0].mxu0
      %v4285 = vadd.f32 0.0, %v4284
      %v4286 = vpop.f32.mrb[0].mxu0
      %v4287 = vpop.f32.mrb[0].mxu0
      %v4288 = vadd.f32 0.0, %v4287
      %v4289 = vpop.f32.mrb[0].mxu0
      %4290 = vmatprep.mubr.bf16.mxu0 0
      %4291 = vmatmul.mubr.bf16.gmra.mrb[0].mxu0 %v4136
      %v4292 = vpop.f32.mrb[0].mxu0
      %v4293 = vadd.f32 0.0, %v4292
      %v4294 = vpop.f32.mrb[0].mxu0
      %v4295 = vpop.f32.mrb[0].mxu0
      %v4296 = vadd.f32 0.0, %v4295
      %v4297 = vpop.f32.mrb[0].mxu0
      %4298 = vmatprep.mubr.bf16.mxu0 0
      %4299 = vmatmul.mubr.bf16.gmra.mrb[0].mxu0 %v4137
      %v4300 = vpop.f32.mrb[0].mxu0
      %v4301 = vadd.f32 0.0, %v4300
      %v4302 = vpop.f32.mrb[0].mxu0
      %v4303 = vpop.f32.mrb[0].mxu0
      %v4304 = vadd.f32 0.0, %v4303
      %v4305 = vpop.f32.mrb[0].mxu0
      %4306 = vmatprep.mubr.bf16.mxu0 0
      %4307 = vmatmul.mubr.bf16.gmra.mrb[0].mxu0 %v4138
      %v4308 = vpop.f32.mrb[0].mxu0
      %v4309 = vadd.f32 0.0, %v4308
      %v4310 = vpop.f32.mrb[0].mxu0
      %v4311 = vpop.f32.mrb[0].mxu0
      %v4312 = vadd.f32 0.0, %v4311
      %v4313 = vpop.f32.mrb[0].mxu0
      %4314 = vmatprep.mubr.bf16.mxu0 0
      %4315 = vmatmul.mubr.bf16.gmra.mrb[0].mxu0 %v4139
      %v4316 = vpop.f32.mrb[0].mxu0
      %v4317 = vadd.f32 0.0, %v4316
      %v4318 = vpop.f32.mrb[0].mxu0
      %v4319 = vpop.f32.mrb[0].mxu0
      %v4320 = vadd.f32 0.0, %v4319
      %v4321 = vpop.f32.mrb[0].mxu0
      %4322 = vmatprep.mubr.bf16.mxu0 0
      %4323 = vmatmul.mubr.bf16.gmra.mrb[0].mxu0 %v4140
      %v4324 = vpop.f32.mrb[0].mxu0
      %v4325 = vadd.f32 0.0, %v4324
      %v4326 = vpop.f32.mrb[0].mxu0
      %v4327 = vpop.f32.mrb[0].mxu0
      %v4328 = vadd.f32 0.0, %v4327
      %v4329 = vpop.f32.mrb[0].mxu0
      %4330 = vmatprep.mubr.bf16.mxu0 0
      %4331 = vmatmul.mubr.bf16.gmra.mrb[0].mxu0 %v4141
      %v4332 = vpop.f32.mrb[0].mxu0
      %v4333 = vadd.f32 0.0, %v4332
      %v4334 = vpop.f32.mrb[0].mxu0
      %v4335 = vpop.f32.mrb[0].mxu0
      %v4336 = vadd.f32 0.0, %v4335
      %v4337 = vpop.f32.mrb[0].mxu0
      %4338 = vmatprep.mubr.bf16.mxu0 0
      %4339 = vmatmul.mubr.bf16.gmra.mrb[0].mxu0 %v4142
      %v4340 = vpop.f32.mrb[0].mxu0
      %v4341 = vadd.f32 0.0, %v4340
      %v4342 = vpop.f32.mrb[0].mxu0
      %v4343 = vpop.f32.mrb[0].mxu0
      %v4344 = vadd.f32 0.0, %v4343
      %v4345 = vpop.f32.mrb[0].mxu0
      %4346 = vmatprep.mubr.bf16.mxu0 0
      %4347 = vmatmul.mubr.bf16.gmra.mrb[0].mxu0 %v4143
      %v4348 = vpop.f32.mrb[0].mxu0
      %v4349 = vadd.f32 0.0, %v4348
      %v4350 = vpop.f32.mrb[0].mxu0
      %v4351 = vpop.f32.mrb[0].mxu0
      %v4352 = vadd.f32 0.0, %v4351
      %v4353 = vpop.f32.mrb[0].mxu0
      %4354 = vmatprep.mubr.bf16.mxu0 0
      %4355 = vmatmul.mubr.bf16.gmra.mrb[0].mxu0 %v4144
      %v4356 = vpop.f32.mrb[0].mxu0
      %v4357 = vadd.f32 0.0, %v4356
      %v4358 = vpop.f32.mrb[0].mxu0
      %v4359 = vpop.f32.mrb[0].mxu0
      %v4360 = vadd.f32 0.0, %v4359
      %v4361 = vpop.f32.mrb[0].mxu0
      %4362 = vmatprep.mubr.bf16.mxu0 0
      %4363 = vmatmul.mubr.bf16.gmra.mrb[0].mxu0 %v4145
      %v4364 = vpop.f32.mrb[0].mxu0
      %v4365 = vadd.f32 0.0, %v4364
      %v4366 = vpop.f32.mrb[0].mxu0
      %v4367 = vpop.f32.mrb[0].mxu0
      %v4368 = vadd.f32 0.0, %v4367
      %v4369 = vpop.f32.mrb[0].mxu0
      %4370 = vdwg.mxu0
      %v4371 = vadd.f32 %v3984, %v4245
      %v4372 = vadd.f32 %v3985, %v4248
      %v4373 = vadd.f32 %v3986, %v4253
      %v4374 = vadd.f32 %v3987, %v4256
      %v4375 = vadd.f32 %v3988, %v4261
      %v4376 = vadd.f32 %v3989, %v4264
      %v4377 = vadd.f32 %v3990, %v4269
      %v4378 = vadd.f32 %v3991, %v4272
      %v4379 = vadd.f32 %v3992, %v4277
      %v4380 = vadd.f32 %v3993, %v4280
      %v4381 = vadd.f32 %v3994, %v4285
      %v4382 = vadd.f32 %v3995, %v4288
      %v4383 = vadd.f32 %v3996, %v4293
      %v4384 = vadd.f32 %v3997, %v4296
      %v4385 = vadd.f32 %v3998, %v4301
      %v4386 = vadd.f32 %v3999, %v4304
      %v4387 = vadd.f32 %v4000, %v4309
      %v4388 = vadd.f32 %v4001, %v4312
      %v4389 = vadd.f32 %v4002, %v4317
      %v4390 = vadd.f32 %v4003, %v4320
      %v4391 = vadd.f32 %v4004, %v4325
      %v4392 = vadd.f32 %v4005, %v4328
      %v4393 = vadd.f32 %v4006, %v4333
      %v4394 = vadd.f32 %v4007, %v4336
      %v4395 = vadd.f32 %v4008, %v4341
      %v4396 = vadd.f32 %v4009, %v4344
      %v4397 = vadd.f32 %v4010, %v4349
      %v4398 = vadd.f32 %v4011, %v4352
      %v4399 = vadd.f32 %v4012, %v4357
      %v4400 = vadd.f32 %v4013, %v4360
      %v4401 = vadd.f32 %v4014, %v4365
      %v4402 = vadd.f32 %v4015, %v4368
      %v4403 = vld [vmem:[%s4016] sm:$0xf]
      %v4404 = vld [vmem:[%s4016 + $0x4] sm:$0xf]
      %v4405 = vld [vmem:[%s4016 + $0x8] sm:$0x1]
      %v4406 = vld [vmem:[%s4016 + $0xc] sm:$0xf]
      %v4407 = vld [vmem:[%s4016 + $0x10] sm:$0xf]
      %v4408 = vld [vmem:[%s4016 + $0x14] sm:$0x1]
      %v4409 = vld [vmem:[%s4016 + $0x18] sm:$0xf]
      %v4410 = vld [vmem:[%s4016 + $0x1c] sm:$0xf]
      %v4411 = vld [vmem:[%s4016 + $0x20] sm:$0x1]
      %v4412 = vld [vmem:[%s4016 + $0x24] sm:$0xf]
      %v4413 = vld [vmem:[%s4016 + $0x28] sm:$0xf]
      %v4414 = vld [vmem:[%s4016 + $0x2c] sm:$0x1]
      %v4415 = vld [vmem:[%s4016 + $0x30] sm:$0xf]
      %v4416 = vld [vmem:[%s4016 + $0x34] sm:$0xf]
      %v4417 = vld [vmem:[%s4016 + $0x38] sm:$0x1]
      %v4418 = vld [vmem:[%s4016 + $0x3c] sm:$0xf]
      %v4419 = vld [vmem:[%s4016 + $0x40] sm:$0xf]
      %v4420 = vld [vmem:[%s4016 + $0x44] sm:$0x1]
      %v4421 = vld [vmem:[%s4016 + $0x48] sm:$0xf]
      %v4422 = vld [vmem:[%s4016 + $0x4c] sm:$0xf]
      %v4423 = vld [vmem:[%s4016 + $0x50] sm:$0x1]
      %v4424 = vld [vmem:[%s4016 + $0x54] sm:$0xf]
      %v4425 = vld [vmem:[%s4016 + $0x58] sm:$0xf]
      %v4426 = vld [vmem:[%s4016 + $0x5c] sm:$0x1]
      %v4427 = vld [vmem:[%s4016 + $0x60] sm:$0xf]
      %v4428 = vld [vmem:[%s4016 + $0x64] sm:$0xf]
      %v4429 = vld [vmem:[%s4016 + $0x68] sm:$0x1]
      %v4430 = vld [vmem:[%s4016 + $0x6c] sm:$0xf]
      %v4431 = vld [vmem:[%s4016 + $0x70] sm:$0xf]
      %v4432 = vld [vmem:[%s4016 + $0x74] sm:$0x1]
      %v4433 = vld [vmem:[%s4016 + $0x78] sm:$0xf]
      %v4434 = vld [vmem:[%s4016 + $0x7c] sm:$0xf]
      %v4435 = vld [vmem:[%s4016 + $0x80] sm:$0x1]
      %v4436 = vld [vmem:[%s4016 + $0x84] sm:$0xf]
      %v4437 = vld [vmem:[%s4016 + $0x88] sm:$0xf]
      %v4438 = vld [vmem:[%s4016 + $0x8c] sm:$0x1]
      %v4439 = vld [vmem:[%s4016 + $0x90] sm:$0xf]
      %v4440 = vld [vmem:[%s4016 + $0x94] sm:$0xf]
      %v4441 = vld [vmem:[%s4016 + $0x98] sm:$0x1]
      %v4442 = vld [vmem:[%s4016 + $0x9c] sm:$0xf]
      %v4443 = vld [vmem:[%s4016 + $0xa0] sm:$0xf]
      %v4444 = vld [vmem:[%s4016 + $0xa4] sm:$0x1]
      %v4445 = vld [vmem:[%s4016 + $0xa8] sm:$0xf]
      %v4446 = vld [vmem:[%s4016 + $0xac] sm:$0xf]
      %v4447 = vld [vmem:[%s4016 + $0xb0] sm:$0x1]
      %v4448 = vld [vmem:[%s4016 + $0xb4] sm:$0xf]
      %v4449 = vld [vmem:[%s4016 + $0xb8] sm:$0xf]
      %v4450 = vld [vmem:[%s4016 + $0xbc] sm:$0x1]
      %v4452 = vshrl.u32 %v4403, 16
      %v4454 = vrot.slane %v4452, 4
      %v4455 = vshll.u32 %v4403, 16
      %v4457 = vrot.slane %v4455, 5
      %v4458 = vor.u32 %v4454, %v4457
      %v4459 = vrot.slane %v4458, 4
      %v4461 = vshll.u32 %v4404, 16
      %v4463 = vrot.slane %v4461, 5
      %v4464 = vsel %vm913, %v4459, %v4463
      %v4465 = vshrl.u32 %v4404, 16
      %v4467 = vrot.slane %v4465, 4
      %v4468 = vor.u32 %v4467, %v4463
      %v4469 = vrot.slane %v4468, 4
      %v4471 = vshll.u32 %v4405, 16
      %v4473 = vrot.slane %v4471, 5
      %v4474 = vsel %vm913, %v4469, %v4473
      %v4476 = vshrl.u32 %v4406, 16
      %v4478 = vrot.slane %v4476, 4
      %v4479 = vshll.u32 %v4406, 16
      %v4481 = vrot.slane %v4479, 5
      %v4482 = vor.u32 %v4478, %v4481
      %v4483 = vrot.slane %v4482, 4
      %v4485 = vshll.u32 %v4407, 16
      %v4487 = vrot.slane %v4485, 5
      %v4488 = vsel %vm913, %v4483, %v4487
      %v4489 = vshrl.u32 %v4407, 16
      %v4491 = vrot.slane %v4489, 4
      %v4492 = vor.u32 %v4491, %v4487
      %v4493 = vrot.slane %v4492, 4
      %v4495 = vshll.u32 %v4408, 16
      %v4497 = vrot.slane %v4495, 5
      %v4498 = vsel %vm913, %v4493, %v4497
      %v4500 = vshrl.u32 %v4409, 16
      %v4502 = vrot.slane %v4500, 4
      %v4503 = vshll.u32 %v4409, 16
      %v4505 = vrot.slane %v4503, 5
      %v4506 = vor.u32 %v4502, %v4505
      %v4507 = vrot.slane %v4506, 4
      %v4509 = vshll.u32 %v4410, 16
      %v4511 = vrot.slane %v4509, 5
      %v4512 = vsel %vm913, %v4507, %v4511
      %v4513 = vshrl.u32 %v4410, 16
      %v4515 = vrot.slane %v4513, 4
      %v4516 = vor.u32 %v4515, %v4511
      %v4517 = vrot.slane %v4516, 4
      %v4519 = vshll.u32 %v4411, 16
      %v4521 = vrot.slane %v4519, 5
      %v4522 = vsel %vm913, %v4517, %v4521
      %v4524 = vshrl.u32 %v4412, 16
      %v4526 = vrot.slane %v4524, 4
      %v4527 = vshll.u32 %v4412, 16
      %v4529 = vrot.slane %v4527, 5
      %v4530 = vor.u32 %v4526, %v4529
      %v4531 = vrot.slane %v4530, 4
      %v4533 = vshll.u32 %v4413, 16
      %v4535 = vrot.slane %v4533, 5
      %v4536 = vsel %vm913, %v4531, %v4535
      %v4537 = vshrl.u32 %v4413, 16
      %v4539 = vrot.slane %v4537, 4
      %v4540 = vor.u32 %v4539, %v4535
      %v4541 = vrot.slane %v4540, 4
      %v4543 = vshll.u32 %v4414, 16
      %v4545 = vrot.slane %v4543, 5
      %v4546 = vsel %vm913, %v4541, %v4545
      %v4548 = vshrl.u32 %v4415, 16
      %v4550 = vrot.slane %v4548, 4
      %v4551 = vshll.u32 %v4415, 16
      %v4553 = vrot.slane %v4551, 5
      %v4554 = vor.u32 %v4550, %v4553
      %v4555 = vrot.slane %v4554, 4
      %v4557 = vshll.u32 %v4416, 16
      %v4559 = vrot.slane %v4557, 5
      %v4560 = vsel %vm913, %v4555, %v4559
      %v4561 = vshrl.u32 %v4416, 16
      %v4563 = vrot.slane %v4561, 4
      %v4564 = vor.u32 %v4563, %v4559
      %v4565 = vrot.slane %v4564, 4
      %v4567 = vshll.u32 %v4417, 16
      %v4569 = vrot.slane %v4567, 5
      %v4570 = vsel %vm913, %v4565, %v4569
      %v4572 = vshrl.u32 %v4418, 16
      %v4574 = vrot.slane %v4572, 4
      %v4575 = vshll.u32 %v4418, 16
      %v4577 = vrot.slane %v4575, 5
      %v4578 = vor.u32 %v4574, %v4577
      %v4579 = vrot.slane %v4578, 4
      %v4581 = vshll.u32 %v4419, 16
      %v4583 = vrot.slane %v4581, 5
      %v4584 = vsel %vm913, %v4579, %v4583
      %v4585 = vshrl.u32 %v4419, 16
      %v4587 = vrot.slane %v4585, 4
      %v4588 = vor.u32 %v4587, %v4583
      %v4589 = vrot.slane %v4588, 4
      %v4591 = vshll.u32 %v4420, 16
      %v4593 = vrot.slane %v4591, 5
      %v4594 = vsel %vm913, %v4589, %v4593
      %v4596 = vshrl.u32 %v4421, 16
      %v4598 = vrot.slane %v4596, 4
      %v4599 = vshll.u32 %v4421, 16
      %v4601 = vrot.slane %v4599, 5
      %v4602 = vor.u32 %v4598, %v4601
      %v4603 = vrot.slane %v4602, 4
      %v4605 = vshll.u32 %v4422, 16
      %v4607 = vrot.slane %v4605, 5
      %v4608 = vsel %vm913, %v4603, %v4607
      %v4609 = vshrl.u32 %v4422, 16
      %v4611 = vrot.slane %v4609, 4
      %v4612 = vor.u32 %v4611, %v4607
      %v4613 = vrot.slane %v4612, 4
      %v4615 = vshll.u32 %v4423, 16
      %v4617 = vrot.slane %v4615, 5
      %v4618 = vsel %vm913, %v4613, %v4617
      %v4620 = vshrl.u32 %v4424, 16
      %v4622 = vrot.slane %v4620, 4
      %v4623 = vshll.u32 %v4424, 16
      %v4625 = vrot.slane %v4623, 5
      %v4626 = vor.u32 %v4622, %v4625
      %v4627 = vrot.slane %v4626, 4
      %v4629 = vshll.u32 %v4425, 16
      %v4631 = vrot.slane %v4629, 5
      %v4632 = vsel %vm913, %v4627, %v4631
      %v4633 = vshrl.u32 %v4425, 16
      %v4635 = vrot.slane %v4633, 4
      %v4636 = vor.u32 %v4635, %v4631
      %v4637 = vrot.slane %v4636, 4
      %v4639 = vshll.u32 %v4426, 16
      %v4641 = vrot.slane %v4639, 5
      %v4642 = vsel %vm913, %v4637, %v4641
      %v4644 = vshrl.u32 %v4427, 16
      %v4646 = vrot.slane %v4644, 4
      %v4647 = vshll.u32 %v4427, 16
      %v4649 = vrot.slane %v4647, 5
      %v4650 = vor.u32 %v4646, %v4649
      %v4651 = vrot.slane %v4650, 4
      %v4653 = vshll.u32 %v4428, 16
      %v4655 = vrot.slane %v4653, 5
      %v4656 = vsel %vm913, %v4651, %v4655
      %v4657 = vshrl.u32 %v4428, 16
      %v4659 = vrot.slane %v4657, 4
      %v4660 = vor.u32 %v4659, %v4655
      %v4661 = vrot.slane %v4660, 4
      %v4663 = vshll.u32 %v4429, 16
      %v4665 = vrot.slane %v4663, 5
      %v4666 = vsel %vm913, %v4661, %v4665
      %v4668 = vshrl.u32 %v4430, 16
      %v4670 = vrot.slane %v4668, 4
      %v4671 = vshll.u32 %v4430, 16
      %v4673 = vrot.slane %v4671, 5
      %v4674 = vor.u32 %v4670, %v4673
      %v4675 = vrot.slane %v4674, 4
      %v4677 = vshll.u32 %v4431, 16
      %v4679 = vrot.slane %v4677, 5
      %v4680 = vsel %vm913, %v4675, %v4679
      %v4681 = vshrl.u32 %v4431, 16
      %v4683 = vrot.slane %v4681, 4
      %v4684 = vor.u32 %v4683, %v4679
      %v4685 = vrot.slane %v4684, 4
      %v4687 = vshll.u32 %v4432, 16
      %v4689 = vrot.slane %v4687, 5
      %v4690 = vsel %vm913, %v4685, %v4689
      %v4692 = vshrl.u32 %v4433, 16
      %v4694 = vrot.slane %v4692, 4
      %v4695 = vshll.u32 %v4433, 16
      %v4697 = vrot.slane %v4695, 5
      %v4698 = vor.u32 %v4694, %v4697
      %v4699 = vrot.slane %v4698, 4
      %v4701 = vshll.u32 %v4434, 16
      %v4703 = vrot.slane %v4701, 5
      %v4704 = vsel %vm913, %v4699, %v4703
      %v4705 = vshrl.u32 %v4434, 16
      %v4707 = vrot.slane %v4705, 4
      %v4708 = vor.u32 %v4707, %v4703
      %v4709 = vrot.slane %v4708, 4
      %v4711 = vshll.u32 %v4435, 16
      %v4713 = vrot.slane %v4711, 5
      %v4714 = vsel %vm913, %v4709, %v4713
      %v4716 = vshrl.u32 %v4436, 16
      %v4718 = vrot.slane %v4716, 4
      %v4719 = vshll.u32 %v4436, 16
      %v4721 = vrot.slane %v4719, 5
      %v4722 = vor.u32 %v4718, %v4721
      %v4723 = vrot.slane %v4722, 4
      %v4725 = vshll.u32 %v4437, 16
      %v4727 = vrot.slane %v4725, 5
      %v4728 = vsel %vm913, %v4723, %v4727
      %v4729 = vshrl.u32 %v4437, 16
      %v4731 = vrot.slane %v4729, 4
      %v4732 = vor.u32 %v4731, %v4727
      %v4733 = vrot.slane %v4732, 4
      %v4735 = vshll.u32 %v4438, 16
      %v4737 = vrot.slane %v4735, 5
      %v4738 = vsel %vm913, %v4733, %v4737
      %v4740 = vshrl.u32 %v4439, 16
      %v4742 = vrot.slane %v4740, 4
      %v4743 = vshll.u32 %v4439, 16
      %v4745 = vrot.slane %v4743, 5
      %v4746 = vor.u32 %v4742, %v4745
      %v4747 = vrot.slane %v4746, 4
      %v4749 = vshll.u32 %v4440, 16
      %v4751 = vrot.slane %v4749, 5
      %v4752 = vsel %vm913, %v4747, %v4751
      %v4753 = vshrl.u32 %v4440, 16
      %v4755 = vrot.slane %v4753, 4
      %v4756 = vor.u32 %v4755, %v4751
      %v4757 = vrot.slane %v4756, 4
      %v4759 = vshll.u32 %v4441, 16
      %v4761 = vrot.slane %v4759, 5
      %v4762 = vsel %vm913, %v4757, %v4761
      %v4764 = vshrl.u32 %v4442, 16
      %v4766 = vrot.slane %v4764, 4
      %v4767 = vshll.u32 %v4442, 16
      %v4769 = vrot.slane %v4767, 5
      %v4770 = vor.u32 %v4766, %v4769
      %v4771 = vrot.slane %v4770, 4
      %v4773 = vshll.u32 %v4443, 16
      %v4775 = vrot.slane %v4773, 5
      %v4776 = vsel %vm913, %v4771, %v4775
      %v4777 = vshrl.u32 %v4443, 16
      %v4779 = vrot.slane %v4777, 4
      %v4780 = vor.u32 %v4779, %v4775
      %v4781 = vrot.slane %v4780, 4
      %v4783 = vshll.u32 %v4444, 16
      %v4785 = vrot.slane %v4783, 5
      %v4786 = vsel %vm913, %v4781, %v4785
      %v4788 = vshrl.u32 %v4445, 16
      %v4790 = vrot.slane %v4788, 4
      %v4791 = vshll.u32 %v4445, 16
      %v4793 = vrot.slane %v4791, 5
      %v4794 = vor.u32 %v4790, %v4793
      %v4795 = vrot.slane %v4794, 4
      %v4797 = vshll.u32 %v4446, 16
      %v4799 = vrot.slane %v4797, 5
      %v4800 = vsel %vm913, %v4795, %v4799
      %v4801 = vshrl.u32 %v4446, 16
      %v4803 = vrot.slane %v4801, 4
      %v4804 = vor.u32 %v4803, %v4799
      %v4805 = vrot.slane %v4804, 4
      %v4807 = vshll.u32 %v4447, 16
      %v4809 = vrot.slane %v4807, 5
      %v4810 = vsel %vm913, %v4805, %v4809
      %v4812 = vshrl.u32 %v4448, 16
      %v4814 = vrot.slane %v4812, 4
      %v4815 = vshll.u32 %v4448, 16
      %v4817 = vrot.slane %v4815, 5
      %v4818 = vor.u32 %v4814, %v4817
      %v4819 = vrot.slane %v4818, 4
      %v4821 = vshll.u32 %v4449, 16
      %v4823 = vrot.slane %v4821, 5
      %v4824 = vsel %vm913, %v4819, %v4823
      %v4825 = vshrl.u32 %v4449, 16
      %v4827 = vrot.slane %v4825, 4
      %v4828 = vor.u32 %v4827, %v4823
      %v4829 = vrot.slane %v4828, 4
      %v4831 = vshll.u32 %v4450, 16
      %v4833 = vrot.slane %v4831, 5
      %v4834 = vsel %vm913, %v4829, %v4833
      %s4835 = scalar_lea.vmem %s3, 448
      %v4836 = vld [vmem:[%s4835] sm:$0xf]
      %v4837 = vld [vmem:[%s4835 + $0x4] sm:$0xf]
      %v4838 = vld [vmem:[%s4835 + $0x8] sm:$0xf]
      %v4839 = vld [vmem:[%s4835 + $0xc] sm:$0xf]
      %v4840 = vld [vmem:[%s4835 + $0x10] sm:$0xf]
      %v4841 = vld [vmem:[%s4835 + $0x14] sm:$0xf]
      %v4842 = vld [vmem:[%s4835 + $0x18] sm:$0xf]
      %v4843 = vld [vmem:[%s4835 + $0x1c] sm:$0xf]
      %v4844 = vld [vmem:[%s4835 + $0x20] sm:$0xf]
      %v4845 = vld [vmem:[%s4835 + $0x24] sm:$0xf]
      %v4846 = vld [vmem:[%s4835 + $0x28] sm:$0xf]
      %v4847 = vld [vmem:[%s4835 + $0x2c] sm:$0xf]
      %v4848 = vld [vmem:[%s4835 + $0x30] sm:$0xf]
      %v4849 = vld [vmem:[%s4835 + $0x34] sm:$0xf]
      %v4850 = vld [vmem:[%s4835 + $0x38] sm:$0xf]
      %v4851 = vld [vmem:[%s4835 + $0x3c] sm:$0xf]
      %v4852 = vunpack.c.l.b16 %v4464
      %v4853 = vunpack.c.l.b16 %v4474
      %v4854 = vunpack.c.l.b16 %v4488
      %v4855 = vunpack.c.l.b16 %v4498
      %v4856 = vunpack.c.l.b16 %v4512
      %v4857 = vunpack.c.l.b16 %v4522
      %v4858 = vunpack.c.l.b16 %v4536
      %v4859 = vunpack.c.l.b16 %v4546
      %v4860 = vunpack.c.l.b16 %v4560
      %v4861 = vunpack.c.l.b16 %v4570
      %v4862 = vunpack.c.l.b16 %v4584
      %v4863 = vunpack.c.l.b16 %v4594
      %v4864 = vunpack.c.l.b16 %v4608
      %v4865 = vunpack.c.l.b16 %v4618
      %v4866 = vunpack.c.l.b16 %v4632
      %v4867 = vunpack.c.l.b16 %v4642
      %v4868 = vunpack.c.l.b16 %v4656
      %v4869 = vunpack.c.l.b16 %v4666
      %v4870 = vunpack.c.l.b16 %v4680
      %v4871 = vunpack.c.l.b16 %v4690
      %v4872 = vunpack.c.l.b16 %v4704
      %v4873 = vunpack.c.l.b16 %v4714
      %v4874 = vunpack.c.l.b16 %v4728
      %v4875 = vunpack.c.l.b16 %v4738
      %v4876 = vunpack.c.l.b16 %v4752
      %v4877 = vunpack.c.l.b16 %v4762
      %v4878 = vunpack.c.l.b16 %v4776
      %v4879 = vunpack.c.l.b16 %v4786
      %v4880 = vunpack.c.l.b16 %v4800
      %v4881 = vunpack.c.l.b16 %v4810
      %v4882 = vunpack.c.l.b16 %v4824
      %v4883 = vunpack.c.l.b16 %v4834
      %v4884 = vpack.c.b16 %v4853, %v4852
      %v4885 = vpack.c.b16 %v4855, %v4854
      %v4886 = vpack.c.b16 %v4857, %v4856
      %v4887 = vpack.c.b16 %v4859, %v4858
      %v4888 = vpack.c.b16 %v4861, %v4860
      %v4889 = vpack.c.b16 %v4863, %v4862
      %v4890 = vpack.c.b16 %v4865, %v4864
      %v4891 = vpack.c.b16 %v4867, %v4866
      %v4892 = vpack.c.b16 %v4869, %v4868
      %v4893 = vpack.c.b16 %v4871, %v4870
      %v4894 = vpack.c.b16 %v4873, %v4872
      %v4895 = vpack.c.b16 %v4875, %v4874
      %v4896 = vpack.c.b16 %v4877, %v4876
      %v4897 = vpack.c.b16 %v4879, %v4878
      %v4898 = vpack.c.b16 %v4881, %v4880
      %v4899 = vpack.c.b16 %v4883, %v4882
      %v4932 = vunpack.c.l.b16 %v4836
      %v4933 = vunpack.c.l.b16 %v4837
      %v4934 = vunpack.c.l.b16 %v4838
      %v4935 = vunpack.c.l.b16 %v4839
      %v4936 = vunpack.c.l.b16 %v4840
      %v4937 = vunpack.c.l.b16 %v4841
      %v4938 = vunpack.c.l.b16 %v4842
      %v4939 = vunpack.c.l.b16 %v4843
      %v4940 = vunpack.c.l.b16 %v4844
      %v4941 = vunpack.c.l.b16 %v4845
      %v4942 = vunpack.c.l.b16 %v4846
      %v4943 = vunpack.c.l.b16 %v4847
      %v4944 = vunpack.c.l.b16 %v4848
      %v4945 = vunpack.c.l.b16 %v4849
      %v4946 = vunpack.c.l.b16 %v4850
      %v4947 = vunpack.c.l.b16 %v4851
      %v4948 = vpack.c.b16 %v4933, %v4932
      %v4949 = vpack.c.b16 %v4935, %v4934
      %v4950 = vpack.c.b16 %v4937, %v4936
      %v4951 = vpack.c.b16 %v4939, %v4938
      %v4952 = vpack.c.b16 %v4941, %v4940
      %v4953 = vpack.c.b16 %v4943, %v4942
      %v4954 = vpack.c.b16 %v4945, %v4944
      %v4955 = vpack.c.b16 %v4947, %v4946
      %4964 = vmatprep.subr.bf16.mxu0 0
      %4965 = vmatpush1.bf16.msra.mxu0 %v4948
      %4966 = vmatprep.subr.bf16.mxu0 0
      %4967 = vmatpush1.bf16.msra.mxu0 %v4949
      %4968 = vmatprep.subr.bf16.mxu0 0
      %4969 = vmatpush1.bf16.msra.mxu0 %v4950
      %4970 = vmatprep.subr.bf16.mxu0 0
      %4971 = vmatpush1.bf16.msra.mxu0 %v4951
      %4972 = vmatprep.subr.bf16.mxu0 0
      %4973 = vmatpush1.bf16.msra.mxu0 %v4952
      %4974 = vmatprep.subr.bf16.mxu0 0
      %4975 = vmatpush1.bf16.msra.mxu0 %v4953
      %4976 = vmatprep.subr.bf16.mxu0 0
      %4977 = vmatpush1.bf16.msra.mxu0 %v4954
      %4978 = vmatprep.subr.bf16.mxu0 0
      %4979 = vmatpush1.bf16.msra.mxu0 %v4955
      %4980 = vmatprep.subr.bf16.mxu0 0
      %4981 = vmatpush1.bf16.msra.mxu0 0
      %4982 = vmatprep.subr.bf16.mxu0 0
      %4983 = vmatpush1.bf16.msra.mxu0 0
      %4984 = vmatprep.subr.bf16.mxu0 0
      %4985 = vmatpush1.bf16.msra.mxu0 0
      %4986 = vmatprep.subr.bf16.mxu0 0
      %4987 = vmatpush1.bf16.msra.mxu0 0
      %4988 = vmatprep.subr.bf16.mxu0 0
      %4989 = vmatpush1.bf16.msra.mxu0 0
      %4990 = vmatprep.subr.bf16.mxu0 0
      %4991 = vmatpush1.bf16.msra.mxu0 0
      %4992 = vmatprep.subr.bf16.mxu0 0
      %4993 = vmatpush1.bf16.msra.mxu0 0
      %4994 = vmatprep.subr.bf16.mxu0 0
      %4995 = vmatpush1.bf16.msra.mxu0 0
      %4996 = vmatprep.mubr.bf16.mxu0 0
      %4997 = vmatmul.mubr.bf16.gmra.mrb[0].mxu0 %v4884
      %v4998 = vpop.f32.mrb[0].mxu0
      %v4999 = vadd.f32 0.0, %v4998
      %v5000 = vpop.f32.mrb[0].mxu0
      %v5001 = vpop.f32.mrb[0].mxu0
      %v5002 = vadd.f32 0.0, %v5001
      %v5003 = vpop.f32.mrb[0].mxu0
      %5004 = vmatprep.mubr.bf16.mxu0 0
      %5005 = vmatmul.mubr.bf16.gmra.mrb[0].mxu0 %v4885
      %v5006 = vpop.f32.mrb[0].mxu0
      %v5007 = vadd.f32 0.0, %v5006
      %v5008 = vpop.f32.mrb[0].mxu0
      %v5009 = vpop.f32.mrb[0].mxu0
      %v5010 = vadd.f32 0.0, %v5009
      %v5011 = vpop.f32.mrb[0].mxu0
      %5012 = vmatprep.mubr.bf16.mxu0 0
      %5013 = vmatmul.mubr.bf16.gmra.mrb[0].mxu0 %v4886
      %v5014 = vpop.f32.mrb[0].mxu0
      %v5015 = vadd.f32 0.0, %v5014
      %v5016 = vpop.f32.mrb[0].mxu0
      %v5017 = vpop.f32.mrb[0].mxu0
      %v5018 = vadd.f32 0.0, %v5017
      %v5019 = vpop.f32.mrb[0].mxu0
      %5020 = vmatprep.mubr.bf16.mxu0 0
      %5021 = vmatmul.mubr.bf16.gmra.mrb[0].mxu0 %v4887
      %v5022 = vpop.f32.mrb[0].mxu0
      %v5023 = vadd.f32 0.0, %v5022
      %v5024 = vpop.f32.mrb[0].mxu0
      %v5025 = vpop.f32.mrb[0].mxu0
      %v5026 = vadd.f32 0.0, %v5025
      %v5027 = vpop.f32.mrb[0].mxu0
      %5028 = vmatprep.mubr.bf16.mxu0 0
      %5029 = vmatmul.mubr.bf16.gmra.mrb[0].mxu0 %v4888
      %v5030 = vpop.f32.mrb[0].mxu0
      %v5031 = vadd.f32 0.0, %v5030
      %v5032 = vpop.f32.mrb[0].mxu0
      %v5033 = vpop.f32.mrb[0].mxu0
      %v5034 = vadd.f32 0.0, %v5033
      %v5035 = vpop.f32.mrb[0].mxu0
      %5036 = vmatprep.mubr.bf16.mxu0 0
      %5037 = vmatmul.mubr.bf16.gmra.mrb[0].mxu0 %v4889
      %v5038 = vpop.f32.mrb[0].mxu0
      %v5039 = vadd.f32 0.0, %v5038
      %v5040 = vpop.f32.mrb[0].mxu0
      %v5041 = vpop.f32.mrb[0].mxu0
      %v5042 = vadd.f32 0.0, %v5041
      %v5043 = vpop.f32.mrb[0].mxu0
      %5044 = vmatprep.mubr.bf16.mxu0 0
      %5045 = vmatmul.mubr.bf16.gmra.mrb[0].mxu0 %v4890
      %v5046 = vpop.f32.mrb[0].mxu0
      %v5047 = vadd.f32 0.0, %v5046
      %v5048 = vpop.f32.mrb[0].mxu0
      %v5049 = vpop.f32.mrb[0].mxu0
      %v5050 = vadd.f32 0.0, %v5049
      %v5051 = vpop.f32.mrb[0].mxu0
      %5052 = vmatprep.mubr.bf16.mxu0 0
      %5053 = vmatmul.mubr.bf16.gmra.mrb[0].mxu0 %v4891
      %v5054 = vpop.f32.mrb[0].mxu0
      %v5055 = vadd.f32 0.0, %v5054
      %v5056 = vpop.f32.mrb[0].mxu0
      %v5057 = vpop.f32.mrb[0].mxu0
      %v5058 = vadd.f32 0.0, %v5057
      %v5059 = vpop.f32.mrb[0].mxu0
      %5060 = vmatprep.mubr.bf16.mxu0 0
      %5061 = vmatmul.mubr.bf16.gmra.mrb[0].mxu0 %v4892
      %v5062 = vpop.f32.mrb[0].mxu0
      %v5063 = vadd.f32 0.0, %v5062
      %v5064 = vpop.f32.mrb[0].mxu0
      %v5065 = vpop.f32.mrb[0].mxu0
      %v5066 = vadd.f32 0.0, %v5065
      %v5067 = vpop.f32.mrb[0].mxu0
      %5068 = vmatprep.mubr.bf16.mxu0 0
      %5069 = vmatmul.mubr.bf16.gmra.mrb[0].mxu0 %v4893
      %v5070 = vpop.f32.mrb[0].mxu0
      %v5071 = vadd.f32 0.0, %v5070
      %v5072 = vpop.f32.mrb[0].mxu0
      %v5073 = vpop.f32.mrb[0].mxu0
      %v5074 = vadd.f32 0.0, %v5073
      %v5075 = vpop.f32.mrb[0].mxu0
      %5076 = vmatprep.mubr.bf16.mxu0 0
      %5077 = vmatmul.mubr.bf16.gmra.mrb[0].mxu0 %v4894
      %v5078 = vpop.f32.mrb[0].mxu0
      %v5079 = vadd.f32 0.0, %v5078
      %v5080 = vpop.f32.mrb[0].mxu0
      %v5081 = vpop.f32.mrb[0].mxu0
      %v5082 = vadd.f32 0.0, %v5081
      %v5083 = vpop.f32.mrb[0].mxu0
      %5084 = vmatprep.mubr.bf16.mxu0 0
      %5085 = vmatmul.mubr.bf16.gmra.mrb[0].mxu0 %v4895
      %v5086 = vpop.f32.mrb[0].mxu0
      %v5087 = vadd.f32 0.0, %v5086
      %v5088 = vpop.f32.mrb[0].mxu0
      %v5089 = vpop.f32.mrb[0].mxu0
      %v5090 = vadd.f32 0.0, %v5089
      %v5091 = vpop.f32.mrb[0].mxu0
      %5092 = vmatprep.mubr.bf16.mxu0 0
      %5093 = vmatmul.mubr.bf16.gmra.mrb[0].mxu0 %v4896
      %v5094 = vpop.f32.mrb[0].mxu0
      %v5095 = vadd.f32 0.0, %v5094
      %v5096 = vpop.f32.mrb[0].mxu0
      %v5097 = vpop.f32.mrb[0].mxu0
      %v5098 = vadd.f32 0.0, %v5097
      %v5099 = vpop.f32.mrb[0].mxu0
      %5100 = vmatprep.mubr.bf16.mxu0 0
      %5101 = vmatmul.mubr.bf16.gmra.mrb[0].mxu0 %v4897
      %v5102 = vpop.f32.mrb[0].mxu0
      %v5103 = vadd.f32 0.0, %v5102
      %v5104 = vpop.f32.mrb[0].mxu0
      %v5105 = vpop.f32.mrb[0].mxu0
      %v5106 = vadd.f32 0.0, %v5105
      %v5107 = vpop.f32.mrb[0].mxu0
      %5108 = vmatprep.mubr.bf16.mxu0 0
      %5109 = vmatmul.mubr.bf16.gmra.mrb[0].mxu0 %v4898
      %v5110 = vpop.f32.mrb[0].mxu0
      %v5111 = vadd.f32 0.0, %v5110
      %v5112 = vpop.f32.mrb[0].mxu0
      %v5113 = vpop.f32.mrb[0].mxu0
      %v5114 = vadd.f32 0.0, %v5113
      %v5115 = vpop.f32.mrb[0].mxu0
      %5116 = vmatprep.mubr.bf16.mxu0 0
      %5117 = vmatmul.mubr.bf16.gmra.mrb[0].mxu0 %v4899
      %v5118 = vpop.f32.mrb[0].mxu0
      %v5119 = vadd.f32 0.0, %v5118
      %v5120 = vpop.f32.mrb[0].mxu0
      %v5121 = vpop.f32.mrb[0].mxu0
      %v5122 = vadd.f32 0.0, %v5121
      %v5123 = vpop.f32.mrb[0].mxu0
      %5124 = vdwg.mxu0
      %v5125 = vadd.f32 %v4371, %v4999
      %v5126 = vadd.f32 %v4372, %v5002
      %v5127 = vadd.f32 %v4373, %v5007
      %v5128 = vadd.f32 %v4374, %v5010
      %v5129 = vadd.f32 %v4375, %v5015
      %v5130 = vadd.f32 %v4376, %v5018
      %v5131 = vadd.f32 %v4377, %v5023
      %v5132 = vadd.f32 %v4378, %v5026
      %v5133 = vadd.f32 %v4379, %v5031
      %v5134 = vadd.f32 %v4380, %v5034
      %v5135 = vadd.f32 %v4381, %v5039
      %v5136 = vadd.f32 %v4382, %v5042
      %v5137 = vadd.f32 %v4383, %v5047
      %v5138 = vadd.f32 %v4384, %v5050
      %v5139 = vadd.f32 %v4385, %v5055
      %v5140 = vadd.f32 %v4386, %v5058
      %v5141 = vadd.f32 %v4387, %v5063
      %v5142 = vadd.f32 %v4388, %v5066
      %v5143 = vadd.f32 %v4389, %v5071
      %v5144 = vadd.f32 %v4390, %v5074
      %v5145 = vadd.f32 %v4391, %v5079
      %v5146 = vadd.f32 %v4392, %v5082
      %v5147 = vadd.f32 %v4393, %v5087
      %v5148 = vadd.f32 %v4394, %v5090
      %v5149 = vadd.f32 %v4395, %v5095
      %v5150 = vadd.f32 %v4396, %v5098
      %v5151 = vadd.f32 %v4397, %v5103
      %v5152 = vadd.f32 %v4398, %v5106
      %v5153 = vadd.f32 %v4399, %v5111
      %v5154 = vadd.f32 %v4400, %v5114
      %v5155 = vadd.f32 %v4401, %v5119
      %v5156 = vadd.f32 %v4402, %v5122
      %v5157 = vld [vmem:[%s4016] sm:$0xe]
      %v5158 = vld [vmem:[%s4016 + $0xc] sm:$0xe]
      %v5159 = vld [vmem:[%s4016 + $0x18] sm:$0xe]
      %v5160 = vld [vmem:[%s4016 + $0x24] sm:$0xe]
      %v5161 = vld [vmem:[%s4016 + $0x30] sm:$0xe]
      %v5162 = vld [vmem:[%s4016 + $0x3c] sm:$0xe]
      %v5163 = vld [vmem:[%s4016 + $0x48] sm:$0xe]
      %v5164 = vld [vmem:[%s4016 + $0x54] sm:$0xe]
      %v5165 = vld [vmem:[%s4016 + $0x60] sm:$0xe]
      %v5166 = vld [vmem:[%s4016 + $0x6c] sm:$0xe]
      %v5167 = vld [vmem:[%s4016 + $0x78] sm:$0xe]
      %v5168 = vld [vmem:[%s4016 + $0x84] sm:$0xe]
      %v5169 = vld [vmem:[%s4016 + $0x90] sm:$0xe]
      %v5170 = vld [vmem:[%s4016 + $0x9c] sm:$0xe]
      %v5171 = vld [vmem:[%s4016 + $0xa8] sm:$0xe]
      %v5172 = vld [vmem:[%s4016 + $0xb4] sm:$0xe]
      %v5221 = vrot.slane %v5157, 5
      %v5222 = vrot.slane %v5221, 4
      %v5223 = vrot.slane %v4404, 5
      %v5224 = vsel %vm1943, %v5222, %v5223
      %v5225 = vrot.slane %v5223, 4
      %v5226 = vrot.slane %v4405, 5
      %v5227 = vsel %vm1943, %v5225, %v5226
      %v5228 = vrot.slane %v5158, 5
      %v5229 = vrot.slane %v5228, 4
      %v5230 = vrot.slane %v4407, 5
      %v5231 = vsel %vm1943, %v5229, %v5230
      %v5232 = vrot.slane %v5230, 4
      %v5233 = vrot.slane %v4408, 5
      %v5234 = vsel %vm1943, %v5232, %v5233
      %v5235 = vrot.slane %v5159, 5
      %v5236 = vrot.slane %v5235, 4
      %v5237 = vrot.slane %v4410, 5
      %v5238 = vsel %vm1943, %v5236, %v5237
      %v5239 = vrot.slane %v5237, 4
      %v5240 = vrot.slane %v4411, 5
      %v5241 = vsel %vm1943, %v5239, %v5240
      %v5242 = vrot.slane %v5160, 5
      %v5243 = vrot.slane %v5242, 4
      %v5244 = vrot.slane %v4413, 5
      %v5245 = vsel %vm1943, %v5243, %v5244
      %v5246 = vrot.slane %v5244, 4
      %v5247 = vrot.slane %v4414, 5
      %v5248 = vsel %vm1943, %v5246, %v5247
      %v5249 = vrot.slane %v5161, 5
      %v5250 = vrot.slane %v5249, 4
      %v5251 = vrot.slane %v4416, 5
      %v5252 = vsel %vm1943, %v5250, %v5251
      %v5253 = vrot.slane %v5251, 4
      %v5254 = vrot.slane %v4417, 5
      %v5255 = vsel %vm1943, %v5253, %v5254
      %v5256 = vrot.slane %v5162, 5
      %v5257 = vrot.slane %v5256, 4
      %v5258 = vrot.slane %v4419, 5
      %v5259 = vsel %vm1943, %v5257, %v5258
      %v5260 = vrot.slane %v5258, 4
      %v5261 = vrot.slane %v4420, 5
      %v5262 = vsel %vm1943, %v5260, %v5261
      %v5263 = vrot.slane %v5163, 5
      %v5264 = vrot.slane %v5263, 4
      %v5265 = vrot.slane %v4422, 5
      %v5266 = vsel %vm1943, %v5264, %v5265
      %v5267 = vrot.slane %v5265, 4
      %v5268 = vrot.slane %v4423, 5
      %v5269 = vsel %vm1943, %v5267, %v5268
      %v5270 = vrot.slane %v5164, 5
      %v5271 = vrot.slane %v5270, 4
      %v5272 = vrot.slane %v4425, 5
      %v5273 = vsel %vm1943, %v5271, %v5272
      %v5274 = vrot.slane %v5272, 4
      %v5275 = vrot.slane %v4426, 5
      %v5276 = vsel %vm1943, %v5274, %v5275
      %v5277 = vrot.slane %v5165, 5
      %v5278 = vrot.slane %v5277, 4
      %v5279 = vrot.slane %v4428, 5
      %v5280 = vsel %vm1943, %v5278, %v5279
      %v5281 = vrot.slane %v5279, 4
      %v5282 = vrot.slane %v4429, 5
      %v5283 = vsel %vm1943, %v5281, %v5282
      %v5284 = vrot.slane %v5166, 5
      %v5285 = vrot.slane %v5284, 4
      %v5286 = vrot.slane %v4431, 5
      %v5287 = vsel %vm1943, %v5285, %v5286
      %v5288 = vrot.slane %v5286, 4
      %v5289 = vrot.slane %v4432, 5
      %v5290 = vsel %vm1943, %v5288, %v5289
      %v5291 = vrot.slane %v5167, 5
      %v5292 = vrot.slane %v5291, 4
      %v5293 = vrot.slane %v4434, 5
      %v5294 = vsel %vm1943, %v5292, %v5293
      %v5295 = vrot.slane %v5293, 4
      %v5296 = vrot.slane %v4435, 5
      %v5297 = vsel %vm1943, %v5295, %v5296
      %v5298 = vrot.slane %v5168, 5
      %v5299 = vrot.slane %v5298, 4
      %v5300 = vrot.slane %v4437, 5
      %v5301 = vsel %vm1943, %v5299, %v5300
      %v5302 = vrot.slane %v5300, 4
      %v5303 = vrot.slane %v4438, 5
      %v5304 = vsel %vm1943, %v5302, %v5303
      %v5305 = vrot.slane %v5169, 5
      %v5306 = vrot.slane %v5305, 4
      %v5307 = vrot.slane %v4440, 5
      %v5308 = vsel %vm1943, %v5306, %v5307
      %v5309 = vrot.slane %v5307, 4
      %v5310 = vrot.slane %v4441, 5
      %v5311 = vsel %vm1943, %v5309, %v5310
      %v5312 = vrot.slane %v5170, 5
      %v5313 = vrot.slane %v5312, 4
      %v5314 = vrot.slane %v4443, 5
      %v5315 = vsel %vm1943, %v5313, %v5314
      %v5316 = vrot.slane %v5314, 4
      %v5317 = vrot.slane %v4444, 5
      %v5318 = vsel %vm1943, %v5316, %v5317
      %v5319 = vrot.slane %v5171, 5
      %v5320 = vrot.slane %v5319, 4
      %v5321 = vrot.slane %v4446, 5
      %v5322 = vsel %vm1943, %v5320, %v5321
      %v5323 = vrot.slane %v5321, 4
      %v5324 = vrot.slane %v4447, 5
      %v5325 = vsel %vm1943, %v5323, %v5324
      %v5326 = vrot.slane %v5172, 5
      %v5327 = vrot.slane %v5326, 4
      %v5328 = vrot.slane %v4449, 5
      %v5329 = vsel %vm1943, %v5327, %v5328
      %v5330 = vrot.slane %v5328, 4
      %v5331 = vrot.slane %v4450, 5
      %v5332 = vsel %vm1943, %v5330, %v5331
      %s5333 = scalar_lea.vmem %s3, 512
      %v5334 = vld [vmem:[%s5333] sm:$0xf]
      %v5335 = vld [vmem:[%s5333 + $0x4] sm:$0xf]
      %v5336 = vld [vmem:[%s5333 + $0x8] sm:$0xf]
      %v5337 = vld [vmem:[%s5333 + $0xc] sm:$0xf]
      %v5338 = vld [vmem:[%s5333 + $0x10] sm:$0xf]
      %v5339 = vld [vmem:[%s5333 + $0x14] sm:$0xf]
      %v5340 = vld [vmem:[%s5333 + $0x18] sm:$0xf]
      %v5341 = vld [vmem:[%s5333 + $0x1c] sm:$0xf]
      %v5342 = vld [vmem:[%s5333 + $0x20] sm:$0xf]
      %v5343 = vld [vmem:[%s5333 + $0x24] sm:$0xf]
      %v5344 = vld [vmem:[%s5333 + $0x28] sm:$0xf]
      %v5345 = vld [vmem:[%s5333 + $0x2c] sm:$0xf]
      %v5346 = vld [vmem:[%s5333 + $0x30] sm:$0xf]
      %v5347 = vld [vmem:[%s5333 + $0x34] sm:$0xf]
      %v5348 = vld [vmem:[%s5333 + $0x38] sm:$0xf]
      %v5349 = vld [vmem:[%s5333 + $0x3c] sm:$0xf]
      %v5350 = vunpack.c.l.b16 %v5224
      %v5351 = vunpack.c.l.b16 %v5227
      %v5352 = vunpack.c.l.b16 %v5231
      %v5353 = vunpack.c.l.b16 %v5234
      %v5354 = vunpack.c.l.b16 %v5238
      %v5355 = vunpack.c.l.b16 %v5241
      %v5356 = vunpack.c.l.b16 %v5245
      %v5357 = vunpack.c.l.b16 %v5248
      %v5358 = vunpack.c.l.b16 %v5252
      %v5359 = vunpack.c.l.b16 %v5255
      %v5360 = vunpack.c.l.b16 %v5259
      %v5361 = vunpack.c.l.b16 %v5262
      %v5362 = vunpack.c.l.b16 %v5266
      %v5363 = vunpack.c.l.b16 %v5269
      %v5364 = vunpack.c.l.b16 %v5273
      %v5365 = vunpack.c.l.b16 %v5276
      %v5366 = vunpack.c.l.b16 %v5280
      %v5367 = vunpack.c.l.b16 %v5283
      %v5368 = vunpack.c.l.b16 %v5287
      %v5369 = vunpack.c.l.b16 %v5290
      %v5370 = vunpack.c.l.b16 %v5294
      %v5371 = vunpack.c.l.b16 %v5297
      %v5372 = vunpack.c.l.b16 %v5301
      %v5373 = vunpack.c.l.b16 %v5304
      %v5374 = vunpack.c.l.b16 %v5308
      %v5375 = vunpack.c.l.b16 %v5311
      %v5376 = vunpack.c.l.b16 %v5315
      %v5377 = vunpack.c.l.b16 %v5318
      %v5378 = vunpack.c.l.b16 %v5322
      %v5379 = vunpack.c.l.b16 %v5325
      %v5380 = vunpack.c.l.b16 %v5329
      %v5381 = vunpack.c.l.b16 %v5332
      %v5382 = vpack.c.b16 %v5351, %v5350
      %v5383 = vpack.c.b16 %v5353, %v5352
      %v5384 = vpack.c.b16 %v5355, %v5354
      %v5385 = vpack.c.b16 %v5357, %v5356
      %v5386 = vpack.c.b16 %v5359, %v5358
      %v5387 = vpack.c.b16 %v5361, %v5360
      %v5388 = vpack.c.b16 %v5363, %v5362
      %v5389 = vpack.c.b16 %v5365, %v5364
      %v5390 = vpack.c.b16 %v5367, %v5366
      %v5391 = vpack.c.b16 %v5369, %v5368
      %v5392 = vpack.c.b16 %v5371, %v5370
      %v5393 = vpack.c.b16 %v5373, %v5372
      %v5394 = vpack.c.b16 %v5375, %v5374
      %v5395 = vpack.c.b16 %v5377, %v5376
      %v5396 = vpack.c.b16 %v5379, %v5378
      %v5397 = vpack.c.b16 %v5381, %v5380
      %v5430 = vunpack.c.l.b16 %v5334
      %v5431 = vunpack.c.l.b16 %v5335
      %v5432 = vunpack.c.l.b16 %v5336
      %v5433 = vunpack.c.l.b16 %v5337
      %v5434 = vunpack.c.l.b16 %v5338
      %v5435 = vunpack.c.l.b16 %v5339
      %v5436 = vunpack.c.l.b16 %v5340
      %v5437 = vunpack.c.l.b16 %v5341
      %v5438 = vunpack.c.l.b16 %v5342
      %v5439 = vunpack.c.l.b16 %v5343
      %v5440 = vunpack.c.l.b16 %v5344
      %v5441 = vunpack.c.l.b16 %v5345
      %v5442 = vunpack.c.l.b16 %v5346
      %v5443 = vunpack.c.l.b16 %v5347
      %v5444 = vunpack.c.l.b16 %v5348
      %v5445 = vunpack.c.l.b16 %v5349
      %v5446 = vpack.c.b16 %v5431, %v5430
      %v5447 = vpack.c.b16 %v5433, %v5432
      %v5448 = vpack.c.b16 %v5435, %v5434
      %v5449 = vpack.c.b16 %v5437, %v5436
      %v5450 = vpack.c.b16 %v5439, %v5438
      %v5451 = vpack.c.b16 %v5441, %v5440
      %v5452 = vpack.c.b16 %v5443, %v5442
      %v5453 = vpack.c.b16 %v5445, %v5444
      %5462 = vmatprep.subr.bf16.mxu0 0
      %5463 = vmatpush1.bf16.msra.mxu0 %v5446
      %5464 = vmatprep.subr.bf16.mxu0 0
      %5465 = vmatpush1.bf16.msra.mxu0 %v5447
      %5466 = vmatprep.subr.bf16.mxu0 0
      %5467 = vmatpush1.bf16.msra.mxu0 %v5448
      %5468 = vmatprep.subr.bf16.mxu0 0
      %5469 = vmatpush1.bf16.msra.mxu0 %v5449
      %5470 = vmatprep.subr.bf16.mxu0 0
      %5471 = vmatpush1.bf16.msra.mxu0 %v5450
      %5472 = vmatprep.subr.bf16.mxu0 0
      %5473 = vmatpush1.bf16.msra.mxu0 %v5451
      %5474 = vmatprep.subr.bf16.mxu0 0
      %5475 = vmatpush1.bf16.msra.mxu0 %v5452
      %5476 = vmatprep.subr.bf16.mxu0 0
      %5477 = vmatpush1.bf16.msra.mxu0 %v5453
      %5478 = vmatprep.subr.bf16.mxu0 0
      %5479 = vmatpush1.bf16.msra.mxu0 0
      %5480 = vmatprep.subr.bf16.mxu0 0
      %5481 = vmatpush1.bf16.msra.mxu0 0
      %5482 = vmatprep.subr.bf16.mxu0 0
      %5483 = vmatpush1.bf16.msra.mxu0 0
      %5484 = vmatprep.subr.bf16.mxu0 0
      %5485 = vmatpush1.bf16.msra.mxu0 0
      %5486 = vmatprep.subr.bf16.mxu0 0
      %5487 = vmatpush1.bf16.msra.mxu0 0
      %5488 = vmatprep.subr.bf16.mxu0 0
      %5489 = vmatpush1.bf16.msra.mxu0 0
      %5490 = vmatprep.subr.bf16.mxu0 0
      %5491 = vmatpush1.bf16.msra.mxu0 0
      %5492 = vmatprep.subr.bf16.mxu0 0
      %5493 = vmatpush1.bf16.msra.mxu0 0
      %5494 = vmatprep.mubr.bf16.mxu0 0
      %5495 = vmatmul.mubr.bf16.gmra.mrb[0].mxu0 %v5382
      %v5496 = vpop.f32.mrb[0].mxu0
      %v5497 = vadd.f32 0.0, %v5496
      %v5498 = vpop.f32.mrb[0].mxu0
      %v5499 = vpop.f32.mrb[0].mxu0
      %v5500 = vadd.f32 0.0, %v5499
      %v5501 = vpop.f32.mrb[0].mxu0
      %5502 = vmatprep.mubr.bf16.mxu0 0
      %5503 = vmatmul.mubr.bf16.gmra.mrb[0].mxu0 %v5383
      %v5504 = vpop.f32.mrb[0].mxu0
      %v5505 = vadd.f32 0.0, %v5504
      %v5506 = vpop.f32.mrb[0].mxu0
      %v5507 = vpop.f32.mrb[0].mxu0
      %v5508 = vadd.f32 0.0, %v5507
      %v5509 = vpop.f32.mrb[0].mxu0
      %5510 = vmatprep.mubr.bf16.mxu0 0
      %5511 = vmatmul.mubr.bf16.gmra.mrb[0].mxu0 %v5384
      %v5512 = vpop.f32.mrb[0].mxu0
      %v5513 = vadd.f32 0.0, %v5512
      %v5514 = vpop.f32.mrb[0].mxu0
      %v5515 = vpop.f32.mrb[0].mxu0
      %v5516 = vadd.f32 0.0, %v5515
      %v5517 = vpop.f32.mrb[0].mxu0
      %5518 = vmatprep.mubr.bf16.mxu0 0
      %5519 = vmatmul.mubr.bf16.gmra.mrb[0].mxu0 %v5385
      %v5520 = vpop.f32.mrb[0].mxu0
      %v5521 = vadd.f32 0.0, %v5520
      %v5522 = vpop.f32.mrb[0].mxu0
      %v5523 = vpop.f32.mrb[0].mxu0
      %v5524 = vadd.f32 0.0, %v5523
      %v5525 = vpop.f32.mrb[0].mxu0
      %5526 = vmatprep.mubr.bf16.mxu0 0
      %5527 = vmatmul.mubr.bf16.gmra.mrb[0].mxu0 %v5386
      %v5528 = vpop.f32.mrb[0].mxu0
      %v5529 = vadd.f32 0.0, %v5528
      %v5530 = vpop.f32.mrb[0].mxu0
      %v5531 = vpop.f32.mrb[0].mxu0
      %v5532 = vadd.f32 0.0, %v5531
      %v5533 = vpop.f32.mrb[0].mxu0
      %5534 = vmatprep.mubr.bf16.mxu0 0
      %5535 = vmatmul.mubr.bf16.gmra.mrb[0].mxu0 %v5387
      %v5536 = vpop.f32.mrb[0].mxu0
      %v5537 = vadd.f32 0.0, %v5536
      %v5538 = vpop.f32.mrb[0].mxu0
      %v5539 = vpop.f32.mrb[0].mxu0
      %v5540 = vadd.f32 0.0, %v5539
      %v5541 = vpop.f32.mrb[0].mxu0
      %5542 = vmatprep.mubr.bf16.mxu0 0
      %5543 = vmatmul.mubr.bf16.gmra.mrb[0].mxu0 %v5388
      %v5544 = vpop.f32.mrb[0].mxu0
      %v5545 = vadd.f32 0.0, %v5544
      %v5546 = vpop.f32.mrb[0].mxu0
      %v5547 = vpop.f32.mrb[0].mxu0
      %v5548 = vadd.f32 0.0, %v5547
      %v5549 = vpop.f32.mrb[0].mxu0
      %5550 = vmatprep.mubr.bf16.mxu0 0
      %5551 = vmatmul.mubr.bf16.gmra.mrb[0].mxu0 %v5389
      %v5552 = vpop.f32.mrb[0].mxu0
      %v5553 = vadd.f32 0.0, %v5552
      %v5554 = vpop.f32.mrb[0].mxu0
      %v5555 = vpop.f32.mrb[0].mxu0
      %v5556 = vadd.f32 0.0, %v5555
      %v5557 = vpop.f32.mrb[0].mxu0
      %5558 = vmatprep.mubr.bf16.mxu0 0
      %5559 = vmatmul.mubr.bf16.gmra.mrb[0].mxu0 %v5390
      %v5560 = vpop.f32.mrb[0].mxu0
      %v5561 = vadd.f32 0.0, %v5560
      %v5562 = vpop.f32.mrb[0].mxu0
      %v5563 = vpop.f32.mrb[0].mxu0
      %v5564 = vadd.f32 0.0, %v5563
      %v5565 = vpop.f32.mrb[0].mxu0
      %5566 = vmatprep.mubr.bf16.mxu0 0
      %5567 = vmatmul.mubr.bf16.gmra.mrb[0].mxu0 %v5391
      %v5568 = vpop.f32.mrb[0].mxu0
      %v5569 = vadd.f32 0.0, %v5568
      %v5570 = vpop.f32.mrb[0].mxu0
      %v5571 = vpop.f32.mrb[0].mxu0
      %v5572 = vadd.f32 0.0, %v5571
      %v5573 = vpop.f32.mrb[0].mxu0
      %5574 = vmatprep.mubr.bf16.mxu0 0
      %5575 = vmatmul.mubr.bf16.gmra.mrb[0].mxu0 %v5392
      %v5576 = vpop.f32.mrb[0].mxu0
      %v5577 = vadd.f32 0.0, %v5576
      %v5578 = vpop.f32.mrb[0].mxu0
      %v5579 = vpop.f32.mrb[0].mxu0
      %v5580 = vadd.f32 0.0, %v5579
      %v5581 = vpop.f32.mrb[0].mxu0
      %5582 = vmatprep.mubr.bf16.mxu0 0
      %5583 = vmatmul.mubr.bf16.gmra.mrb[0].mxu0 %v5393
      %v5584 = vpop.f32.mrb[0].mxu0
      %v5585 = vadd.f32 0.0, %v5584
      %v5586 = vpop.f32.mrb[0].mxu0
      %v5587 = vpop.f32.mrb[0].mxu0
      %v5588 = vadd.f32 0.0, %v5587
      %v5589 = vpop.f32.mrb[0].mxu0
      %5590 = vmatprep.mubr.bf16.mxu0 0
      %5591 = vmatmul.mubr.bf16.gmra.mrb[0].mxu0 %v5394
      %v5592 = vpop.f32.mrb[0].mxu0
      %v5593 = vadd.f32 0.0, %v5592
      %v5594 = vpop.f32.mrb[0].mxu0
      %v5595 = vpop.f32.mrb[0].mxu0
      %v5596 = vadd.f32 0.0, %v5595
      %v5597 = vpop.f32.mrb[0].mxu0
      %5598 = vmatprep.mubr.bf16.mxu0 0
      %5599 = vmatmul.mubr.bf16.gmra.mrb[0].mxu0 %v5395
      %v5600 = vpop.f32.mrb[0].mxu0
      %v5601 = vadd.f32 0.0, %v5600
      %v5602 = vpop.f32.mrb[0].mxu0
      %v5603 = vpop.f32.mrb[0].mxu0
      %v5604 = vadd.f32 0.0, %v5603
      %v5605 = vpop.f32.mrb[0].mxu0
      %5606 = vmatprep.mubr.bf16.mxu0 0
      %5607 = vmatmul.mubr.bf16.gmra.mrb[0].mxu0 %v5396
      %v5608 = vpop.f32.mrb[0].mxu0
      %v5609 = vadd.f32 0.0, %v5608
      %v5610 = vpop.f32.mrb[0].mxu0
      %v5611 = vpop.f32.mrb[0].mxu0
      %v5612 = vadd.f32 0.0, %v5611
      %v5613 = vpop.f32.mrb[0].mxu0
      %5614 = vmatprep.mubr.bf16.mxu0 0
      %5615 = vmatmul.mubr.bf16.gmra.mrb[0].mxu0 %v5397
      %v5616 = vpop.f32.mrb[0].mxu0
      %v5617 = vadd.f32 0.0, %v5616
      %v5618 = vpop.f32.mrb[0].mxu0
      %v5619 = vpop.f32.mrb[0].mxu0
      %v5620 = vadd.f32 0.0, %v5619
      %v5621 = vpop.f32.mrb[0].mxu0
      %5622 = vdwg.mxu0
      %v5623 = vadd.f32 %v5125, %v5497
      %v5624 = vadd.f32 %v5126, %v5500
      %v5625 = vadd.f32 %v5127, %v5505
      %v5626 = vadd.f32 %v5128, %v5508
      %v5627 = vadd.f32 %v5129, %v5513
      %v5628 = vadd.f32 %v5130, %v5516
      %v5629 = vadd.f32 %v5131, %v5521
      %v5630 = vadd.f32 %v5132, %v5524
      %v5631 = vadd.f32 %v5133, %v5529
      %v5632 = vadd.f32 %v5134, %v5532
      %v5633 = vadd.f32 %v5135, %v5537
      %v5634 = vadd.f32 %v5136, %v5540
      %v5635 = vadd.f32 %v5137, %v5545
      %v5636 = vadd.f32 %v5138, %v5548
      %v5637 = vadd.f32 %v5139, %v5553
      %v5638 = vadd.f32 %v5140, %v5556
      %v5639 = vadd.f32 %v5141, %v5561
      %v5640 = vadd.f32 %v5142, %v5564
      %v5641 = vadd.f32 %v5143, %v5569
      %v5642 = vadd.f32 %v5144, %v5572
      %v5643 = vadd.f32 %v5145, %v5577
      %v5644 = vadd.f32 %v5146, %v5580
      %v5645 = vadd.f32 %v5147, %v5585
      %v5646 = vadd.f32 %v5148, %v5588
      %v5647 = vadd.f32 %v5149, %v5593
      %v5648 = vadd.f32 %v5150, %v5596
      %v5649 = vadd.f32 %v5151, %v5601
      %v5650 = vadd.f32 %v5152, %v5604
      %v5651 = vadd.f32 %v5153, %v5609
      %v5652 = vadd.f32 %v5154, %v5612
      %v5653 = vadd.f32 %v5155, %v5617
      %v5654 = vadd.f32 %v5156, %v5620
      %v5655 = vld [vmem:[%s239] sm:$0xff]
      %v5656 = vld [vmem:[%s239 + $0x8] sm:$0xff]
      %v5657 = vld [vmem:[%s239 + $0x10] sm:$0xff]
      %v5658 = vld [vmem:[%s239 + $0x18] sm:$0xff]
      %v5659 = vld [vmem:[%s239 + $0x20] sm:$0xff]
      %v5660 = vld [vmem:[%s239 + $0x28] sm:$0xff]
      %v5661 = vld [vmem:[%s239 + $0x30] sm:$0xff]
      %v5662 = vld [vmem:[%s239 + $0x38] sm:$0xff]
      %v5663 = vld [vmem:[%s239 + $0x40] sm:$0xff]
      %v5664 = vld [vmem:[%s239 + $0x48] sm:$0xff]
      %v5665 = vld [vmem:[%s239 + $0x50] sm:$0xff]
      %v5666 = vld [vmem:[%s239 + $0x58] sm:$0xff]
      %v5667 = vld [vmem:[%s239 + $0x60] sm:$0xff]
      %v5668 = vld [vmem:[%s239 + $0x68] sm:$0xff]
      %v5669 = vld [vmem:[%s239 + $0x70] sm:$0xff]
      %v5670 = vld [vmem:[%s239 + $0x78] sm:$0xff]
      %v5671 = vld [vmem:[%s239 + $0x80] sm:$0xff]
      %v5672 = vld [vmem:[%s239 + $0x88] sm:$0xff]
      %v5673 = vld [vmem:[%s239 + $0x90] sm:$0xff]
      %v5674 = vld [vmem:[%s239 + $0x98] sm:$0xff]
      %v5675 = vld [vmem:[%s239 + $0xa0] sm:$0xff]
      %v5676 = vld [vmem:[%s239 + $0xa8] sm:$0xff]
      %v5677 = vld [vmem:[%s239 + $0xb0] sm:$0xff]
      %v5678 = vld [vmem:[%s239 + $0xb8] sm:$0xff]
      %v5679 = vld [vmem:[%s239 + $0xc0] sm:$0xff]
      %v5680 = vld [vmem:[%s239 + $0xc8] sm:$0xff]
      %v5681 = vld [vmem:[%s239 + $0xd0] sm:$0xff]
      %v5682 = vld [vmem:[%s239 + $0xd8] sm:$0xff]
      %v5683 = vld [vmem:[%s239 + $0xe0] sm:$0xff]
      %v5684 = vld [vmem:[%s239 + $0xe8] sm:$0xff]
      %v5685 = vld [vmem:[%s239 + $0xf0] sm:$0xff]
      %v5686 = vld [vmem:[%s239 + $0xf8] sm:$0xff]
      %v5687 = vadd.f32 %v5623, %v5655
      %v5688 = vadd.f32 %v5624, %v5656
      %v5689 = vadd.f32 %v5625, %v5657
      %v5690 = vadd.f32 %v5626, %v5658
      %v5691 = vadd.f32 %v5627, %v5659
      %v5692 = vadd.f32 %v5628, %v5660
      %v5693 = vadd.f32 %v5629, %v5661
      %v5694 = vadd.f32 %v5630, %v5662
      %v5695 = vadd.f32 %v5631, %v5663
      %v5696 = vadd.f32 %v5632, %v5664
      %v5697 = vadd.f32 %v5633, %v5665
      %v5698 = vadd.f32 %v5634, %v5666
      %v5699 = vadd.f32 %v5635, %v5667
      %v5700 = vadd.f32 %v5636, %v5668
      %v5701 = vadd.f32 %v5637, %v5669
      %v5702 = vadd.f32 %v5638, %v5670
      %v5703 = vadd.f32 %v5639, %v5671
      %v5704 = vadd.f32 %v5640, %v5672
      %v5705 = vadd.f32 %v5641, %v5673
      %v5706 = vadd.f32 %v5642, %v5674
      %v5707 = vadd.f32 %v5643, %v5675
      %v5708 = vadd.f32 %v5644, %v5676
      %v5709 = vadd.f32 %v5645, %v5677
      %v5710 = vadd.f32 %v5646, %v5678
      %v5711 = vadd.f32 %v5647, %v5679
      %v5712 = vadd.f32 %v5648, %v5680
      %v5713 = vadd.f32 %v5649, %v5681
      %v5714 = vadd.f32 %v5650, %v5682
      %v5715 = vadd.f32 %v5651, %v5683
      %v5716 = vadd.f32 %v5652, %v5684
      %v5717 = vadd.f32 %v5653, %v5685
      %v5718 = vadd.f32 %v5654, %v5686
      %5719 = vst [vmem:[%s244] sm:$0xff] %v5687
      %5720 = vst [vmem:[%s244 + $0x8] sm:$0xff] %v5688
      %5721 = vst [vmem:[%s244 + $0x10] sm:$0xff] %v5689
      %5722 = vst [vmem:[%s244 + $0x18] sm:$0xff] %v5690
      %5723 = vst [vmem:[%s244 + $0x20] sm:$0xff] %v5691
      %5724 = vst [vmem:[%s244 + $0x28] sm:$0xff] %v5692
      %5725 = vst [vmem:[%s244 + $0x30] sm:$0xff] %v5693
      %5726 = vst [vmem:[%s244 + $0x38] sm:$0xff] %v5694
      %5727 = vst [vmem:[%s244 + $0x40] sm:$0xff] %v5695
      %5728 = vst [vmem:[%s244 + $0x48] sm:$0xff] %v5696
      %5729 = vst [vmem:[%s244 + $0x50] sm:$0xff] %v5697
      %5730 = vst [vmem:[%s244 + $0x58] sm:$0xff] %v5698
      %5731 = vst [vmem:[%s244 + $0x60] sm:$0xff] %v5699
      %5732 = vst [vmem:[%s244 + $0x68] sm:$0xff] %v5700
      %5733 = vst [vmem:[%s244 + $0x70] sm:$0xff] %v5701
      %5734 = vst [vmem:[%s244 + $0x78] sm:$0xff] %v5702
      %5735 = vst [vmem:[%s244 + $0x80] sm:$0xff] %v5703
      %5736 = vst [vmem:[%s244 + $0x88] sm:$0xff] %v5704
      %5737 = vst [vmem:[%s244 + $0x90] sm:$0xff] %v5705
      %5738 = vst [vmem:[%s244 + $0x98] sm:$0xff] %v5706
      %5739 = vst [vmem:[%s244 + $0xa0] sm:$0xff] %v5707
      %5740 = vst [vmem:[%s244 + $0xa8] sm:$0xff] %v5708
      %5741 = vst [vmem:[%s244 + $0xb0] sm:$0xff] %v5709
      %5742 = vst [vmem:[%s244 + $0xb8] sm:$0xff] %v5710
      %5743 = vst [vmem:[%s244 + $0xc0] sm:$0xff] %v5711
      %5744 = vst [vmem:[%s244 + $0xc8] sm:$0xff] %v5712
      %5745 = vst [vmem:[%s244 + $0xd0] sm:$0xff] %v5713
      %5746 = vst [vmem:[%s244 + $0xd8] sm:$0xff] %v5714
      %5747 = vst [vmem:[%s244 + $0xe0] sm:$0xff] %v5715
      %5748 = vst [vmem:[%s244 + $0xe8] sm:$0xff] %v5716
      %5749 = vst [vmem:[%s244 + $0xf0] sm:$0xff] %v5717
      %5750 = vst [vmem:[%s244 + $0xf8] sm:$0xff] %v5718
      %p5751 = scmp.lt.s32.totalorder %s16, 1
      %s5752 = scalar_select %p5751, %s16, 1
      %s5753 = smul.addr %s5752, 32
      %s5754 = smul.addr %s5753, 8
      %s5755 = scalar_lea.vmem %s5, %s5754
      // Predicated region
      $region41: #{basic_block_forward.3} parent=39 // pred_check
        %p5756 = pneg %p149
      $region42: #{basic_block_forward.3} parent=39 // pred_check_branch
        %5758 = sbr.rel (%p5756) target = $region44
      $region43: #{basic_block_forward.3} parent=39 // pred_region
        _
      $region44: #{basic_block_forward.3} parent=39 // pred_fallthru
        _
    $region40: #{basic_block_forward.3} parent=5 // pred_fallthru
      _
    %p5759 = scmp.le.s32.totalorder 2, %s11
    // Predicated region
    $region45: #{basic_block_forward.3} parent=5 // pred_check
      %p5760 = pneg %p5759
    $region46: #{basic_block_forward.3} parent=5 // pred_check_branch
      %5762 = sbr.rel (%p5760) target = $region48
    $region47: #{basic_block_forward.3} parent=5 // pred_region
      %s5763 = ssub.s32 %s11, 2
      // Predicated region
      $region49: #{basic_block_forward.3} parent=47 // pred_check
        %p5764 = pneg %p155
      $region50: #{basic_block_forward.3} parent=47 // pred_check_branch
        %5766 = sbr.rel (%p5764) target = $region52
      $region51: #{basic_block_forward.3} parent=47 // pred_region
        %p5767 = scmp.lt.s32.totalorder %s17, 1
        %s5768 = scalar_select %p5767, %s17, 1
        %s5769 = smul.addr %s5768, 32
        %s5770 = smul.addr %s5769, 8
        %s5771 = scalar_lea.vmem %s5, %s5770
      $region52: #{basic_block_forward.3} parent=47 // pred_fallthru
        _
    $region48: #{basic_block_forward.3} parent=5 // pred_fallthru
      _
  $region6: #{basic_block_forward.3} parent=0 // loop_footer
    %s15 = sadd.s32 1, %s11
  $region7: #{basic_block_forward.3} parent=0 // loop_footer_branch
    %10 = sbr.rel target = $region3
  $region8: #{basic_block_forward.3} parent=0 // loop_exit
    _

</llo_original>
